<compile_context>
chip_gen: v7x
topology: tpu7x:2x2x1
jax: 0.10.0
libtpu: 0.0.40
codegen_flags: <defaults>
</compile_context>

<pallas_src>
import functools

import jax
import jax.numpy as jnp
from jax.experimental import pallas as pl
from jax.experimental.pallas import tpu as pltpu

NEG_SLOPE = 0.01  # nn.LeakyReLU default negative_slope

_VMEM_LIMIT = 32 * 1024 * 1024
_CONV_CP = pltpu.CompilerParams(dimension_semantics=("parallel",),
                                vmem_limit_bytes=_VMEM_LIMIT)
_TAIL_CP = pltpu.CompilerParams(dimension_semantics=("arbitrary",),
                                vmem_limit_bytes=_VMEM_LIMIT)


# ----------------------------- kernels ------------------------------------ #
def conv_lrelu_pool_kernel(xt_ref, w_ref, b_ref, o_ref):
    """Fused 3x3 conv (one K=9*Cin matmul per 2x2 pool tap) + bias + LeakyReLU
    + 2x2 max pool.

    xt_ref: (4, TM, 9*Cin) bf16   -- 4 = positions of each 2x2 pool window
    w_ref:  (9*Cin, Cout)  bf16
    b_ref:  (1, Cout)      f32
    o_ref:  (TM, Cout)     f32    -- pooled + activated output rows
    """
    w = w_ref[...]
    m = jnp.dot(xt_ref[0], w, preferred_element_type=jnp.float32)
    m = jnp.maximum(m, jnp.dot(xt_ref[1], w, preferred_element_type=jnp.float32))
    m = jnp.maximum(m, jnp.dot(xt_ref[2], w, preferred_element_type=jnp.float32))
    m = jnp.maximum(m, jnp.dot(xt_ref[3], w, preferred_element_type=jnp.float32))
    m = m + b_ref[...]
    # LeakyReLU after the max (equivalent to before, since it is monotonic).
    o_ref[...] = jnp.where(m >= 0, m, NEG_SLOPE * m)


def tail_kernel(xt_ref, w_ref, b_ref, wl_ref, bl_ref, o_ref, *, n, hw):
    """Fused conv5 + LeakyReLU + global average pool + Linear.

    xt_ref: (n*hw, 9*Cin) bf16, w_ref: (9*Cin, C5) bf16, b_ref: (1, C5) f32
    wl_ref: (C5, n_out) f32,    bl_ref: (1, n_out) f32,  o_ref: (n, n_out) f32
    """
    a = jnp.dot(xt_ref[...], w_ref[...], preferred_element_type=jnp.float32)
    a = a + b_ref[...]
    a = jnp.where(a >= 0, a, NEG_SLOPE * a)                       # (n*hw, C5)
    pooled = jnp.mean(a.reshape(n, hw, a.shape[-1]), axis=1)      # (n, C5)
    o_ref[...] = (jnp.dot(pooled, wl_ref[...],
                          preferred_element_type=jnp.float32) + bl_ref[...])


# ----------------------------- wrappers ------------------------------------ #
def _im2col(x_nhwc, dtype=jnp.bfloat16):
    """(N,H,W,Cin) -> (N,H,W,9*Cin): packed 3x3 taps of the zero-padded input."""
    N, H, W, _ = x_nhwc.shape
    xp = jnp.pad(x_nhwc, ((0, 0), (1, 1), (1, 1), (0, 0)))
    taps = [xp[:, dy:dy + H, dx:dx + W, :] for dy in range(3) for dx in range(3)]
    return jnp.concatenate(taps, axis=-1).astype(dtype)


def _row_tile(mo):
    """Pick a row-tile size (multiple of 8) giving >=2 grid steps when possible."""
    if mo > 256 and mo % 256 == 0:
        return 256
    if mo % 2 == 0 and (mo // 2) >= 8 and (mo // 2) % 8 == 0:
        return mo // 2
    return mo


def conv3x3_lrelu_pool(x_nhwc, w, b):
    """3x3 conv (stride 1, pad 1) + LeakyReLU + MaxPool2d(2,2), fully fused."""
    N, H, W, Cin = x_nhwc.shape
    Cout = w.shape[-1]
    Ho, Wo = H // 2, W // 2
    Mo = N * Ho * Wo
    K = 9 * Cin

    xt = _im2col(x_nhwc)                                   # (N,H,W,9Cin) bf16
    # Group the 4 positions of each 2x2 pool window on a leading axis.
    xt = (xt.reshape(N, Ho, 2, Wo, 2, K)
            .transpose(2, 4, 0, 1, 3, 5)
            .reshape(4, Mo, K))
    w2 = w.reshape(K, Cout).astype(jnp.bfloat16)
    b2 = b.reshape(1, Cout).astype(jnp.float32)

    tm = _row_tile(Mo)
    out = pl.pallas_call(
        conv_lrelu_pool_kernel,
        out_shape=jax.ShapeDtypeStruct((Mo, Cout), jnp.float32),
        grid=(Mo // tm,),
        in_specs=[
            pl.BlockSpec((4, tm, K), lambda i: (0, i, 0)),
            pl.BlockSpec((K, Cout), lambda i: (0, 0)),
            pl.BlockSpec((1, Cout), lambda i: (0, 0)),
        ],
        out_specs=pl.BlockSpec((tm, Cout), lambda i: (i, 0)),
        compiler_params=_CONV_CP,
    )(xt, w2, b2)
    return out.reshape(N, Ho, Wo, Cout)


def conv_tail_head(x_nhwc, w, b, wl, bl):
    """Fused conv5 + LeakyReLU + AdaptiveAvgPool2d((1,1)) + Flatten + Linear."""
    N, H, W, Cin = x_nhwc.shape
    Cout = w.shape[-1]
    n_out = wl.shape[1]
    K = 9 * Cin
    M = N * H * W

    xt = _im2col(x_nhwc).reshape(M, K)                     # bf16
    w2 = w.reshape(K, Cout).astype(jnp.bfloat16)
    b2 = b.reshape(1, Cout).astype(jnp.float32)
    wl2 = wl.astype(jnp.float32)
    bl2 = bl.reshape(1, n_out).astype(jnp.float32)

    kern = functools.partial(tail_kernel, n=N, hw=H * W)
    return pl.pallas_call(
        kern,
        out_shape=jax.ShapeDtypeStruct((N, n_out), jnp.float32),
        grid=(1,),
        in_specs=[
            pl.BlockSpec((M, K), lambda i: (0, 0)),
            pl.BlockSpec((K, Cout), lambda i: (0, 0)),
            pl.BlockSpec((1, Cout), lambda i: (0, 0)),
            pl.BlockSpec((wl2.shape[0], n_out), lambda i: (0, 0)),
            pl.BlockSpec((1, n_out), lambda i: (0, 0)),
        ],
        out_specs=pl.BlockSpec((N, n_out), lambda i: (0, 0)),
        compiler_params=_TAIL_CP,
    )(xt, w2, b2, wl2, bl2)


# ----------------------------- model --------------------------------------- #
def init_params(key, size=1):
    chans = [3, 16 * size, 32 * size, 64 * size, 128 * size, 256 * size]
    keys = jax.random.split(key, 12)
    convs = []
    for i in range(5):
        cin, cout = chans[i], chans[i + 1]
        w = jax.random.normal(keys[2 * i], (3, 3, cin, cout), jnp.float32)
        w = w * (1.0 / jnp.sqrt(9.0 * cin))
        b = jax.random.normal(keys[2 * i + 1], (cout,), jnp.float32) * 0.01
        convs.append((w, b))
    wl = jax.random.normal(keys[10], (chans[5], 3 * size), jnp.float32)
    wl = wl * (1.0 / jnp.sqrt(float(chans[5])))
    bl = jax.random.normal(keys[11], (3 * size,), jnp.float32) * 0.01
    return convs, (wl, bl)


def cnn_forward(x_nchw, convs, linear):
    """Forward of CNN(size=1): 4x [conv3x3+LeakyReLU+MaxPool2d(2,2)] fused,
    then fused [conv3x3+LeakyReLU+global avg pool+Linear]."""
    x = jnp.transpose(x_nchw, (0, 2, 3, 1)).astype(jnp.float32)  # NCHW -> NHWC
    for w, b in convs[:4]:
        x = conv3x3_lrelu_pool(x, w, b)
    w5, b5 = convs[4]
    wl, bl = linear
    return conv_tail_head(x, w5, b5, wl, bl)


if __name__ == "__main__":
    key = jax.random.PRNGKey(0)
    kx, kp = jax.random.split(key)
    x = jax.random.normal(kx, (2, 3, 32, 32), jnp.float32)       # NCHW like PyTorch
    convs, linear = init_params(kp, size=1)
    logits = jax.jit(lambda inp: cnn_forward(inp, convs, linear))(x)
    jax.block_until_ready(logits)
    assert logits.shape == (2, 3) and logits.dtype == jnp.float32
    print("KERNEL_OK")
</pallas_src>

<mosaic_0001>
module attributes {stable_mosaic.version = 11 : i64} {
  func.func @conv_lrelu_pool_kernel(%arg0: i32, %arg1: memref<4x256x27xbf16, #tpu.memory_space<vmem>>, %arg2: memref<27x16xbf16, #tpu.memory_space<vmem>>, %arg3: memref<1x16xf32, #tpu.memory_space<vmem>>, %arg4: memref<256x16xf32, #tpu.memory_space<vmem>>) attributes {dimension_semantics = [#tpu.dimension_semantics<parallel>], iteration_bounds = array<i64: 2>, scalar_prefetch = 0 : i64, scratch_operands = 0 : i64, tpu.core_type = #tpu.core_type<tc>, window_params = [{transform_indices = @transform_0, window_bounds = array<i64: 4, 256, 27>}, {pipeline_mode = #tpu.pipeline_mode<synchronous>, transform_indices = @transform_1, window_bounds = array<i64: 27, 16>}, {pipeline_mode = #tpu.pipeline_mode<synchronous>, transform_indices = @transform_2, window_bounds = array<i64: 1, 16>}, {transform_indices = @transform_3, window_bounds = array<i64: 256, 16>}]} {
    %c0 = arith.constant 0 : index
    %c0_0 = arith.constant 0 : index
    %0 = vector.load %arg2[%c0, %c0_0] : memref<27x16xbf16, #tpu.memory_space<vmem>>, vector<27x16xbf16>
    %c0_1 = arith.constant 0 : index
    %c0_2 = arith.constant 0 : index
    %c0_3 = arith.constant 0 : index
    %1 = vector.load %arg1[%c0_1, %c0_2, %c0_3] : memref<4x256x27xbf16, #tpu.memory_space<vmem>>, vector<1x256x27xbf16>
    %2 = vector.shape_cast %1 : vector<1x256x27xbf16> to vector<256x27xbf16>
    %cst = arith.constant dense<0.000000e+00> : vector<256x16xf32>
    %3 = tpu.matmul %2, %0, %cst {dimension_numbers = #tpu.dot_dimension_numbers<[1], [0], [0], [1], [0, 0, 1, 1], [], []>} : vector<256x27xbf16>, vector<27x16xbf16>, vector<256x16xf32> -> vector<256x16xf32>
    %c1 = arith.constant 1 : index
    %c0_4 = arith.constant 0 : index
    %c0_5 = arith.constant 0 : index
    %4 = vector.load %arg1[%c1, %c0_4, %c0_5] : memref<4x256x27xbf16, #tpu.memory_space<vmem>>, vector<1x256x27xbf16>
    %5 = vector.shape_cast %4 : vector<1x256x27xbf16> to vector<256x27xbf16>
    %cst_6 = arith.constant dense<0.000000e+00> : vector<256x16xf32>
    %6 = tpu.matmul %5, %0, %cst_6 {dimension_numbers = #tpu.dot_dimension_numbers<[1], [0], [0], [1], [0, 0, 1, 1], [], []>} : vector<256x27xbf16>, vector<27x16xbf16>, vector<256x16xf32> -> vector<256x16xf32>
    %7 = arith.maximumf %3, %6 : vector<256x16xf32>
    %c2 = arith.constant 2 : index
    %c0_7 = arith.constant 0 : index
    %c0_8 = arith.constant 0 : index
    %8 = vector.load %arg1[%c2, %c0_7, %c0_8] : memref<4x256x27xbf16, #tpu.memory_space<vmem>>, vector<1x256x27xbf16>
    %9 = vector.shape_cast %8 : vector<1x256x27xbf16> to vector<256x27xbf16>
    %cst_9 = arith.constant dense<0.000000e+00> : vector<256x16xf32>
    %10 = tpu.matmul %9, %0, %cst_9 {dimension_numbers = #tpu.dot_dimension_numbers<[1], [0], [0], [1], [0, 0, 1, 1], [], []>} : vector<256x27xbf16>, vector<27x16xbf16>, vector<256x16xf32> -> vector<256x16xf32>
    %11 = arith.maximumf %7, %10 : vector<256x16xf32>
    %c3 = arith.constant 3 : index
    %c0_10 = arith.constant 0 : index
    %c0_11 = arith.constant 0 : index
    %12 = vector.load %arg1[%c3, %c0_10, %c0_11] : memref<4x256x27xbf16, #tpu.memory_space<vmem>>, vector<1x256x27xbf16>
    %13 = vector.shape_cast %12 : vector<1x256x27xbf16> to vector<256x27xbf16>
    %cst_12 = arith.constant dense<0.000000e+00> : vector<256x16xf32>
    %14 = tpu.matmul %13, %0, %cst_12 {dimension_numbers = #tpu.dot_dimension_numbers<[1], [0], [0], [1], [0, 0, 1, 1], [], []>} : vector<256x27xbf16>, vector<27x16xbf16>, vector<256x16xf32> -> vector<256x16xf32>
    %15 = arith.maximumf %11, %14 : vector<256x16xf32>
    %c0_13 = arith.constant 0 : index
    %c0_14 = arith.constant 0 : index
    %16 = vector.load %arg3[%c0_13, %c0_14] : memref<1x16xf32, #tpu.memory_space<vmem>>, vector<1x16xf32>
    %17 = vector.broadcast %16 : vector<1x16xf32> to vector<256x16xf32>
    %18 = arith.addf %15, %17 : vector<256x16xf32>
    %cst_15 = arith.constant 0.000000e+00 : f32
    %19 = vector.broadcast %cst_15 : f32 to vector<256x16xf32>
    %20 = arith.cmpf oge, %18, %19 : vector<256x16xf32>
    %cst_16 = arith.constant 0.00999999977 : f32
    %21 = vector.broadcast %cst_16 : f32 to vector<256x16xf32>
    %22 = arith.mulf %21, %18 : vector<256x16xf32>
    %23 = arith.select %20, %18, %22 : vector<256x16xi1>, vector<256x16xf32>
    %c0_17 = arith.constant 0 : index
    %c0_18 = arith.constant 0 : index
    %24 = vector.load %arg4[%c0_17, %c0_18] : memref<256x16xf32, #tpu.memory_space<vmem>>, vector<256x16xf32>
    tpu.vector_store %arg4[%c0_17, %c0_18], %23 {strides = array<i32>} : memref<256x16xf32, #tpu.memory_space<vmem>>, vector<256x16xf32>,
    return
  }
  func.func @transform_0(%arg0: i32) -> (i32, i32, i32) {
    %c0_i32 = arith.constant 0 : i32
    %c0_i32_0 = arith.constant 0 : i32
    %c0_i32_1 = arith.constant 0 : i32
    return %c0_i32, %arg0, %c0_i32_0 : i32, i32, i32
  }
  func.func @transform_1(%arg0: i32) -> (i32, i32) {
    %c0_i32 = arith.constant 0 : i32
    %c0_i32_0 = arith.constant 0 : i32
    %c0_i32_1 = arith.constant 0 : i32
    return %c0_i32, %c0_i32_0 : i32, i32
  }
  func.func @transform_2(%arg0: i32) -> (i32, i32) {
    %c0_i32 = arith.constant 0 : i32
    %c0_i32_0 = arith.constant 0 : i32
    %c0_i32_1 = arith.constant 0 : i32
    return %c0_i32, %c0_i32_0 : i32, i32
  }
  func.func @transform_3(%arg0: i32) -> (i32, i32) {
    %c0_i32 = arith.constant 0 : i32
    %c0_i32_0 = arith.constant 0 : i32
    return %arg0, %c0_i32 : i32, i32
  }
}

module attributes {stable_mosaic.version = 11 : i64} {
  func.func @conv_lrelu_pool_kernel(%arg0: i32, %arg1: memref<4x64x144xbf16, #tpu.memory_space<vmem>>, %arg2: memref<144x32xbf16, #tpu.memory_space<vmem>>, %arg3: memref<1x32xf32, #tpu.memory_space<vmem>>, %arg4: memref<64x32xf32, #tpu.memory_space<vmem>>) attributes {dimension_semantics = [#tpu.dimension_semantics<parallel>], iteration_bounds = array<i64: 2>, scalar_prefetch = 0 : i64, scratch_operands = 0 : i64, tpu.core_type = #tpu.core_type<tc>, window_params = [{transform_indices = @transform_0, window_bounds = array<i64: 4, 64, 144>}, {pipeline_mode = #tpu.pipeline_mode<synchronous>, transform_indices = @transform_1, window_bounds = array<i64: 144, 32>}, {pipeline_mode = #tpu.pipeline_mode<synchronous>, transform_indices = @transform_2, window_bounds = array<i64: 1, 32>}, {transform_indices = @transform_3, window_bounds = array<i64: 64, 32>}]} {
    %c0 = arith.constant 0 : index
    %c0_0 = arith.constant 0 : index
    %0 = vector.load %arg2[%c0, %c0_0] : memref<144x32xbf16, #tpu.memory_space<vmem>>, vector<144x32xbf16>
    %c0_1 = arith.constant 0 : index
    %c0_2 = arith.constant 0 : index
    %c0_3 = arith.constant 0 : index
    %1 = vector.load %arg1[%c0_1, %c0_2, %c0_3] : memref<4x64x144xbf16, #tpu.memory_space<vmem>>, vector<1x64x144xbf16>
    %2 = vector.shape_cast %1 : vector<1x64x144xbf16> to vector<64x144xbf16>
    %cst = arith.constant dense<0.000000e+00> : vector<64x32xf32>
    %3 = tpu.matmul %2, %0, %cst {dimension_numbers = #tpu.dot_dimension_numbers<[1], [0], [0], [1], [0, 0, 1, 1], [], []>} : vector<64x144xbf16>, vector<144x32xbf16>, vector<64x32xf32> -> vector<64x32xf32>
    %c1 = arith.constant 1 : index
    %c0_4 = arith.constant 0 : index
    %c0_5 = arith.constant 0 : index
    %4 = vector.load %arg1[%c1, %c0_4, %c0_5] : memref<4x64x144xbf16, #tpu.memory_space<vmem>>, vector<1x64x144xbf16>
    %5 = vector.shape_cast %4 : vector<1x64x144xbf16> to vector<64x144xbf16>
    %cst_6 = arith.constant dense<0.000000e+00> : vector<64x32xf32>
    %6 = tpu.matmul %5, %0, %cst_6 {dimension_numbers = #tpu.dot_dimension_numbers<[1], [0], [0], [1], [0, 0, 1, 1], [], []>} : vector<64x144xbf16>, vector<144x32xbf16>, vector<64x32xf32> -> vector<64x32xf32>
    %7 = arith.maximumf %3, %6 : vector<64x32xf32>
    %c2 = arith.constant 2 : index
    %c0_7 = arith.constant 0 : index
    %c0_8 = arith.constant 0 : index
    %8 = vector.load %arg1[%c2, %c0_7, %c0_8] : memref<4x64x144xbf16, #tpu.memory_space<vmem>>, vector<1x64x144xbf16>
    %9 = vector.shape_cast %8 : vector<1x64x144xbf16> to vector<64x144xbf16>
    %cst_9 = arith.constant dense<0.000000e+00> : vector<64x32xf32>
    %10 = tpu.matmul %9, %0, %cst_9 {dimension_numbers = #tpu.dot_dimension_numbers<[1], [0], [0], [1], [0, 0, 1, 1], [], []>} : vector<64x144xbf16>, vector<144x32xbf16>, vector<64x32xf32> -> vector<64x32xf32>
    %11 = arith.maximumf %7, %10 : vector<64x32xf32>
    %c3 = arith.constant 3 : index
    %c0_10 = arith.constant 0 : index
    %c0_11 = arith.constant 0 : index
    %12 = vector.load %arg1[%c3, %c0_10, %c0_11] : memref<4x64x144xbf16, #tpu.memory_space<vmem>>, vector<1x64x144xbf16>
    %13 = vector.shape_cast %12 : vector<1x64x144xbf16> to vector<64x144xbf16>
    %cst_12 = arith.constant dense<0.000000e+00> : vector<64x32xf32>
    %14 = tpu.matmul %13, %0, %cst_12 {dimension_numbers = #tpu.dot_dimension_numbers<[1], [0], [0], [1], [0, 0, 1, 1], [], []>} : vector<64x144xbf16>, vector<144x32xbf16>, vector<64x32xf32> -> vector<64x32xf32>
    %15 = arith.maximumf %11, %14 : vector<64x32xf32>
    %c0_13 = arith.constant 0 : index
    %c0_14 = arith.constant 0 : index
    %16 = vector.load %arg3[%c0_13, %c0_14] : memref<1x32xf32, #tpu.memory_space<vmem>>, vector<1x32xf32>
    %17 = vector.broadcast %16 : vector<1x32xf32> to vector<64x32xf32>
    %18 = arith.addf %15, %17 : vector<64x32xf32>
    %cst_15 = arith.constant 0.000000e+00 : f32
    %19 = vector.broadcast %cst_15 : f32 to vector<64x32xf32>
    %20 = arith.cmpf oge, %18, %19 : vector<64x32xf32>
    %cst_16 = arith.constant 0.00999999977 : f32
    %21 = vector.broadcast %cst_16 : f32 to vector<64x32xf32>
    %22 = arith.mulf %21, %18 : vector<64x32xf32>
    %23 = arith.select %20, %18, %22 : vector<64x32xi1>, vector<64x32xf32>
    %c0_17 = arith.constant 0 : index
    %c0_18 = arith.constant 0 : index
    %24 = vector.load %arg4[%c0_17, %c0_18] : memref<64x32xf32, #tpu.memory_space<vmem>>, vector<64x32xf32>
    tpu.vector_store %arg4[%c0_17, %c0_18], %23 {strides = array<i32>} : memref<64x32xf32, #tpu.memory_space<vmem>>, vector<64x32xf32>,
    return
  }
  func.func @transform_0(%arg0: i32) -> (i32, i32, i32) {
    %c0_i32 = arith.constant 0 : i32
    %c0_i32_0 = arith.constant 0 : i32
    %c0_i32_1 = arith.constant 0 : i32
    return %c0_i32, %arg0, %c0_i32_0 : i32, i32, i32
  }
  func.func @transform_1(%arg0: i32) -> (i32, i32) {
    %c0_i32 = arith.constant 0 : i32
    %c0_i32_0 = arith.constant 0 : i32
    %c0_i32_1 = arith.constant 0 : i32
    return %c0_i32, %c0_i32_0 : i32, i32
  }
  func.func @transform_2(%arg0: i32) -> (i32, i32) {
    %c0_i32 = arith.constant 0 : i32
    %c0_i32_0 = arith.constant 0 : i32
    %c0_i32_1 = arith.constant 0 : i32
    return %c0_i32, %c0_i32_0 : i32, i32
  }
  func.func @transform_3(%arg0: i32) -> (i32, i32) {
    %c0_i32 = arith.constant 0 : i32
    %c0_i32_0 = arith.constant 0 : i32
    return %arg0, %c0_i32 : i32, i32
  }
}

module attributes {stable_mosaic.version = 11 : i64} {
  func.func @conv_lrelu_pool_kernel(%arg0: i32, %arg1: memref<4x16x288xbf16, #tpu.memory_space<vmem>>, %arg2: memref<288x64xbf16, #tpu.memory_space<vmem>>, %arg3: memref<1x64xf32, #tpu.memory_space<vmem>>, %arg4: memref<16x64xf32, #tpu.memory_space<vmem>>) attributes {dimension_semantics = [#tpu.dimension_semantics<parallel>], iteration_bounds = array<i64: 2>, scalar_prefetch = 0 : i64, scratch_operands = 0 : i64, tpu.core_type = #tpu.core_type<tc>, window_params = [{transform_indices = @transform_0, window_bounds = array<i64: 4, 16, 288>}, {pipeline_mode = #tpu.pipeline_mode<synchronous>, transform_indices = @transform_1, window_bounds = array<i64: 288, 64>}, {pipeline_mode = #tpu.pipeline_mode<synchronous>, transform_indices = @transform_2, window_bounds = array<i64: 1, 64>}, {transform_indices = @transform_3, window_bounds = array<i64: 16, 64>}]} {
    %c0 = arith.constant 0 : index
    %c0_0 = arith.constant 0 : index
    %0 = vector.load %arg2[%c0, %c0_0] : memref<288x64xbf16, #tpu.memory_space<vmem>>, vector<288x64xbf16>
    %c0_1 = arith.constant 0 : index
    %c0_2 = arith.constant 0 : index
    %c0_3 = arith.constant 0 : index
    %1 = vector.load %arg1[%c0_1, %c0_2, %c0_3] : memref<4x16x288xbf16, #tpu.memory_space<vmem>>, vector<1x16x288xbf16>
    %2 = vector.shape_cast %1 : vector<1x16x288xbf16> to vector<16x288xbf16>
    %cst = arith.constant dense<0.000000e+00> : vector<16x64xf32>
    %3 = tpu.matmul %2, %0, %cst {dimension_numbers = #tpu.dot_dimension_numbers<[1], [0], [0], [1], [0, 0, 1, 1], [], []>} : vector<16x288xbf16>, vector<288x64xbf16>, vector<16x64xf32> -> vector<16x64xf32>
    %c1 = arith.constant 1 : index
    %c0_4 = arith.constant 0 : index
    %c0_5 = arith.constant 0 : index
    %4 = vector.load %arg1[%c1, %c0_4, %c0_5] : memref<4x16x288xbf16, #tpu.memory_space<vmem>>, vector<1x16x288xbf16>
    %5 = vector.shape_cast %4 : vector<1x16x288xbf16> to vector<16x288xbf16>
    %cst_6 = arith.constant dense<0.000000e+00> : vector<16x64xf32>
    %6 = tpu.matmul %5, %0, %cst_6 {dimension_numbers = #tpu.dot_dimension_numbers<[1], [0], [0], [1], [0, 0, 1, 1], [], []>} : vector<16x288xbf16>, vector<288x64xbf16>, vector<16x64xf32> -> vector<16x64xf32>
    %7 = arith.maximumf %3, %6 : vector<16x64xf32>
    %c2 = arith.constant 2 : index
    %c0_7 = arith.constant 0 : index
    %c0_8 = arith.constant 0 : index
    %8 = vector.load %arg1[%c2, %c0_7, %c0_8] : memref<4x16x288xbf16, #tpu.memory_space<vmem>>, vector<1x16x288xbf16>
    %9 = vector.shape_cast %8 : vector<1x16x288xbf16> to vector<16x288xbf16>
    %cst_9 = arith.constant dense<0.000000e+00> : vector<16x64xf32>
    %10 = tpu.matmul %9, %0, %cst_9 {dimension_numbers = #tpu.dot_dimension_numbers<[1], [0], [0], [1], [0, 0, 1, 1], [], []>} : vector<16x288xbf16>, vector<288x64xbf16>, vector<16x64xf32> -> vector<16x64xf32>
    %11 = arith.maximumf %7, %10 : vector<16x64xf32>
    %c3 = arith.constant 3 : index
    %c0_10 = arith.constant 0 : index
    %c0_11 = arith.constant 0 : index
    %12 = vector.load %arg1[%c3, %c0_10, %c0_11] : memref<4x16x288xbf16, #tpu.memory_space<vmem>>, vector<1x16x288xbf16>
    %13 = vector.shape_cast %12 : vector<1x16x288xbf16> to vector<16x288xbf16>
    %cst_12 = arith.constant dense<0.000000e+00> : vector<16x64xf32>
    %14 = tpu.matmul %13, %0, %cst_12 {dimension_numbers = #tpu.dot_dimension_numbers<[1], [0], [0], [1], [0, 0, 1, 1], [], []>} : vector<16x288xbf16>, vector<288x64xbf16>, vector<16x64xf32> -> vector<16x64xf32>
    %15 = arith.maximumf %11, %14 : vector<16x64xf32>
    %c0_13 = arith.constant 0 : index
    %c0_14 = arith.constant 0 : index
    %16 = vector.load %arg3[%c0_13, %c0_14] : memref<1x64xf32, #tpu.memory_space<vmem>>, vector<1x64xf32>
    %17 = vector.broadcast %16 : vector<1x64xf32> to vector<16x64xf32>
    %18 = arith.addf %15, %17 : vector<16x64xf32>
    %cst_15 = arith.constant 0.000000e+00 : f32
    %19 = vector.broadcast %cst_15 : f32 to vector<16x64xf32>
    %20 = arith.cmpf oge, %18, %19 : vector<16x64xf32>
    %cst_16 = arith.constant 0.00999999977 : f32
    %21 = vector.broadcast %cst_16 : f32 to vector<16x64xf32>
    %22 = arith.mulf %21, %18 : vector<16x64xf32>
    %23 = arith.select %20, %18, %22 : vector<16x64xi1>, vector<16x64xf32>
    %c0_17 = arith.constant 0 : index
    %c0_18 = arith.constant 0 : index
    %24 = vector.load %arg4[%c0_17, %c0_18] : memref<16x64xf32, #tpu.memory_space<vmem>>, vector<16x64xf32>
    tpu.vector_store %arg4[%c0_17, %c0_18], %23 {strides = array<i32>} : memref<16x64xf32, #tpu.memory_space<vmem>>, vector<16x64xf32>,
    return
  }
  func.func @transform_0(%arg0: i32) -> (i32, i32, i32) {
    %c0_i32 = arith.constant 0 : i32
    %c0_i32_0 = arith.constant 0 : i32
    %c0_i32_1 = arith.constant 0 : i32
    return %c0_i32, %arg0, %c0_i32_0 : i32, i32, i32
  }
  func.func @transform_1(%arg0: i32) -> (i32, i32) {
    %c0_i32 = arith.constant 0 : i32
    %c0_i32_0 = arith.constant 0 : i32
    %c0_i32_1 = arith.constant 0 : i32
    return %c0_i32, %c0_i32_0 : i32, i32
  }
  func.func @transform_2(%arg0: i32) -> (i32, i32) {
    %c0_i32 = arith.constant 0 : i32
    %c0_i32_0 = arith.constant 0 : i32
    %c0_i32_1 = arith.constant 0 : i32
    return %c0_i32, %c0_i32_0 : i32, i32
  }
  func.func @transform_3(%arg0: i32) -> (i32, i32) {
    %c0_i32 = arith.constant 0 : i32
    %c0_i32_0 = arith.constant 0 : i32
    return %arg0, %c0_i32 : i32, i32
  }
}

module attributes {stable_mosaic.version = 11 : i64} {
  func.func @conv_lrelu_pool_kernel(%arg0: i32, %arg1: memref<4x8x576xbf16, #tpu.memory_space<vmem>>, %arg2: memref<576x128xbf16, #tpu.memory_space<vmem>>, %arg3: memref<1x128xf32, #tpu.memory_space<vmem>>, %arg4: memref<8x128xf32, #tpu.memory_space<vmem>>) attributes {dimension_semantics = [#tpu.dimension_semantics<parallel>], iteration_bounds = array<i64: 1>, scalar_prefetch = 0 : i64, scratch_operands = 0 : i64, tpu.core_type = #tpu.core_type<tc>, window_params = [{transform_indices = @transform_0, window_bounds = array<i64: 4, 8, 576>}, {pipeline_mode = #tpu.pipeline_mode<synchronous>, transform_indices = @transform_1, window_bounds = array<i64: 576, 128>}, {pipeline_mode = #tpu.pipeline_mode<synchronous>, transform_indices = @transform_2, window_bounds = array<i64: 1, 128>}, {transform_indices = @transform_3, window_bounds = array<i64: 8, 128>}]} {
    %c0 = arith.constant 0 : index
    %c0_0 = arith.constant 0 : index
    %0 = vector.load %arg2[%c0, %c0_0] : memref<576x128xbf16, #tpu.memory_space<vmem>>, vector<576x128xbf16>
    %c0_1 = arith.constant 0 : index
    %c0_2 = arith.constant 0 : index
    %c0_3 = arith.constant 0 : index
    %1 = vector.load %arg1[%c0_1, %c0_2, %c0_3] : memref<4x8x576xbf16, #tpu.memory_space<vmem>>, vector<1x8x576xbf16>
    %2 = vector.shape_cast %1 : vector<1x8x576xbf16> to vector<8x576xbf16>
    %cst = arith.constant dense<0.000000e+00> : vector<8x128xf32>
    %3 = tpu.matmul %2, %0, %cst {dimension_numbers = #tpu.dot_dimension_numbers<[1], [0], [0], [1], [0, 0, 1, 1], [], []>} : vector<8x576xbf16>, vector<576x128xbf16>, vector<8x128xf32> -> vector<8x128xf32>
    %c1 = arith.constant 1 : index
    %c0_4 = arith.constant 0 : index
    %c0_5 = arith.constant 0 : index
    %4 = vector.load %arg1[%c1, %c0_4, %c0_5] : memref<4x8x576xbf16, #tpu.memory_space<vmem>>, vector<1x8x576xbf16>
    %5 = vector.shape_cast %4 : vector<1x8x576xbf16> to vector<8x576xbf16>
    %cst_6 = arith.constant dense<0.000000e+00> : vector<8x128xf32>
    %6 = tpu.matmul %5, %0, %cst_6 {dimension_numbers = #tpu.dot_dimension_numbers<[1], [0], [0], [1], [0, 0, 1, 1], [], []>} : vector<8x576xbf16>, vector<576x128xbf16>, vector<8x128xf32> -> vector<8x128xf32>
    %7 = arith.maximumf %3, %6 : vector<8x128xf32>
    %c2 = arith.constant 2 : index
    %c0_7 = arith.constant 0 : index
    %c0_8 = arith.constant 0 : index
    %8 = vector.load %arg1[%c2, %c0_7, %c0_8] : memref<4x8x576xbf16, #tpu.memory_space<vmem>>, vector<1x8x576xbf16>
    %9 = vector.shape_cast %8 : vector<1x8x576xbf16> to vector<8x576xbf16>
    %cst_9 = arith.constant dense<0.000000e+00> : vector<8x128xf32>
    %10 = tpu.matmul %9, %0, %cst_9 {dimension_numbers = #tpu.dot_dimension_numbers<[1], [0], [0], [1], [0, 0, 1, 1], [], []>} : vector<8x576xbf16>, vector<576x128xbf16>, vector<8x128xf32> -> vector<8x128xf32>
    %11 = arith.maximumf %7, %10 : vector<8x128xf32>
    %c3 = arith.constant 3 : index
    %c0_10 = arith.constant 0 : index
    %c0_11 = arith.constant 0 : index
    %12 = vector.load %arg1[%c3, %c0_10, %c0_11] : memref<4x8x576xbf16, #tpu.memory_space<vmem>>, vector<1x8x576xbf16>
    %13 = vector.shape_cast %12 : vector<1x8x576xbf16> to vector<8x576xbf16>
    %cst_12 = arith.constant dense<0.000000e+00> : vector<8x128xf32>
    %14 = tpu.matmul %13, %0, %cst_12 {dimension_numbers = #tpu.dot_dimension_numbers<[1], [0], [0], [1], [0, 0, 1, 1], [], []>} : vector<8x576xbf16>, vector<576x128xbf16>, vector<8x128xf32> -> vector<8x128xf32>
    %15 = arith.maximumf %11, %14 : vector<8x128xf32>
    %c0_13 = arith.constant 0 : index
    %c0_14 = arith.constant 0 : index
    %16 = vector.load %arg3[%c0_13, %c0_14] : memref<1x128xf32, #tpu.memory_space<vmem>>, vector<1x128xf32>
    %17 = vector.broadcast %16 : vector<1x128xf32> to vector<8x128xf32>
    %18 = arith.addf %15, %17 : vector<8x128xf32>
    %cst_15 = arith.constant 0.000000e+00 : f32
    %19 = vector.broadcast %cst_15 : f32 to vector<8x128xf32>
    %20 = arith.cmpf oge, %18, %19 : vector<8x128xf32>
    %cst_16 = arith.constant 0.00999999977 : f32
    %21 = vector.broadcast %cst_16 : f32 to vector<8x128xf32>
    %22 = arith.mulf %21, %18 : vector<8x128xf32>
    %23 = arith.select %20, %18, %22 : vector<8x128xi1>, vector<8x128xf32>
    %c0_17 = arith.constant 0 : index
    %c0_18 = arith.constant 0 : index
    %24 = vector.load %arg4[%c0_17, %c0_18] : memref<8x128xf32, #tpu.memory_space<vmem>>, vector<8x128xf32>
    tpu.vector_store %arg4[%c0_17, %c0_18], %23 {strides = array<i32>} : memref<8x128xf32, #tpu.memory_space<vmem>>, vector<8x128xf32>,
    return
  }
  func.func @transform_0(%arg0: i32) -> (i32, i32, i32) {
    %c0_i32 = arith.constant 0 : i32
    %c0_i32_0 = arith.constant 0 : i32
    %c0_i32_1 = arith.constant 0 : i32
    return %c0_i32, %arg0, %c0_i32_0 : i32, i32, i32
  }
  func.func @transform_1(%arg0: i32) -> (i32, i32) {
    %c0_i32 = arith.constant 0 : i32
    %c0_i32_0 = arith.constant 0 : i32
    %c0_i32_1 = arith.constant 0 : i32
    return %c0_i32, %c0_i32_0 : i32, i32
  }
  func.func @transform_2(%arg0: i32) -> (i32, i32) {
    %c0_i32 = arith.constant 0 : i32
    %c0_i32_0 = arith.constant 0 : i32
    %c0_i32_1 = arith.constant 0 : i32
    return %c0_i32, %c0_i32_0 : i32, i32
  }
  func.func @transform_3(%arg0: i32) -> (i32, i32) {
    %c0_i32 = arith.constant 0 : i32
    %c0_i32_0 = arith.constant 0 : i32
    return %arg0, %c0_i32 : i32, i32
  }
}

module attributes {stable_mosaic.version = 11 : i64} {
  func.func @tail_kernel(%arg0: i32, %arg1: memref<8x1152xbf16, #tpu.memory_space<vmem>>, %arg2: memref<1152x256xbf16, #tpu.memory_space<vmem>>, %arg3: memref<1x256xf32, #tpu.memory_space<vmem>>, %arg4: memref<256x3xf32, #tpu.memory_space<vmem>>, %arg5: memref<1x3xf32, #tpu.memory_space<vmem>>, %arg6: memref<2x3xf32, #tpu.memory_space<vmem>>) attributes {dimension_semantics = [#tpu.dimension_semantics<arbitrary>], iteration_bounds = array<i64: 1>, scalar_prefetch = 0 : i64, scratch_operands = 0 : i64, tpu.core_type = #tpu.core_type<tc>, window_params = [{pipeline_mode = #tpu.pipeline_mode<synchronous>, transform_indices = @transform_0, window_bounds = array<i64: 8, 1152>}, {pipeline_mode = #tpu.pipeline_mode<synchronous>, transform_indices = @transform_1, window_bounds = array<i64: 1152, 256>}, {pipeline_mode = #tpu.pipeline_mode<synchronous>, transform_indices = @transform_2, window_bounds = array<i64: 1, 256>}, {pipeline_mode = #tpu.pipeline_mode<synchronous>, transform_indices = @transform_3, window_bounds = array<i64: 256, 3>}, {pipeline_mode = #tpu.pipeline_mode<synchronous>, transform_indices = @transform_4, window_bounds = array<i64: 1, 3>}, {pipeline_mode = #tpu.pipeline_mode<synchronous>, transform_indices = @transform_5, window_bounds = array<i64: 2, 3>}]} {
    %c0 = arith.constant 0 : index
    %c0_0 = arith.constant 0 : index
    %0 = vector.load %arg1[%c0, %c0_0] : memref<8x1152xbf16, #tpu.memory_space<vmem>>, vector<8x1152xbf16>
    %c0_1 = arith.constant 0 : index
    %c0_2 = arith.constant 0 : index
    %1 = vector.load %arg2[%c0_1, %c0_2] : memref<1152x256xbf16, #tpu.memory_space<vmem>>, vector<1152x256xbf16>
    %cst = arith.constant dense<0.000000e+00> : vector<8x256xf32>
    %2 = tpu.matmul %0, %1, %cst {dimension_numbers = #tpu.dot_dimension_numbers<[1], [0], [0], [1], [0, 0, 1, 1], [], []>} : vector<8x1152xbf16>, vector<1152x256xbf16>, vector<8x256xf32> -> vector<8x256xf32>
    %c0_3 = arith.constant 0 : index
    %c0_4 = arith.constant 0 : index
    %3 = vector.load %arg3[%c0_3, %c0_4] : memref<1x256xf32, #tpu.memory_space<vmem>>, vector<1x256xf32>
    %4 = vector.broadcast %3 : vector<1x256xf32> to vector<8x256xf32>
    %5 = arith.addf %2, %4 : vector<8x256xf32>
    %cst_5 = arith.constant 0.000000e+00 : f32
    %6 = vector.broadcast %cst_5 : f32 to vector<8x256xf32>
    %7 = arith.cmpf oge, %5, %6 : vector<8x256xf32>
    %cst_6 = arith.constant 0.00999999977 : f32
    %8 = vector.broadcast %cst_6 : f32 to vector<8x256xf32>
    %9 = arith.mulf %8, %5 : vector<8x256xf32>
    %10 = arith.select %7, %5, %9 : vector<8x256xi1>, vector<8x256xf32>
    %11 = vector.shape_cast %10 : vector<8x256xf32> to vector<2x4x256xf32>
    %cst_7 = arith.constant dense<0.000000e+00> : vector<2x256xf32>
    %12 = vector.multi_reduction <add>, %11, %cst_7 [1] : vector<2x4x256xf32> to vector<2x256xf32>
    %cst_8 = arith.constant 4.000000e+00 : f32
    %13 = vector.broadcast %cst_8 : f32 to vector<2x256xf32>
    %14 = arith.divf %12, %13 : vector<2x256xf32>
    %c0_9 = arith.constant 0 : index
    %c0_10 = arith.constant 0 : index
    %15 = vector.load %arg4[%c0_9, %c0_10] : memref<256x3xf32, #tpu.memory_space<vmem>>, vector<256x3xf32>
    %cst_11 = arith.constant dense<0.000000e+00> : vector<2x3xf32>
    %16 = tpu.matmul %14, %15, %cst_11 {dimension_numbers = #tpu.dot_dimension_numbers<[1], [0], [0], [1], [0, 0, 1, 1], [], []>} : vector<2x256xf32>, vector<256x3xf32>, vector<2x3xf32> -> vector<2x3xf32>
    %c0_12 = arith.constant 0 : index
    %c0_13 = arith.constant 0 : index
    %17 = vector.load %arg5[%c0_12, %c0_13] : memref<1x3xf32, #tpu.memory_space<vmem>>, vector<1x3xf32>
    %18 = vector.broadcast %17 : vector<1x3xf32> to vector<2x3xf32>
    %19 = arith.addf %16, %18 : vector<2x3xf32>
    %c0_14 = arith.constant 0 : index
    %c0_15 = arith.constant 0 : index
    %20 = vector.load %arg6[%c0_14, %c0_15] : memref<2x3xf32, #tpu.memory_space<vmem>>, vector<2x3xf32>
    tpu.vector_store %arg6[%c0_14, %c0_15], %19 {strides = array<i32>} : memref<2x3xf32, #tpu.memory_space<vmem>>, vector<2x3xf32>,
    return
  }
  func.func @transform_0(%arg0: i32) -> (i32, i32) {
    %c0_i32 = arith.constant 0 : i32
    %c0_i32_0 = arith.constant 0 : i32
    %c0_i32_1 = arith.constant 0 : i32
    return %c0_i32, %c0_i32_0 : i32, i32
  }
  func.func @transform_1(%arg0: i32) -> (i32, i32) {
    %c0_i32 = arith.constant 0 : i32
    %c0_i32_0 = arith.constant 0 : i32
    %c0_i32_1 = arith.constant 0 : i32
    return %c0_i32, %c0_i32_0 : i32, i32
  }
  func.func @transform_2(%arg0: i32) -> (i32, i32) {
    %c0_i32 = arith.constant 0 : i32
    %c0_i32_0 = arith.constant 0 : i32
    %c0_i32_1 = arith.constant 0 : i32
    return %c0_i32, %c0_i32_0 : i32, i32
  }
  func.func @transform_3(%arg0: i32) -> (i32, i32) {
    %c0_i32 = arith.constant 0 : i32
    %c0_i32_0 = arith.constant 0 : i32
    %c0_i32_1 = arith.constant 0 : i32
    return %c0_i32, %c0_i32_0 : i32, i32
  }
  func.func @transform_4(%arg0: i32) -> (i32, i32) {
    %c0_i32 = arith.constant 0 : i32
    %c0_i32_0 = arith.constant 0 : i32
    %c0_i32_1 = arith.constant 0 : i32
    return %c0_i32, %c0_i32_0 : i32, i32
  }
  func.func @transform_5(%arg0: i32) -> (i32, i32) {
    %c0_i32 = arith.constant 0 : i32
    %c0_i32_0 = arith.constant 0 : i32
    %c0_i32_1 = arith.constant 0 : i32
    return %c0_i32, %c0_i32_0 : i32, i32
  }
}

</mosaic_0001>

<llo_original>
// kernel: _lambda_.5
$region0: #{_lambda_.5}
  #allocation0 [shape = 'u32[]', space=smem, size = 0x4, offset = 0x4, fixed_abs, tag = 'smem constant byte address 0x4 - core index']
  #allocation1 [shape = 'u32[144,128]{1,0:T(1,128)}', space=vmem, size = 0x12000, scoped, tag = 'internal scratch']
  %s0 = inlined_call_operand.vmem [shape: bf16[4,512,27], index: 0, kind: input, shape index: {}]
  %s1 = inlined_call_operand.vmem [shape: bf16[27,16], index: 1, kind: input, shape index: {}]
  %s2 = inlined_call_operand.vmem [shape: f32[1,16], index: 2, kind: input, shape index: {}]
  %s3 = inlined_call_operand.vmem [shape: f32[512,16], index: 3, kind: output, shape index: {}]
  %s4 = sld [smem:[#allocation0]]
  $region86: #{_lambda_.5} parent=0
    _
  %s6 = ssub.s32 1, %s4
  %s7 = scalar_select 0, %s6, %s4
  $region1: #{_lambda_.5} parent=0
    #allocation2 [shape = 'u8[524288]{0}', space=vmem, size = 0x80000, scoped, tag = 'input window, operand 0']
    loop: start=0, step=1, limit=4
    $region2: #{_lambda_.5} parent=1 // loop_pre_header
      _
    $region3: #{_lambda_.5} parent=1 // loop_header
      %s9 = sphi 0, %s13
      %p10 = scmp.ge.s32.totalorder %s9, 4
      %s19 = sphi 0, %s21
      %s22 = sphi 0, %s19
      %s23 = sphi 0, %s22
      %s39 = sphi 0, %s23
      %s43 = sphi 0, %s43
      %s45 = sphi 0, %s43
      %s46 = sphi 0, %s45
      %s60 = sphi 0, %s46
      %s64 = sphi 0, %s64
      %s66 = sphi 0, %s64
      %s67 = sphi 0, %s66
      %s81 = sphi 0, %s67
      %s87 = sphi 0, %s89
      %s90 = sphi 0, %s87
      %s91 = sphi 0, %s90
      %s107 = sphi 0, %s91
    $region4: #{_lambda_.5} parent=1 // loop_header_branch
      %12 = sbr.rel (%p10) target = $region8
    $region5: #{_lambda_.5} parent=1 // loop_body
      %s14 = ssub.s32 %s9, 1
      %s15 = ssub.s32 %s9, 2
      %s16 = sadd.s32 %s9, 1
      %s17 = ssub.s32 %s9, %s16
      %p18 = scmp.eq.s32.totalorder %s17, 0
      %s20 = sadd.s32 %s19, 1
      %s21 = scalar_select %p18, %s19, %s20
      %p24 = pneg %p18
      %p25 = scmp.eq.s32.totalorder %s9, 1
      %p26 = por %p24, %p25
      %p27 = scmp.ne.s32.totalorder %s19, %s22
      %p28 = scmp.eq.s32.totalorder %s9, 0
      %p29 = por %p27, %p28
      %p30 = scmp.ne.s32.totalorder %s19, %s22
      %p31 = scmp.eq.s32.totalorder %s14, 1
      %p32 = por %p30, %p31
      %p33 = scmp.ne.s32.totalorder %s22, %s23
      %p34 = scmp.eq.s32.totalorder %s14, 0
      %p35 = por %p33, %p34
      %p36 = scmp.ne.s32.totalorder %s22, %s23
      %p37 = scmp.eq.s32.totalorder %s15, 1
      %p38 = por %p36, %p37
      %p40 = scmp.ne.s32.totalorder %s23, %s39
      %p41 = scmp.eq.s32.totalorder %s15, 0
      %p42 = por %p40, %p41
      %s44 = sadd.s32 %s43, 1
      %p47 = scmp.eq.s32.totalorder %s9, 1
      %p48 = scmp.ne.s32.totalorder %s43, %s45
      %p49 = scmp.eq.s32.totalorder %s9, 0
      %p50 = por %p48, %p49
      %p51 = scmp.ne.s32.totalorder %s43, %s45
      %p52 = scmp.eq.s32.totalorder %s14, 1
      %p53 = por %p51, %p52
      %p54 = scmp.ne.s32.totalorder %s45, %s46
      %p55 = scmp.eq.s32.totalorder %s14, 0
      %p56 = por %p54, %p55
      %p57 = scmp.ne.s32.totalorder %s45, %s46
      %p58 = scmp.eq.s32.totalorder %s15, 1
      %p59 = por %p57, %p58
      %p61 = scmp.ne.s32.totalorder %s46, %s60
      %p62 = scmp.eq.s32.totalorder %s15, 0
      %p63 = por %p61, %p62
      %s65 = sadd.s32 %s64, 1
      %p68 = scmp.eq.s32.totalorder %s9, 1
      %p69 = scmp.ne.s32.totalorder %s64, %s66
      %p70 = scmp.eq.s32.totalorder %s9, 0
      %p71 = por %p69, %p70
      %p72 = scmp.ne.s32.totalorder %s64, %s66
      %p73 = scmp.eq.s32.totalorder %s14, 1
      %p74 = por %p72, %p73
      %p75 = scmp.ne.s32.totalorder %s66, %s67
      %p76 = scmp.eq.s32.totalorder %s14, 0
      %p77 = por %p75, %p76
      %p78 = scmp.ne.s32.totalorder %s66, %s67
      %p79 = scmp.eq.s32.totalorder %s15, 1
      %p80 = por %p78, %p79
      %p82 = scmp.ne.s32.totalorder %s67, %s81
      %p83 = scmp.eq.s32.totalorder %s15, 0
      %p84 = por %p82, %p83
      %s85 = ssub.s32 %s9, %s16
      %p86 = scmp.eq.s32.totalorder %s85, 0
      %s88 = sadd.s32 %s87, 1
      %s89 = scalar_select %p86, %s87, %s88
      %p92 = pneg %p86
      %p93 = scmp.eq.s32.totalorder %s9, 1
      %p94 = por %p92, %p93
      %p95 = scmp.ne.s32.totalorder %s87, %s90
      %p96 = scmp.eq.s32.totalorder %s9, 0
      %p97 = por %p95, %p96
      %p98 = scmp.ne.s32.totalorder %s87, %s90
      %p99 = scmp.eq.s32.totalorder %s14, 1
      %p100 = por %p98, %p99
      %p101 = scmp.ne.s32.totalorder %s90, %s91
      %p102 = scmp.eq.s32.totalorder %s14, 0
      %p103 = por %p101, %p102
      %p104 = scmp.ne.s32.totalorder %s90, %s91
      %p105 = scmp.eq.s32.totalorder %s15, 1
      %p106 = por %p104, %p105
      %p108 = scmp.ne.s32.totalorder %s91, %s107
      %p109 = scmp.eq.s32.totalorder %s15, 0
      %p110 = por %p108, %p109
      %p111 = scmp.le.s32.totalorder 1, %s9
      %p112 = scmp.lt.s32.totalorder %s9, 3
      %p113 = pnand %p111, %p112
      %p114 = pneg %p113
      // Predicated region
      $region9: #{_lambda_.5} parent=5 // pred_check
        _
      $region10: #{_lambda_.5} parent=5 // pred_check_branch
        %116 = sbr.rel (%p113) target = $region12
      $region11: #{_lambda_.5} parent=5 // pred_region
        %s117 = ssub.s32 %s9, 1
        // Predicated region
        $region13: #{_lambda_.5} parent=11 // pred_check
          %p118 = pneg %p56
        $region14: #{_lambda_.5} parent=11 // pred_check_branch
          %120 = sbr.rel (%p118) target = $region16
        $region15: #{_lambda_.5} parent=11 // pred_region
          _
        $region16: #{_lambda_.5} parent=11 // pred_fallthru
          _
        // Predicated region
        $region17: #{_lambda_.5} parent=11 // pred_check
          %p121 = pneg %p77
        $region18: #{_lambda_.5} parent=11 // pred_check_branch
          %123 = sbr.rel (%p121) target = $region20
        $region19: #{_lambda_.5} parent=11 // pred_region
          _
        $region20: #{_lambda_.5} parent=11 // pred_fallthru
          _
      $region12: #{_lambda_.5} parent=5 // pred_fallthru
        _
      %p124 = scmp.lt.s32.totalorder %s9, 2
      // Predicated region
      $region21: #{_lambda_.5} parent=5 // pred_check
        %p125 = pneg %p124
      $region22: #{_lambda_.5} parent=5 // pred_check_branch
        %127 = sbr.rel (%p125) target = $region24
      $region23: #{_lambda_.5} parent=5 // pred_region
        // Predicated region
        $region25: #{_lambda_.5} parent=23 // pred_check
          %p128 = pneg %p29
        $region26: #{_lambda_.5} parent=23 // pred_check_branch
          %130 = sbr.rel (%p128) target = $region28
        $region27: #{_lambda_.5} parent=23 // pred_region
          %s131 = sand.u32 %s19, 1
          %s132 = sand.u32 %s19, 1
          %s133 = smul.addr %s132, 512
          %s134 = scalar_lea.vmem [#allocation2], %s133
          %s135 = smul.u32 32, %s9
          %s136 = smul.addr %s135, 4
          %s137 = scalar_lea.vmem %s0, %s136
          // Predicated region
          $region29: #{_lambda_.5} parent=27 // pred_check
            _
          $region30: #{_lambda_.5} parent=27 // pred_check_branch
            %139 = sbr.rel (0) target = $region32
          $region31: #{_lambda_.5} parent=27 // pred_region
            // Predicated region
            $region33: #{_lambda_.5} parent=31 // pred_check
              _
            $region34: #{_lambda_.5} parent=31 // pred_check_branch
              %141 = sbr.rel target = $region36
            $region35: #{_lambda_.5} parent=31 // pred_region
              // Predicated region
              $region48: #{_lambda_.5} parent=35 // pred_check
                _
              $region49: #{_lambda_.5} parent=35 // pred_check_branch
                %410 = sbr.rel (0) target = $region51
              $region50: #{_lambda_.5} parent=35 // pred_region
                loop: start=0, step=1, limit=1
                $region52: #{_lambda_.5} parent=50 // loop_pre_header
                  _
                $region53: #{_lambda_.5} parent=50 // loop_header
                  %s412 = sphi 0, %s416
                  %p413 = scmp.ge.s32.totalorder %s412, 1
                  %s417 = sphi %s137, %s137
                  %s418 = sphi %s134, %s134
                $region54: #{_lambda_.5} parent=50 // loop_header_branch
                  %415 = sbr.rel (%p413) target = $region58
                $region55: #{_lambda_.5} parent=50 // loop_body
                  _
                $region56: #{_lambda_.5} parent=50 // loop_footer
                  %s416 = sadd.s32 1, %s412
                $region57: #{_lambda_.5} parent=50 // loop_footer_branch
                  %411 = sbr.rel target = $region53
                $region58: #{_lambda_.5} parent=50 // loop_exit
                  _
                loop: start=0, step=1, limit=1
                $region59: #{_lambda_.5} parent=50 // loop_pre_header
                  _
                $region60: #{_lambda_.5} parent=50 // loop_header
                  %s421 = sphi 0, %s425
                  %p422 = scmp.ge.s32.totalorder %s421, 1
                  %s426 = sphi %s137, %s137
                  %s427 = sphi %s134, %s134
                $region61: #{_lambda_.5} parent=50 // loop_header_branch
                  %424 = sbr.rel (%p422) target = $region65
                $region62: #{_lambda_.5} parent=50 // loop_body
                  %v428 = vld [vmem:[%s426] sm:$0xf]
                  %429 = vst [vmem:[%s427] sm:$0xf] %v428
                  %v430 = vld [vmem:[%s426 + $0x4] sm:$0xf]
                  %431 = vst [vmem:[%s427 + $0x4] sm:$0xf] %v430
                  %v432 = vld [vmem:[%s426 + $0x8] sm:$0xf]
                  %433 = vst [vmem:[%s427 + $0x8] sm:$0xf] %v432
                  %v434 = vld [vmem:[%s426 + $0xc] sm:$0xf]
                  %435 = vst [vmem:[%s427 + $0xc] sm:$0xf] %v434
                  %v436 = vld [vmem:[%s426 + $0x10] sm:$0xf]
                  %437 = vst [vmem:[%s427 + $0x10] sm:$0xf] %v436
                  %v438 = vld [vmem:[%s426 + $0x14] sm:$0xf]
                  %439 = vst [vmem:[%s427 + $0x14] sm:$0xf] %v438
                  %v440 = vld [vmem:[%s426 + $0x18] sm:$0xf]
                  %441 = vst [vmem:[%s427 + $0x18] sm:$0xf] %v440
                  %v442 = vld [vmem:[%s426 + $0x1c] sm:$0xf]
                  %443 = vst [vmem:[%s427 + $0x1c] sm:$0xf] %v442
                  %v444 = vld [vmem:[%s426 + $0x20] sm:$0xf]
                  %445 = vst [vmem:[%s427 + $0x20] sm:$0xf] %v444
                  %v446 = vld [vmem:[%s426 + $0x24] sm:$0xf]
                  %447 = vst [vmem:[%s427 + $0x24] sm:$0xf] %v446
                  %v448 = vld [vmem:[%s426 + $0x28] sm:$0xf]
                  %449 = vst [vmem:[%s427 + $0x28] sm:$0xf] %v448
                  %v450 = vld [vmem:[%s426 + $0x2c] sm:$0xf]
                  %451 = vst [vmem:[%s427 + $0x2c] sm:$0xf] %v450
                  %v452 = vld [vmem:[%s426 + $0x30] sm:$0xf]
                  %453 = vst [vmem:[%s427 + $0x30] sm:$0xf] %v452
                  %v454 = vld [vmem:[%s426 + $0x34] sm:$0xf]
                  %455 = vst [vmem:[%s427 + $0x34] sm:$0xf] %v454
                  %v456 = vld [vmem:[%s426 + $0x38] sm:$0xf]
                  %457 = vst [vmem:[%s427 + $0x38] sm:$0xf] %v456
                  %v458 = vld [vmem:[%s426 + $0x3c] sm:$0xf]
                  %459 = vst [vmem:[%s427 + $0x3c] sm:$0xf] %v458
                  %v460 = vld [vmem:[%s426 + $0x40] sm:$0xf]
                  %461 = vst [vmem:[%s427 + $0x40] sm:$0xf] %v460
                  %v462 = vld [vmem:[%s426 + $0x44] sm:$0xf]
                  %463 = vst [vmem:[%s427 + $0x44] sm:$0xf] %v462
                  %v464 = vld [vmem:[%s426 + $0x48] sm:$0xf]
                  %465 = vst [vmem:[%s427 + $0x48] sm:$0xf] %v464
                  %v466 = vld [vmem:[%s426 + $0x4c] sm:$0xf]
                  %467 = vst [vmem:[%s427 + $0x4c] sm:$0xf] %v466
                  %v468 = vld [vmem:[%s426 + $0x50] sm:$0xf]
                  %469 = vst [vmem:[%s427 + $0x50] sm:$0xf] %v468
                  %v470 = vld [vmem:[%s426 + $0x54] sm:$0xf]
                  %471 = vst [vmem:[%s427 + $0x54] sm:$0xf] %v470
                  %v472 = vld [vmem:[%s426 + $0x58] sm:$0xf]
                  %473 = vst [vmem:[%s427 + $0x58] sm:$0xf] %v472
                  %v474 = vld [vmem:[%s426 + $0x5c] sm:$0xf]
                  %475 = vst [vmem:[%s427 + $0x5c] sm:$0xf] %v474
                  %v476 = vld [vmem:[%s426 + $0x60] sm:$0xf]
                  %477 = vst [vmem:[%s427 + $0x60] sm:$0xf] %v476
                  %v478 = vld [vmem:[%s426 + $0x64] sm:$0xf]
                  %479 = vst [vmem:[%s427 + $0x64] sm:$0xf] %v478
                  %v480 = vld [vmem:[%s426 + $0x68] sm:$0xf]
                  %481 = vst [vmem:[%s427 + $0x68] sm:$0xf] %v480
                  %v482 = vld [vmem:[%s426 + $0x6c] sm:$0xf]
                  %483 = vst [vmem:[%s427 + $0x6c] sm:$0xf] %v482
                  %v484 = vld [vmem:[%s426 + $0x70] sm:$0xf]
                  %485 = vst [vmem:[%s427 + $0x70] sm:$0xf] %v484
                  %v486 = vld [vmem:[%s426 + $0x74] sm:$0xf]
                  %487 = vst [vmem:[%s427 + $0x74] sm:$0xf] %v486
                  %v488 = vld [vmem:[%s426 + $0x78] sm:$0xf]
                  %489 = vst [vmem:[%s427 + $0x78] sm:$0xf] %v488
                  %v490 = vld [vmem:[%s426 + $0x7c] sm:$0xf]
                  %491 = vst [vmem:[%s427 + $0x7c] sm:$0xf] %v490
                  %v492 = vld [vmem:[%s426 + $0x100] sm:$0xf]
                  %493 = vst [vmem:[%s427 + $0x80] sm:$0xf] %v492
                  %v494 = vld [vmem:[%s426 + $0x104] sm:$0xf]
                  %495 = vst [vmem:[%s427 + $0x84] sm:$0xf] %v494
                  %v496 = vld [vmem:[%s426 + $0x108] sm:$0xf]
                  %497 = vst [vmem:[%s427 + $0x88] sm:$0xf] %v496
                  %v498 = vld [vmem:[%s426 + $0x10c] sm:$0xf]
                  %499 = vst [vmem:[%s427 + $0x8c] sm:$0xf] %v498
                  %v500 = vld [vmem:[%s426 + $0x110] sm:$0xf]
                  %501 = vst [vmem:[%s427 + $0x90] sm:$0xf] %v500
                  %v502 = vld [vmem:[%s426 + $0x114] sm:$0xf]
                  %503 = vst [vmem:[%s427 + $0x94] sm:$0xf] %v502
                  %v504 = vld [vmem:[%s426 + $0x118] sm:$0xf]
                  %505 = vst [vmem:[%s427 + $0x98] sm:$0xf] %v504
                  %v506 = vld [vmem:[%s426 + $0x11c] sm:$0xf]
                  %507 = vst [vmem:[%s427 + $0x9c] sm:$0xf] %v506
                  %v508 = vld [vmem:[%s426 + $0x120] sm:$0xf]
                  %509 = vst [vmem:[%s427 + $0xa0] sm:$0xf] %v508
                  %v510 = vld [vmem:[%s426 + $0x124] sm:$0xf]
                  %511 = vst [vmem:[%s427 + $0xa4] sm:$0xf] %v510
                  %v512 = vld [vmem:[%s426 + $0x128] sm:$0xf]
                  %513 = vst [vmem:[%s427 + $0xa8] sm:$0xf] %v512
                  %v514 = vld [vmem:[%s426 + $0x12c] sm:$0xf]
                  %515 = vst [vmem:[%s427 + $0xac] sm:$0xf] %v514
                  %v516 = vld [vmem:[%s426 + $0x130] sm:$0xf]
                  %517 = vst [vmem:[%s427 + $0xb0] sm:$0xf] %v516
                  %v518 = vld [vmem:[%s426 + $0x134] sm:$0xf]
                  %519 = vst [vmem:[%s427 + $0xb4] sm:$0xf] %v518
                  %v520 = vld [vmem:[%s426 + $0x138] sm:$0xf]
                  %521 = vst [vmem:[%s427 + $0xb8] sm:$0xf] %v520
                  %v522 = vld [vmem:[%s426 + $0x13c] sm:$0xf]
                  %523 = vst [vmem:[%s427 + $0xbc] sm:$0xf] %v522
                  %v524 = vld [vmem:[%s426 + $0x140] sm:$0xf]
                  %525 = vst [vmem:[%s427 + $0xc0] sm:$0xf] %v524
                  %v526 = vld [vmem:[%s426 + $0x144] sm:$0xf]
                  %527 = vst [vmem:[%s427 + $0xc4] sm:$0xf] %v526
                  %v528 = vld [vmem:[%s426 + $0x148] sm:$0xf]
                  %529 = vst [vmem:[%s427 + $0xc8] sm:$0xf] %v528
                  %v530 = vld [vmem:[%s426 + $0x14c] sm:$0xf]
                  %531 = vst [vmem:[%s427 + $0xcc] sm:$0xf] %v530
                  %v532 = vld [vmem:[%s426 + $0x150] sm:$0xf]
                  %533 = vst [vmem:[%s427 + $0xd0] sm:$0xf] %v532
                  %v534 = vld [vmem:[%s426 + $0x154] sm:$0xf]
                  %535 = vst [vmem:[%s427 + $0xd4] sm:$0xf] %v534
                  %v536 = vld [vmem:[%s426 + $0x158] sm:$0xf]
                  %537 = vst [vmem:[%s427 + $0xd8] sm:$0xf] %v536
                  %v538 = vld [vmem:[%s426 + $0x15c] sm:$0xf]
                  %539 = vst [vmem:[%s427 + $0xdc] sm:$0xf] %v538
                  %v540 = vld [vmem:[%s426 + $0x160] sm:$0xf]
                  %541 = vst [vmem:[%s427 + $0xe0] sm:$0xf] %v540
                  %v542 = vld [vmem:[%s426 + $0x164] sm:$0xf]
                  %543 = vst [vmem:[%s427 + $0xe4] sm:$0xf] %v542
                  %v544 = vld [vmem:[%s426 + $0x168] sm:$0xf]
                  %545 = vst [vmem:[%s427 + $0xe8] sm:$0xf] %v544
                  %v546 = vld [vmem:[%s426 + $0x16c] sm:$0xf]
                  %547 = vst [vmem:[%s427 + $0xec] sm:$0xf] %v546
                  %v548 = vld [vmem:[%s426 + $0x170] sm:$0xf]
                  %549 = vst [vmem:[%s427 + $0xf0] sm:$0xf] %v548
                  %v550 = vld [vmem:[%s426 + $0x174] sm:$0xf]
                  %551 = vst [vmem:[%s427 + $0xf4] sm:$0xf] %v550
                  %v552 = vld [vmem:[%s426 + $0x178] sm:$0xf]
                  %553 = vst [vmem:[%s427 + $0xf8] sm:$0xf] %v552
                  %v554 = vld [vmem:[%s426 + $0x17c] sm:$0xf]
                  %555 = vst [vmem:[%s427 + $0xfc] sm:$0xf] %v554
                  %v556 = vld [vmem:[%s426 + $0x200] sm:$0xf]
                  %557 = vst [vmem:[%s427 + $0x100] sm:$0xf] %v556
                  %v558 = vld [vmem:[%s426 + $0x204] sm:$0xf]
                  %559 = vst [vmem:[%s427 + $0x104] sm:$0xf] %v558
                  %v560 = vld [vmem:[%s426 + $0x208] sm:$0xf]
                  %561 = vst [vmem:[%s427 + $0x108] sm:$0xf] %v560
                  %v562 = vld [vmem:[%s426 + $0x20c] sm:$0xf]
                  %563 = vst [vmem:[%s427 + $0x10c] sm:$0xf] %v562
                  %v564 = vld [vmem:[%s426 + $0x210] sm:$0xf]
                  %565 = vst [vmem:[%s427 + $0x110] sm:$0xf] %v564
                  %v566 = vld [vmem:[%s426 + $0x214] sm:$0xf]
                  %567 = vst [vmem:[%s427 + $0x114] sm:$0xf] %v566
                  %v568 = vld [vmem:[%s426 + $0x218] sm:$0xf]
                  %569 = vst [vmem:[%s427 + $0x118] sm:$0xf] %v568
                  %v570 = vld [vmem:[%s426 + $0x21c] sm:$0xf]
                  %571 = vst [vmem:[%s427 + $0x11c] sm:$0xf] %v570
                  %v572 = vld [vmem:[%s426 + $0x220] sm:$0xf]
                  %573 = vst [vmem:[%s427 + $0x120] sm:$0xf] %v572
                  %v574 = vld [vmem:[%s426 + $0x224] sm:$0xf]
                  %575 = vst [vmem:[%s427 + $0x124] sm:$0xf] %v574
                  %v576 = vld [vmem:[%s426 + $0x228] sm:$0xf]
                  %577 = vst [vmem:[%s427 + $0x128] sm:$0xf] %v576
                  %v578 = vld [vmem:[%s426 + $0x22c] sm:$0xf]
                  %579 = vst [vmem:[%s427 + $0x12c] sm:$0xf] %v578
                  %v580 = vld [vmem:[%s426 + $0x230] sm:$0xf]
                  %581 = vst [vmem:[%s427 + $0x130] sm:$0xf] %v580
                  %v582 = vld [vmem:[%s426 + $0x234] sm:$0xf]
                  %583 = vst [vmem:[%s427 + $0x134] sm:$0xf] %v582
                  %v584 = vld [vmem:[%s426 + $0x238] sm:$0xf]
                  %585 = vst [vmem:[%s427 + $0x138] sm:$0xf] %v584
                  %v586 = vld [vmem:[%s426 + $0x23c] sm:$0xf]
                  %587 = vst [vmem:[%s427 + $0x13c] sm:$0xf] %v586
                  %v588 = vld [vmem:[%s426 + $0x240] sm:$0xf]
                  %589 = vst [vmem:[%s427 + $0x140] sm:$0xf] %v588
                  %v590 = vld [vmem:[%s426 + $0x244] sm:$0xf]
                  %591 = vst [vmem:[%s427 + $0x144] sm:$0xf] %v590
                  %v592 = vld [vmem:[%s426 + $0x248] sm:$0xf]
                  %593 = vst [vmem:[%s427 + $0x148] sm:$0xf] %v592
                  %v594 = vld [vmem:[%s426 + $0x24c] sm:$0xf]
                  %595 = vst [vmem:[%s427 + $0x14c] sm:$0xf] %v594
                  %v596 = vld [vmem:[%s426 + $0x250] sm:$0xf]
                  %597 = vst [vmem:[%s427 + $0x150] sm:$0xf] %v596
                  %v598 = vld [vmem:[%s426 + $0x254] sm:$0xf]
                  %599 = vst [vmem:[%s427 + $0x154] sm:$0xf] %v598
                  %v600 = vld [vmem:[%s426 + $0x258] sm:$0xf]
                  %601 = vst [vmem:[%s427 + $0x158] sm:$0xf] %v600
                  %v602 = vld [vmem:[%s426 + $0x25c] sm:$0xf]
                  %603 = vst [vmem:[%s427 + $0x15c] sm:$0xf] %v602
                  %v604 = vld [vmem:[%s426 + $0x260] sm:$0xf]
                  %605 = vst [vmem:[%s427 + $0x160] sm:$0xf] %v604
                  %v606 = vld [vmem:[%s426 + $0x264] sm:$0xf]
                  %607 = vst [vmem:[%s427 + $0x164] sm:$0xf] %v606
                  %v608 = vld [vmem:[%s426 + $0x268] sm:$0xf]
                  %609 = vst [vmem:[%s427 + $0x168] sm:$0xf] %v608
                  %v610 = vld [vmem:[%s426 + $0x26c] sm:$0xf]
                  %611 = vst [vmem:[%s427 + $0x16c] sm:$0xf] %v610
                  %v612 = vld [vmem:[%s426 + $0x270] sm:$0xf]
                  %613 = vst [vmem:[%s427 + $0x170] sm:$0xf] %v612
                  %v614 = vld [vmem:[%s426 + $0x274] sm:$0xf]
                  %615 = vst [vmem:[%s427 + $0x174] sm:$0xf] %v614
                  %v616 = vld [vmem:[%s426 + $0x278] sm:$0xf]
                  %617 = vst [vmem:[%s427 + $0x178] sm:$0xf] %v616
                  %v618 = vld [vmem:[%s426 + $0x27c] sm:$0xf]
                  %619 = vst [vmem:[%s427 + $0x17c] sm:$0xf] %v618
                  %v620 = vld [vmem:[%s426 + $0x300] sm:$0xf]
                  %621 = vst [vmem:[%s427 + $0x180] sm:$0xf] %v620
                  %v622 = vld [vmem:[%s426 + $0x304] sm:$0xf]
                  %623 = vst [vmem:[%s427 + $0x184] sm:$0xf] %v622
                  %v624 = vld [vmem:[%s426 + $0x308] sm:$0xf]
                  %625 = vst [vmem:[%s427 + $0x188] sm:$0xf] %v624
                  %v626 = vld [vmem:[%s426 + $0x30c] sm:$0xf]
                  %627 = vst [vmem:[%s427 + $0x18c] sm:$0xf] %v626
                  %v628 = vld [vmem:[%s426 + $0x310] sm:$0xf]
                  %629 = vst [vmem:[%s427 + $0x190] sm:$0xf] %v628
                  %v630 = vld [vmem:[%s426 + $0x314] sm:$0xf]
                  %631 = vst [vmem:[%s427 + $0x194] sm:$0xf] %v630
                  %v632 = vld [vmem:[%s426 + $0x318] sm:$0xf]
                  %633 = vst [vmem:[%s427 + $0x198] sm:$0xf] %v632
                  %v634 = vld [vmem:[%s426 + $0x31c] sm:$0xf]
                  %635 = vst [vmem:[%s427 + $0x19c] sm:$0xf] %v634
                  %v636 = vld [vmem:[%s426 + $0x320] sm:$0xf]
                  %637 = vst [vmem:[%s427 + $0x1a0] sm:$0xf] %v636
                  %v638 = vld [vmem:[%s426 + $0x324] sm:$0xf]
                  %639 = vst [vmem:[%s427 + $0x1a4] sm:$0xf] %v638
                  %v640 = vld [vmem:[%s426 + $0x328] sm:$0xf]
                  %641 = vst [vmem:[%s427 + $0x1a8] sm:$0xf] %v640
                  %v642 = vld [vmem:[%s426 + $0x32c] sm:$0xf]
                  %643 = vst [vmem:[%s427 + $0x1ac] sm:$0xf] %v642
                  %v644 = vld [vmem:[%s426 + $0x330] sm:$0xf]
                  %645 = vst [vmem:[%s427 + $0x1b0] sm:$0xf] %v644
                  %v646 = vld [vmem:[%s426 + $0x334] sm:$0xf]
                  %647 = vst [vmem:[%s427 + $0x1b4] sm:$0xf] %v646
                  %v648 = vld [vmem:[%s426 + $0x338] sm:$0xf]
                  %649 = vst [vmem:[%s427 + $0x1b8] sm:$0xf] %v648
                  %v650 = vld [vmem:[%s426 + $0x33c] sm:$0xf]
                  %651 = vst [vmem:[%s427 + $0x1bc] sm:$0xf] %v650
                  %v652 = vld [vmem:[%s426 + $0x340] sm:$0xf]
                  %653 = vst [vmem:[%s427 + $0x1c0] sm:$0xf] %v652
                  %v654 = vld [vmem:[%s426 + $0x344] sm:$0xf]
                  %655 = vst [vmem:[%s427 + $0x1c4] sm:$0xf] %v654
                  %v656 = vld [vmem:[%s426 + $0x348] sm:$0xf]
                  %657 = vst [vmem:[%s427 + $0x1c8] sm:$0xf] %v656
                  %v658 = vld [vmem:[%s426 + $0x34c] sm:$0xf]
                  %659 = vst [vmem:[%s427 + $0x1cc] sm:$0xf] %v658
                  %v660 = vld [vmem:[%s426 + $0x350] sm:$0xf]
                  %661 = vst [vmem:[%s427 + $0x1d0] sm:$0xf] %v660
                  %v662 = vld [vmem:[%s426 + $0x354] sm:$0xf]
                  %663 = vst [vmem:[%s427 + $0x1d4] sm:$0xf] %v662
                  %v664 = vld [vmem:[%s426 + $0x358] sm:$0xf]
                  %665 = vst [vmem:[%s427 + $0x1d8] sm:$0xf] %v664
                  %v666 = vld [vmem:[%s426 + $0x35c] sm:$0xf]
                  %667 = vst [vmem:[%s427 + $0x1dc] sm:$0xf] %v666
                  %v668 = vld [vmem:[%s426 + $0x360] sm:$0xf]
                  %669 = vst [vmem:[%s427 + $0x1e0] sm:$0xf] %v668
                  %v670 = vld [vmem:[%s426 + $0x364] sm:$0xf]
                  %671 = vst [vmem:[%s427 + $0x1e4] sm:$0xf] %v670
                  %v672 = vld [vmem:[%s426 + $0x368] sm:$0xf]
                  %673 = vst [vmem:[%s427 + $0x1e8] sm:$0xf] %v672
                  %v674 = vld [vmem:[%s426 + $0x36c] sm:$0xf]
                  %675 = vst [vmem:[%s427 + $0x1ec] sm:$0xf] %v674
                  %v676 = vld [vmem:[%s426 + $0x370] sm:$0xf]
                  %677 = vst [vmem:[%s427 + $0x1f0] sm:$0xf] %v676
                  %v678 = vld [vmem:[%s426 + $0x374] sm:$0xf]
                  %679 = vst [vmem:[%s427 + $0x1f4] sm:$0xf] %v678
                  %v680 = vld [vmem:[%s426 + $0x378] sm:$0xf]
                  %681 = vst [vmem:[%s427 + $0x1f8] sm:$0xf] %v680
                  %v682 = vld [vmem:[%s426 + $0x37c] sm:$0xf]
                  %683 = vst [vmem:[%s427 + $0x1fc] sm:$0xf] %v682
                $region63: #{_lambda_.5} parent=50 // loop_footer
                  %s425 = sadd.s32 1, %s421
                $region64: #{_lambda_.5} parent=50 // loop_footer_branch
                  %420 = sbr.rel target = $region60
                $region65: #{_lambda_.5} parent=50 // loop_exit
                  _
              $region51: #{_lambda_.5} parent=35 // pred_fallthru
                _
            $region36: #{_lambda_.5} parent=31 // pred_fallthru
              _
            // Predicated region
            $region37: #{_lambda_.5} parent=31 // pred_check
              _
            $region38: #{_lambda_.5} parent=31 // pred_check_branch
              %143 = sbr.rel (0) target = $region40
            $region39: #{_lambda_.5} parent=31 // pred_region
              loop: start=0, step=1, limit=1
              $region41: #{_lambda_.5} parent=39 // loop_pre_header
                _
              $region42: #{_lambda_.5} parent=39 // loop_header
                %s146 = sphi 0, %s150
                %p147 = scmp.ge.s32.totalorder %s146, 1
                %s151 = sphi %s137, %s137
                %s152 = sphi %s134, %s134
              $region43: #{_lambda_.5} parent=39 // loop_header_branch
                %149 = sbr.rel (%p147) target = $region47
              $region44: #{_lambda_.5} parent=39 // loop_body
                %v153 = vld [vmem:[%s151] sm:$0xf]
                %154 = vst [vmem:[%s152] sm:$0xf] %v153
                %v155 = vld [vmem:[%s151 + $0x4] sm:$0xf]
                %156 = vst [vmem:[%s152 + $0x4] sm:$0xf] %v155
                %v157 = vld [vmem:[%s151 + $0x8] sm:$0xf]
                %158 = vst [vmem:[%s152 + $0x8] sm:$0xf] %v157
                %v159 = vld [vmem:[%s151 + $0xc] sm:$0xf]
                %160 = vst [vmem:[%s152 + $0xc] sm:$0xf] %v159
                %v161 = vld [vmem:[%s151 + $0x10] sm:$0xf]
                %162 = vst [vmem:[%s152 + $0x10] sm:$0xf] %v161
                %v163 = vld [vmem:[%s151 + $0x14] sm:$0xf]
                %164 = vst [vmem:[%s152 + $0x14] sm:$0xf] %v163
                %v165 = vld [vmem:[%s151 + $0x18] sm:$0xf]
                %166 = vst [vmem:[%s152 + $0x18] sm:$0xf] %v165
                %v167 = vld [vmem:[%s151 + $0x1c] sm:$0xf]
                %168 = vst [vmem:[%s152 + $0x1c] sm:$0xf] %v167
                %v169 = vld [vmem:[%s151 + $0x20] sm:$0xf]
                %170 = vst [vmem:[%s152 + $0x20] sm:$0xf] %v169
                %v171 = vld [vmem:[%s151 + $0x24] sm:$0xf]
                %172 = vst [vmem:[%s152 + $0x24] sm:$0xf] %v171
                %v173 = vld [vmem:[%s151 + $0x28] sm:$0xf]
                %174 = vst [vmem:[%s152 + $0x28] sm:$0xf] %v173
                %v175 = vld [vmem:[%s151 + $0x2c] sm:$0xf]
                %176 = vst [vmem:[%s152 + $0x2c] sm:$0xf] %v175
                %v177 = vld [vmem:[%s151 + $0x30] sm:$0xf]
                %178 = vst [vmem:[%s152 + $0x30] sm:$0xf] %v177
                %v179 = vld [vmem:[%s151 + $0x34] sm:$0xf]
                %180 = vst [vmem:[%s152 + $0x34] sm:$0xf] %v179
                %v181 = vld [vmem:[%s151 + $0x38] sm:$0xf]
                %182 = vst [vmem:[%s152 + $0x38] sm:$0xf] %v181
                %v183 = vld [vmem:[%s151 + $0x3c] sm:$0xf]
                %184 = vst [vmem:[%s152 + $0x3c] sm:$0xf] %v183
                %v185 = vld [vmem:[%s151 + $0x40] sm:$0xf]
                %186 = vst [vmem:[%s152 + $0x40] sm:$0xf] %v185
                %v187 = vld [vmem:[%s151 + $0x44] sm:$0xf]
                %188 = vst [vmem:[%s152 + $0x44] sm:$0xf] %v187
                %v189 = vld [vmem:[%s151 + $0x48] sm:$0xf]
                %190 = vst [vmem:[%s152 + $0x48] sm:$0xf] %v189
                %v191 = vld [vmem:[%s151 + $0x4c] sm:$0xf]
                %192 = vst [vmem:[%s152 + $0x4c] sm:$0xf] %v191
                %v193 = vld [vmem:[%s151 + $0x50] sm:$0xf]
                %194 = vst [vmem:[%s152 + $0x50] sm:$0xf] %v193
                %v195 = vld [vmem:[%s151 + $0x54] sm:$0xf]
                %196 = vst [vmem:[%s152 + $0x54] sm:$0xf] %v195
                %v197 = vld [vmem:[%s151 + $0x58] sm:$0xf]
                %198 = vst [vmem:[%s152 + $0x58] sm:$0xf] %v197
                %v199 = vld [vmem:[%s151 + $0x5c] sm:$0xf]
                %200 = vst [vmem:[%s152 + $0x5c] sm:$0xf] %v199
                %v201 = vld [vmem:[%s151 + $0x60] sm:$0xf]
                %202 = vst [vmem:[%s152 + $0x60] sm:$0xf] %v201
                %v203 = vld [vmem:[%s151 + $0x64] sm:$0xf]
                %204 = vst [vmem:[%s152 + $0x64] sm:$0xf] %v203
                %v205 = vld [vmem:[%s151 + $0x68] sm:$0xf]
                %206 = vst [vmem:[%s152 + $0x68] sm:$0xf] %v205
                %v207 = vld [vmem:[%s151 + $0x6c] sm:$0xf]
                %208 = vst [vmem:[%s152 + $0x6c] sm:$0xf] %v207
                %v209 = vld [vmem:[%s151 + $0x70] sm:$0xf]
                %210 = vst [vmem:[%s152 + $0x70] sm:$0xf] %v209
                %v211 = vld [vmem:[%s151 + $0x74] sm:$0xf]
                %212 = vst [vmem:[%s152 + $0x74] sm:$0xf] %v211
                %v213 = vld [vmem:[%s151 + $0x78] sm:$0xf]
                %214 = vst [vmem:[%s152 + $0x78] sm:$0xf] %v213
                %v215 = vld [vmem:[%s151 + $0x7c] sm:$0xf]
                %216 = vst [vmem:[%s152 + $0x7c] sm:$0xf] %v215
                %v217 = vld [vmem:[%s151 + $0x100] sm:$0xf]
                %218 = vst [vmem:[%s152 + $0x80] sm:$0xf] %v217
                %v219 = vld [vmem:[%s151 + $0x104] sm:$0xf]
                %220 = vst [vmem:[%s152 + $0x84] sm:$0xf] %v219
                %v221 = vld [vmem:[%s151 + $0x108] sm:$0xf]
                %222 = vst [vmem:[%s152 + $0x88] sm:$0xf] %v221
                %v223 = vld [vmem:[%s151 + $0x10c] sm:$0xf]
                %224 = vst [vmem:[%s152 + $0x8c] sm:$0xf] %v223
                %v225 = vld [vmem:[%s151 + $0x110] sm:$0xf]
                %226 = vst [vmem:[%s152 + $0x90] sm:$0xf] %v225
                %v227 = vld [vmem:[%s151 + $0x114] sm:$0xf]
                %228 = vst [vmem:[%s152 + $0x94] sm:$0xf] %v227
                %v229 = vld [vmem:[%s151 + $0x118] sm:$0xf]
                %230 = vst [vmem:[%s152 + $0x98] sm:$0xf] %v229
                %v231 = vld [vmem:[%s151 + $0x11c] sm:$0xf]
                %232 = vst [vmem:[%s152 + $0x9c] sm:$0xf] %v231
                %v233 = vld [vmem:[%s151 + $0x120] sm:$0xf]
                %234 = vst [vmem:[%s152 + $0xa0] sm:$0xf] %v233
                %v235 = vld [vmem:[%s151 + $0x124] sm:$0xf]
                %236 = vst [vmem:[%s152 + $0xa4] sm:$0xf] %v235
                %v237 = vld [vmem:[%s151 + $0x128] sm:$0xf]
                %238 = vst [vmem:[%s152 + $0xa8] sm:$0xf] %v237
                %v239 = vld [vmem:[%s151 + $0x12c] sm:$0xf]
                %240 = vst [vmem:[%s152 + $0xac] sm:$0xf] %v239
                %v241 = vld [vmem:[%s151 + $0x130] sm:$0xf]
                %242 = vst [vmem:[%s152 + $0xb0] sm:$0xf] %v241
                %v243 = vld [vmem:[%s151 + $0x134] sm:$0xf]
                %244 = vst [vmem:[%s152 + $0xb4] sm:$0xf] %v243
                %v245 = vld [vmem:[%s151 + $0x138] sm:$0xf]
                %246 = vst [vmem:[%s152 + $0xb8] sm:$0xf] %v245
                %v247 = vld [vmem:[%s151 + $0x13c] sm:$0xf]
                %248 = vst [vmem:[%s152 + $0xbc] sm:$0xf] %v247
                %v249 = vld [vmem:[%s151 + $0x140] sm:$0xf]
                %250 = vst [vmem:[%s152 + $0xc0] sm:$0xf] %v249
                %v251 = vld [vmem:[%s151 + $0x144] sm:$0xf]
                %252 = vst [vmem:[%s152 + $0xc4] sm:$0xf] %v251
                %v253 = vld [vmem:[%s151 + $0x148] sm:$0xf]
                %254 = vst [vmem:[%s152 + $0xc8] sm:$0xf] %v253
                %v255 = vld [vmem:[%s151 + $0x14c] sm:$0xf]
                %256 = vst [vmem:[%s152 + $0xcc] sm:$0xf] %v255
                %v257 = vld [vmem:[%s151 + $0x150] sm:$0xf]
                %258 = vst [vmem:[%s152 + $0xd0] sm:$0xf] %v257
                %v259 = vld [vmem:[%s151 + $0x154] sm:$0xf]
                %260 = vst [vmem:[%s152 + $0xd4] sm:$0xf] %v259
                %v261 = vld [vmem:[%s151 + $0x158] sm:$0xf]
                %262 = vst [vmem:[%s152 + $0xd8] sm:$0xf] %v261
                %v263 = vld [vmem:[%s151 + $0x15c] sm:$0xf]
                %264 = vst [vmem:[%s152 + $0xdc] sm:$0xf] %v263
                %v265 = vld [vmem:[%s151 + $0x160] sm:$0xf]
                %266 = vst [vmem:[%s152 + $0xe0] sm:$0xf] %v265
                %v267 = vld [vmem:[%s151 + $0x164] sm:$0xf]
                %268 = vst [vmem:[%s152 + $0xe4] sm:$0xf] %v267
                %v269 = vld [vmem:[%s151 + $0x168] sm:$0xf]
                %270 = vst [vmem:[%s152 + $0xe8] sm:$0xf] %v269
                %v271 = vld [vmem:[%s151 + $0x16c] sm:$0xf]
                %272 = vst [vmem:[%s152 + $0xec] sm:$0xf] %v271
                %v273 = vld [vmem:[%s151 + $0x170] sm:$0xf]
                %274 = vst [vmem:[%s152 + $0xf0] sm:$0xf] %v273
                %v275 = vld [vmem:[%s151 + $0x174] sm:$0xf]
                %276 = vst [vmem:[%s152 + $0xf4] sm:$0xf] %v275
                %v277 = vld [vmem:[%s151 + $0x178] sm:$0xf]
                %278 = vst [vmem:[%s152 + $0xf8] sm:$0xf] %v277
                %v279 = vld [vmem:[%s151 + $0x17c] sm:$0xf]
                %280 = vst [vmem:[%s152 + $0xfc] sm:$0xf] %v279
                %v281 = vld [vmem:[%s151 + $0x200] sm:$0xf]
                %282 = vst [vmem:[%s152 + $0x100] sm:$0xf] %v281
                %v283 = vld [vmem:[%s151 + $0x204] sm:$0xf]
                %284 = vst [vmem:[%s152 + $0x104] sm:$0xf] %v283
                %v285 = vld [vmem:[%s151 + $0x208] sm:$0xf]
                %286 = vst [vmem:[%s152 + $0x108] sm:$0xf] %v285
                %v287 = vld [vmem:[%s151 + $0x20c] sm:$0xf]
                %288 = vst [vmem:[%s152 + $0x10c] sm:$0xf] %v287
                %v289 = vld [vmem:[%s151 + $0x210] sm:$0xf]
                %290 = vst [vmem:[%s152 + $0x110] sm:$0xf] %v289
                %v291 = vld [vmem:[%s151 + $0x214] sm:$0xf]
                %292 = vst [vmem:[%s152 + $0x114] sm:$0xf] %v291
                %v293 = vld [vmem:[%s151 + $0x218] sm:$0xf]
                %294 = vst [vmem:[%s152 + $0x118] sm:$0xf] %v293
                %v295 = vld [vmem:[%s151 + $0x21c] sm:$0xf]
                %296 = vst [vmem:[%s152 + $0x11c] sm:$0xf] %v295
                %v297 = vld [vmem:[%s151 + $0x220] sm:$0xf]
                %298 = vst [vmem:[%s152 + $0x120] sm:$0xf] %v297
                %v299 = vld [vmem:[%s151 + $0x224] sm:$0xf]
                %300 = vst [vmem:[%s152 + $0x124] sm:$0xf] %v299
                %v301 = vld [vmem:[%s151 + $0x228] sm:$0xf]
                %302 = vst [vmem:[%s152 + $0x128] sm:$0xf] %v301
                %v303 = vld [vmem:[%s151 + $0x22c] sm:$0xf]
                %304 = vst [vmem:[%s152 + $0x12c] sm:$0xf] %v303
                %v305 = vld [vmem:[%s151 + $0x230] sm:$0xf]
                %306 = vst [vmem:[%s152 + $0x130] sm:$0xf] %v305
                %v307 = vld [vmem:[%s151 + $0x234] sm:$0xf]
                %308 = vst [vmem:[%s152 + $0x134] sm:$0xf] %v307
                %v309 = vld [vmem:[%s151 + $0x238] sm:$0xf]
                %310 = vst [vmem:[%s152 + $0x138] sm:$0xf] %v309
                %v311 = vld [vmem:[%s151 + $0x23c] sm:$0xf]
                %312 = vst [vmem:[%s152 + $0x13c] sm:$0xf] %v311
                %v313 = vld [vmem:[%s151 + $0x240] sm:$0xf]
                %314 = vst [vmem:[%s152 + $0x140] sm:$0xf] %v313
                %v315 = vld [vmem:[%s151 + $0x244] sm:$0xf]
                %316 = vst [vmem:[%s152 + $0x144] sm:$0xf] %v315
                %v317 = vld [vmem:[%s151 + $0x248] sm:$0xf]
                %318 = vst [vmem:[%s152 + $0x148] sm:$0xf] %v317
                %v319 = vld [vmem:[%s151 + $0x24c] sm:$0xf]
                %320 = vst [vmem:[%s152 + $0x14c] sm:$0xf] %v319
                %v321 = vld [vmem:[%s151 + $0x250] sm:$0xf]
                %322 = vst [vmem:[%s152 + $0x150] sm:$0xf] %v321
                %v323 = vld [vmem:[%s151 + $0x254] sm:$0xf]
                %324 = vst [vmem:[%s152 + $0x154] sm:$0xf] %v323
                %v325 = vld [vmem:[%s151 + $0x258] sm:$0xf]
                %326 = vst [vmem:[%s152 + $0x158] sm:$0xf] %v325
                %v327 = vld [vmem:[%s151 + $0x25c] sm:$0xf]
                %328 = vst [vmem:[%s152 + $0x15c] sm:$0xf] %v327
                %v329 = vld [vmem:[%s151 + $0x260] sm:$0xf]
                %330 = vst [vmem:[%s152 + $0x160] sm:$0xf] %v329
                %v331 = vld [vmem:[%s151 + $0x264] sm:$0xf]
                %332 = vst [vmem:[%s152 + $0x164] sm:$0xf] %v331
                %v333 = vld [vmem:[%s151 + $0x268] sm:$0xf]
                %334 = vst [vmem:[%s152 + $0x168] sm:$0xf] %v333
                %v335 = vld [vmem:[%s151 + $0x26c] sm:$0xf]
                %336 = vst [vmem:[%s152 + $0x16c] sm:$0xf] %v335
                %v337 = vld [vmem:[%s151 + $0x270] sm:$0xf]
                %338 = vst [vmem:[%s152 + $0x170] sm:$0xf] %v337
                %v339 = vld [vmem:[%s151 + $0x274] sm:$0xf]
                %340 = vst [vmem:[%s152 + $0x174] sm:$0xf] %v339
                %v341 = vld [vmem:[%s151 + $0x278] sm:$0xf]
                %342 = vst [vmem:[%s152 + $0x178] sm:$0xf] %v341
                %v343 = vld [vmem:[%s151 + $0x27c] sm:$0xf]
                %344 = vst [vmem:[%s152 + $0x17c] sm:$0xf] %v343
                %v345 = vld [vmem:[%s151 + $0x300] sm:$0xf]
                %346 = vst [vmem:[%s152 + $0x180] sm:$0xf] %v345
                %v347 = vld [vmem:[%s151 + $0x304] sm:$0xf]
                %348 = vst [vmem:[%s152 + $0x184] sm:$0xf] %v347
                %v349 = vld [vmem:[%s151 + $0x308] sm:$0xf]
                %350 = vst [vmem:[%s152 + $0x188] sm:$0xf] %v349
                %v351 = vld [vmem:[%s151 + $0x30c] sm:$0xf]
                %352 = vst [vmem:[%s152 + $0x18c] sm:$0xf] %v351
                %v353 = vld [vmem:[%s151 + $0x310] sm:$0xf]
                %354 = vst [vmem:[%s152 + $0x190] sm:$0xf] %v353
                %v355 = vld [vmem:[%s151 + $0x314] sm:$0xf]
                %356 = vst [vmem:[%s152 + $0x194] sm:$0xf] %v355
                %v357 = vld [vmem:[%s151 + $0x318] sm:$0xf]
                %358 = vst [vmem:[%s152 + $0x198] sm:$0xf] %v357
                %v359 = vld [vmem:[%s151 + $0x31c] sm:$0xf]
                %360 = vst [vmem:[%s152 + $0x19c] sm:$0xf] %v359
                %v361 = vld [vmem:[%s151 + $0x320] sm:$0xf]
                %362 = vst [vmem:[%s152 + $0x1a0] sm:$0xf] %v361
                %v363 = vld [vmem:[%s151 + $0x324] sm:$0xf]
                %364 = vst [vmem:[%s152 + $0x1a4] sm:$0xf] %v363
                %v365 = vld [vmem:[%s151 + $0x328] sm:$0xf]
                %366 = vst [vmem:[%s152 + $0x1a8] sm:$0xf] %v365
                %v367 = vld [vmem:[%s151 + $0x32c] sm:$0xf]
                %368 = vst [vmem:[%s152 + $0x1ac] sm:$0xf] %v367
                %v369 = vld [vmem:[%s151 + $0x330] sm:$0xf]
                %370 = vst [vmem:[%s152 + $0x1b0] sm:$0xf] %v369
                %v371 = vld [vmem:[%s151 + $0x334] sm:$0xf]
                %372 = vst [vmem:[%s152 + $0x1b4] sm:$0xf] %v371
                %v373 = vld [vmem:[%s151 + $0x338] sm:$0xf]
                %374 = vst [vmem:[%s152 + $0x1b8] sm:$0xf] %v373
                %v375 = vld [vmem:[%s151 + $0x33c] sm:$0xf]
                %376 = vst [vmem:[%s152 + $0x1bc] sm:$0xf] %v375
                %v377 = vld [vmem:[%s151 + $0x340] sm:$0xf]
                %378 = vst [vmem:[%s152 + $0x1c0] sm:$0xf] %v377
                %v379 = vld [vmem:[%s151 + $0x344] sm:$0xf]
                %380 = vst [vmem:[%s152 + $0x1c4] sm:$0xf] %v379
                %v381 = vld [vmem:[%s151 + $0x348] sm:$0xf]
                %382 = vst [vmem:[%s152 + $0x1c8] sm:$0xf] %v381
                %v383 = vld [vmem:[%s151 + $0x34c] sm:$0xf]
                %384 = vst [vmem:[%s152 + $0x1cc] sm:$0xf] %v383
                %v385 = vld [vmem:[%s151 + $0x350] sm:$0xf]
                %386 = vst [vmem:[%s152 + $0x1d0] sm:$0xf] %v385
                %v387 = vld [vmem:[%s151 + $0x354] sm:$0xf]
                %388 = vst [vmem:[%s152 + $0x1d4] sm:$0xf] %v387
                %v389 = vld [vmem:[%s151 + $0x358] sm:$0xf]
                %390 = vst [vmem:[%s152 + $0x1d8] sm:$0xf] %v389
                %v391 = vld [vmem:[%s151 + $0x35c] sm:$0xf]
                %392 = vst [vmem:[%s152 + $0x1dc] sm:$0xf] %v391
                %v393 = vld [vmem:[%s151 + $0x360] sm:$0xf]
                %394 = vst [vmem:[%s152 + $0x1e0] sm:$0xf] %v393
                %v395 = vld [vmem:[%s151 + $0x364] sm:$0xf]
                %396 = vst [vmem:[%s152 + $0x1e4] sm:$0xf] %v395
                %v397 = vld [vmem:[%s151 + $0x368] sm:$0xf]
                %398 = vst [vmem:[%s152 + $0x1e8] sm:$0xf] %v397
                %v399 = vld [vmem:[%s151 + $0x36c] sm:$0xf]
                %400 = vst [vmem:[%s152 + $0x1ec] sm:$0xf] %v399
                %v401 = vld [vmem:[%s151 + $0x370] sm:$0xf]
                %402 = vst [vmem:[%s152 + $0x1f0] sm:$0xf] %v401
                %v403 = vld [vmem:[%s151 + $0x374] sm:$0xf]
                %404 = vst [vmem:[%s152 + $0x1f4] sm:$0xf] %v403
                %v405 = vld [vmem:[%s151 + $0x378] sm:$0xf]
                %406 = vst [vmem:[%s152 + $0x1f8] sm:$0xf] %v405
                %v407 = vld [vmem:[%s151 + $0x37c] sm:$0xf]
                %408 = vst [vmem:[%s152 + $0x1fc] sm:$0xf] %v407
              $region45: #{_lambda_.5} parent=39 // loop_footer
                %s150 = sadd.s32 1, %s146
              $region46: #{_lambda_.5} parent=39 // loop_footer_branch
                %145 = sbr.rel target = $region42
              $region47: #{_lambda_.5} parent=39 // loop_exit
                _
            $region40: #{_lambda_.5} parent=31 // pred_fallthru
              _
          $region32: #{_lambda_.5} parent=27 // pred_fallthru
            _
          %684 = vnop
        $region28: #{_lambda_.5} parent=23 // pred_fallthru
          _
      $region24: #{_lambda_.5} parent=5 // pred_fallthru
        _
      %p685 = scmp.le.s32.totalorder 1, %s9
      %p686 = scmp.lt.s32.totalorder %s9, 3
      %p687 = pnand %p685, %p686
      %p688 = pneg %p687
      // Predicated region
      $region66: #{_lambda_.5} parent=5 // pred_check
        _
      $region67: #{_lambda_.5} parent=5 // pred_check_branch
        %690 = sbr.rel (%p687) target = $region69
      $region68: #{_lambda_.5} parent=5 // pred_region
        %s691 = ssub.s32 %s9, 1
        %s692 = sand.u32 %s22, 1
        %s693 = sand.u32 %s22, 1
        %s694 = smul.addr %s693, 512
        %s695 = scalar_lea.vmem [#allocation2], %s694
        // Predicated region
        $region70: #{_lambda_.5} parent=68 // pred_check
          %p696 = pneg %p35
        $region71: #{_lambda_.5} parent=68 // pred_check_branch
          %698 = sbr.rel (%p696) target = $region73
        $region72: #{_lambda_.5} parent=68 // pred_region
          _
        $region73: #{_lambda_.5} parent=68 // pred_fallthru
          _
        %s699 = sand.u32 %s22, 1
        %s700 = sand.u32 %s22, 1
        %s701 = smul.addr %s700, 512
        %s702 = scalar_lea.vmem [#allocation2], %s701
        %p703 = pneg %p35
        %p704 = pneg %p32
        %p705 = pneg %p56
        %p706 = pneg %p53
        %p707 = pneg %p77
        %p708 = pneg %p74
        %p709 = pneg %p103
        %p710 = pneg %p100
        %s711 = smul.u32 32, %s14
        %p712 = scmp.lt.s32.totalorder %s711, 63
        %s713 = scalar_select %p712, %s711, 63
        %s714 = smul.addr %s713, 8
        %s715 = scalar_lea.vmem %s3, %s714
        %s716 = smul.u32 32, %s14
        %s717 = smul.u32 32, %s14
        %p718 = scmp.lt.s32.totalorder %s717, 63
        %s719 = scalar_select %p718, %s717, 63
        %s720 = smul.addr %s719, 8
        %s721 = scalar_lea.vmem %s3, %s720
        %s722 = smul.u32 32, %s14
        %v724 = vld [vmem:[%s1] sm:$0xf]
        %v725 = vld [vmem:[%s1 + $0x4] sm:$0xf]
        %v726 = vld [vmem:[%s1 + $0x8] sm:$0xf]
        %v727 = vld [vmem:[%s1 + $0xc] sm:$0x3]
        %v728 = vld [vmem:[%s695] sm:$0xf]
        %v729 = vld [vmem:[%s695 + $0x4] sm:$0xf]
        %v730 = vld [vmem:[%s695 + $0x8] sm:$0xf]
        %v731 = vld [vmem:[%s695 + $0xc] sm:$0xf]
        %v732 = vld [vmem:[%s695 + $0x10] sm:$0xf]
        %v733 = vld [vmem:[%s695 + $0x14] sm:$0xf]
        %v734 = vld [vmem:[%s695 + $0x18] sm:$0xf]
        %v735 = vld [vmem:[%s695 + $0x1c] sm:$0xf]
        %v736 = vld [vmem:[%s695 + $0x20] sm:$0xf]
        %v737 = vld [vmem:[%s695 + $0x24] sm:$0xf]
        %v738 = vld [vmem:[%s695 + $0x28] sm:$0xf]
        %v739 = vld [vmem:[%s695 + $0x2c] sm:$0xf]
        %v740 = vld [vmem:[%s695 + $0x30] sm:$0xf]
        %v741 = vld [vmem:[%s695 + $0x34] sm:$0xf]
        %v742 = vld [vmem:[%s695 + $0x38] sm:$0xf]
        %v743 = vld [vmem:[%s695 + $0x3c] sm:$0xf]
        %v744 = vld [vmem:[%s695 + $0x40] sm:$0xf]
        %v745 = vld [vmem:[%s695 + $0x44] sm:$0xf]
        %v746 = vld [vmem:[%s695 + $0x48] sm:$0xf]
        %v747 = vld [vmem:[%s695 + $0x4c] sm:$0xf]
        %v748 = vld [vmem:[%s695 + $0x50] sm:$0xf]
        %v749 = vld [vmem:[%s695 + $0x54] sm:$0xf]
        %v750 = vld [vmem:[%s695 + $0x58] sm:$0xf]
        %v751 = vld [vmem:[%s695 + $0x5c] sm:$0xf]
        %v752 = vld [vmem:[%s695 + $0x60] sm:$0xf]
        %v753 = vld [vmem:[%s695 + $0x64] sm:$0xf]
        %v754 = vld [vmem:[%s695 + $0x68] sm:$0xf]
        %v755 = vld [vmem:[%s695 + $0x6c] sm:$0xf]
        %v756 = vld [vmem:[%s695 + $0x70] sm:$0xf]
        %v757 = vld [vmem:[%s695 + $0x74] sm:$0xf]
        %v758 = vld [vmem:[%s695 + $0x78] sm:$0xf]
        %v759 = vld [vmem:[%s695 + $0x7c] sm:$0xf]
        %v792 = vunpack.c.l.b16 %v728
        %v793 = vunpack.c.l.b16 %v729
        %v794 = vunpack.c.l.b16 %v730
        %v795 = vunpack.c.l.b16 %v731
        %v796 = vunpack.c.l.b16 %v732
        %v797 = vunpack.c.l.b16 %v733
        %v798 = vunpack.c.l.b16 %v734
        %v799 = vunpack.c.l.b16 %v735
        %v800 = vunpack.c.l.b16 %v736
        %v801 = vunpack.c.l.b16 %v737
        %v802 = vunpack.c.l.b16 %v738
        %v803 = vunpack.c.l.b16 %v739
        %v804 = vunpack.c.l.b16 %v740
        %v805 = vunpack.c.l.b16 %v741
        %v806 = vunpack.c.l.b16 %v742
        %v807 = vunpack.c.l.b16 %v743
        %v808 = vunpack.c.l.b16 %v744
        %v809 = vunpack.c.l.b16 %v745
        %v810 = vunpack.c.l.b16 %v746
        %v811 = vunpack.c.l.b16 %v747
        %v812 = vunpack.c.l.b16 %v748
        %v813 = vunpack.c.l.b16 %v749
        %v814 = vunpack.c.l.b16 %v750
        %v815 = vunpack.c.l.b16 %v751
        %v816 = vunpack.c.l.b16 %v752
        %v817 = vunpack.c.l.b16 %v753
        %v818 = vunpack.c.l.b16 %v754
        %v819 = vunpack.c.l.b16 %v755
        %v820 = vunpack.c.l.b16 %v756
        %v821 = vunpack.c.l.b16 %v757
        %v822 = vunpack.c.l.b16 %v758
        %v823 = vunpack.c.l.b16 %v759
        %v824 = vpack.c.b16 %v793, %v792
        %v825 = vpack.c.b16 %v795, %v794
        %v826 = vpack.c.b16 %v797, %v796
        %v827 = vpack.c.b16 %v799, %v798
        %v828 = vpack.c.b16 %v801, %v800
        %v829 = vpack.c.b16 %v803, %v802
        %v830 = vpack.c.b16 %v805, %v804
        %v831 = vpack.c.b16 %v807, %v806
        %v832 = vpack.c.b16 %v809, %v808
        %v833 = vpack.c.b16 %v811, %v810
        %v834 = vpack.c.b16 %v813, %v812
        %v835 = vpack.c.b16 %v815, %v814
        %v836 = vpack.c.b16 %v817, %v816
        %v837 = vpack.c.b16 %v819, %v818
        %v838 = vpack.c.b16 %v821, %v820
        %v839 = vpack.c.b16 %v823, %v822
        %v844 = vunpack.c.l.b16 %v724
        %v845 = vunpack.c.l.b16 %v725
        %v846 = vunpack.c.l.b16 %v726
        %v847 = vunpack.c.l.b16 %v727
        %v848 = vpack.c.b16 %v845, %v844
        %v849 = vpack.c.b16 %v847, %v846
        %vm851 = vcmask 220160
        %v853 = vsel %vm851, %v824, 0
        %v856 = vsel %vm851, %v825, 0
        %v859 = vsel %vm851, %v826, 0
        %v862 = vsel %vm851, %v827, 0
        %v865 = vsel %vm851, %v828, 0
        %v868 = vsel %vm851, %v829, 0
        %v871 = vsel %vm851, %v830, 0
        %v874 = vsel %vm851, %v831, 0
        %v877 = vsel %vm851, %v832, 0
        %v880 = vsel %vm851, %v833, 0
        %v883 = vsel %vm851, %v834, 0
        %v886 = vsel %vm851, %v835, 0
        %v889 = vsel %vm851, %v836, 0
        %v892 = vsel %vm851, %v837, 0
        %v895 = vsel %vm851, %v838, 0
        %v898 = vsel %vm851, %v839, 0
        %vm900 = vcmask 1044480
        %vm901 = vcmask 1045504
        %v902 = vsel %vm900, 4294967295, 65535
        %v903 = vsel %vm901, %v902, 0
        %v905 = vand.u32 %v849, %v903
        %907 = vmatprep.subr.bf16.mxu0 0
        %908 = vmatpush1.bf16.msra.mxu0 %v848
        %909 = vmatprep.subr.bf16.mxu0 0
        %910 = vmatpush1.bf16.msra.mxu0 %v905
        %911 = vmatprep.subr.bf16.mxu0 0
        %912 = vmatpush1.bf16.msra.mxu0 0
        %913 = vmatprep.subr.bf16.mxu0 0
        %914 = vmatpush1.bf16.msra.mxu0 0
        %915 = vmatprep.subr.bf16.mxu0 0
        %916 = vmatpush1.bf16.msra.mxu0 0
        %917 = vmatprep.subr.bf16.mxu0 0
        %918 = vmatpush1.bf16.msra.mxu0 0
        %919 = vmatprep.subr.bf16.mxu0 0
        %920 = vmatpush1.bf16.msra.mxu0 0
        %921 = vmatprep.subr.bf16.mxu0 0
        %922 = vmatpush1.bf16.msra.mxu0 0
        %923 = vmatprep.subr.bf16.mxu0 0
        %924 = vmatpush1.bf16.msra.mxu0 0
        %925 = vmatprep.subr.bf16.mxu0 0
        %926 = vmatpush1.bf16.msra.mxu0 0
        %927 = vmatprep.subr.bf16.mxu0 0
        %928 = vmatpush1.bf16.msra.mxu0 0
        %929 = vmatprep.subr.bf16.mxu0 0
        %930 = vmatpush1.bf16.msra.mxu0 0
        %931 = vmatprep.subr.bf16.mxu0 0
        %932 = vmatpush1.bf16.msra.mxu0 0
        %933 = vmatprep.subr.bf16.mxu0 0
        %934 = vmatpush1.bf16.msra.mxu0 0
        %935 = vmatprep.subr.bf16.mxu0 0
        %936 = vmatpush1.bf16.msra.mxu0 0
        %937 = vmatprep.subr.bf16.mxu0 0
        %938 = vmatpush1.bf16.msra.mxu0 0
        %939 = vmatprep.mubr.bf16.mxu0 0
        %940 = vmatmul.mubr.bf16.gmra.mrb[0].mxu0 %v853
        %v941 = vpop.f32.mrb[0].mxu0
        %v942 = vadd.f32 0.0, %v941
        %v943 = vpop.f32.mrb[0].mxu0
        %v944 = vpop.f32.mrb[0].mxu0
        %v945 = vadd.f32 0.0, %v944
        %v946 = vpop.f32.mrb[0].mxu0
        %947 = vmatprep.mubr.bf16.mxu0 0
        %948 = vmatmul.mubr.bf16.gmra.mrb[0].mxu0 %v856
        %v949 = vpop.f32.mrb[0].mxu0
        %v950 = vadd.f32 0.0, %v949
        %v951 = vpop.f32.mrb[0].mxu0
        %v952 = vpop.f32.mrb[0].mxu0
        %v953 = vadd.f32 0.0, %v952
        %v954 = vpop.f32.mrb[0].mxu0
        %955 = vmatprep.mubr.bf16.mxu0 0
        %956 = vmatmul.mubr.bf16.gmra.mrb[0].mxu0 %v859
        %v957 = vpop.f32.mrb[0].mxu0
        %v958 = vadd.f32 0.0, %v957
        %v959 = vpop.f32.mrb[0].mxu0
        %v960 = vpop.f32.mrb[0].mxu0
        %v961 = vadd.f32 0.0, %v960
        %v962 = vpop.f32.mrb[0].mxu0
        %963 = vmatprep.mubr.bf16.mxu0 0
        %964 = vmatmul.mubr.bf16.gmra.mrb[0].mxu0 %v862
        %v965 = vpop.f32.mrb[0].mxu0
        %v966 = vadd.f32 0.0, %v965
        %v967 = vpop.f32.mrb[0].mxu0
        %v968 = vpop.f32.mrb[0].mxu0
        %v969 = vadd.f32 0.0, %v968
        %v970 = vpop.f32.mrb[0].mxu0
        %971 = vmatprep.mubr.bf16.mxu0 0
        %972 = vmatmul.mubr.bf16.gmra.mrb[0].mxu0 %v865
        %v973 = vpop.f32.mrb[0].mxu0
        %v974 = vadd.f32 0.0, %v973
        %v975 = vpop.f32.mrb[0].mxu0
        %v976 = vpop.f32.mrb[0].mxu0
        %v977 = vadd.f32 0.0, %v976
        %v978 = vpop.f32.mrb[0].mxu0
        %979 = vmatprep.mubr.bf16.mxu0 0
        %980 = vmatmul.mubr.bf16.gmra.mrb[0].mxu0 %v868
        %v981 = vpop.f32.mrb[0].mxu0
        %v982 = vadd.f32 0.0, %v981
        %v983 = vpop.f32.mrb[0].mxu0
        %v984 = vpop.f32.mrb[0].mxu0
        %v985 = vadd.f32 0.0, %v984
        %v986 = vpop.f32.mrb[0].mxu0
        %987 = vmatprep.mubr.bf16.mxu0 0
        %988 = vmatmul.mubr.bf16.gmra.mrb[0].mxu0 %v871
        %v989 = vpop.f32.mrb[0].mxu0
        %v990 = vadd.f32 0.0, %v989
        %v991 = vpop.f32.mrb[0].mxu0
        %v992 = vpop.f32.mrb[0].mxu0
        %v993 = vadd.f32 0.0, %v992
        %v994 = vpop.f32.mrb[0].mxu0
        %995 = vmatprep.mubr.bf16.mxu0 0
        %996 = vmatmul.mubr.bf16.gmra.mrb[0].mxu0 %v874
        %v997 = vpop.f32.mrb[0].mxu0
        %v998 = vadd.f32 0.0, %v997
        %v999 = vpop.f32.mrb[0].mxu0
        %v1000 = vpop.f32.mrb[0].mxu0
        %v1001 = vadd.f32 0.0, %v1000
        %v1002 = vpop.f32.mrb[0].mxu0
        %1003 = vmatprep.mubr.bf16.mxu0 0
        %1004 = vmatmul.mubr.bf16.gmra.mrb[0].mxu0 %v877
        %v1005 = vpop.f32.mrb[0].mxu0
        %v1006 = vadd.f32 0.0, %v1005
        %v1007 = vpop.f32.mrb[0].mxu0
        %v1008 = vpop.f32.mrb[0].mxu0
        %v1009 = vadd.f32 0.0, %v1008
        %v1010 = vpop.f32.mrb[0].mxu0
        %1011 = vmatprep.mubr.bf16.mxu0 0
        %1012 = vmatmul.mubr.bf16.gmra.mrb[0].mxu0 %v880
        %v1013 = vpop.f32.mrb[0].mxu0
        %v1014 = vadd.f32 0.0, %v1013
        %v1015 = vpop.f32.mrb[0].mxu0
        %v1016 = vpop.f32.mrb[0].mxu0
        %v1017 = vadd.f32 0.0, %v1016
        %v1018 = vpop.f32.mrb[0].mxu0
        %1019 = vmatprep.mubr.bf16.mxu0 0
        %1020 = vmatmul.mubr.bf16.gmra.mrb[0].mxu0 %v883
        %v1021 = vpop.f32.mrb[0].mxu0
        %v1022 = vadd.f32 0.0, %v1021
        %v1023 = vpop.f32.mrb[0].mxu0
        %v1024 = vpop.f32.mrb[0].mxu0
        %v1025 = vadd.f32 0.0, %v1024
        %v1026 = vpop.f32.mrb[0].mxu0
        %1027 = vmatprep.mubr.bf16.mxu0 0
        %1028 = vmatmul.mubr.bf16.gmra.mrb[0].mxu0 %v886
        %v1029 = vpop.f32.mrb[0].mxu0
        %v1030 = vadd.f32 0.0, %v1029
        %v1031 = vpop.f32.mrb[0].mxu0
        %v1032 = vpop.f32.mrb[0].mxu0
        %v1033 = vadd.f32 0.0, %v1032
        %v1034 = vpop.f32.mrb[0].mxu0
        %1035 = vmatprep.mubr.bf16.mxu0 0
        %1036 = vmatmul.mubr.bf16.gmra.mrb[0].mxu0 %v889
        %v1037 = vpop.f32.mrb[0].mxu0
        %v1038 = vadd.f32 0.0, %v1037
        %v1039 = vpop.f32.mrb[0].mxu0
        %v1040 = vpop.f32.mrb[0].mxu0
        %v1041 = vadd.f32 0.0, %v1040
        %v1042 = vpop.f32.mrb[0].mxu0
        %1043 = vmatprep.mubr.bf16.mxu0 0
        %1044 = vmatmul.mubr.bf16.gmra.mrb[0].mxu0 %v892
        %v1045 = vpop.f32.mrb[0].mxu0
        %v1046 = vadd.f32 0.0, %v1045
        %v1047 = vpop.f32.mrb[0].mxu0
        %v1048 = vpop.f32.mrb[0].mxu0
        %v1049 = vadd.f32 0.0, %v1048
        %v1050 = vpop.f32.mrb[0].mxu0
        %1051 = vmatprep.mubr.bf16.mxu0 0
        %1052 = vmatmul.mubr.bf16.gmra.mrb[0].mxu0 %v895
        %v1053 = vpop.f32.mrb[0].mxu0
        %v1054 = vadd.f32 0.0, %v1053
        %v1055 = vpop.f32.mrb[0].mxu0
        %v1056 = vpop.f32.mrb[0].mxu0
        %v1057 = vadd.f32 0.0, %v1056
        %v1058 = vpop.f32.mrb[0].mxu0
        %1059 = vmatprep.mubr.bf16.mxu0 0
        %1060 = vmatmul.mubr.bf16.gmra.mrb[0].mxu0 %v898
        %v1061 = vpop.f32.mrb[0].mxu0
        %v1062 = vadd.f32 0.0, %v1061
        %v1063 = vpop.f32.mrb[0].mxu0
        %v1064 = vpop.f32.mrb[0].mxu0
        %v1065 = vadd.f32 0.0, %v1064
        %v1066 = vpop.f32.mrb[0].mxu0
        %1067 = vdwg.mxu0
        %s1068 = scalar_lea.vmem %s695, 128 [#allocation2]
        %v1069 = vld [vmem:[%s1068] sm:$0xf]
        %v1070 = vld [vmem:[%s1068 + $0x4] sm:$0xf]
        %v1071 = vld [vmem:[%s1068 + $0x8] sm:$0xf]
        %v1072 = vld [vmem:[%s1068 + $0xc] sm:$0xf]
        %v1073 = vld [vmem:[%s1068 + $0x10] sm:$0xf]
        %v1074 = vld [vmem:[%s1068 + $0x14] sm:$0xf]
        %v1075 = vld [vmem:[%s1068 + $0x18] sm:$0xf]
        %v1076 = vld [vmem:[%s1068 + $0x1c] sm:$0xf]
        %v1077 = vld [vmem:[%s1068 + $0x20] sm:$0xf]
        %v1078 = vld [vmem:[%s1068 + $0x24] sm:$0xf]
        %v1079 = vld [vmem:[%s1068 + $0x28] sm:$0xf]
        %v1080 = vld [vmem:[%s1068 + $0x2c] sm:$0xf]
        %v1081 = vld [vmem:[%s1068 + $0x30] sm:$0xf]
        %v1082 = vld [vmem:[%s1068 + $0x34] sm:$0xf]
        %v1083 = vld [vmem:[%s1068 + $0x38] sm:$0xf]
        %v1084 = vld [vmem:[%s1068 + $0x3c] sm:$0xf]
        %v1085 = vld [vmem:[%s1068 + $0x40] sm:$0xf]
        %v1086 = vld [vmem:[%s1068 + $0x44] sm:$0xf]
        %v1087 = vld [vmem:[%s1068 + $0x48] sm:$0xf]
        %v1088 = vld [vmem:[%s1068 + $0x4c] sm:$0xf]
        %v1089 = vld [vmem:[%s1068 + $0x50] sm:$0xf]
        %v1090 = vld [vmem:[%s1068 + $0x54] sm:$0xf]
        %v1091 = vld [vmem:[%s1068 + $0x58] sm:$0xf]
        %v1092 = vld [vmem:[%s1068 + $0x5c] sm:$0xf]
        %v1093 = vld [vmem:[%s1068 + $0x60] sm:$0xf]
        %v1094 = vld [vmem:[%s1068 + $0x64] sm:$0xf]
        %v1095 = vld [vmem:[%s1068 + $0x68] sm:$0xf]
        %v1096 = vld [vmem:[%s1068 + $0x6c] sm:$0xf]
        %v1097 = vld [vmem:[%s1068 + $0x70] sm:$0xf]
        %v1098 = vld [vmem:[%s1068 + $0x74] sm:$0xf]
        %v1099 = vld [vmem:[%s1068 + $0x78] sm:$0xf]
        %v1100 = vld [vmem:[%s1068 + $0x7c] sm:$0xf]
        %v1133 = vunpack.c.l.b16 %v1069
        %v1134 = vunpack.c.l.b16 %v1070
        %v1135 = vunpack.c.l.b16 %v1071
        %v1136 = vunpack.c.l.b16 %v1072
        %v1137 = vunpack.c.l.b16 %v1073
        %v1138 = vunpack.c.l.b16 %v1074
        %v1139 = vunpack.c.l.b16 %v1075
        %v1140 = vunpack.c.l.b16 %v1076
        %v1141 = vunpack.c.l.b16 %v1077
        %v1142 = vunpack.c.l.b16 %v1078
        %v1143 = vunpack.c.l.b16 %v1079
        %v1144 = vunpack.c.l.b16 %v1080
        %v1145 = vunpack.c.l.b16 %v1081
        %v1146 = vunpack.c.l.b16 %v1082
        %v1147 = vunpack.c.l.b16 %v1083
        %v1148 = vunpack.c.l.b16 %v1084
        %v1149 = vunpack.c.l.b16 %v1085
        %v1150 = vunpack.c.l.b16 %v1086
        %v1151 = vunpack.c.l.b16 %v1087
        %v1152 = vunpack.c.l.b16 %v1088
        %v1153 = vunpack.c.l.b16 %v1089
        %v1154 = vunpack.c.l.b16 %v1090
        %v1155 = vunpack.c.l.b16 %v1091
        %v1156 = vunpack.c.l.b16 %v1092
        %v1157 = vunpack.c.l.b16 %v1093
        %v1158 = vunpack.c.l.b16 %v1094
        %v1159 = vunpack.c.l.b16 %v1095
        %v1160 = vunpack.c.l.b16 %v1096
        %v1161 = vunpack.c.l.b16 %v1097
        %v1162 = vunpack.c.l.b16 %v1098
        %v1163 = vunpack.c.l.b16 %v1099
        %v1164 = vunpack.c.l.b16 %v1100
        %v1165 = vpack.c.b16 %v1134, %v1133
        %v1166 = vpack.c.b16 %v1136, %v1135
        %v1167 = vpack.c.b16 %v1138, %v1137
        %v1168 = vpack.c.b16 %v1140, %v1139
        %v1169 = vpack.c.b16 %v1142, %v1141
        %v1170 = vpack.c.b16 %v1144, %v1143
        %v1171 = vpack.c.b16 %v1146, %v1145
        %v1172 = vpack.c.b16 %v1148, %v1147
        %v1173 = vpack.c.b16 %v1150, %v1149
        %v1174 = vpack.c.b16 %v1152, %v1151
        %v1175 = vpack.c.b16 %v1154, %v1153
        %v1176 = vpack.c.b16 %v1156, %v1155
        %v1177 = vpack.c.b16 %v1158, %v1157
        %v1178 = vpack.c.b16 %v1160, %v1159
        %v1179 = vpack.c.b16 %v1162, %v1161
        %v1180 = vpack.c.b16 %v1164, %v1163
        %v1182 = vsel %vm851, %v1165, 0
        %v1185 = vsel %vm851, %v1166, 0
        %v1188 = vsel %vm851, %v1167, 0
        %v1191 = vsel %vm851, %v1168, 0
        %v1194 = vsel %vm851, %v1169, 0
        %v1197 = vsel %vm851, %v1170, 0
        %v1200 = vsel %vm851, %v1171, 0
        %v1203 = vsel %vm851, %v1172, 0
        %v1206 = vsel %vm851, %v1173, 0
        %v1209 = vsel %vm851, %v1174, 0
        %v1212 = vsel %vm851, %v1175, 0
        %v1215 = vsel %vm851, %v1176, 0
        %v1218 = vsel %vm851, %v1177, 0
        %v1221 = vsel %vm851, %v1178, 0
        %v1224 = vsel %vm851, %v1179, 0
        %v1227 = vsel %vm851, %v1180, 0
        %1229 = vmatprep.subr.bf16.mxu0 0
        %1230 = vmatpush1.bf16.msra.mxu0 %v848
        %1231 = vmatprep.subr.bf16.mxu0 0
        %1232 = vmatpush1.bf16.msra.mxu0 %v905
        %1233 = vmatprep.subr.bf16.mxu0 0
        %1234 = vmatpush1.bf16.msra.mxu0 0
        %1235 = vmatprep.subr.bf16.mxu0 0
        %1236 = vmatpush1.bf16.msra.mxu0 0
        %1237 = vmatprep.subr.bf16.mxu0 0
        %1238 = vmatpush1.bf16.msra.mxu0 0
        %1239 = vmatprep.subr.bf16.mxu0 0
        %1240 = vmatpush1.bf16.msra.mxu0 0
        %1241 = vmatprep.subr.bf16.mxu0 0
        %1242 = vmatpush1.bf16.msra.mxu0 0
        %1243 = vmatprep.subr.bf16.mxu0 0
        %1244 = vmatpush1.bf16.msra.mxu0 0
        %1245 = vmatprep.subr.bf16.mxu0 0
        %1246 = vmatpush1.bf16.msra.mxu0 0
        %1247 = vmatprep.subr.bf16.mxu0 0
        %1248 = vmatpush1.bf16.msra.mxu0 0
        %1249 = vmatprep.subr.bf16.mxu0 0
        %1250 = vmatpush1.bf16.msra.mxu0 0
        %1251 = vmatprep.subr.bf16.mxu0 0
        %1252 = vmatpush1.bf16.msra.mxu0 0
        %1253 = vmatprep.subr.bf16.mxu0 0
        %1254 = vmatpush1.bf16.msra.mxu0 0
        %1255 = vmatprep.subr.bf16.mxu0 0
        %1256 = vmatpush1.bf16.msra.mxu0 0
        %1257 = vmatprep.subr.bf16.mxu0 0
        %1258 = vmatpush1.bf16.msra.mxu0 0
        %1259 = vmatprep.subr.bf16.mxu0 0
        %1260 = vmatpush1.bf16.msra.mxu0 0
        %1261 = vmatprep.mubr.bf16.mxu0 0
        %1262 = vmatmul.mubr.bf16.gmra.mrb[0].mxu0 %v1182
        %v1263 = vpop.f32.mrb[0].mxu0
        %v1264 = vadd.f32 0.0, %v1263
        %v1265 = vpop.f32.mrb[0].mxu0
        %v1266 = vpop.f32.mrb[0].mxu0
        %v1267 = vadd.f32 0.0, %v1266
        %v1268 = vpop.f32.mrb[0].mxu0
        %1269 = vmatprep.mubr.bf16.mxu0 0
        %1270 = vmatmul.mubr.bf16.gmra.mrb[0].mxu0 %v1185
        %v1271 = vpop.f32.mrb[0].mxu0
        %v1272 = vadd.f32 0.0, %v1271
        %v1273 = vpop.f32.mrb[0].mxu0
        %v1274 = vpop.f32.mrb[0].mxu0
        %v1275 = vadd.f32 0.0, %v1274
        %v1276 = vpop.f32.mrb[0].mxu0
        %1277 = vmatprep.mubr.bf16.mxu0 0
        %1278 = vmatmul.mubr.bf16.gmra.mrb[0].mxu0 %v1188
        %v1279 = vpop.f32.mrb[0].mxu0
        %v1280 = vadd.f32 0.0, %v1279
        %v1281 = vpop.f32.mrb[0].mxu0
        %v1282 = vpop.f32.mrb[0].mxu0
        %v1283 = vadd.f32 0.0, %v1282
        %v1284 = vpop.f32.mrb[0].mxu0
        %1285 = vmatprep.mubr.bf16.mxu0 0
        %1286 = vmatmul.mubr.bf16.gmra.mrb[0].mxu0 %v1191
        %v1287 = vpop.f32.mrb[0].mxu0
        %v1288 = vadd.f32 0.0, %v1287
        %v1289 = vpop.f32.mrb[0].mxu0
        %v1290 = vpop.f32.mrb[0].mxu0
        %v1291 = vadd.f32 0.0, %v1290
        %v1292 = vpop.f32.mrb[0].mxu0
        %1293 = vmatprep.mubr.bf16.mxu0 0
        %1294 = vmatmul.mubr.bf16.gmra.mrb[0].mxu0 %v1194
        %v1295 = vpop.f32.mrb[0].mxu0
        %v1296 = vadd.f32 0.0, %v1295
        %v1297 = vpop.f32.mrb[0].mxu0
        %v1298 = vpop.f32.mrb[0].mxu0
        %v1299 = vadd.f32 0.0, %v1298
        %v1300 = vpop.f32.mrb[0].mxu0
        %1301 = vmatprep.mubr.bf16.mxu0 0
        %1302 = vmatmul.mubr.bf16.gmra.mrb[0].mxu0 %v1197
        %v1303 = vpop.f32.mrb[0].mxu0
        %v1304 = vadd.f32 0.0, %v1303
        %v1305 = vpop.f32.mrb[0].mxu0
        %v1306 = vpop.f32.mrb[0].mxu0
        %v1307 = vadd.f32 0.0, %v1306
        %v1308 = vpop.f32.mrb[0].mxu0
        %1309 = vmatprep.mubr.bf16.mxu0 0
        %1310 = vmatmul.mubr.bf16.gmra.mrb[0].mxu0 %v1200
        %v1311 = vpop.f32.mrb[0].mxu0
        %v1312 = vadd.f32 0.0, %v1311
        %v1313 = vpop.f32.mrb[0].mxu0
        %v1314 = vpop.f32.mrb[0].mxu0
        %v1315 = vadd.f32 0.0, %v1314
        %v1316 = vpop.f32.mrb[0].mxu0
        %1317 = vmatprep.mubr.bf16.mxu0 0
        %1318 = vmatmul.mubr.bf16.gmra.mrb[0].mxu0 %v1203
        %v1319 = vpop.f32.mrb[0].mxu0
        %v1320 = vadd.f32 0.0, %v1319
        %v1321 = vpop.f32.mrb[0].mxu0
        %v1322 = vpop.f32.mrb[0].mxu0
        %v1323 = vadd.f32 0.0, %v1322
        %v1324 = vpop.f32.mrb[0].mxu0
        %1325 = vmatprep.mubr.bf16.mxu0 0
        %1326 = vmatmul.mubr.bf16.gmra.mrb[0].mxu0 %v1206
        %v1327 = vpop.f32.mrb[0].mxu0
        %v1328 = vadd.f32 0.0, %v1327
        %v1329 = vpop.f32.mrb[0].mxu0
        %v1330 = vpop.f32.mrb[0].mxu0
        %v1331 = vadd.f32 0.0, %v1330
        %v1332 = vpop.f32.mrb[0].mxu0
        %1333 = vmatprep.mubr.bf16.mxu0 0
        %1334 = vmatmul.mubr.bf16.gmra.mrb[0].mxu0 %v1209
        %v1335 = vpop.f32.mrb[0].mxu0
        %v1336 = vadd.f32 0.0, %v1335
        %v1337 = vpop.f32.mrb[0].mxu0
        %v1338 = vpop.f32.mrb[0].mxu0
        %v1339 = vadd.f32 0.0, %v1338
        %v1340 = vpop.f32.mrb[0].mxu0
        %1341 = vmatprep.mubr.bf16.mxu0 0
        %1342 = vmatmul.mubr.bf16.gmra.mrb[0].mxu0 %v1212
        %v1343 = vpop.f32.mrb[0].mxu0
        %v1344 = vadd.f32 0.0, %v1343
        %v1345 = vpop.f32.mrb[0].mxu0
        %v1346 = vpop.f32.mrb[0].mxu0
        %v1347 = vadd.f32 0.0, %v1346
        %v1348 = vpop.f32.mrb[0].mxu0
        %1349 = vmatprep.mubr.bf16.mxu0 0
        %1350 = vmatmul.mubr.bf16.gmra.mrb[0].mxu0 %v1215
        %v1351 = vpop.f32.mrb[0].mxu0
        %v1352 = vadd.f32 0.0, %v1351
        %v1353 = vpop.f32.mrb[0].mxu0
        %v1354 = vpop.f32.mrb[0].mxu0
        %v1355 = vadd.f32 0.0, %v1354
        %v1356 = vpop.f32.mrb[0].mxu0
        %1357 = vmatprep.mubr.bf16.mxu0 0
        %1358 = vmatmul.mubr.bf16.gmra.mrb[0].mxu0 %v1218
        %v1359 = vpop.f32.mrb[0].mxu0
        %v1360 = vadd.f32 0.0, %v1359
        %v1361 = vpop.f32.mrb[0].mxu0
        %v1362 = vpop.f32.mrb[0].mxu0
        %v1363 = vadd.f32 0.0, %v1362
        %v1364 = vpop.f32.mrb[0].mxu0
        %1365 = vmatprep.mubr.bf16.mxu0 0
        %1366 = vmatmul.mubr.bf16.gmra.mrb[0].mxu0 %v1221
        %v1367 = vpop.f32.mrb[0].mxu0
        %v1368 = vadd.f32 0.0, %v1367
        %v1369 = vpop.f32.mrb[0].mxu0
        %v1370 = vpop.f32.mrb[0].mxu0
        %v1371 = vadd.f32 0.0, %v1370
        %v1372 = vpop.f32.mrb[0].mxu0
        %1373 = vmatprep.mubr.bf16.mxu0 0
        %1374 = vmatmul.mubr.bf16.gmra.mrb[0].mxu0 %v1224
        %v1375 = vpop.f32.mrb[0].mxu0
        %v1376 = vadd.f32 0.0, %v1375
        %v1377 = vpop.f32.mrb[0].mxu0
        %v1378 = vpop.f32.mrb[0].mxu0
        %v1379 = vadd.f32 0.0, %v1378
        %v1380 = vpop.f32.mrb[0].mxu0
        %1381 = vmatprep.mubr.bf16.mxu0 0
        %1382 = vmatmul.mubr.bf16.gmra.mrb[0].mxu0 %v1227
        %v1383 = vpop.f32.mrb[0].mxu0
        %v1384 = vadd.f32 0.0, %v1383
        %v1385 = vpop.f32.mrb[0].mxu0
        %v1386 = vpop.f32.mrb[0].mxu0
        %v1387 = vadd.f32 0.0, %v1386
        %v1388 = vpop.f32.mrb[0].mxu0
        %1389 = vdwg.mxu0
        %v1390 = vmax.f32 %v942, %v1264
        %v1391 = vmax.f32 %v945, %v1267
        %v1392 = vmax.f32 %v950, %v1272
        %v1393 = vmax.f32 %v953, %v1275
        %v1394 = vmax.f32 %v958, %v1280
        %v1395 = vmax.f32 %v961, %v1283
        %v1396 = vmax.f32 %v966, %v1288
        %v1397 = vmax.f32 %v969, %v1291
        %v1398 = vmax.f32 %v974, %v1296
        %v1399 = vmax.f32 %v977, %v1299
        %v1400 = vmax.f32 %v982, %v1304
        %v1401 = vmax.f32 %v985, %v1307
        %v1402 = vmax.f32 %v990, %v1312
        %v1403 = vmax.f32 %v993, %v1315
        %v1404 = vmax.f32 %v998, %v1320
        %v1405 = vmax.f32 %v1001, %v1323
        %v1406 = vmax.f32 %v1006, %v1328
        %v1407 = vmax.f32 %v1009, %v1331
        %v1408 = vmax.f32 %v1014, %v1336
        %v1409 = vmax.f32 %v1017, %v1339
        %v1410 = vmax.f32 %v1022, %v1344
        %v1411 = vmax.f32 %v1025, %v1347
        %v1412 = vmax.f32 %v1030, %v1352
        %v1413 = vmax.f32 %v1033, %v1355
        %v1414 = vmax.f32 %v1038, %v1360
        %v1415 = vmax.f32 %v1041, %v1363
        %v1416 = vmax.f32 %v1046, %v1368
        %v1417 = vmax.f32 %v1049, %v1371
        %v1418 = vmax.f32 %v1054, %v1376
        %v1419 = vmax.f32 %v1057, %v1379
        %v1420 = vmax.f32 %v1062, %v1384
        %v1421 = vmax.f32 %v1065, %v1387
        %s1422 = scalar_lea.vmem %s695, 256 [#allocation2]
        %v1423 = vld [vmem:[%s1422] sm:$0xf]
        %v1424 = vld [vmem:[%s1422 + $0x4] sm:$0xf]
        %v1425 = vld [vmem:[%s1422 + $0x8] sm:$0xf]
        %v1426 = vld [vmem:[%s1422 + $0xc] sm:$0xf]
        %v1427 = vld [vmem:[%s1422 + $0x10] sm:$0xf]
        %v1428 = vld [vmem:[%s1422 + $0x14] sm:$0xf]
        %v1429 = vld [vmem:[%s1422 + $0x18] sm:$0xf]
        %v1430 = vld [vmem:[%s1422 + $0x1c] sm:$0xf]
        %v1431 = vld [vmem:[%s1422 + $0x20] sm:$0xf]
        %v1432 = vld [vmem:[%s1422 + $0x24] sm:$0xf]
        %v1433 = vld [vmem:[%s1422 + $0x28] sm:$0xf]
        %v1434 = vld [vmem:[%s1422 + $0x2c] sm:$0xf]
        %v1435 = vld [vmem:[%s1422 + $0x30] sm:$0xf]
        %v1436 = vld [vmem:[%s1422 + $0x34] sm:$0xf]
        %v1437 = vld [vmem:[%s1422 + $0x38] sm:$0xf]
        %v1438 = vld [vmem:[%s1422 + $0x3c] sm:$0xf]
        %v1439 = vld [vmem:[%s1422 + $0x40] sm:$0xf]
        %v1440 = vld [vmem:[%s1422 + $0x44] sm:$0xf]
        %v1441 = vld [vmem:[%s1422 + $0x48] sm:$0xf]
        %v1442 = vld [vmem:[%s1422 + $0x4c] sm:$0xf]
        %v1443 = vld [vmem:[%s1422 + $0x50] sm:$0xf]
        %v1444 = vld [vmem:[%s1422 + $0x54] sm:$0xf]
        %v1445 = vld [vmem:[%s1422 + $0x58] sm:$0xf]
        %v1446 = vld [vmem:[%s1422 + $0x5c] sm:$0xf]
        %v1447 = vld [vmem:[%s1422 + $0x60] sm:$0xf]
        %v1448 = vld [vmem:[%s1422 + $0x64] sm:$0xf]
        %v1449 = vld [vmem:[%s1422 + $0x68] sm:$0xf]
        %v1450 = vld [vmem:[%s1422 + $0x6c] sm:$0xf]
        %v1451 = vld [vmem:[%s1422 + $0x70] sm:$0xf]
        %v1452 = vld [vmem:[%s1422 + $0x74] sm:$0xf]
        %v1453 = vld [vmem:[%s1422 + $0x78] sm:$0xf]
        %v1454 = vld [vmem:[%s1422 + $0x7c] sm:$0xf]
        %v1487 = vunpack.c.l.b16 %v1423
        %v1488 = vunpack.c.l.b16 %v1424
        %v1489 = vunpack.c.l.b16 %v1425
        %v1490 = vunpack.c.l.b16 %v1426
        %v1491 = vunpack.c.l.b16 %v1427
        %v1492 = vunpack.c.l.b16 %v1428
        %v1493 = vunpack.c.l.b16 %v1429
        %v1494 = vunpack.c.l.b16 %v1430
        %v1495 = vunpack.c.l.b16 %v1431
        %v1496 = vunpack.c.l.b16 %v1432
        %v1497 = vunpack.c.l.b16 %v1433
        %v1498 = vunpack.c.l.b16 %v1434
        %v1499 = vunpack.c.l.b16 %v1435
        %v1500 = vunpack.c.l.b16 %v1436
        %v1501 = vunpack.c.l.b16 %v1437
        %v1502 = vunpack.c.l.b16 %v1438
        %v1503 = vunpack.c.l.b16 %v1439
        %v1504 = vunpack.c.l.b16 %v1440
        %v1505 = vunpack.c.l.b16 %v1441
        %v1506 = vunpack.c.l.b16 %v1442
        %v1507 = vunpack.c.l.b16 %v1443
        %v1508 = vunpack.c.l.b16 %v1444
        %v1509 = vunpack.c.l.b16 %v1445
        %v1510 = vunpack.c.l.b16 %v1446
        %v1511 = vunpack.c.l.b16 %v1447
        %v1512 = vunpack.c.l.b16 %v1448
        %v1513 = vunpack.c.l.b16 %v1449
        %v1514 = vunpack.c.l.b16 %v1450
        %v1515 = vunpack.c.l.b16 %v1451
        %v1516 = vunpack.c.l.b16 %v1452
        %v1517 = vunpack.c.l.b16 %v1453
        %v1518 = vunpack.c.l.b16 %v1454
        %v1519 = vpack.c.b16 %v1488, %v1487
        %v1520 = vpack.c.b16 %v1490, %v1489
        %v1521 = vpack.c.b16 %v1492, %v1491
        %v1522 = vpack.c.b16 %v1494, %v1493
        %v1523 = vpack.c.b16 %v1496, %v1495
        %v1524 = vpack.c.b16 %v1498, %v1497
        %v1525 = vpack.c.b16 %v1500, %v1499
        %v1526 = vpack.c.b16 %v1502, %v1501
        %v1527 = vpack.c.b16 %v1504, %v1503
        %v1528 = vpack.c.b16 %v1506, %v1505
        %v1529 = vpack.c.b16 %v1508, %v1507
        %v1530 = vpack.c.b16 %v1510, %v1509
        %v1531 = vpack.c.b16 %v1512, %v1511
        %v1532 = vpack.c.b16 %v1514, %v1513
        %v1533 = vpack.c.b16 %v1516, %v1515
        %v1534 = vpack.c.b16 %v1518, %v1517
        %v1536 = vsel %vm851, %v1519, 0
        %v1539 = vsel %vm851, %v1520, 0
        %v1542 = vsel %vm851, %v1521, 0
        %v1545 = vsel %vm851, %v1522, 0
        %v1548 = vsel %vm851, %v1523, 0
        %v1551 = vsel %vm851, %v1524, 0
        %v1554 = vsel %vm851, %v1525, 0
        %v1557 = vsel %vm851, %v1526, 0
        %v1560 = vsel %vm851, %v1527, 0
        %v1563 = vsel %vm851, %v1528, 0
        %v1566 = vsel %vm851, %v1529, 0
        %v1569 = vsel %vm851, %v1530, 0
        %v1572 = vsel %vm851, %v1531, 0
        %v1575 = vsel %vm851, %v1532, 0
        %v1578 = vsel %vm851, %v1533, 0
        %v1581 = vsel %vm851, %v1534, 0
        %1583 = vmatprep.subr.bf16.mxu0 0
        %1584 = vmatpush1.bf16.msra.mxu0 %v848
        %1585 = vmatprep.subr.bf16.mxu0 0
        %1586 = vmatpush1.bf16.msra.mxu0 %v905
        %1587 = vmatprep.subr.bf16.mxu0 0
        %1588 = vmatpush1.bf16.msra.mxu0 0
        %1589 = vmatprep.subr.bf16.mxu0 0
        %1590 = vmatpush1.bf16.msra.mxu0 0
        %1591 = vmatprep.subr.bf16.mxu0 0
        %1592 = vmatpush1.bf16.msra.mxu0 0
        %1593 = vmatprep.subr.bf16.mxu0 0
        %1594 = vmatpush1.bf16.msra.mxu0 0
        %1595 = vmatprep.subr.bf16.mxu0 0
        %1596 = vmatpush1.bf16.msra.mxu0 0
        %1597 = vmatprep.subr.bf16.mxu0 0
        %1598 = vmatpush1.bf16.msra.mxu0 0
        %1599 = vmatprep.subr.bf16.mxu0 0
        %1600 = vmatpush1.bf16.msra.mxu0 0
        %1601 = vmatprep.subr.bf16.mxu0 0
        %1602 = vmatpush1.bf16.msra.mxu0 0
        %1603 = vmatprep.subr.bf16.mxu0 0
        %1604 = vmatpush1.bf16.msra.mxu0 0
        %1605 = vmatprep.subr.bf16.mxu0 0
        %1606 = vmatpush1.bf16.msra.mxu0 0
        %1607 = vmatprep.subr.bf16.mxu0 0
        %1608 = vmatpush1.bf16.msra.mxu0 0
        %1609 = vmatprep.subr.bf16.mxu0 0
        %1610 = vmatpush1.bf16.msra.mxu0 0
        %1611 = vmatprep.subr.bf16.mxu0 0
        %1612 = vmatpush1.bf16.msra.mxu0 0
        %1613 = vmatprep.subr.bf16.mxu0 0
        %1614 = vmatpush1.bf16.msra.mxu0 0
        %1615 = vmatprep.mubr.bf16.mxu0 0
        %1616 = vmatmul.mubr.bf16.gmra.mrb[0].mxu0 %v1536
        %v1617 = vpop.f32.mrb[0].mxu0
        %v1618 = vadd.f32 0.0, %v1617
        %v1619 = vpop.f32.mrb[0].mxu0
        %v1620 = vpop.f32.mrb[0].mxu0
        %v1621 = vadd.f32 0.0, %v1620
        %v1622 = vpop.f32.mrb[0].mxu0
        %1623 = vmatprep.mubr.bf16.mxu0 0
        %1624 = vmatmul.mubr.bf16.gmra.mrb[0].mxu0 %v1539
        %v1625 = vpop.f32.mrb[0].mxu0
        %v1626 = vadd.f32 0.0, %v1625
        %v1627 = vpop.f32.mrb[0].mxu0
        %v1628 = vpop.f32.mrb[0].mxu0
        %v1629 = vadd.f32 0.0, %v1628
        %v1630 = vpop.f32.mrb[0].mxu0
        %1631 = vmatprep.mubr.bf16.mxu0 0
        %1632 = vmatmul.mubr.bf16.gmra.mrb[0].mxu0 %v1542
        %v1633 = vpop.f32.mrb[0].mxu0
        %v1634 = vadd.f32 0.0, %v1633
        %v1635 = vpop.f32.mrb[0].mxu0
        %v1636 = vpop.f32.mrb[0].mxu0
        %v1637 = vadd.f32 0.0, %v1636
        %v1638 = vpop.f32.mrb[0].mxu0
        %1639 = vmatprep.mubr.bf16.mxu0 0
        %1640 = vmatmul.mubr.bf16.gmra.mrb[0].mxu0 %v1545
        %v1641 = vpop.f32.mrb[0].mxu0
        %v1642 = vadd.f32 0.0, %v1641
        %v1643 = vpop.f32.mrb[0].mxu0
        %v1644 = vpop.f32.mrb[0].mxu0
        %v1645 = vadd.f32 0.0, %v1644
        %v1646 = vpop.f32.mrb[0].mxu0
        %1647 = vmatprep.mubr.bf16.mxu0 0
        %1648 = vmatmul.mubr.bf16.gmra.mrb[0].mxu0 %v1548
        %v1649 = vpop.f32.mrb[0].mxu0
        %v1650 = vadd.f32 0.0, %v1649
        %v1651 = vpop.f32.mrb[0].mxu0
        %v1652 = vpop.f32.mrb[0].mxu0
        %v1653 = vadd.f32 0.0, %v1652
        %v1654 = vpop.f32.mrb[0].mxu0
        %1655 = vmatprep.mubr.bf16.mxu0 0
        %1656 = vmatmul.mubr.bf16.gmra.mrb[0].mxu0 %v1551
        %v1657 = vpop.f32.mrb[0].mxu0
        %v1658 = vadd.f32 0.0, %v1657
        %v1659 = vpop.f32.mrb[0].mxu0
        %v1660 = vpop.f32.mrb[0].mxu0
        %v1661 = vadd.f32 0.0, %v1660
        %v1662 = vpop.f32.mrb[0].mxu0
        %1663 = vmatprep.mubr.bf16.mxu0 0
        %1664 = vmatmul.mubr.bf16.gmra.mrb[0].mxu0 %v1554
        %v1665 = vpop.f32.mrb[0].mxu0
        %v1666 = vadd.f32 0.0, %v1665
        %v1667 = vpop.f32.mrb[0].mxu0
        %v1668 = vpop.f32.mrb[0].mxu0
        %v1669 = vadd.f32 0.0, %v1668
        %v1670 = vpop.f32.mrb[0].mxu0
        %1671 = vmatprep.mubr.bf16.mxu0 0
        %1672 = vmatmul.mubr.bf16.gmra.mrb[0].mxu0 %v1557
        %v1673 = vpop.f32.mrb[0].mxu0
        %v1674 = vadd.f32 0.0, %v1673
        %v1675 = vpop.f32.mrb[0].mxu0
        %v1676 = vpop.f32.mrb[0].mxu0
        %v1677 = vadd.f32 0.0, %v1676
        %v1678 = vpop.f32.mrb[0].mxu0
        %1679 = vmatprep.mubr.bf16.mxu0 0
        %1680 = vmatmul.mubr.bf16.gmra.mrb[0].mxu0 %v1560
        %v1681 = vpop.f32.mrb[0].mxu0
        %v1682 = vadd.f32 0.0, %v1681
        %v1683 = vpop.f32.mrb[0].mxu0
        %v1684 = vpop.f32.mrb[0].mxu0
        %v1685 = vadd.f32 0.0, %v1684
        %v1686 = vpop.f32.mrb[0].mxu0
        %1687 = vmatprep.mubr.bf16.mxu0 0
        %1688 = vmatmul.mubr.bf16.gmra.mrb[0].mxu0 %v1563
        %v1689 = vpop.f32.mrb[0].mxu0
        %v1690 = vadd.f32 0.0, %v1689
        %v1691 = vpop.f32.mrb[0].mxu0
        %v1692 = vpop.f32.mrb[0].mxu0
        %v1693 = vadd.f32 0.0, %v1692
        %v1694 = vpop.f32.mrb[0].mxu0
        %1695 = vmatprep.mubr.bf16.mxu0 0
        %1696 = vmatmul.mubr.bf16.gmra.mrb[0].mxu0 %v1566
        %v1697 = vpop.f32.mrb[0].mxu0
        %v1698 = vadd.f32 0.0, %v1697
        %v1699 = vpop.f32.mrb[0].mxu0
        %v1700 = vpop.f32.mrb[0].mxu0
        %v1701 = vadd.f32 0.0, %v1700
        %v1702 = vpop.f32.mrb[0].mxu0
        %1703 = vmatprep.mubr.bf16.mxu0 0
        %1704 = vmatmul.mubr.bf16.gmra.mrb[0].mxu0 %v1569
        %v1705 = vpop.f32.mrb[0].mxu0
        %v1706 = vadd.f32 0.0, %v1705
        %v1707 = vpop.f32.mrb[0].mxu0
        %v1708 = vpop.f32.mrb[0].mxu0
        %v1709 = vadd.f32 0.0, %v1708
        %v1710 = vpop.f32.mrb[0].mxu0
        %1711 = vmatprep.mubr.bf16.mxu0 0
        %1712 = vmatmul.mubr.bf16.gmra.mrb[0].mxu0 %v1572
        %v1713 = vpop.f32.mrb[0].mxu0
        %v1714 = vadd.f32 0.0, %v1713
        %v1715 = vpop.f32.mrb[0].mxu0
        %v1716 = vpop.f32.mrb[0].mxu0
        %v1717 = vadd.f32 0.0, %v1716
        %v1718 = vpop.f32.mrb[0].mxu0
        %1719 = vmatprep.mubr.bf16.mxu0 0
        %1720 = vmatmul.mubr.bf16.gmra.mrb[0].mxu0 %v1575
        %v1721 = vpop.f32.mrb[0].mxu0
        %v1722 = vadd.f32 0.0, %v1721
        %v1723 = vpop.f32.mrb[0].mxu0
        %v1724 = vpop.f32.mrb[0].mxu0
        %v1725 = vadd.f32 0.0, %v1724
        %v1726 = vpop.f32.mrb[0].mxu0
        %1727 = vmatprep.mubr.bf16.mxu0 0
        %1728 = vmatmul.mubr.bf16.gmra.mrb[0].mxu0 %v1578
        %v1729 = vpop.f32.mrb[0].mxu0
        %v1730 = vadd.f32 0.0, %v1729
        %v1731 = vpop.f32.mrb[0].mxu0
        %v1732 = vpop.f32.mrb[0].mxu0
        %v1733 = vadd.f32 0.0, %v1732
        %v1734 = vpop.f32.mrb[0].mxu0
        %1735 = vmatprep.mubr.bf16.mxu0 0
        %1736 = vmatmul.mubr.bf16.gmra.mrb[0].mxu0 %v1581
        %v1737 = vpop.f32.mrb[0].mxu0
        %v1738 = vadd.f32 0.0, %v1737
        %v1739 = vpop.f32.mrb[0].mxu0
        %v1740 = vpop.f32.mrb[0].mxu0
        %v1741 = vadd.f32 0.0, %v1740
        %v1742 = vpop.f32.mrb[0].mxu0
        %1743 = vdwg.mxu0
        %v1744 = vmax.f32 %v1390, %v1618
        %v1745 = vmax.f32 %v1391, %v1621
        %v1746 = vmax.f32 %v1392, %v1626
        %v1747 = vmax.f32 %v1393, %v1629
        %v1748 = vmax.f32 %v1394, %v1634
        %v1749 = vmax.f32 %v1395, %v1637
        %v1750 = vmax.f32 %v1396, %v1642
        %v1751 = vmax.f32 %v1397, %v1645
        %v1752 = vmax.f32 %v1398, %v1650
        %v1753 = vmax.f32 %v1399, %v1653
        %v1754 = vmax.f32 %v1400, %v1658
        %v1755 = vmax.f32 %v1401, %v1661
        %v1756 = vmax.f32 %v1402, %v1666
        %v1757 = vmax.f32 %v1403, %v1669
        %v1758 = vmax.f32 %v1404, %v1674
        %v1759 = vmax.f32 %v1405, %v1677
        %v1760 = vmax.f32 %v1406, %v1682
        %v1761 = vmax.f32 %v1407, %v1685
        %v1762 = vmax.f32 %v1408, %v1690
        %v1763 = vmax.f32 %v1409, %v1693
        %v1764 = vmax.f32 %v1410, %v1698
        %v1765 = vmax.f32 %v1411, %v1701
        %v1766 = vmax.f32 %v1412, %v1706
        %v1767 = vmax.f32 %v1413, %v1709
        %v1768 = vmax.f32 %v1414, %v1714
        %v1769 = vmax.f32 %v1415, %v1717
        %v1770 = vmax.f32 %v1416, %v1722
        %v1771 = vmax.f32 %v1417, %v1725
        %v1772 = vmax.f32 %v1418, %v1730
        %v1773 = vmax.f32 %v1419, %v1733
        %v1774 = vmax.f32 %v1420, %v1738
        %v1775 = vmax.f32 %v1421, %v1741
        %s1776 = scalar_lea.vmem %s695, 384 [#allocation2]
        %v1777 = vld [vmem:[%s1776] sm:$0xf]
        %v1778 = vld [vmem:[%s1776 + $0x4] sm:$0xf]
        %v1779 = vld [vmem:[%s1776 + $0x8] sm:$0xf]
        %v1780 = vld [vmem:[%s1776 + $0xc] sm:$0xf]
        %v1781 = vld [vmem:[%s1776 + $0x10] sm:$0xf]
        %v1782 = vld [vmem:[%s1776 + $0x14] sm:$0xf]
        %v1783 = vld [vmem:[%s1776 + $0x18] sm:$0xf]
        %v1784 = vld [vmem:[%s1776 + $0x1c] sm:$0xf]
        %v1785 = vld [vmem:[%s1776 + $0x20] sm:$0xf]
        %v1786 = vld [vmem:[%s1776 + $0x24] sm:$0xf]
        %v1787 = vld [vmem:[%s1776 + $0x28] sm:$0xf]
        %v1788 = vld [vmem:[%s1776 + $0x2c] sm:$0xf]
        %v1789 = vld [vmem:[%s1776 + $0x30] sm:$0xf]
        %v1790 = vld [vmem:[%s1776 + $0x34] sm:$0xf]
        %v1791 = vld [vmem:[%s1776 + $0x38] sm:$0xf]
        %v1792 = vld [vmem:[%s1776 + $0x3c] sm:$0xf]
        %v1793 = vld [vmem:[%s1776 + $0x40] sm:$0xf]
        %v1794 = vld [vmem:[%s1776 + $0x44] sm:$0xf]
        %v1795 = vld [vmem:[%s1776 + $0x48] sm:$0xf]
        %v1796 = vld [vmem:[%s1776 + $0x4c] sm:$0xf]
        %v1797 = vld [vmem:[%s1776 + $0x50] sm:$0xf]
        %v1798 = vld [vmem:[%s1776 + $0x54] sm:$0xf]
        %v1799 = vld [vmem:[%s1776 + $0x58] sm:$0xf]
        %v1800 = vld [vmem:[%s1776 + $0x5c] sm:$0xf]
        %v1801 = vld [vmem:[%s1776 + $0x60] sm:$0xf]
        %v1802 = vld [vmem:[%s1776 + $0x64] sm:$0xf]
        %v1803 = vld [vmem:[%s1776 + $0x68] sm:$0xf]
        %v1804 = vld [vmem:[%s1776 + $0x6c] sm:$0xf]
        %v1805 = vld [vmem:[%s1776 + $0x70] sm:$0xf]
        %v1806 = vld [vmem:[%s1776 + $0x74] sm:$0xf]
        %v1807 = vld [vmem:[%s1776 + $0x78] sm:$0xf]
        %v1808 = vld [vmem:[%s1776 + $0x7c] sm:$0xf]
        %v1841 = vunpack.c.l.b16 %v1777
        %v1842 = vunpack.c.l.b16 %v1778
        %v1843 = vunpack.c.l.b16 %v1779
        %v1844 = vunpack.c.l.b16 %v1780
        %v1845 = vunpack.c.l.b16 %v1781
        %v1846 = vunpack.c.l.b16 %v1782
        %v1847 = vunpack.c.l.b16 %v1783
        %v1848 = vunpack.c.l.b16 %v1784
        %v1849 = vunpack.c.l.b16 %v1785
        %v1850 = vunpack.c.l.b16 %v1786
        %v1851 = vunpack.c.l.b16 %v1787
        %v1852 = vunpack.c.l.b16 %v1788
        %v1853 = vunpack.c.l.b16 %v1789
        %v1854 = vunpack.c.l.b16 %v1790
        %v1855 = vunpack.c.l.b16 %v1791
        %v1856 = vunpack.c.l.b16 %v1792
        %v1857 = vunpack.c.l.b16 %v1793
        %v1858 = vunpack.c.l.b16 %v1794
        %v1859 = vunpack.c.l.b16 %v1795
        %v1860 = vunpack.c.l.b16 %v1796
        %v1861 = vunpack.c.l.b16 %v1797
        %v1862 = vunpack.c.l.b16 %v1798
        %v1863 = vunpack.c.l.b16 %v1799
        %v1864 = vunpack.c.l.b16 %v1800
        %v1865 = vunpack.c.l.b16 %v1801
        %v1866 = vunpack.c.l.b16 %v1802
        %v1867 = vunpack.c.l.b16 %v1803
        %v1868 = vunpack.c.l.b16 %v1804
        %v1869 = vunpack.c.l.b16 %v1805
        %v1870 = vunpack.c.l.b16 %v1806
        %v1871 = vunpack.c.l.b16 %v1807
        %v1872 = vunpack.c.l.b16 %v1808
        %v1873 = vpack.c.b16 %v1842, %v1841
        %v1874 = vpack.c.b16 %v1844, %v1843
        %v1875 = vpack.c.b16 %v1846, %v1845
        %v1876 = vpack.c.b16 %v1848, %v1847
        %v1877 = vpack.c.b16 %v1850, %v1849
        %v1878 = vpack.c.b16 %v1852, %v1851
        %v1879 = vpack.c.b16 %v1854, %v1853
        %v1880 = vpack.c.b16 %v1856, %v1855
        %v1881 = vpack.c.b16 %v1858, %v1857
        %v1882 = vpack.c.b16 %v1860, %v1859
        %v1883 = vpack.c.b16 %v1862, %v1861
        %v1884 = vpack.c.b16 %v1864, %v1863
        %v1885 = vpack.c.b16 %v1866, %v1865
        %v1886 = vpack.c.b16 %v1868, %v1867
        %v1887 = vpack.c.b16 %v1870, %v1869
        %v1888 = vpack.c.b16 %v1872, %v1871
        %v1890 = vsel %vm851, %v1873, 0
        %v1893 = vsel %vm851, %v1874, 0
        %v1896 = vsel %vm851, %v1875, 0
        %v1899 = vsel %vm851, %v1876, 0
        %v1902 = vsel %vm851, %v1877, 0
        %v1905 = vsel %vm851, %v1878, 0
        %v1908 = vsel %vm851, %v1879, 0
        %v1911 = vsel %vm851, %v1880, 0
        %v1914 = vsel %vm851, %v1881, 0
        %v1917 = vsel %vm851, %v1882, 0
        %v1920 = vsel %vm851, %v1883, 0
        %v1923 = vsel %vm851, %v1884, 0
        %v1926 = vsel %vm851, %v1885, 0
        %v1929 = vsel %vm851, %v1886, 0
        %v1932 = vsel %vm851, %v1887, 0
        %v1935 = vsel %vm851, %v1888, 0
        %1937 = vmatprep.subr.bf16.mxu0 0
        %1938 = vmatpush1.bf16.msra.mxu0 %v848
        %1939 = vmatprep.subr.bf16.mxu0 0
        %1940 = vmatpush1.bf16.msra.mxu0 %v905
        %1941 = vmatprep.subr.bf16.mxu0 0
        %1942 = vmatpush1.bf16.msra.mxu0 0
        %1943 = vmatprep.subr.bf16.mxu0 0
        %1944 = vmatpush1.bf16.msra.mxu0 0
        %1945 = vmatprep.subr.bf16.mxu0 0
        %1946 = vmatpush1.bf16.msra.mxu0 0
        %1947 = vmatprep.subr.bf16.mxu0 0
        %1948 = vmatpush1.bf16.msra.mxu0 0
        %1949 = vmatprep.subr.bf16.mxu0 0
        %1950 = vmatpush1.bf16.msra.mxu0 0
        %1951 = vmatprep.subr.bf16.mxu0 0
        %1952 = vmatpush1.bf16.msra.mxu0 0
        %1953 = vmatprep.subr.bf16.mxu0 0
        %1954 = vmatpush1.bf16.msra.mxu0 0
        %1955 = vmatprep.subr.bf16.mxu0 0
        %1956 = vmatpush1.bf16.msra.mxu0 0
        %1957 = vmatprep.subr.bf16.mxu0 0
        %1958 = vmatpush1.bf16.msra.mxu0 0
        %1959 = vmatprep.subr.bf16.mxu0 0
        %1960 = vmatpush1.bf16.msra.mxu0 0
        %1961 = vmatprep.subr.bf16.mxu0 0
        %1962 = vmatpush1.bf16.msra.mxu0 0
        %1963 = vmatprep.subr.bf16.mxu0 0
        %1964 = vmatpush1.bf16.msra.mxu0 0
        %1965 = vmatprep.subr.bf16.mxu0 0
        %1966 = vmatpush1.bf16.msra.mxu0 0
        %1967 = vmatprep.subr.bf16.mxu0 0
        %1968 = vmatpush1.bf16.msra.mxu0 0
        %1969 = vmatprep.mubr.bf16.mxu0 0
        %1970 = vmatmul.mubr.bf16.gmra.mrb[0].mxu0 %v1890
        %v1971 = vpop.f32.mrb[0].mxu0
        %v1972 = vadd.f32 0.0, %v1971
        %v1973 = vpop.f32.mrb[0].mxu0
        %v1974 = vpop.f32.mrb[0].mxu0
        %v1975 = vadd.f32 0.0, %v1974
        %v1976 = vpop.f32.mrb[0].mxu0
        %1977 = vmatprep.mubr.bf16.mxu0 0
        %1978 = vmatmul.mubr.bf16.gmra.mrb[0].mxu0 %v1893
        %v1979 = vpop.f32.mrb[0].mxu0
        %v1980 = vadd.f32 0.0, %v1979
        %v1981 = vpop.f32.mrb[0].mxu0
        %v1982 = vpop.f32.mrb[0].mxu0
        %v1983 = vadd.f32 0.0, %v1982
        %v1984 = vpop.f32.mrb[0].mxu0
        %1985 = vmatprep.mubr.bf16.mxu0 0
        %1986 = vmatmul.mubr.bf16.gmra.mrb[0].mxu0 %v1896
        %v1987 = vpop.f32.mrb[0].mxu0
        %v1988 = vadd.f32 0.0, %v1987
        %v1989 = vpop.f32.mrb[0].mxu0
        %v1990 = vpop.f32.mrb[0].mxu0
        %v1991 = vadd.f32 0.0, %v1990
        %v1992 = vpop.f32.mrb[0].mxu0
        %1993 = vmatprep.mubr.bf16.mxu0 0
        %1994 = vmatmul.mubr.bf16.gmra.mrb[0].mxu0 %v1899
        %v1995 = vpop.f32.mrb[0].mxu0
        %v1996 = vadd.f32 0.0, %v1995
        %v1997 = vpop.f32.mrb[0].mxu0
        %v1998 = vpop.f32.mrb[0].mxu0
        %v1999 = vadd.f32 0.0, %v1998
        %v2000 = vpop.f32.mrb[0].mxu0
        %2001 = vmatprep.mubr.bf16.mxu0 0
        %2002 = vmatmul.mubr.bf16.gmra.mrb[0].mxu0 %v1902
        %v2003 = vpop.f32.mrb[0].mxu0
        %v2004 = vadd.f32 0.0, %v2003
        %v2005 = vpop.f32.mrb[0].mxu0
        %v2006 = vpop.f32.mrb[0].mxu0
        %v2007 = vadd.f32 0.0, %v2006
        %v2008 = vpop.f32.mrb[0].mxu0
        %2009 = vmatprep.mubr.bf16.mxu0 0
        %2010 = vmatmul.mubr.bf16.gmra.mrb[0].mxu0 %v1905
        %v2011 = vpop.f32.mrb[0].mxu0
        %v2012 = vadd.f32 0.0, %v2011
        %v2013 = vpop.f32.mrb[0].mxu0
        %v2014 = vpop.f32.mrb[0].mxu0
        %v2015 = vadd.f32 0.0, %v2014
        %v2016 = vpop.f32.mrb[0].mxu0
        %2017 = vmatprep.mubr.bf16.mxu0 0
        %2018 = vmatmul.mubr.bf16.gmra.mrb[0].mxu0 %v1908
        %v2019 = vpop.f32.mrb[0].mxu0
        %v2020 = vadd.f32 0.0, %v2019
        %v2021 = vpop.f32.mrb[0].mxu0
        %v2022 = vpop.f32.mrb[0].mxu0
        %v2023 = vadd.f32 0.0, %v2022
        %v2024 = vpop.f32.mrb[0].mxu0
        %2025 = vmatprep.mubr.bf16.mxu0 0
        %2026 = vmatmul.mubr.bf16.gmra.mrb[0].mxu0 %v1911
        %v2027 = vpop.f32.mrb[0].mxu0
        %v2028 = vadd.f32 0.0, %v2027
        %v2029 = vpop.f32.mrb[0].mxu0
        %v2030 = vpop.f32.mrb[0].mxu0
        %v2031 = vadd.f32 0.0, %v2030
        %v2032 = vpop.f32.mrb[0].mxu0
        %2033 = vmatprep.mubr.bf16.mxu0 0
        %2034 = vmatmul.mubr.bf16.gmra.mrb[0].mxu0 %v1914
        %v2035 = vpop.f32.mrb[0].mxu0
        %v2036 = vadd.f32 0.0, %v2035
        %v2037 = vpop.f32.mrb[0].mxu0
        %v2038 = vpop.f32.mrb[0].mxu0
        %v2039 = vadd.f32 0.0, %v2038
        %v2040 = vpop.f32.mrb[0].mxu0
        %2041 = vmatprep.mubr.bf16.mxu0 0
        %2042 = vmatmul.mubr.bf16.gmra.mrb[0].mxu0 %v1917
        %v2043 = vpop.f32.mrb[0].mxu0
        %v2044 = vadd.f32 0.0, %v2043
        %v2045 = vpop.f32.mrb[0].mxu0
        %v2046 = vpop.f32.mrb[0].mxu0
        %v2047 = vadd.f32 0.0, %v2046
        %v2048 = vpop.f32.mrb[0].mxu0
        %2049 = vmatprep.mubr.bf16.mxu0 0
        %2050 = vmatmul.mubr.bf16.gmra.mrb[0].mxu0 %v1920
        %v2051 = vpop.f32.mrb[0].mxu0
        %v2052 = vadd.f32 0.0, %v2051
        %v2053 = vpop.f32.mrb[0].mxu0
        %v2054 = vpop.f32.mrb[0].mxu0
        %v2055 = vadd.f32 0.0, %v2054
        %v2056 = vpop.f32.mrb[0].mxu0
        %2057 = vmatprep.mubr.bf16.mxu0 0
        %2058 = vmatmul.mubr.bf16.gmra.mrb[0].mxu0 %v1923
        %v2059 = vpop.f32.mrb[0].mxu0
        %v2060 = vadd.f32 0.0, %v2059
        %v2061 = vpop.f32.mrb[0].mxu0
        %v2062 = vpop.f32.mrb[0].mxu0
        %v2063 = vadd.f32 0.0, %v2062
        %v2064 = vpop.f32.mrb[0].mxu0
        %2065 = vmatprep.mubr.bf16.mxu0 0
        %2066 = vmatmul.mubr.bf16.gmra.mrb[0].mxu0 %v1926
        %v2067 = vpop.f32.mrb[0].mxu0
        %v2068 = vadd.f32 0.0, %v2067
        %v2069 = vpop.f32.mrb[0].mxu0
        %v2070 = vpop.f32.mrb[0].mxu0
        %v2071 = vadd.f32 0.0, %v2070
        %v2072 = vpop.f32.mrb[0].mxu0
        %2073 = vmatprep.mubr.bf16.mxu0 0
        %2074 = vmatmul.mubr.bf16.gmra.mrb[0].mxu0 %v1929
        %v2075 = vpop.f32.mrb[0].mxu0
        %v2076 = vadd.f32 0.0, %v2075
        %v2077 = vpop.f32.mrb[0].mxu0
        %v2078 = vpop.f32.mrb[0].mxu0
        %v2079 = vadd.f32 0.0, %v2078
        %v2080 = vpop.f32.mrb[0].mxu0
        %2081 = vmatprep.mubr.bf16.mxu0 0
        %2082 = vmatmul.mubr.bf16.gmra.mrb[0].mxu0 %v1932
        %v2083 = vpop.f32.mrb[0].mxu0
        %v2084 = vadd.f32 0.0, %v2083
        %v2085 = vpop.f32.mrb[0].mxu0
        %v2086 = vpop.f32.mrb[0].mxu0
        %v2087 = vadd.f32 0.0, %v2086
        %v2088 = vpop.f32.mrb[0].mxu0
        %2089 = vmatprep.mubr.bf16.mxu0 0
        %2090 = vmatmul.mubr.bf16.gmra.mrb[0].mxu0 %v1935
        %v2091 = vpop.f32.mrb[0].mxu0
        %v2092 = vadd.f32 0.0, %v2091
        %v2093 = vpop.f32.mrb[0].mxu0
        %v2094 = vpop.f32.mrb[0].mxu0
        %v2095 = vadd.f32 0.0, %v2094
        %v2096 = vpop.f32.mrb[0].mxu0
        %2097 = vdwg.mxu0
        %v2098 = vmax.f32 %v1744, %v1972
        %v2099 = vmax.f32 %v1745, %v1975
        %v2100 = vmax.f32 %v1746, %v1980
        %v2101 = vmax.f32 %v1747, %v1983
        %v2102 = vmax.f32 %v1748, %v1988
        %v2103 = vmax.f32 %v1749, %v1991
        %v2104 = vmax.f32 %v1750, %v1996
        %v2105 = vmax.f32 %v1751, %v1999
        %v2106 = vmax.f32 %v1752, %v2004
        %v2107 = vmax.f32 %v1753, %v2007
        %v2108 = vmax.f32 %v1754, %v2012
        %v2109 = vmax.f32 %v1755, %v2015
        %v2110 = vmax.f32 %v1756, %v2020
        %v2111 = vmax.f32 %v1757, %v2023
        %v2112 = vmax.f32 %v1758, %v2028
        %v2113 = vmax.f32 %v1759, %v2031
        %v2114 = vmax.f32 %v1760, %v2036
        %v2115 = vmax.f32 %v1761, %v2039
        %v2116 = vmax.f32 %v1762, %v2044
        %v2117 = vmax.f32 %v1763, %v2047
        %v2118 = vmax.f32 %v1764, %v2052
        %v2119 = vmax.f32 %v1765, %v2055
        %v2120 = vmax.f32 %v1766, %v2060
        %v2121 = vmax.f32 %v1767, %v2063
        %v2122 = vmax.f32 %v1768, %v2068
        %v2123 = vmax.f32 %v1769, %v2071
        %v2124 = vmax.f32 %v1770, %v2076
        %v2125 = vmax.f32 %v1771, %v2079
        %v2126 = vmax.f32 %v1772, %v2084
        %v2127 = vmax.f32 %v1773, %v2087
        %v2128 = vmax.f32 %v1774, %v2092
        %v2129 = vmax.f32 %v1775, %v2095
        %v2130 = vld [vmem:[%s2] sm:$0x1]
        %v2132 = vlaneseq
        %v2133 = vshrl.u32 %v2132, 7
        %v2134 = vsub.s32 0, %v2133
        %v2135 = vrot.slane %v2130, %v2134
        %v2137 = vadd.f32 %v2098, %v2135
        %v2138 = vadd.f32 %v2099, %v2135
        %v2139 = vadd.f32 %v2100, %v2135
        %v2140 = vadd.f32 %v2101, %v2135
        %v2141 = vadd.f32 %v2102, %v2135
        %v2142 = vadd.f32 %v2103, %v2135
        %v2143 = vadd.f32 %v2104, %v2135
        %v2144 = vadd.f32 %v2105, %v2135
        %v2145 = vadd.f32 %v2106, %v2135
        %v2146 = vadd.f32 %v2107, %v2135
        %v2147 = vadd.f32 %v2108, %v2135
        %v2148 = vadd.f32 %v2109, %v2135
        %v2149 = vadd.f32 %v2110, %v2135
        %v2150 = vadd.f32 %v2111, %v2135
        %v2151 = vadd.f32 %v2112, %v2135
        %v2152 = vadd.f32 %v2113, %v2135
        %v2153 = vadd.f32 %v2114, %v2135
        %v2154 = vadd.f32 %v2115, %v2135
        %v2155 = vadd.f32 %v2116, %v2135
        %v2156 = vadd.f32 %v2117, %v2135
        %v2157 = vadd.f32 %v2118, %v2135
        %v2158 = vadd.f32 %v2119, %v2135
        %v2159 = vadd.f32 %v2120, %v2135
        %v2160 = vadd.f32 %v2121, %v2135
        %v2161 = vadd.f32 %v2122, %v2135
        %v2162 = vadd.f32 %v2123, %v2135
        %v2163 = vadd.f32 %v2124, %v2135
        %v2164 = vadd.f32 %v2125, %v2135
        %v2165 = vadd.f32 %v2126, %v2135
        %v2166 = vadd.f32 %v2127, %v2135
        %v2167 = vadd.f32 %v2128, %v2135
        %v2168 = vadd.f32 %v2129, %v2135
        %vm2169 = vcmp.ge.f32.partialorder %v2137, 0.0
        %vm2170 = vcmp.ge.f32.partialorder %v2138, 0.0
        %vm2171 = vcmp.ge.f32.partialorder %v2139, 0.0
        %vm2172 = vcmp.ge.f32.partialorder %v2140, 0.0
        %vm2173 = vcmp.ge.f32.partialorder %v2141, 0.0
        %vm2174 = vcmp.ge.f32.partialorder %v2142, 0.0
        %vm2175 = vcmp.ge.f32.partialorder %v2143, 0.0
        %vm2176 = vcmp.ge.f32.partialorder %v2144, 0.0
        %vm2177 = vcmp.ge.f32.partialorder %v2145, 0.0
        %vm2178 = vcmp.ge.f32.partialorder %v2146, 0.0
        %vm2179 = vcmp.ge.f32.partialorder %v2147, 0.0
        %vm2180 = vcmp.ge.f32.partialorder %v2148, 0.0
        %vm2181 = vcmp.ge.f32.partialorder %v2149, 0.0
        %vm2182 = vcmp.ge.f32.partialorder %v2150, 0.0
        %vm2183 = vcmp.ge.f32.partialorder %v2151, 0.0
        %vm2184 = vcmp.ge.f32.partialorder %v2152, 0.0
        %vm2185 = vcmp.ge.f32.partialorder %v2153, 0.0
        %vm2186 = vcmp.ge.f32.partialorder %v2154, 0.0
        %vm2187 = vcmp.ge.f32.partialorder %v2155, 0.0
        %vm2188 = vcmp.ge.f32.partialorder %v2156, 0.0
        %vm2189 = vcmp.ge.f32.partialorder %v2157, 0.0
        %vm2190 = vcmp.ge.f32.partialorder %v2158, 0.0
        %vm2191 = vcmp.ge.f32.partialorder %v2159, 0.0
        %vm2192 = vcmp.ge.f32.partialorder %v2160, 0.0
        %vm2193 = vcmp.ge.f32.partialorder %v2161, 0.0
        %vm2194 = vcmp.ge.f32.partialorder %v2162, 0.0
        %vm2195 = vcmp.ge.f32.partialorder %v2163, 0.0
        %vm2196 = vcmp.ge.f32.partialorder %v2164, 0.0
        %vm2197 = vcmp.ge.f32.partialorder %v2165, 0.0
        %vm2198 = vcmp.ge.f32.partialorder %v2166, 0.0
        %vm2199 = vcmp.ge.f32.partialorder %v2167, 0.0
        %vm2200 = vcmp.ge.f32.partialorder %v2168, 0.0
        %v2201 = vmul.f32 %v2137, 0.01
        %v2202 = vmul.f32 %v2138, 0.01
        %v2203 = vmul.f32 %v2139, 0.01
        %v2204 = vmul.f32 %v2140, 0.01
        %v2205 = vmul.f32 %v2141, 0.01
        %v2206 = vmul.f32 %v2142, 0.01
        %v2207 = vmul.f32 %v2143, 0.01
        %v2208 = vmul.f32 %v2144, 0.01
        %v2209 = vmul.f32 %v2145, 0.01
        %v2210 = vmul.f32 %v2146, 0.01
        %v2211 = vmul.f32 %v2147, 0.01
        %v2212 = vmul.f32 %v2148, 0.01
        %v2213 = vmul.f32 %v2149, 0.01
        %v2214 = vmul.f32 %v2150, 0.01
        %v2215 = vmul.f32 %v2151, 0.01
        %v2216 = vmul.f32 %v2152, 0.01
        %v2217 = vmul.f32 %v2153, 0.01
        %v2218 = vmul.f32 %v2154, 0.01
        %v2219 = vmul.f32 %v2155, 0.01
        %v2220 = vmul.f32 %v2156, 0.01
        %v2221 = vmul.f32 %v2157, 0.01
        %v2222 = vmul.f32 %v2158, 0.01
        %v2223 = vmul.f32 %v2159, 0.01
        %v2224 = vmul.f32 %v2160, 0.01
        %v2225 = vmul.f32 %v2161, 0.01
        %v2226 = vmul.f32 %v2162, 0.01
        %v2227 = vmul.f32 %v2163, 0.01
        %v2228 = vmul.f32 %v2164, 0.01
        %v2229 = vmul.f32 %v2165, 0.01
        %v2230 = vmul.f32 %v2166, 0.01
        %v2231 = vmul.f32 %v2167, 0.01
        %v2232 = vmul.f32 %v2168, 0.01
        %v2233 = vsel %vm2169, %v2137, %v2201
        %v2234 = vsel %vm2170, %v2138, %v2202
        %v2235 = vsel %vm2171, %v2139, %v2203
        %v2236 = vsel %vm2172, %v2140, %v2204
        %v2237 = vsel %vm2173, %v2141, %v2205
        %v2238 = vsel %vm2174, %v2142, %v2206
        %v2239 = vsel %vm2175, %v2143, %v2207
        %v2240 = vsel %vm2176, %v2144, %v2208
        %v2241 = vsel %vm2177, %v2145, %v2209
        %v2242 = vsel %vm2178, %v2146, %v2210
        %v2243 = vsel %vm2179, %v2147, %v2211
        %v2244 = vsel %vm2180, %v2148, %v2212
        %v2245 = vsel %vm2181, %v2149, %v2213
        %v2246 = vsel %vm2182, %v2150, %v2214
        %v2247 = vsel %vm2183, %v2151, %v2215
        %v2248 = vsel %vm2184, %v2152, %v2216
        %v2249 = vsel %vm2185, %v2153, %v2217
        %v2250 = vsel %vm2186, %v2154, %v2218
        %v2251 = vsel %vm2187, %v2155, %v2219
        %v2252 = vsel %vm2188, %v2156, %v2220
        %v2253 = vsel %vm2189, %v2157, %v2221
        %v2254 = vsel %vm2190, %v2158, %v2222
        %v2255 = vsel %vm2191, %v2159, %v2223
        %v2256 = vsel %vm2192, %v2160, %v2224
        %v2257 = vsel %vm2193, %v2161, %v2225
        %v2258 = vsel %vm2194, %v2162, %v2226
        %v2259 = vsel %vm2195, %v2163, %v2227
        %v2260 = vsel %vm2196, %v2164, %v2228
        %v2261 = vsel %vm2197, %v2165, %v2229
        %v2262 = vsel %vm2198, %v2166, %v2230
        %v2263 = vsel %vm2199, %v2167, %v2231
        %v2264 = vsel %vm2200, %v2168, %v2232
        %vm2265 = vcmask 130048
        %2266 = vst.msk [vmem:[%s721] sm:$0xff] %vm2265, %v2233
        %2267 = vst.msk [vmem:[%s721 + $0x8] sm:$0xff] %vm2265, %v2234
        %2268 = vst.msk [vmem:[%s721 + $0x10] sm:$0xff] %vm2265, %v2235
        %2269 = vst.msk [vmem:[%s721 + $0x18] sm:$0xff] %vm2265, %v2236
        %2270 = vst.msk [vmem:[%s721 + $0x20] sm:$0xff] %vm2265, %v2237
        %2271 = vst.msk [vmem:[%s721 + $0x28] sm:$0xff] %vm2265, %v2238
        %2272 = vst.msk [vmem:[%s721 + $0x30] sm:$0xff] %vm2265, %v2239
        %2273 = vst.msk [vmem:[%s721 + $0x38] sm:$0xff] %vm2265, %v2240
        %2274 = vst.msk [vmem:[%s721 + $0x40] sm:$0xff] %vm2265, %v2241
        %2275 = vst.msk [vmem:[%s721 + $0x48] sm:$0xff] %vm2265, %v2242
        %2276 = vst.msk [vmem:[%s721 + $0x50] sm:$0xff] %vm2265, %v2243
        %2277 = vst.msk [vmem:[%s721 + $0x58] sm:$0xff] %vm2265, %v2244
        %2278 = vst.msk [vmem:[%s721 + $0x60] sm:$0xff] %vm2265, %v2245
        %2279 = vst.msk [vmem:[%s721 + $0x68] sm:$0xff] %vm2265, %v2246
        %2280 = vst.msk [vmem:[%s721 + $0x70] sm:$0xff] %vm2265, %v2247
        %2281 = vst.msk [vmem:[%s721 + $0x78] sm:$0xff] %vm2265, %v2248
        %2282 = vst.msk [vmem:[%s721 + $0x80] sm:$0xff] %vm2265, %v2249
        %2283 = vst.msk [vmem:[%s721 + $0x88] sm:$0xff] %vm2265, %v2250
        %2284 = vst.msk [vmem:[%s721 + $0x90] sm:$0xff] %vm2265, %v2251
        %2285 = vst.msk [vmem:[%s721 + $0x98] sm:$0xff] %vm2265, %v2252
        %2286 = vst.msk [vmem:[%s721 + $0xa0] sm:$0xff] %vm2265, %v2253
        %2287 = vst.msk [vmem:[%s721 + $0xa8] sm:$0xff] %vm2265, %v2254
        %2288 = vst.msk [vmem:[%s721 + $0xb0] sm:$0xff] %vm2265, %v2255
        %2289 = vst.msk [vmem:[%s721 + $0xb8] sm:$0xff] %vm2265, %v2256
        %2290 = vst.msk [vmem:[%s721 + $0xc0] sm:$0xff] %vm2265, %v2257
        %2291 = vst.msk [vmem:[%s721 + $0xc8] sm:$0xff] %vm2265, %v2258
        %2292 = vst.msk [vmem:[%s721 + $0xd0] sm:$0xff] %vm2265, %v2259
        %2293 = vst.msk [vmem:[%s721 + $0xd8] sm:$0xff] %vm2265, %v2260
        %2294 = vst.msk [vmem:[%s721 + $0xe0] sm:$0xff] %vm2265, %v2261
        %2295 = vst.msk [vmem:[%s721 + $0xe8] sm:$0xff] %vm2265, %v2262
        %2296 = vst.msk [vmem:[%s721 + $0xf0] sm:$0xff] %vm2265, %v2263
        %2297 = vst.msk [vmem:[%s721 + $0xf8] sm:$0xff] %vm2265, %v2264
        %s2298 = smul.u32 32, %s14
        %p2299 = scmp.lt.s32.totalorder %s2298, 63
        %s2300 = scalar_select %p2299, %s2298, 63
        %s2301 = smul.addr %s2300, 8
        %s2302 = scalar_lea.vmem %s3, %s2301
        // Predicated region
        $region74: #{_lambda_.5} parent=68 // pred_check
          %p2303 = pneg %p100
        $region75: #{_lambda_.5} parent=68 // pred_check_branch
          %2305 = sbr.rel (%p2303) target = $region77
        $region76: #{_lambda_.5} parent=68 // pred_region
          %s2306 = smul.u32 32, %s14
        $region77: #{_lambda_.5} parent=68 // pred_fallthru
          _
      $region69: #{_lambda_.5} parent=5 // pred_fallthru
        _
      %p2307 = scmp.le.s32.totalorder 2, %s9
      // Predicated region
      $region78: #{_lambda_.5} parent=5 // pred_check
        %p2308 = pneg %p2307
      $region79: #{_lambda_.5} parent=5 // pred_check_branch
        %2310 = sbr.rel (%p2308) target = $region81
      $region80: #{_lambda_.5} parent=5 // pred_region
        %s2311 = ssub.s32 %s9, 2
        // Predicated region
        $region82: #{_lambda_.5} parent=80 // pred_check
          %p2312 = pneg %p106
        $region83: #{_lambda_.5} parent=80 // pred_check_branch
          %2314 = sbr.rel (%p2312) target = $region85
        $region84: #{_lambda_.5} parent=80 // pred_region
          %s2315 = smul.u32 32, %s15
          %p2316 = scmp.lt.s32.totalorder %s2315, 63
          %s2317 = scalar_select %p2316, %s2315, 63
          %s2318 = smul.addr %s2317, 8
          %s2319 = scalar_lea.vmem %s3, %s2318
        $region85: #{_lambda_.5} parent=80 // pred_fallthru
          _
      $region81: #{_lambda_.5} parent=5 // pred_fallthru
        _
    $region6: #{_lambda_.5} parent=1 // loop_footer
      %s13 = sadd.s32 1, %s9
    $region7: #{_lambda_.5} parent=1 // loop_footer_branch
      %8 = sbr.rel target = $region3
    $region8: #{_lambda_.5} parent=1 // loop_exit
      _

// kernel: _lambda_.6
$region0: #{_lambda_.6}
  #allocation0 [shape = 'u32[]', space=smem, size = 0x4, offset = 0x4, fixed_abs, tag = 'smem constant byte address 0x4 - core index']
  #allocation1 [shape = 'u32[144,128]{1,0:T(1,128)}', space=vmem, size = 0x12000, scoped, tag = 'internal scratch']
  %s0 = inlined_call_operand.vmem [shape: bf16[4,128,144], index: 0, kind: input, shape index: {}]
  %s1 = inlined_call_operand.vmem [shape: bf16[144,32], index: 1, kind: input, shape index: {}]
  %s2 = inlined_call_operand.vmem [shape: f32[1,32], index: 2, kind: input, shape index: {}]
  %s3 = inlined_call_operand.vmem [shape: f32[128,32], index: 3, kind: output, shape index: {}]
  %s4 = sld [smem:[#allocation0]]
  $region83: #{_lambda_.6} parent=0
    _
  %s6 = ssub.s32 1, %s4
  %s7 = scalar_select 0, %s6, %s4
  $region1: #{_lambda_.6} parent=0
    #allocation2 [shape = 'u8[262144]{0}', space=vmem, size = 0x40000, scoped, tag = 'input window, operand 0']
    loop: start=0, step=1, limit=4
    $region2: #{_lambda_.6} parent=1 // loop_pre_header
      _
    $region3: #{_lambda_.6} parent=1 // loop_header
      %s9 = sphi 0, %s13
      %p10 = scmp.ge.s32.totalorder %s9, 4
      %s19 = sphi 0, %s21
      %s22 = sphi 0, %s19
      %s23 = sphi 0, %s22
      %s39 = sphi 0, %s23
      %s43 = sphi 0, %s43
      %s45 = sphi 0, %s43
      %s46 = sphi 0, %s45
      %s60 = sphi 0, %s46
      %s64 = sphi 0, %s64
      %s66 = sphi 0, %s64
      %s67 = sphi 0, %s66
      %s81 = sphi 0, %s67
      %s87 = sphi 0, %s89
      %s90 = sphi 0, %s87
      %s91 = sphi 0, %s90
      %s107 = sphi 0, %s91
    $region4: #{_lambda_.6} parent=1 // loop_header_branch
      %12 = sbr.rel (%p10) target = $region8
    $region5: #{_lambda_.6} parent=1 // loop_body
      %s14 = ssub.s32 %s9, 1
      %s15 = ssub.s32 %s9, 2
      %s16 = sadd.s32 %s9, 1
      %s17 = ssub.s32 %s9, %s16
      %p18 = scmp.eq.s32.totalorder %s17, 0
      %s20 = sadd.s32 %s19, 1
      %s21 = scalar_select %p18, %s19, %s20
      %p24 = pneg %p18
      %p25 = scmp.eq.s32.totalorder %s9, 1
      %p26 = por %p24, %p25
      %p27 = scmp.ne.s32.totalorder %s19, %s22
      %p28 = scmp.eq.s32.totalorder %s9, 0
      %p29 = por %p27, %p28
      %p30 = scmp.ne.s32.totalorder %s19, %s22
      %p31 = scmp.eq.s32.totalorder %s14, 1
      %p32 = por %p30, %p31
      %p33 = scmp.ne.s32.totalorder %s22, %s23
      %p34 = scmp.eq.s32.totalorder %s14, 0
      %p35 = por %p33, %p34
      %p36 = scmp.ne.s32.totalorder %s22, %s23
      %p37 = scmp.eq.s32.totalorder %s15, 1
      %p38 = por %p36, %p37
      %p40 = scmp.ne.s32.totalorder %s23, %s39
      %p41 = scmp.eq.s32.totalorder %s15, 0
      %p42 = por %p40, %p41
      %s44 = sadd.s32 %s43, 1
      %p47 = scmp.eq.s32.totalorder %s9, 1
      %p48 = scmp.ne.s32.totalorder %s43, %s45
      %p49 = scmp.eq.s32.totalorder %s9, 0
      %p50 = por %p48, %p49
      %p51 = scmp.ne.s32.totalorder %s43, %s45
      %p52 = scmp.eq.s32.totalorder %s14, 1
      %p53 = por %p51, %p52
      %p54 = scmp.ne.s32.totalorder %s45, %s46
      %p55 = scmp.eq.s32.totalorder %s14, 0
      %p56 = por %p54, %p55
      %p57 = scmp.ne.s32.totalorder %s45, %s46
      %p58 = scmp.eq.s32.totalorder %s15, 1
      %p59 = por %p57, %p58
      %p61 = scmp.ne.s32.totalorder %s46, %s60
      %p62 = scmp.eq.s32.totalorder %s15, 0
      %p63 = por %p61, %p62
      %s65 = sadd.s32 %s64, 1
      %p68 = scmp.eq.s32.totalorder %s9, 1
      %p69 = scmp.ne.s32.totalorder %s64, %s66
      %p70 = scmp.eq.s32.totalorder %s9, 0
      %p71 = por %p69, %p70
      %p72 = scmp.ne.s32.totalorder %s64, %s66
      %p73 = scmp.eq.s32.totalorder %s14, 1
      %p74 = por %p72, %p73
      %p75 = scmp.ne.s32.totalorder %s66, %s67
      %p76 = scmp.eq.s32.totalorder %s14, 0
      %p77 = por %p75, %p76
      %p78 = scmp.ne.s32.totalorder %s66, %s67
      %p79 = scmp.eq.s32.totalorder %s15, 1
      %p80 = por %p78, %p79
      %p82 = scmp.ne.s32.totalorder %s67, %s81
      %p83 = scmp.eq.s32.totalorder %s15, 0
      %p84 = por %p82, %p83
      %s85 = ssub.s32 %s9, %s16
      %p86 = scmp.eq.s32.totalorder %s85, 0
      %s88 = sadd.s32 %s87, 1
      %s89 = scalar_select %p86, %s87, %s88
      %p92 = pneg %p86
      %p93 = scmp.eq.s32.totalorder %s9, 1
      %p94 = por %p92, %p93
      %p95 = scmp.ne.s32.totalorder %s87, %s90
      %p96 = scmp.eq.s32.totalorder %s9, 0
      %p97 = por %p95, %p96
      %p98 = scmp.ne.s32.totalorder %s87, %s90
      %p99 = scmp.eq.s32.totalorder %s14, 1
      %p100 = por %p98, %p99
      %p101 = scmp.ne.s32.totalorder %s90, %s91
      %p102 = scmp.eq.s32.totalorder %s14, 0
      %p103 = por %p101, %p102
      %p104 = scmp.ne.s32.totalorder %s90, %s91
      %p105 = scmp.eq.s32.totalorder %s15, 1
      %p106 = por %p104, %p105
      %p108 = scmp.ne.s32.totalorder %s91, %s107
      %p109 = scmp.eq.s32.totalorder %s15, 0
      %p110 = por %p108, %p109
      %p111 = scmp.le.s32.totalorder 1, %s9
      %p112 = scmp.lt.s32.totalorder %s9, 3
      %p113 = pnand %p111, %p112
      %p114 = pneg %p113
      // Predicated region
      $region9: #{_lambda_.6} parent=5 // pred_check
        _
      $region10: #{_lambda_.6} parent=5 // pred_check_branch
        %116 = sbr.rel (%p113) target = $region12
      $region11: #{_lambda_.6} parent=5 // pred_region
        %s117 = ssub.s32 %s9, 1
        // Predicated region
        $region13: #{_lambda_.6} parent=11 // pred_check
          %p118 = pneg %p56
        $region14: #{_lambda_.6} parent=11 // pred_check_branch
          %120 = sbr.rel (%p118) target = $region16
        $region15: #{_lambda_.6} parent=11 // pred_region
          _
        $region16: #{_lambda_.6} parent=11 // pred_fallthru
          _
        // Predicated region
        $region17: #{_lambda_.6} parent=11 // pred_check
          %p121 = pneg %p77
        $region18: #{_lambda_.6} parent=11 // pred_check_branch
          %123 = sbr.rel (%p121) target = $region20
        $region19: #{_lambda_.6} parent=11 // pred_region
          _
        $region20: #{_lambda_.6} parent=11 // pred_fallthru
          _
      $region12: #{_lambda_.6} parent=5 // pred_fallthru
        _
      %p124 = scmp.lt.s32.totalorder %s9, 2
      // Predicated region
      $region21: #{_lambda_.6} parent=5 // pred_check
        %p125 = pneg %p124
      $region22: #{_lambda_.6} parent=5 // pred_check_branch
        %127 = sbr.rel (%p125) target = $region24
      $region23: #{_lambda_.6} parent=5 // pred_region
        // Predicated region
        $region25: #{_lambda_.6} parent=23 // pred_check
          %p128 = pneg %p29
        $region26: #{_lambda_.6} parent=23 // pred_check_branch
          %130 = sbr.rel (%p128) target = $region28
        $region27: #{_lambda_.6} parent=23 // pred_region
          %s131 = sand.u32 %s19, 1
          %s132 = sand.u32 %s19, 1
          %s133 = smul.addr %s132, 256
          %s134 = scalar_lea.vmem [#allocation2], %s133
          %s135 = smul.u32 8, %s9
          %s136 = smul.addr %s135, 2
          %s137 = smul.addr %s136, 4
          %s138 = scalar_lea.vmem %s0, %s137
          // Predicated region
          $region29: #{_lambda_.6} parent=27 // pred_check
            _
          $region30: #{_lambda_.6} parent=27 // pred_check_branch
            %140 = sbr.rel (0) target = $region32
          $region31: #{_lambda_.6} parent=27 // pred_region
            // Predicated region
            $region33: #{_lambda_.6} parent=31 // pred_check
              _
            $region34: #{_lambda_.6} parent=31 // pred_check_branch
              %142 = sbr.rel (0) target = $region36
            $region35: #{_lambda_.6} parent=31 // pred_region
              // Predicated region
              $region48: #{_lambda_.6} parent=35 // pred_check
                _
              $region49: #{_lambda_.6} parent=35 // pred_check_branch
                %219 = sbr.rel (0) target = $region51
              $region50: #{_lambda_.6} parent=35 // pred_region
                loop: start=0, step=1, limit=1
                $region52: #{_lambda_.6} parent=50 // loop_pre_header
                  _
                $region53: #{_lambda_.6} parent=50 // loop_header
                  %s221 = sphi 0, %s225
                  %p222 = scmp.ge.s32.totalorder %s221, 1
                  %s226 = sphi %s138, %s138
                  %s227 = sphi %s134, %s134
                $region54: #{_lambda_.6} parent=50 // loop_header_branch
                  %224 = sbr.rel (%p222) target = $region58
                $region55: #{_lambda_.6} parent=50 // loop_body
                  %v228 = vld [vmem:[%s226] sm:$0xff]
                  %229 = vst [vmem:[%s227] sm:$0xff] %v228
                  %v230 = vld [vmem:[%s226 + $0x8] sm:$0xff]
                  %231 = vst [vmem:[%s227 + $0x8] sm:$0xff] %v230
                  %v232 = vld [vmem:[%s226 + $0x10] sm:$0xff]
                  %233 = vst [vmem:[%s227 + $0x10] sm:$0xff] %v232
                  %v234 = vld [vmem:[%s226 + $0x18] sm:$0xff]
                  %235 = vst [vmem:[%s227 + $0x18] sm:$0xff] %v234
                  %v236 = vld [vmem:[%s226 + $0x20] sm:$0xff]
                  %237 = vst [vmem:[%s227 + $0x20] sm:$0xff] %v236
                  %v238 = vld [vmem:[%s226 + $0x28] sm:$0xff]
                  %239 = vst [vmem:[%s227 + $0x28] sm:$0xff] %v238
                  %v240 = vld [vmem:[%s226 + $0x30] sm:$0xff]
                  %241 = vst [vmem:[%s227 + $0x30] sm:$0xff] %v240
                  %v242 = vld [vmem:[%s226 + $0x38] sm:$0xff]
                  %243 = vst [vmem:[%s227 + $0x38] sm:$0xff] %v242
                  %v244 = vld [vmem:[%s226 + $0x80] sm:$0xff]
                  %245 = vst [vmem:[%s227 + $0x40] sm:$0xff] %v244
                  %v246 = vld [vmem:[%s226 + $0x88] sm:$0xff]
                  %247 = vst [vmem:[%s227 + $0x48] sm:$0xff] %v246
                  %v248 = vld [vmem:[%s226 + $0x90] sm:$0xff]
                  %249 = vst [vmem:[%s227 + $0x50] sm:$0xff] %v248
                  %v250 = vld [vmem:[%s226 + $0x98] sm:$0xff]
                  %251 = vst [vmem:[%s227 + $0x58] sm:$0xff] %v250
                  %v252 = vld [vmem:[%s226 + $0xa0] sm:$0xff]
                  %253 = vst [vmem:[%s227 + $0x60] sm:$0xff] %v252
                  %v254 = vld [vmem:[%s226 + $0xa8] sm:$0xff]
                  %255 = vst [vmem:[%s227 + $0x68] sm:$0xff] %v254
                  %v256 = vld [vmem:[%s226 + $0xb0] sm:$0xff]
                  %257 = vst [vmem:[%s227 + $0x70] sm:$0xff] %v256
                  %v258 = vld [vmem:[%s226 + $0xb8] sm:$0xff]
                  %259 = vst [vmem:[%s227 + $0x78] sm:$0xff] %v258
                  %v260 = vld [vmem:[%s226 + $0x100] sm:$0xff]
                  %261 = vst [vmem:[%s227 + $0x80] sm:$0xff] %v260
                  %v262 = vld [vmem:[%s226 + $0x108] sm:$0xff]
                  %263 = vst [vmem:[%s227 + $0x88] sm:$0xff] %v262
                  %v264 = vld [vmem:[%s226 + $0x110] sm:$0xff]
                  %265 = vst [vmem:[%s227 + $0x90] sm:$0xff] %v264
                  %v266 = vld [vmem:[%s226 + $0x118] sm:$0xff]
                  %267 = vst [vmem:[%s227 + $0x98] sm:$0xff] %v266
                  %v268 = vld [vmem:[%s226 + $0x120] sm:$0xff]
                  %269 = vst [vmem:[%s227 + $0xa0] sm:$0xff] %v268
                  %v270 = vld [vmem:[%s226 + $0x128] sm:$0xff]
                  %271 = vst [vmem:[%s227 + $0xa8] sm:$0xff] %v270
                  %v272 = vld [vmem:[%s226 + $0x130] sm:$0xff]
                  %273 = vst [vmem:[%s227 + $0xb0] sm:$0xff] %v272
                  %v274 = vld [vmem:[%s226 + $0x138] sm:$0xff]
                  %275 = vst [vmem:[%s227 + $0xb8] sm:$0xff] %v274
                  %v276 = vld [vmem:[%s226 + $0x180] sm:$0xff]
                  %277 = vst [vmem:[%s227 + $0xc0] sm:$0xff] %v276
                  %v278 = vld [vmem:[%s226 + $0x188] sm:$0xff]
                  %279 = vst [vmem:[%s227 + $0xc8] sm:$0xff] %v278
                  %v280 = vld [vmem:[%s226 + $0x190] sm:$0xff]
                  %281 = vst [vmem:[%s227 + $0xd0] sm:$0xff] %v280
                  %v282 = vld [vmem:[%s226 + $0x198] sm:$0xff]
                  %283 = vst [vmem:[%s227 + $0xd8] sm:$0xff] %v282
                  %v284 = vld [vmem:[%s226 + $0x1a0] sm:$0xff]
                  %285 = vst [vmem:[%s227 + $0xe0] sm:$0xff] %v284
                  %v286 = vld [vmem:[%s226 + $0x1a8] sm:$0xff]
                  %287 = vst [vmem:[%s227 + $0xe8] sm:$0xff] %v286
                  %v288 = vld [vmem:[%s226 + $0x1b0] sm:$0xff]
                  %289 = vst [vmem:[%s227 + $0xf0] sm:$0xff] %v288
                  %v290 = vld [vmem:[%s226 + $0x1b8] sm:$0xff]
                  %291 = vst [vmem:[%s227 + $0xf8] sm:$0xff] %v290
                $region56: #{_lambda_.6} parent=50 // loop_footer
                  %s225 = sadd.s32 1, %s221
                $region57: #{_lambda_.6} parent=50 // loop_footer_branch
                  %220 = sbr.rel target = $region53
                $region58: #{_lambda_.6} parent=50 // loop_exit
                  _
              $region51: #{_lambda_.6} parent=35 // pred_fallthru
                _
              // Predicated region
              $region59: #{_lambda_.6} parent=35 // pred_check
                _
              $region60: #{_lambda_.6} parent=35 // pred_check_branch
                %293 = sbr.rel target = $region62
              $region61: #{_lambda_.6} parent=35 // pred_region
                _
              $region62: #{_lambda_.6} parent=35 // pred_fallthru
                _
            $region36: #{_lambda_.6} parent=31 // pred_fallthru
              _
            // Predicated region
            $region37: #{_lambda_.6} parent=31 // pred_check
              _
            $region38: #{_lambda_.6} parent=31 // pred_check_branch
              %144 = sbr.rel target = $region40
            $region39: #{_lambda_.6} parent=31 // pred_region
              loop: start=0, step=1, limit=1
              $region41: #{_lambda_.6} parent=39 // loop_pre_header
                _
              $region42: #{_lambda_.6} parent=39 // loop_header
                %s147 = sphi 0, %s151
                %p148 = scmp.ge.s32.totalorder %s147, 1
                %s152 = sphi %s138, %s138
                %s153 = sphi %s134, %s134
              $region43: #{_lambda_.6} parent=39 // loop_header_branch
                %150 = sbr.rel (%p148) target = $region47
              $region44: #{_lambda_.6} parent=39 // loop_body
                %v154 = vld [vmem:[%s152] sm:$0xff]
                %155 = vst [vmem:[%s153] sm:$0xff] %v154
                %v156 = vld [vmem:[%s152 + $0x8] sm:$0xff]
                %157 = vst [vmem:[%s153 + $0x8] sm:$0xff] %v156
                %v158 = vld [vmem:[%s152 + $0x10] sm:$0xff]
                %159 = vst [vmem:[%s153 + $0x10] sm:$0xff] %v158
                %v160 = vld [vmem:[%s152 + $0x18] sm:$0xff]
                %161 = vst [vmem:[%s153 + $0x18] sm:$0xff] %v160
                %v162 = vld [vmem:[%s152 + $0x20] sm:$0xff]
                %163 = vst [vmem:[%s153 + $0x20] sm:$0xff] %v162
                %v164 = vld [vmem:[%s152 + $0x28] sm:$0xff]
                %165 = vst [vmem:[%s153 + $0x28] sm:$0xff] %v164
                %v166 = vld [vmem:[%s152 + $0x30] sm:$0xff]
                %167 = vst [vmem:[%s153 + $0x30] sm:$0xff] %v166
                %v168 = vld [vmem:[%s152 + $0x38] sm:$0xff]
                %169 = vst [vmem:[%s153 + $0x38] sm:$0xff] %v168
                %v170 = vld [vmem:[%s152 + $0x80] sm:$0xff]
                %171 = vst [vmem:[%s153 + $0x40] sm:$0xff] %v170
                %v172 = vld [vmem:[%s152 + $0x88] sm:$0xff]
                %173 = vst [vmem:[%s153 + $0x48] sm:$0xff] %v172
                %v174 = vld [vmem:[%s152 + $0x90] sm:$0xff]
                %175 = vst [vmem:[%s153 + $0x50] sm:$0xff] %v174
                %v176 = vld [vmem:[%s152 + $0x98] sm:$0xff]
                %177 = vst [vmem:[%s153 + $0x58] sm:$0xff] %v176
                %v178 = vld [vmem:[%s152 + $0xa0] sm:$0xff]
                %179 = vst [vmem:[%s153 + $0x60] sm:$0xff] %v178
                %v180 = vld [vmem:[%s152 + $0xa8] sm:$0xff]
                %181 = vst [vmem:[%s153 + $0x68] sm:$0xff] %v180
                %v182 = vld [vmem:[%s152 + $0xb0] sm:$0xff]
                %183 = vst [vmem:[%s153 + $0x70] sm:$0xff] %v182
                %v184 = vld [vmem:[%s152 + $0xb8] sm:$0xff]
                %185 = vst [vmem:[%s153 + $0x78] sm:$0xff] %v184
                %v186 = vld [vmem:[%s152 + $0x100] sm:$0xff]
                %187 = vst [vmem:[%s153 + $0x80] sm:$0xff] %v186
                %v188 = vld [vmem:[%s152 + $0x108] sm:$0xff]
                %189 = vst [vmem:[%s153 + $0x88] sm:$0xff] %v188
                %v190 = vld [vmem:[%s152 + $0x110] sm:$0xff]
                %191 = vst [vmem:[%s153 + $0x90] sm:$0xff] %v190
                %v192 = vld [vmem:[%s152 + $0x118] sm:$0xff]
                %193 = vst [vmem:[%s153 + $0x98] sm:$0xff] %v192
                %v194 = vld [vmem:[%s152 + $0x120] sm:$0xff]
                %195 = vst [vmem:[%s153 + $0xa0] sm:$0xff] %v194
                %v196 = vld [vmem:[%s152 + $0x128] sm:$0xff]
                %197 = vst [vmem:[%s153 + $0xa8] sm:$0xff] %v196
                %v198 = vld [vmem:[%s152 + $0x130] sm:$0xff]
                %199 = vst [vmem:[%s153 + $0xb0] sm:$0xff] %v198
                %v200 = vld [vmem:[%s152 + $0x138] sm:$0xff]
                %201 = vst [vmem:[%s153 + $0xb8] sm:$0xff] %v200
                %v202 = vld [vmem:[%s152 + $0x180] sm:$0xff]
                %203 = vst [vmem:[%s153 + $0xc0] sm:$0xff] %v202
                %v204 = vld [vmem:[%s152 + $0x188] sm:$0xff]
                %205 = vst [vmem:[%s153 + $0xc8] sm:$0xff] %v204
                %v206 = vld [vmem:[%s152 + $0x190] sm:$0xff]
                %207 = vst [vmem:[%s153 + $0xd0] sm:$0xff] %v206
                %v208 = vld [vmem:[%s152 + $0x198] sm:$0xff]
                %209 = vst [vmem:[%s153 + $0xd8] sm:$0xff] %v208
                %v210 = vld [vmem:[%s152 + $0x1a0] sm:$0xff]
                %211 = vst [vmem:[%s153 + $0xe0] sm:$0xff] %v210
                %v212 = vld [vmem:[%s152 + $0x1a8] sm:$0xff]
                %213 = vst [vmem:[%s153 + $0xe8] sm:$0xff] %v212
                %v214 = vld [vmem:[%s152 + $0x1b0] sm:$0xff]
                %215 = vst [vmem:[%s153 + $0xf0] sm:$0xff] %v214
                %v216 = vld [vmem:[%s152 + $0x1b8] sm:$0xff]
                %217 = vst [vmem:[%s153 + $0xf8] sm:$0xff] %v216
              $region45: #{_lambda_.6} parent=39 // loop_footer
                %s151 = sadd.s32 1, %s147
              $region46: #{_lambda_.6} parent=39 // loop_footer_branch
                %146 = sbr.rel target = $region42
              $region47: #{_lambda_.6} parent=39 // loop_exit
                _
            $region40: #{_lambda_.6} parent=31 // pred_fallthru
              _
          $region32: #{_lambda_.6} parent=27 // pred_fallthru
            _
          %294 = vnop
        $region28: #{_lambda_.6} parent=23 // pred_fallthru
          _
      $region24: #{_lambda_.6} parent=5 // pred_fallthru
        _
      %p295 = scmp.le.s32.totalorder 1, %s9
      %p296 = scmp.lt.s32.totalorder %s9, 3
      %p297 = pnand %p295, %p296
      %p298 = pneg %p297
      // Predicated region
      $region63: #{_lambda_.6} parent=5 // pred_check
        _
      $region64: #{_lambda_.6} parent=5 // pred_check_branch
        %300 = sbr.rel (%p297) target = $region66
      $region65: #{_lambda_.6} parent=5 // pred_region
        %s301 = ssub.s32 %s9, 1
        %s302 = sand.u32 %s22, 1
        %s303 = sand.u32 %s22, 1
        %s304 = smul.addr %s303, 256
        %s305 = scalar_lea.vmem [#allocation2], %s304
        // Predicated region
        $region67: #{_lambda_.6} parent=65 // pred_check
          %p306 = pneg %p35
        $region68: #{_lambda_.6} parent=65 // pred_check_branch
          %308 = sbr.rel (%p306) target = $region70
        $region69: #{_lambda_.6} parent=65 // pred_region
          _
        $region70: #{_lambda_.6} parent=65 // pred_fallthru
          _
        %s309 = sand.u32 %s22, 1
        %s310 = sand.u32 %s22, 1
        %s311 = smul.addr %s310, 256
        %s312 = scalar_lea.vmem [#allocation2], %s311
        %p313 = pneg %p35
        %p314 = pneg %p32
        %p315 = pneg %p56
        %p316 = pneg %p53
        %p317 = pneg %p77
        %p318 = pneg %p74
        %p319 = pneg %p103
        %p320 = pneg %p100
        %s321 = smul.u32 8, %s14
        %p322 = scmp.lt.s32.totalorder %s321, 15
        %s323 = scalar_select %p322, %s321, 15
        %s324 = smul.addr %s323, 8
        %s325 = scalar_lea.vmem %s3, %s324
        %s326 = smul.u32 8, %s14
        %s327 = smul.u32 8, %s14
        %p328 = scmp.lt.s32.totalorder %s327, 15
        %s329 = scalar_select %p328, %s327, 15
        %s330 = smul.addr %s329, 8
        %s331 = scalar_lea.vmem %s3, %s330
        %s332 = smul.u32 8, %s14
        %v334 = vld [vmem:[%s1] sm:$0xf]
        %v335 = vld [vmem:[%s1 + $0x4] sm:$0xf]
        %v336 = vld [vmem:[%s1 + $0x8] sm:$0xf]
        %v337 = vld [vmem:[%s1 + $0xc] sm:$0xf]
        %v338 = vld [vmem:[%s1 + $0x10] sm:$0xf]
        %v339 = vld [vmem:[%s1 + $0x14] sm:$0xf]
        %v340 = vld [vmem:[%s1 + $0x18] sm:$0xf]
        %v341 = vld [vmem:[%s1 + $0x1c] sm:$0xf]
        %v342 = vld [vmem:[%s1 + $0x20] sm:$0xf]
        %v343 = vld [vmem:[%s1 + $0x24] sm:$0xf]
        %v344 = vld [vmem:[%s1 + $0x28] sm:$0xf]
        %v345 = vld [vmem:[%s1 + $0x2c] sm:$0xf]
        %v346 = vld [vmem:[%s1 + $0x30] sm:$0xf]
        %v347 = vld [vmem:[%s1 + $0x34] sm:$0xf]
        %v348 = vld [vmem:[%s1 + $0x38] sm:$0xf]
        %v349 = vld [vmem:[%s1 + $0x3c] sm:$0xf]
        %v350 = vld [vmem:[%s1 + $0x40] sm:$0xf]
        %v351 = vld [vmem:[%s1 + $0x44] sm:$0xf]
        %v352 = vld [vmem:[%s305] sm:$0xff]
        %v353 = vld [vmem:[%s305 + $0x8] sm:$0xff]
        %v354 = vld [vmem:[%s305 + $0x10] sm:$0xff]
        %v355 = vld [vmem:[%s305 + $0x18] sm:$0xff]
        %v356 = vld [vmem:[%s305 + $0x20] sm:$0xff]
        %v357 = vld [vmem:[%s305 + $0x28] sm:$0xff]
        %v358 = vld [vmem:[%s305 + $0x30] sm:$0xff]
        %v359 = vld [vmem:[%s305 + $0x38] sm:$0xff]
        %v368 = vunpack.c.l.b16 %v352
        %v369 = vunpack.c.h.b16 %v352
        %v370 = vunpack.c.l.b16 %v353
        %v371 = vunpack.c.h.b16 %v353
        %v372 = vunpack.c.l.b16 %v354
        %v373 = vunpack.c.h.b16 %v354
        %v374 = vunpack.c.l.b16 %v355
        %v375 = vunpack.c.h.b16 %v355
        %v376 = vunpack.c.l.b16 %v356
        %v377 = vunpack.c.h.b16 %v356
        %v378 = vunpack.c.l.b16 %v357
        %v379 = vunpack.c.h.b16 %v357
        %v380 = vunpack.c.l.b16 %v358
        %v381 = vunpack.c.h.b16 %v358
        %v382 = vunpack.c.l.b16 %v359
        %v383 = vunpack.c.h.b16 %v359
        %v384 = vpack.c.b16 %v370, %v368
        %v385 = vpack.c.b16 %v371, %v369
        %v386 = vpack.c.b16 %v374, %v372
        %v387 = vpack.c.b16 %v375, %v373
        %v388 = vpack.c.b16 %v378, %v376
        %v389 = vpack.c.b16 %v379, %v377
        %v390 = vpack.c.b16 %v382, %v380
        %v391 = vpack.c.b16 %v383, %v381
        %v414 = vunpack.c.l.b16 %v334
        %v415 = vunpack.c.l.b16 %v335
        %v416 = vunpack.c.l.b16 %v336
        %v417 = vunpack.c.l.b16 %v337
        %v418 = vunpack.c.l.b16 %v338
        %v419 = vunpack.c.l.b16 %v339
        %v420 = vunpack.c.l.b16 %v340
        %v421 = vunpack.c.l.b16 %v341
        %v422 = vunpack.c.l.b16 %v342
        %v423 = vunpack.c.l.b16 %v343
        %v424 = vunpack.c.l.b16 %v344
        %v425 = vunpack.c.l.b16 %v345
        %v426 = vunpack.c.l.b16 %v346
        %v427 = vunpack.c.l.b16 %v347
        %v428 = vunpack.c.l.b16 %v348
        %v429 = vunpack.c.l.b16 %v349
        %v430 = vunpack.c.l.b16 %v350
        %v431 = vunpack.c.l.b16 %v351
        %v432 = vpack.c.b16 %v415, %v414
        %v433 = vpack.c.b16 %v417, %v416
        %v434 = vpack.c.b16 %v419, %v418
        %v435 = vpack.c.b16 %v421, %v420
        %v436 = vpack.c.b16 %v423, %v422
        %v437 = vpack.c.b16 %v425, %v424
        %v438 = vpack.c.b16 %v427, %v426
        %v439 = vpack.c.b16 %v429, %v428
        %v440 = vpack.c.b16 %v431, %v430
        %vm450 = vcmask 130048
        %v452 = vsel %vm450, %v385, 0
        %v455 = vsel %vm450, %v387, 0
        %v458 = vsel %vm450, %v389, 0
        %v461 = vsel %vm450, %v391, 0
        %463 = vmatprep.subr.bf16.mxu0 0
        %464 = vmatpush1.bf16.msra.mxu0 %v432
        %465 = vmatprep.subr.bf16.mxu0 0
        %466 = vmatpush1.bf16.msra.mxu0 %v433
        %467 = vmatprep.subr.bf16.mxu0 0
        %468 = vmatpush1.bf16.msra.mxu0 %v434
        %469 = vmatprep.subr.bf16.mxu0 0
        %470 = vmatpush1.bf16.msra.mxu0 %v435
        %471 = vmatprep.subr.bf16.mxu0 0
        %472 = vmatpush1.bf16.msra.mxu0 %v436
        %473 = vmatprep.subr.bf16.mxu0 0
        %474 = vmatpush1.bf16.msra.mxu0 %v437
        %475 = vmatprep.subr.bf16.mxu0 0
        %476 = vmatpush1.bf16.msra.mxu0 %v438
        %477 = vmatprep.subr.bf16.mxu0 0
        %478 = vmatpush1.bf16.msra.mxu0 %v439
        %479 = vmatprep.subr.bf16.mxu0 0
        %480 = vmatpush1.bf16.msra.mxu0 %v440
        %481 = vmatprep.subr.bf16.mxu0 0
        %482 = vmatpush1.bf16.msra.mxu0 0
        %483 = vmatprep.subr.bf16.mxu0 0
        %484 = vmatpush1.bf16.msra.mxu0 0
        %485 = vmatprep.subr.bf16.mxu0 0
        %486 = vmatpush1.bf16.msra.mxu0 0
        %487 = vmatprep.subr.bf16.mxu0 0
        %488 = vmatpush1.bf16.msra.mxu0 0
        %489 = vmatprep.subr.bf16.mxu0 0
        %490 = vmatpush1.bf16.msra.mxu0 0
        %491 = vmatprep.subr.bf16.mxu0 0
        %492 = vmatpush1.bf16.msra.mxu0 0
        %493 = vmatprep.subr.bf16.mxu0 0
        %494 = vmatpush1.bf16.msra.mxu0 0
        %495 = vmatprep.mubr.bf16.mxu0 %v452
        %496 = vmatmul.mubr.bf16.gmra.mrb[0].mxu0 %v384
        %v497 = vpop.f32.mrb[0].mxu0
        %v498 = vadd.f32 0.0, %v497
        %v499 = vpop.f32.mrb[0].mxu0
        %v500 = vpop.f32.mrb[0].mxu0
        %v501 = vadd.f32 0.0, %v500
        %v502 = vpop.f32.mrb[0].mxu0
        %503 = vmatprep.mubr.bf16.mxu0 %v455
        %504 = vmatmul.mubr.bf16.gmra.mrb[0].mxu0 %v386
        %v505 = vpop.f32.mrb[0].mxu0
        %v506 = vadd.f32 0.0, %v505
        %v507 = vpop.f32.mrb[0].mxu0
        %v508 = vpop.f32.mrb[0].mxu0
        %v509 = vadd.f32 0.0, %v508
        %v510 = vpop.f32.mrb[0].mxu0
        %511 = vmatprep.mubr.bf16.mxu0 %v458
        %512 = vmatmul.mubr.bf16.gmra.mrb[0].mxu0 %v388
        %v513 = vpop.f32.mrb[0].mxu0
        %v514 = vadd.f32 0.0, %v513
        %v515 = vpop.f32.mrb[0].mxu0
        %v516 = vpop.f32.mrb[0].mxu0
        %v517 = vadd.f32 0.0, %v516
        %v518 = vpop.f32.mrb[0].mxu0
        %519 = vmatprep.mubr.bf16.mxu0 %v461
        %520 = vmatmul.mubr.bf16.gmra.mrb[0].mxu0 %v390
        %v521 = vpop.f32.mrb[0].mxu0
        %v522 = vadd.f32 0.0, %v521
        %v523 = vpop.f32.mrb[0].mxu0
        %v524 = vpop.f32.mrb[0].mxu0
        %v525 = vadd.f32 0.0, %v524
        %v526 = vpop.f32.mrb[0].mxu0
        %527 = vdwg.mxu0
        %s528 = scalar_lea.vmem %s305, 64 [#allocation2]
        %v529 = vld [vmem:[%s528] sm:$0xff]
        %v530 = vld [vmem:[%s528 + $0x8] sm:$0xff]
        %v531 = vld [vmem:[%s528 + $0x10] sm:$0xff]
        %v532 = vld [vmem:[%s528 + $0x18] sm:$0xff]
        %v533 = vld [vmem:[%s528 + $0x20] sm:$0xff]
        %v534 = vld [vmem:[%s528 + $0x28] sm:$0xff]
        %v535 = vld [vmem:[%s528 + $0x30] sm:$0xff]
        %v536 = vld [vmem:[%s528 + $0x38] sm:$0xff]
        %v545 = vunpack.c.l.b16 %v529
        %v546 = vunpack.c.h.b16 %v529
        %v547 = vunpack.c.l.b16 %v530
        %v548 = vunpack.c.h.b16 %v530
        %v549 = vunpack.c.l.b16 %v531
        %v550 = vunpack.c.h.b16 %v531
        %v551 = vunpack.c.l.b16 %v532
        %v552 = vunpack.c.h.b16 %v532
        %v553 = vunpack.c.l.b16 %v533
        %v554 = vunpack.c.h.b16 %v533
        %v555 = vunpack.c.l.b16 %v534
        %v556 = vunpack.c.h.b16 %v534
        %v557 = vunpack.c.l.b16 %v535
        %v558 = vunpack.c.h.b16 %v535
        %v559 = vunpack.c.l.b16 %v536
        %v560 = vunpack.c.h.b16 %v536
        %v561 = vpack.c.b16 %v547, %v545
        %v562 = vpack.c.b16 %v548, %v546
        %v563 = vpack.c.b16 %v551, %v549
        %v564 = vpack.c.b16 %v552, %v550
        %v565 = vpack.c.b16 %v555, %v553
        %v566 = vpack.c.b16 %v556, %v554
        %v567 = vpack.c.b16 %v559, %v557
        %v568 = vpack.c.b16 %v560, %v558
        %v574 = vsel %vm450, %v562, 0
        %v577 = vsel %vm450, %v564, 0
        %v580 = vsel %vm450, %v566, 0
        %v583 = vsel %vm450, %v568, 0
        %585 = vmatprep.subr.bf16.mxu0 0
        %586 = vmatpush1.bf16.msra.mxu0 %v432
        %587 = vmatprep.subr.bf16.mxu0 0
        %588 = vmatpush1.bf16.msra.mxu0 %v433
        %589 = vmatprep.subr.bf16.mxu0 0
        %590 = vmatpush1.bf16.msra.mxu0 %v434
        %591 = vmatprep.subr.bf16.mxu0 0
        %592 = vmatpush1.bf16.msra.mxu0 %v435
        %593 = vmatprep.subr.bf16.mxu0 0
        %594 = vmatpush1.bf16.msra.mxu0 %v436
        %595 = vmatprep.subr.bf16.mxu0 0
        %596 = vmatpush1.bf16.msra.mxu0 %v437
        %597 = vmatprep.subr.bf16.mxu0 0
        %598 = vmatpush1.bf16.msra.mxu0 %v438
        %599 = vmatprep.subr.bf16.mxu0 0
        %600 = vmatpush1.bf16.msra.mxu0 %v439
        %601 = vmatprep.subr.bf16.mxu0 0
        %602 = vmatpush1.bf16.msra.mxu0 %v440
        %603 = vmatprep.subr.bf16.mxu0 0
        %604 = vmatpush1.bf16.msra.mxu0 0
        %605 = vmatprep.subr.bf16.mxu0 0
        %606 = vmatpush1.bf16.msra.mxu0 0
        %607 = vmatprep.subr.bf16.mxu0 0
        %608 = vmatpush1.bf16.msra.mxu0 0
        %609 = vmatprep.subr.bf16.mxu0 0
        %610 = vmatpush1.bf16.msra.mxu0 0
        %611 = vmatprep.subr.bf16.mxu0 0
        %612 = vmatpush1.bf16.msra.mxu0 0
        %613 = vmatprep.subr.bf16.mxu0 0
        %614 = vmatpush1.bf16.msra.mxu0 0
        %615 = vmatprep.subr.bf16.mxu0 0
        %616 = vmatpush1.bf16.msra.mxu0 0
        %617 = vmatprep.mubr.bf16.mxu0 %v574
        %618 = vmatmul.mubr.bf16.gmra.mrb[0].mxu0 %v561
        %v619 = vpop.f32.mrb[0].mxu0
        %v620 = vadd.f32 0.0, %v619
        %v621 = vpop.f32.mrb[0].mxu0
        %v622 = vpop.f32.mrb[0].mxu0
        %v623 = vadd.f32 0.0, %v622
        %v624 = vpop.f32.mrb[0].mxu0
        %625 = vmatprep.mubr.bf16.mxu0 %v577
        %626 = vmatmul.mubr.bf16.gmra.mrb[0].mxu0 %v563
        %v627 = vpop.f32.mrb[0].mxu0
        %v628 = vadd.f32 0.0, %v627
        %v629 = vpop.f32.mrb[0].mxu0
        %v630 = vpop.f32.mrb[0].mxu0
        %v631 = vadd.f32 0.0, %v630
        %v632 = vpop.f32.mrb[0].mxu0
        %633 = vmatprep.mubr.bf16.mxu0 %v580
        %634 = vmatmul.mubr.bf16.gmra.mrb[0].mxu0 %v565
        %v635 = vpop.f32.mrb[0].mxu0
        %v636 = vadd.f32 0.0, %v635
        %v637 = vpop.f32.mrb[0].mxu0
        %v638 = vpop.f32.mrb[0].mxu0
        %v639 = vadd.f32 0.0, %v638
        %v640 = vpop.f32.mrb[0].mxu0
        %641 = vmatprep.mubr.bf16.mxu0 %v583
        %642 = vmatmul.mubr.bf16.gmra.mrb[0].mxu0 %v567
        %v643 = vpop.f32.mrb[0].mxu0
        %v644 = vadd.f32 0.0, %v643
        %v645 = vpop.f32.mrb[0].mxu0
        %v646 = vpop.f32.mrb[0].mxu0
        %v647 = vadd.f32 0.0, %v646
        %v648 = vpop.f32.mrb[0].mxu0
        %649 = vdwg.mxu0
        %v650 = vmax.f32 %v498, %v620
        %v651 = vmax.f32 %v501, %v623
        %v652 = vmax.f32 %v506, %v628
        %v653 = vmax.f32 %v509, %v631
        %v654 = vmax.f32 %v514, %v636
        %v655 = vmax.f32 %v517, %v639
        %v656 = vmax.f32 %v522, %v644
        %v657 = vmax.f32 %v525, %v647
        %s658 = scalar_lea.vmem %s305, 128 [#allocation2]
        %v659 = vld [vmem:[%s658] sm:$0xff]
        %v660 = vld [vmem:[%s658 + $0x8] sm:$0xff]
        %v661 = vld [vmem:[%s658 + $0x10] sm:$0xff]
        %v662 = vld [vmem:[%s658 + $0x18] sm:$0xff]
        %v663 = vld [vmem:[%s658 + $0x20] sm:$0xff]
        %v664 = vld [vmem:[%s658 + $0x28] sm:$0xff]
        %v665 = vld [vmem:[%s658 + $0x30] sm:$0xff]
        %v666 = vld [vmem:[%s658 + $0x38] sm:$0xff]
        %v675 = vunpack.c.l.b16 %v659
        %v676 = vunpack.c.h.b16 %v659
        %v677 = vunpack.c.l.b16 %v660
        %v678 = vunpack.c.h.b16 %v660
        %v679 = vunpack.c.l.b16 %v661
        %v680 = vunpack.c.h.b16 %v661
        %v681 = vunpack.c.l.b16 %v662
        %v682 = vunpack.c.h.b16 %v662
        %v683 = vunpack.c.l.b16 %v663
        %v684 = vunpack.c.h.b16 %v663
        %v685 = vunpack.c.l.b16 %v664
        %v686 = vunpack.c.h.b16 %v664
        %v687 = vunpack.c.l.b16 %v665
        %v688 = vunpack.c.h.b16 %v665
        %v689 = vunpack.c.l.b16 %v666
        %v690 = vunpack.c.h.b16 %v666
        %v691 = vpack.c.b16 %v677, %v675
        %v692 = vpack.c.b16 %v678, %v676
        %v693 = vpack.c.b16 %v681, %v679
        %v694 = vpack.c.b16 %v682, %v680
        %v695 = vpack.c.b16 %v685, %v683
        %v696 = vpack.c.b16 %v686, %v684
        %v697 = vpack.c.b16 %v689, %v687
        %v698 = vpack.c.b16 %v690, %v688
        %v704 = vsel %vm450, %v692, 0
        %v707 = vsel %vm450, %v694, 0
        %v710 = vsel %vm450, %v696, 0
        %v713 = vsel %vm450, %v698, 0
        %715 = vmatprep.subr.bf16.mxu0 0
        %716 = vmatpush1.bf16.msra.mxu0 %v432
        %717 = vmatprep.subr.bf16.mxu0 0
        %718 = vmatpush1.bf16.msra.mxu0 %v433
        %719 = vmatprep.subr.bf16.mxu0 0
        %720 = vmatpush1.bf16.msra.mxu0 %v434
        %721 = vmatprep.subr.bf16.mxu0 0
        %722 = vmatpush1.bf16.msra.mxu0 %v435
        %723 = vmatprep.subr.bf16.mxu0 0
        %724 = vmatpush1.bf16.msra.mxu0 %v436
        %725 = vmatprep.subr.bf16.mxu0 0
        %726 = vmatpush1.bf16.msra.mxu0 %v437
        %727 = vmatprep.subr.bf16.mxu0 0
        %728 = vmatpush1.bf16.msra.mxu0 %v438
        %729 = vmatprep.subr.bf16.mxu0 0
        %730 = vmatpush1.bf16.msra.mxu0 %v439
        %731 = vmatprep.subr.bf16.mxu0 0
        %732 = vmatpush1.bf16.msra.mxu0 %v440
        %733 = vmatprep.subr.bf16.mxu0 0
        %734 = vmatpush1.bf16.msra.mxu0 0
        %735 = vmatprep.subr.bf16.mxu0 0
        %736 = vmatpush1.bf16.msra.mxu0 0
        %737 = vmatprep.subr.bf16.mxu0 0
        %738 = vmatpush1.bf16.msra.mxu0 0
        %739 = vmatprep.subr.bf16.mxu0 0
        %740 = vmatpush1.bf16.msra.mxu0 0
        %741 = vmatprep.subr.bf16.mxu0 0
        %742 = vmatpush1.bf16.msra.mxu0 0
        %743 = vmatprep.subr.bf16.mxu0 0
        %744 = vmatpush1.bf16.msra.mxu0 0
        %745 = vmatprep.subr.bf16.mxu0 0
        %746 = vmatpush1.bf16.msra.mxu0 0
        %747 = vmatprep.mubr.bf16.mxu0 %v704
        %748 = vmatmul.mubr.bf16.gmra.mrb[0].mxu0 %v691
        %v749 = vpop.f32.mrb[0].mxu0
        %v750 = vadd.f32 0.0, %v749
        %v751 = vpop.f32.mrb[0].mxu0
        %v752 = vpop.f32.mrb[0].mxu0
        %v753 = vadd.f32 0.0, %v752
        %v754 = vpop.f32.mrb[0].mxu0
        %755 = vmatprep.mubr.bf16.mxu0 %v707
        %756 = vmatmul.mubr.bf16.gmra.mrb[0].mxu0 %v693
        %v757 = vpop.f32.mrb[0].mxu0
        %v758 = vadd.f32 0.0, %v757
        %v759 = vpop.f32.mrb[0].mxu0
        %v760 = vpop.f32.mrb[0].mxu0
        %v761 = vadd.f32 0.0, %v760
        %v762 = vpop.f32.mrb[0].mxu0
        %763 = vmatprep.mubr.bf16.mxu0 %v710
        %764 = vmatmul.mubr.bf16.gmra.mrb[0].mxu0 %v695
        %v765 = vpop.f32.mrb[0].mxu0
        %v766 = vadd.f32 0.0, %v765
        %v767 = vpop.f32.mrb[0].mxu0
        %v768 = vpop.f32.mrb[0].mxu0
        %v769 = vadd.f32 0.0, %v768
        %v770 = vpop.f32.mrb[0].mxu0
        %771 = vmatprep.mubr.bf16.mxu0 %v713
        %772 = vmatmul.mubr.bf16.gmra.mrb[0].mxu0 %v697
        %v773 = vpop.f32.mrb[0].mxu0
        %v774 = vadd.f32 0.0, %v773
        %v775 = vpop.f32.mrb[0].mxu0
        %v776 = vpop.f32.mrb[0].mxu0
        %v777 = vadd.f32 0.0, %v776
        %v778 = vpop.f32.mrb[0].mxu0
        %779 = vdwg.mxu0
        %v780 = vmax.f32 %v650, %v750
        %v781 = vmax.f32 %v651, %v753
        %v782 = vmax.f32 %v652, %v758
        %v783 = vmax.f32 %v653, %v761
        %v784 = vmax.f32 %v654, %v766
        %v785 = vmax.f32 %v655, %v769
        %v786 = vmax.f32 %v656, %v774
        %v787 = vmax.f32 %v657, %v777
        %s788 = scalar_lea.vmem %s305, 192 [#allocation2]
        %v789 = vld [vmem:[%s788] sm:$0xff]
        %v790 = vld [vmem:[%s788 + $0x8] sm:$0xff]
        %v791 = vld [vmem:[%s788 + $0x10] sm:$0xff]
        %v792 = vld [vmem:[%s788 + $0x18] sm:$0xff]
        %v793 = vld [vmem:[%s788 + $0x20] sm:$0xff]
        %v794 = vld [vmem:[%s788 + $0x28] sm:$0xff]
        %v795 = vld [vmem:[%s788 + $0x30] sm:$0xff]
        %v796 = vld [vmem:[%s788 + $0x38] sm:$0xff]
        %v805 = vunpack.c.l.b16 %v789
        %v806 = vunpack.c.h.b16 %v789
        %v807 = vunpack.c.l.b16 %v790
        %v808 = vunpack.c.h.b16 %v790
        %v809 = vunpack.c.l.b16 %v791
        %v810 = vunpack.c.h.b16 %v791
        %v811 = vunpack.c.l.b16 %v792
        %v812 = vunpack.c.h.b16 %v792
        %v813 = vunpack.c.l.b16 %v793
        %v814 = vunpack.c.h.b16 %v793
        %v815 = vunpack.c.l.b16 %v794
        %v816 = vunpack.c.h.b16 %v794
        %v817 = vunpack.c.l.b16 %v795
        %v818 = vunpack.c.h.b16 %v795
        %v819 = vunpack.c.l.b16 %v796
        %v820 = vunpack.c.h.b16 %v796
        %v821 = vpack.c.b16 %v807, %v805
        %v822 = vpack.c.b16 %v808, %v806
        %v823 = vpack.c.b16 %v811, %v809
        %v824 = vpack.c.b16 %v812, %v810
        %v825 = vpack.c.b16 %v815, %v813
        %v826 = vpack.c.b16 %v816, %v814
        %v827 = vpack.c.b16 %v819, %v817
        %v828 = vpack.c.b16 %v820, %v818
        %v834 = vsel %vm450, %v822, 0
        %v837 = vsel %vm450, %v824, 0
        %v840 = vsel %vm450, %v826, 0
        %v843 = vsel %vm450, %v828, 0
        %845 = vmatprep.subr.bf16.mxu0 0
        %846 = vmatpush1.bf16.msra.mxu0 %v432
        %847 = vmatprep.subr.bf16.mxu0 0
        %848 = vmatpush1.bf16.msra.mxu0 %v433
        %849 = vmatprep.subr.bf16.mxu0 0
        %850 = vmatpush1.bf16.msra.mxu0 %v434
        %851 = vmatprep.subr.bf16.mxu0 0
        %852 = vmatpush1.bf16.msra.mxu0 %v435
        %853 = vmatprep.subr.bf16.mxu0 0
        %854 = vmatpush1.bf16.msra.mxu0 %v436
        %855 = vmatprep.subr.bf16.mxu0 0
        %856 = vmatpush1.bf16.msra.mxu0 %v437
        %857 = vmatprep.subr.bf16.mxu0 0
        %858 = vmatpush1.bf16.msra.mxu0 %v438
        %859 = vmatprep.subr.bf16.mxu0 0
        %860 = vmatpush1.bf16.msra.mxu0 %v439
        %861 = vmatprep.subr.bf16.mxu0 0
        %862 = vmatpush1.bf16.msra.mxu0 %v440
        %863 = vmatprep.subr.bf16.mxu0 0
        %864 = vmatpush1.bf16.msra.mxu0 0
        %865 = vmatprep.subr.bf16.mxu0 0
        %866 = vmatpush1.bf16.msra.mxu0 0
        %867 = vmatprep.subr.bf16.mxu0 0
        %868 = vmatpush1.bf16.msra.mxu0 0
        %869 = vmatprep.subr.bf16.mxu0 0
        %870 = vmatpush1.bf16.msra.mxu0 0
        %871 = vmatprep.subr.bf16.mxu0 0
        %872 = vmatpush1.bf16.msra.mxu0 0
        %873 = vmatprep.subr.bf16.mxu0 0
        %874 = vmatpush1.bf16.msra.mxu0 0
        %875 = vmatprep.subr.bf16.mxu0 0
        %876 = vmatpush1.bf16.msra.mxu0 0
        %877 = vmatprep.mubr.bf16.mxu0 %v834
        %878 = vmatmul.mubr.bf16.gmra.mrb[0].mxu0 %v821
        %v879 = vpop.f32.mrb[0].mxu0
        %v880 = vadd.f32 0.0, %v879
        %v881 = vpop.f32.mrb[0].mxu0
        %v882 = vpop.f32.mrb[0].mxu0
        %v883 = vadd.f32 0.0, %v882
        %v884 = vpop.f32.mrb[0].mxu0
        %885 = vmatprep.mubr.bf16.mxu0 %v837
        %886 = vmatmul.mubr.bf16.gmra.mrb[0].mxu0 %v823
        %v887 = vpop.f32.mrb[0].mxu0
        %v888 = vadd.f32 0.0, %v887
        %v889 = vpop.f32.mrb[0].mxu0
        %v890 = vpop.f32.mrb[0].mxu0
        %v891 = vadd.f32 0.0, %v890
        %v892 = vpop.f32.mrb[0].mxu0
        %893 = vmatprep.mubr.bf16.mxu0 %v840
        %894 = vmatmul.mubr.bf16.gmra.mrb[0].mxu0 %v825
        %v895 = vpop.f32.mrb[0].mxu0
        %v896 = vadd.f32 0.0, %v895
        %v897 = vpop.f32.mrb[0].mxu0
        %v898 = vpop.f32.mrb[0].mxu0
        %v899 = vadd.f32 0.0, %v898
        %v900 = vpop.f32.mrb[0].mxu0
        %901 = vmatprep.mubr.bf16.mxu0 %v843
        %902 = vmatmul.mubr.bf16.gmra.mrb[0].mxu0 %v827
        %v903 = vpop.f32.mrb[0].mxu0
        %v904 = vadd.f32 0.0, %v903
        %v905 = vpop.f32.mrb[0].mxu0
        %v906 = vpop.f32.mrb[0].mxu0
        %v907 = vadd.f32 0.0, %v906
        %v908 = vpop.f32.mrb[0].mxu0
        %909 = vdwg.mxu0
        %v910 = vmax.f32 %v780, %v880
        %v911 = vmax.f32 %v781, %v883
        %v912 = vmax.f32 %v782, %v888
        %v913 = vmax.f32 %v783, %v891
        %v914 = vmax.f32 %v784, %v896
        %v915 = vmax.f32 %v785, %v899
        %v916 = vmax.f32 %v786, %v904
        %v917 = vmax.f32 %v787, %v907
        %v918 = vld [vmem:[%s2] sm:$0x1]
        %v920 = vlaneseq
        %v921 = vshrl.u32 %v920, 7
        %v922 = vsub.s32 0, %v921
        %v923 = vrot.slane %v918, %v922
        %v925 = vadd.f32 %v910, %v923
        %v926 = vadd.f32 %v911, %v923
        %v927 = vadd.f32 %v912, %v923
        %v928 = vadd.f32 %v913, %v923
        %v929 = vadd.f32 %v914, %v923
        %v930 = vadd.f32 %v915, %v923
        %v931 = vadd.f32 %v916, %v923
        %v932 = vadd.f32 %v917, %v923
        %vm933 = vcmp.ge.f32.partialorder %v925, 0.0
        %vm934 = vcmp.ge.f32.partialorder %v926, 0.0
        %vm935 = vcmp.ge.f32.partialorder %v927, 0.0
        %vm936 = vcmp.ge.f32.partialorder %v928, 0.0
        %vm937 = vcmp.ge.f32.partialorder %v929, 0.0
        %vm938 = vcmp.ge.f32.partialorder %v930, 0.0
        %vm939 = vcmp.ge.f32.partialorder %v931, 0.0
        %vm940 = vcmp.ge.f32.partialorder %v932, 0.0
        %v941 = vmul.f32 %v925, 0.01
        %v942 = vmul.f32 %v926, 0.01
        %v943 = vmul.f32 %v927, 0.01
        %v944 = vmul.f32 %v928, 0.01
        %v945 = vmul.f32 %v929, 0.01
        %v946 = vmul.f32 %v930, 0.01
        %v947 = vmul.f32 %v931, 0.01
        %v948 = vmul.f32 %v932, 0.01
        %v949 = vsel %vm933, %v925, %v941
        %v950 = vsel %vm934, %v926, %v942
        %v951 = vsel %vm935, %v927, %v943
        %v952 = vsel %vm936, %v928, %v944
        %v953 = vsel %vm937, %v929, %v945
        %v954 = vsel %vm938, %v930, %v946
        %v955 = vsel %vm939, %v931, %v947
        %v956 = vsel %vm940, %v932, %v948
        %vm957 = vcmask 261120
        %958 = vst.msk [vmem:[%s331] sm:$0xff] %vm957, %v949
        %959 = vst.msk [vmem:[%s331 + $0x8] sm:$0xff] %vm957, %v950
        %960 = vst.msk [vmem:[%s331 + $0x10] sm:$0xff] %vm957, %v951
        %961 = vst.msk [vmem:[%s331 + $0x18] sm:$0xff] %vm957, %v952
        %962 = vst.msk [vmem:[%s331 + $0x20] sm:$0xff] %vm957, %v953
        %963 = vst.msk [vmem:[%s331 + $0x28] sm:$0xff] %vm957, %v954
        %964 = vst.msk [vmem:[%s331 + $0x30] sm:$0xff] %vm957, %v955
        %965 = vst.msk [vmem:[%s331 + $0x38] sm:$0xff] %vm957, %v956
        %s966 = smul.u32 8, %s14
        %p967 = scmp.lt.s32.totalorder %s966, 15
        %s968 = scalar_select %p967, %s966, 15
        %s969 = smul.addr %s968, 8
        %s970 = scalar_lea.vmem %s3, %s969
        // Predicated region
        $region71: #{_lambda_.6} parent=65 // pred_check
          %p971 = pneg %p100
        $region72: #{_lambda_.6} parent=65 // pred_check_branch
          %973 = sbr.rel (%p971) target = $region74
        $region73: #{_lambda_.6} parent=65 // pred_region
          %s974 = smul.u32 8, %s14
        $region74: #{_lambda_.6} parent=65 // pred_fallthru
          _
      $region66: #{_lambda_.6} parent=5 // pred_fallthru
        _
      %p975 = scmp.le.s32.totalorder 2, %s9
      // Predicated region
      $region75: #{_lambda_.6} parent=5 // pred_check
        %p976 = pneg %p975
      $region76: #{_lambda_.6} parent=5 // pred_check_branch
        %978 = sbr.rel (%p976) target = $region78
      $region77: #{_lambda_.6} parent=5 // pred_region
        %s979 = ssub.s32 %s9, 2
        // Predicated region
        $region79: #{_lambda_.6} parent=77 // pred_check
          %p980 = pneg %p106
        $region80: #{_lambda_.6} parent=77 // pred_check_branch
          %982 = sbr.rel (%p980) target = $region82
        $region81: #{_lambda_.6} parent=77 // pred_region
          %s983 = smul.u32 8, %s15
          %p984 = scmp.lt.s32.totalorder %s983, 15
          %s985 = scalar_select %p984, %s983, 15
          %s986 = smul.addr %s985, 8
          %s987 = scalar_lea.vmem %s3, %s986
        $region82: #{_lambda_.6} parent=77 // pred_fallthru
          _
      $region78: #{_lambda_.6} parent=5 // pred_fallthru
        _
    $region6: #{_lambda_.6} parent=1 // loop_footer
      %s13 = sadd.s32 1, %s9
    $region7: #{_lambda_.6} parent=1 // loop_footer_branch
      %8 = sbr.rel target = $region3
    $region8: #{_lambda_.6} parent=1 // loop_exit
      _

// kernel: _lambda_.7
$region0: #{_lambda_.7}
  #allocation0 [shape = 'u32[]', space=smem, size = 0x4, offset = 0x4, fixed_abs, tag = 'smem constant byte address 0x4 - core index']
  #allocation1 [shape = 'u32[144,128]{1,0:T(1,128)}', space=vmem, size = 0x12000, scoped, tag = 'internal scratch']
  %s0 = inlined_call_operand.vmem [shape: bf16[4,32,288], index: 0, kind: input, shape index: {}]
  %s1 = inlined_call_operand.vmem [shape: bf16[288,64], index: 1, kind: input, shape index: {}]
  %s2 = inlined_call_operand.vmem [shape: f32[1,64], index: 2, kind: input, shape index: {}]
  %s3 = inlined_call_operand.vmem [shape: f32[32,64], index: 3, kind: output, shape index: {}]
  %s4 = sld [smem:[#allocation0]]
  $region71: #{_lambda_.7} parent=0
    _
  %s6 = ssub.s32 1, %s4
  %s7 = scalar_select 0, %s6, %s4
  $region1: #{_lambda_.7} parent=0
    #allocation2 [shape = 'u8[98304]{0}', space=vmem, size = 0x18000, scoped, tag = 'input window, operand 0']
    loop: start=0, step=1, limit=4
    $region2: #{_lambda_.7} parent=1 // loop_pre_header
      _
    $region3: #{_lambda_.7} parent=1 // loop_header
      %s9 = sphi 0, %s13
      %p10 = scmp.ge.s32.totalorder %s9, 4
      %s19 = sphi 0, %s21
      %s22 = sphi 0, %s19
      %s23 = sphi 0, %s22
      %s39 = sphi 0, %s23
      %s43 = sphi 0, %s43
      %s45 = sphi 0, %s43
      %s46 = sphi 0, %s45
      %s60 = sphi 0, %s46
      %s64 = sphi 0, %s64
      %s66 = sphi 0, %s64
      %s67 = sphi 0, %s66
      %s81 = sphi 0, %s67
      %s87 = sphi 0, %s89
      %s90 = sphi 0, %s87
      %s91 = sphi 0, %s90
      %s107 = sphi 0, %s91
    $region4: #{_lambda_.7} parent=1 // loop_header_branch
      %12 = sbr.rel (%p10) target = $region8
    $region5: #{_lambda_.7} parent=1 // loop_body
      %s14 = ssub.s32 %s9, 1
      %s15 = ssub.s32 %s9, 2
      %s16 = sadd.s32 %s9, 1
      %s17 = ssub.s32 %s9, %s16
      %p18 = scmp.eq.s32.totalorder %s17, 0
      %s20 = sadd.s32 %s19, 1
      %s21 = scalar_select %p18, %s19, %s20
      %p24 = pneg %p18
      %p25 = scmp.eq.s32.totalorder %s9, 1
      %p26 = por %p24, %p25
      %p27 = scmp.ne.s32.totalorder %s19, %s22
      %p28 = scmp.eq.s32.totalorder %s9, 0
      %p29 = por %p27, %p28
      %p30 = scmp.ne.s32.totalorder %s19, %s22
      %p31 = scmp.eq.s32.totalorder %s14, 1
      %p32 = por %p30, %p31
      %p33 = scmp.ne.s32.totalorder %s22, %s23
      %p34 = scmp.eq.s32.totalorder %s14, 0
      %p35 = por %p33, %p34
      %p36 = scmp.ne.s32.totalorder %s22, %s23
      %p37 = scmp.eq.s32.totalorder %s15, 1
      %p38 = por %p36, %p37
      %p40 = scmp.ne.s32.totalorder %s23, %s39
      %p41 = scmp.eq.s32.totalorder %s15, 0
      %p42 = por %p40, %p41
      %s44 = sadd.s32 %s43, 1
      %p47 = scmp.eq.s32.totalorder %s9, 1
      %p48 = scmp.ne.s32.totalorder %s43, %s45
      %p49 = scmp.eq.s32.totalorder %s9, 0
      %p50 = por %p48, %p49
      %p51 = scmp.ne.s32.totalorder %s43, %s45
      %p52 = scmp.eq.s32.totalorder %s14, 1
      %p53 = por %p51, %p52
      %p54 = scmp.ne.s32.totalorder %s45, %s46
      %p55 = scmp.eq.s32.totalorder %s14, 0
      %p56 = por %p54, %p55
      %p57 = scmp.ne.s32.totalorder %s45, %s46
      %p58 = scmp.eq.s32.totalorder %s15, 1
      %p59 = por %p57, %p58
      %p61 = scmp.ne.s32.totalorder %s46, %s60
      %p62 = scmp.eq.s32.totalorder %s15, 0
      %p63 = por %p61, %p62
      %s65 = sadd.s32 %s64, 1
      %p68 = scmp.eq.s32.totalorder %s9, 1
      %p69 = scmp.ne.s32.totalorder %s64, %s66
      %p70 = scmp.eq.s32.totalorder %s9, 0
      %p71 = por %p69, %p70
      %p72 = scmp.ne.s32.totalorder %s64, %s66
      %p73 = scmp.eq.s32.totalorder %s14, 1
      %p74 = por %p72, %p73
      %p75 = scmp.ne.s32.totalorder %s66, %s67
      %p76 = scmp.eq.s32.totalorder %s14, 0
      %p77 = por %p75, %p76
      %p78 = scmp.ne.s32.totalorder %s66, %s67
      %p79 = scmp.eq.s32.totalorder %s15, 1
      %p80 = por %p78, %p79
      %p82 = scmp.ne.s32.totalorder %s67, %s81
      %p83 = scmp.eq.s32.totalorder %s15, 0
      %p84 = por %p82, %p83
      %s85 = ssub.s32 %s9, %s16
      %p86 = scmp.eq.s32.totalorder %s85, 0
      %s88 = sadd.s32 %s87, 1
      %s89 = scalar_select %p86, %s87, %s88
      %p92 = pneg %p86
      %p93 = scmp.eq.s32.totalorder %s9, 1
      %p94 = por %p92, %p93
      %p95 = scmp.ne.s32.totalorder %s87, %s90
      %p96 = scmp.eq.s32.totalorder %s9, 0
      %p97 = por %p95, %p96
      %p98 = scmp.ne.s32.totalorder %s87, %s90
      %p99 = scmp.eq.s32.totalorder %s14, 1
      %p100 = por %p98, %p99
      %p101 = scmp.ne.s32.totalorder %s90, %s91
      %p102 = scmp.eq.s32.totalorder %s14, 0
      %p103 = por %p101, %p102
      %p104 = scmp.ne.s32.totalorder %s90, %s91
      %p105 = scmp.eq.s32.totalorder %s15, 1
      %p106 = por %p104, %p105
      %p108 = scmp.ne.s32.totalorder %s91, %s107
      %p109 = scmp.eq.s32.totalorder %s15, 0
      %p110 = por %p108, %p109
      %p111 = scmp.le.s32.totalorder 1, %s9
      %p112 = scmp.lt.s32.totalorder %s9, 3
      %p113 = pnand %p111, %p112
      %p114 = pneg %p113
      // Predicated region
      $region9: #{_lambda_.7} parent=5 // pred_check
        _
      $region10: #{_lambda_.7} parent=5 // pred_check_branch
        %116 = sbr.rel (%p113) target = $region12
      $region11: #{_lambda_.7} parent=5 // pred_region
        %s117 = ssub.s32 %s9, 1
        // Predicated region
        $region13: #{_lambda_.7} parent=11 // pred_check
          %p118 = pneg %p56
        $region14: #{_lambda_.7} parent=11 // pred_check_branch
          %120 = sbr.rel (%p118) target = $region16
        $region15: #{_lambda_.7} parent=11 // pred_region
          _
        $region16: #{_lambda_.7} parent=11 // pred_fallthru
          _
        // Predicated region
        $region17: #{_lambda_.7} parent=11 // pred_check
          %p121 = pneg %p77
        $region18: #{_lambda_.7} parent=11 // pred_check_branch
          %123 = sbr.rel (%p121) target = $region20
        $region19: #{_lambda_.7} parent=11 // pred_region
          _
        $region20: #{_lambda_.7} parent=11 // pred_fallthru
          _
      $region12: #{_lambda_.7} parent=5 // pred_fallthru
        _
      %p124 = scmp.lt.s32.totalorder %s9, 2
      // Predicated region
      $region21: #{_lambda_.7} parent=5 // pred_check
        %p125 = pneg %p124
      $region22: #{_lambda_.7} parent=5 // pred_check_branch
        %127 = sbr.rel (%p125) target = $region24
      $region23: #{_lambda_.7} parent=5 // pred_region
        // Predicated region
        $region25: #{_lambda_.7} parent=23 // pred_check
          %p128 = pneg %p29
        $region26: #{_lambda_.7} parent=23 // pred_check_branch
          %130 = sbr.rel (%p128) target = $region28
        $region27: #{_lambda_.7} parent=23 // pred_region
          %s131 = sand.u32 %s19, 1
          %s132 = sand.u32 %s19, 1
          %s133 = smul.addr %s132, 96
          %s134 = scalar_lea.vmem [#allocation2], %s133
          %s135 = smul.u32 2, %s9
          %s136 = smul.addr %s135, 3
          %s137 = smul.addr %s136, 4
          %s138 = scalar_lea.vmem %s0, %s137
          // Predicated region
          $region29: #{_lambda_.7} parent=27 // pred_check
            _
          $region30: #{_lambda_.7} parent=27 // pred_check_branch
            %140 = sbr.rel (0) target = $region32
          $region31: #{_lambda_.7} parent=27 // pred_region
            // Predicated region
            $region33: #{_lambda_.7} parent=31 // pred_check
              _
            $region34: #{_lambda_.7} parent=31 // pred_check_branch
              %142 = sbr.rel (0) target = $region36
            $region35: #{_lambda_.7} parent=31 // pred_region
              %s143 = scalar_lea.vmem %s138, 8
              %s144 = scalar_lea.vmem %s134, 8 [#allocation2]
              loop: start=0, step=1, limit=1
              $region37: #{_lambda_.7} parent=35 // loop_pre_header
                _
              $region38: #{_lambda_.7} parent=35 // loop_header
                %s146 = sphi 0, %s150
                %p147 = scmp.ge.s32.totalorder %s146, 1
                %s151 = sphi %s138, %s138
                %s152 = sphi %s134, %s134
              $region39: #{_lambda_.7} parent=35 // loop_header_branch
                %149 = sbr.rel (%p147) target = $region43
              $region40: #{_lambda_.7} parent=35 // loop_body
                %v153 = vld [vmem:[%s151] sm:$0xff]
                %154 = vst [vmem:[%s152] sm:$0xff] %v153
                %v155 = vld [vmem:[%s151 + $0xc] sm:$0xff]
                %156 = vst [vmem:[%s152 + $0xc] sm:$0xff] %v155
                %v157 = vld [vmem:[%s151 + $0x30] sm:$0xff]
                %158 = vst [vmem:[%s152 + $0x18] sm:$0xff] %v157
                %v159 = vld [vmem:[%s151 + $0x3c] sm:$0xff]
                %160 = vst [vmem:[%s152 + $0x24] sm:$0xff] %v159
                %v161 = vld [vmem:[%s151 + $0x60] sm:$0xff]
                %162 = vst [vmem:[%s152 + $0x30] sm:$0xff] %v161
                %v163 = vld [vmem:[%s151 + $0x6c] sm:$0xff]
                %164 = vst [vmem:[%s152 + $0x3c] sm:$0xff] %v163
                %v165 = vld [vmem:[%s151 + $0x90] sm:$0xff]
                %166 = vst [vmem:[%s152 + $0x48] sm:$0xff] %v165
                %v167 = vld [vmem:[%s151 + $0x9c] sm:$0xff]
                %168 = vst [vmem:[%s152 + $0x54] sm:$0xff] %v167
              $region41: #{_lambda_.7} parent=35 // loop_footer
                %s150 = sadd.s32 1, %s146
              $region42: #{_lambda_.7} parent=35 // loop_footer_branch
                %145 = sbr.rel target = $region38
              $region43: #{_lambda_.7} parent=35 // loop_exit
                _
              loop: start=0, step=1, limit=1
              $region44: #{_lambda_.7} parent=35 // loop_pre_header
                _
              $region45: #{_lambda_.7} parent=35 // loop_header
                %s171 = sphi 0, %s175
                %p172 = scmp.ge.s32.totalorder %s171, 1
                %s176 = sphi %s143, %s143
                %s177 = sphi %s144, %s144
              $region46: #{_lambda_.7} parent=35 // loop_header_branch
                %174 = sbr.rel (%p172) target = $region50
              $region47: #{_lambda_.7} parent=35 // loop_body
                %v178 = vld [vmem:[%s176] sm:$0xf]
                %179 = vst [vmem:[%s177] sm:$0xf] %v178
                %v180 = vld [vmem:[%s176 + $0xc] sm:$0xf]
                %181 = vst [vmem:[%s177 + $0xc] sm:$0xf] %v180
                %v182 = vld [vmem:[%s176 + $0x30] sm:$0xf]
                %183 = vst [vmem:[%s177 + $0x18] sm:$0xf] %v182
                %v184 = vld [vmem:[%s176 + $0x3c] sm:$0xf]
                %185 = vst [vmem:[%s177 + $0x24] sm:$0xf] %v184
                %v186 = vld [vmem:[%s176 + $0x60] sm:$0xf]
                %187 = vst [vmem:[%s177 + $0x30] sm:$0xf] %v186
                %v188 = vld [vmem:[%s176 + $0x6c] sm:$0xf]
                %189 = vst [vmem:[%s177 + $0x3c] sm:$0xf] %v188
                %v190 = vld [vmem:[%s176 + $0x90] sm:$0xf]
                %191 = vst [vmem:[%s177 + $0x48] sm:$0xf] %v190
                %v192 = vld [vmem:[%s176 + $0x9c] sm:$0xf]
                %193 = vst [vmem:[%s177 + $0x54] sm:$0xf] %v192
              $region48: #{_lambda_.7} parent=35 // loop_footer
                %s175 = sadd.s32 1, %s171
              $region49: #{_lambda_.7} parent=35 // loop_footer_branch
                %170 = sbr.rel target = $region45
              $region50: #{_lambda_.7} parent=35 // loop_exit
                _
            $region36: #{_lambda_.7} parent=31 // pred_fallthru
              _
          $region32: #{_lambda_.7} parent=27 // pred_fallthru
            _
          %194 = vnop
        $region28: #{_lambda_.7} parent=23 // pred_fallthru
          _
      $region24: #{_lambda_.7} parent=5 // pred_fallthru
        _
      %p195 = scmp.le.s32.totalorder 1, %s9
      %p196 = scmp.lt.s32.totalorder %s9, 3
      %p197 = pnand %p195, %p196
      %p198 = pneg %p197
      // Predicated region
      $region51: #{_lambda_.7} parent=5 // pred_check
        _
      $region52: #{_lambda_.7} parent=5 // pred_check_branch
        %200 = sbr.rel (%p197) target = $region54
      $region53: #{_lambda_.7} parent=5 // pred_region
        %s201 = ssub.s32 %s9, 1
        %s202 = sand.u32 %s22, 1
        %s203 = sand.u32 %s22, 1
        %s204 = smul.addr %s203, 96
        %s205 = scalar_lea.vmem [#allocation2], %s204
        // Predicated region
        $region55: #{_lambda_.7} parent=53 // pred_check
          %p206 = pneg %p35
        $region56: #{_lambda_.7} parent=53 // pred_check_branch
          %208 = sbr.rel (%p206) target = $region58
        $region57: #{_lambda_.7} parent=53 // pred_region
          _
        $region58: #{_lambda_.7} parent=53 // pred_fallthru
          _
        %s209 = sand.u32 %s22, 1
        %s210 = sand.u32 %s22, 1
        %s211 = smul.addr %s210, 96
        %s212 = scalar_lea.vmem [#allocation2], %s211
        %p213 = pneg %p35
        %p214 = pneg %p32
        %p215 = pneg %p56
        %p216 = pneg %p53
        %p217 = pneg %p77
        %p218 = pneg %p74
        %p219 = pneg %p103
        %p220 = pneg %p100
        %s221 = smul.u32 2, %s14
        %p222 = scmp.lt.s32.totalorder %s221, 3
        %s223 = scalar_select %p222, %s221, 3
        %s224 = smul.addr %s223, 8
        %s225 = scalar_lea.vmem %s3, %s224
        %s226 = smul.u32 2, %s14
        %s227 = smul.u32 2, %s14
        %p228 = scmp.lt.s32.totalorder %s227, 3
        %s229 = scalar_select %p228, %s227, 3
        %s230 = smul.addr %s229, 8
        %s231 = scalar_lea.vmem %s3, %s230
        %s232 = smul.u32 2, %s14
        %v234 = vld [vmem:[%s1] sm:$0xf]
        %v235 = vld [vmem:[%s1 + $0x4] sm:$0xf]
        %v236 = vld [vmem:[%s1 + $0x8] sm:$0xf]
        %v237 = vld [vmem:[%s1 + $0xc] sm:$0xf]
        %v238 = vld [vmem:[%s1 + $0x10] sm:$0xf]
        %v239 = vld [vmem:[%s1 + $0x14] sm:$0xf]
        %v240 = vld [vmem:[%s1 + $0x18] sm:$0xf]
        %v241 = vld [vmem:[%s1 + $0x1c] sm:$0xf]
        %v242 = vld [vmem:[%s1 + $0x20] sm:$0xf]
        %v243 = vld [vmem:[%s1 + $0x24] sm:$0xf]
        %v244 = vld [vmem:[%s1 + $0x28] sm:$0xf]
        %v245 = vld [vmem:[%s1 + $0x2c] sm:$0xf]
        %v246 = vld [vmem:[%s1 + $0x30] sm:$0xf]
        %v247 = vld [vmem:[%s1 + $0x34] sm:$0xf]
        %v248 = vld [vmem:[%s1 + $0x38] sm:$0xf]
        %v249 = vld [vmem:[%s1 + $0x3c] sm:$0xf]
        %v250 = vld [vmem:[%s1 + $0x40] sm:$0xf]
        %v251 = vld [vmem:[%s1 + $0x44] sm:$0xf]
        %v252 = vld [vmem:[%s1 + $0x48] sm:$0xf]
        %v253 = vld [vmem:[%s1 + $0x4c] sm:$0xf]
        %v254 = vld [vmem:[%s1 + $0x50] sm:$0xf]
        %v255 = vld [vmem:[%s1 + $0x54] sm:$0xf]
        %v256 = vld [vmem:[%s1 + $0x58] sm:$0xf]
        %v257 = vld [vmem:[%s1 + $0x5c] sm:$0xf]
        %v258 = vld [vmem:[%s1 + $0x60] sm:$0xf]
        %v259 = vld [vmem:[%s1 + $0x64] sm:$0xf]
        %v260 = vld [vmem:[%s1 + $0x68] sm:$0xf]
        %v261 = vld [vmem:[%s1 + $0x6c] sm:$0xf]
        %v262 = vld [vmem:[%s1 + $0x70] sm:$0xf]
        %v263 = vld [vmem:[%s1 + $0x74] sm:$0xf]
        %v264 = vld [vmem:[%s1 + $0x78] sm:$0xf]
        %v265 = vld [vmem:[%s1 + $0x7c] sm:$0xf]
        %v266 = vld [vmem:[%s1 + $0x80] sm:$0xf]
        %v267 = vld [vmem:[%s1 + $0x84] sm:$0xf]
        %v268 = vld [vmem:[%s1 + $0x88] sm:$0xf]
        %v269 = vld [vmem:[%s1 + $0x8c] sm:$0xf]
        %v270 = vld [vmem:[%s205] sm:$0xff]
        %v271 = vld [vmem:[%s205 + $0x8] sm:$0xf]
        %v272 = vld [vmem:[%s205 + $0xc] sm:$0xff]
        %v273 = vld [vmem:[%s205 + $0x14] sm:$0xf]
        %v278 = vunpack.c.l.b16 %v270
        %v279 = vunpack.c.h.b16 %v270
        %v280 = vunpack.c.l.b16 %v271
        %v281 = vunpack.c.l.b16 %v272
        %v282 = vunpack.c.h.b16 %v272
        %v283 = vunpack.c.l.b16 %v273
        %v284 = vpack.c.b16 %v281, %v278
        %v285 = vpack.c.b16 %v282, %v279
        %v286 = vpack.c.b16 %v283, %v280
        %v325 = vunpack.c.l.b16 %v234
        %v326 = vunpack.c.l.b16 %v235
        %v327 = vunpack.c.l.b16 %v236
        %v328 = vunpack.c.l.b16 %v237
        %v329 = vunpack.c.l.b16 %v238
        %v330 = vunpack.c.l.b16 %v239
        %v331 = vunpack.c.l.b16 %v240
        %v332 = vunpack.c.l.b16 %v241
        %v333 = vunpack.c.l.b16 %v242
        %v334 = vunpack.c.l.b16 %v243
        %v335 = vunpack.c.l.b16 %v244
        %v336 = vunpack.c.l.b16 %v245
        %v337 = vunpack.c.l.b16 %v246
        %v338 = vunpack.c.l.b16 %v247
        %v339 = vunpack.c.l.b16 %v248
        %v340 = vunpack.c.l.b16 %v249
        %v341 = vunpack.c.l.b16 %v250
        %v342 = vunpack.c.l.b16 %v251
        %v343 = vunpack.c.l.b16 %v252
        %v344 = vunpack.c.l.b16 %v253
        %v345 = vunpack.c.l.b16 %v254
        %v346 = vunpack.c.l.b16 %v255
        %v347 = vunpack.c.l.b16 %v256
        %v348 = vunpack.c.l.b16 %v257
        %v349 = vunpack.c.l.b16 %v258
        %v350 = vunpack.c.l.b16 %v259
        %v351 = vunpack.c.l.b16 %v260
        %v352 = vunpack.c.l.b16 %v261
        %v353 = vunpack.c.l.b16 %v262
        %v354 = vunpack.c.l.b16 %v263
        %v355 = vunpack.c.l.b16 %v264
        %v356 = vunpack.c.l.b16 %v265
        %v357 = vunpack.c.l.b16 %v266
        %v358 = vunpack.c.l.b16 %v267
        %v359 = vunpack.c.l.b16 %v268
        %v360 = vunpack.c.l.b16 %v269
        %v361 = vpack.c.b16 %v326, %v325
        %v362 = vpack.c.b16 %v328, %v327
        %v363 = vpack.c.b16 %v330, %v329
        %v364 = vpack.c.b16 %v332, %v331
        %v365 = vpack.c.b16 %v334, %v333
        %v366 = vpack.c.b16 %v336, %v335
        %v367 = vpack.c.b16 %v338, %v337
        %v368 = vpack.c.b16 %v340, %v339
        %v369 = vpack.c.b16 %v342, %v341
        %v370 = vpack.c.b16 %v344, %v343
        %v371 = vpack.c.b16 %v346, %v345
        %v372 = vpack.c.b16 %v348, %v347
        %v373 = vpack.c.b16 %v350, %v349
        %v374 = vpack.c.b16 %v352, %v351
        %v375 = vpack.c.b16 %v354, %v353
        %v376 = vpack.c.b16 %v356, %v355
        %v377 = vpack.c.b16 %v358, %v357
        %v378 = vpack.c.b16 %v360, %v359
        %vm397 = vcmask 261120
        %v399 = vsel %vm397, %v286, 0
        %401 = vmatprep.subr.bf16.mxu0 0
        %402 = vmatpush1.bf16.msra.mxu0 %v361
        %403 = vmatprep.subr.bf16.mxu0 0
        %404 = vmatpush1.bf16.msra.mxu0 %v362
        %405 = vmatprep.subr.bf16.mxu0 0
        %406 = vmatpush1.bf16.msra.mxu0 %v363
        %407 = vmatprep.subr.bf16.mxu0 0
        %408 = vmatpush1.bf16.msra.mxu0 %v364
        %409 = vmatprep.subr.bf16.mxu0 0
        %410 = vmatpush1.bf16.msra.mxu0 %v365
        %411 = vmatprep.subr.bf16.mxu0 0
        %412 = vmatpush1.bf16.msra.mxu0 %v366
        %413 = vmatprep.subr.bf16.mxu0 0
        %414 = vmatpush1.bf16.msra.mxu0 %v367
        %415 = vmatprep.subr.bf16.mxu0 0
        %416 = vmatpush1.bf16.msra.mxu0 %v368
        %417 = vmatprep.subr.bf16.mxu0 0
        %418 = vmatpush1.bf16.msra.mxu0 %v369
        %419 = vmatprep.subr.bf16.mxu0 0
        %420 = vmatpush1.bf16.msra.mxu0 %v370
        %421 = vmatprep.subr.bf16.mxu0 0
        %422 = vmatpush1.bf16.msra.mxu0 %v371
        %423 = vmatprep.subr.bf16.mxu0 0
        %424 = vmatpush1.bf16.msra.mxu0 %v372
        %425 = vmatprep.subr.bf16.mxu0 0
        %426 = vmatpush1.bf16.msra.mxu0 %v373
        %427 = vmatprep.subr.bf16.mxu0 0
        %428 = vmatpush1.bf16.msra.mxu0 %v374
        %429 = vmatprep.subr.bf16.mxu0 0
        %430 = vmatpush1.bf16.msra.mxu0 %v375
        %431 = vmatprep.subr.bf16.mxu0 0
        %432 = vmatpush1.bf16.msra.mxu0 %v376
        %433 = vmatprep.mubr.bf16.mxu0 %v285
        %434 = vmatmul.mubr.bf16.gmra.mrb[0].mxu0 %v284
        %v435 = vpop.f32.mrb[0].mxu0
        %v436 = vadd.f32 0.0, %v435
        %v437 = vpop.f32.mrb[0].mxu0
        %v438 = vpop.f32.mrb[0].mxu0
        %v439 = vadd.f32 0.0, %v438
        %v440 = vpop.f32.mrb[0].mxu0
        %441 = vdwg.mxu0
        %442 = vmatprep.subr.bf16.mxu0 0
        %443 = vmatpush1.bf16.msra.mxu0 %v377
        %444 = vmatprep.subr.bf16.mxu0 0
        %445 = vmatpush1.bf16.msra.mxu0 %v378
        %446 = vmatprep.subr.bf16.mxu0 0
        %447 = vmatpush1.bf16.msra.mxu0 0
        %448 = vmatprep.subr.bf16.mxu0 0
        %449 = vmatpush1.bf16.msra.mxu0 0
        %450 = vmatprep.subr.bf16.mxu0 0
        %451 = vmatpush1.bf16.msra.mxu0 0
        %452 = vmatprep.subr.bf16.mxu0 0
        %453 = vmatpush1.bf16.msra.mxu0 0
        %454 = vmatprep.subr.bf16.mxu0 0
        %455 = vmatpush1.bf16.msra.mxu0 0
        %456 = vmatprep.subr.bf16.mxu0 0
        %457 = vmatpush1.bf16.msra.mxu0 0
        %458 = vmatprep.subr.bf16.mxu0 0
        %459 = vmatpush1.bf16.msra.mxu0 0
        %460 = vmatprep.subr.bf16.mxu0 0
        %461 = vmatpush1.bf16.msra.mxu0 0
        %462 = vmatprep.subr.bf16.mxu0 0
        %463 = vmatpush1.bf16.msra.mxu0 0
        %464 = vmatprep.subr.bf16.mxu0 0
        %465 = vmatpush1.bf16.msra.mxu0 0
        %466 = vmatprep.subr.bf16.mxu0 0
        %467 = vmatpush1.bf16.msra.mxu0 0
        %468 = vmatprep.subr.bf16.mxu0 0
        %469 = vmatpush1.bf16.msra.mxu0 0
        %470 = vmatprep.subr.bf16.mxu0 0
        %471 = vmatpush1.bf16.msra.mxu0 0
        %472 = vmatprep.subr.bf16.mxu0 0
        %473 = vmatpush1.bf16.msra.mxu0 0
        %474 = vmatprep.mubr.bf16.mxu0 0
        %475 = vmatmul.mubr.bf16.gmra.mrb[0].mxu0 %v399
        %v476 = vpop.f32.mrb[0].mxu0
        %v477 = vadd.f32 %v436, %v476
        %v478 = vpop.f32.mrb[0].mxu0
        %v479 = vpop.f32.mrb[0].mxu0
        %v480 = vadd.f32 %v439, %v479
        %v481 = vpop.f32.mrb[0].mxu0
        %482 = vdwg.mxu0
        %s483 = scalar_lea.vmem %s205, 24 [#allocation2]
        %v484 = vld [vmem:[%s483] sm:$0xff]
        %v485 = vld [vmem:[%s483 + $0x8] sm:$0xf]
        %v486 = vld [vmem:[%s483 + $0xc] sm:$0xff]
        %v487 = vld [vmem:[%s483 + $0x14] sm:$0xf]
        %v492 = vunpack.c.l.b16 %v484
        %v493 = vunpack.c.h.b16 %v484
        %v494 = vunpack.c.l.b16 %v485
        %v495 = vunpack.c.l.b16 %v486
        %v496 = vunpack.c.h.b16 %v486
        %v497 = vunpack.c.l.b16 %v487
        %v498 = vpack.c.b16 %v495, %v492
        %v499 = vpack.c.b16 %v496, %v493
        %v500 = vpack.c.b16 %v497, %v494
        %v504 = vsel %vm397, %v500, 0
        %506 = vmatprep.subr.bf16.mxu0 0
        %507 = vmatpush1.bf16.msra.mxu0 %v361
        %508 = vmatprep.subr.bf16.mxu0 0
        %509 = vmatpush1.bf16.msra.mxu0 %v362
        %510 = vmatprep.subr.bf16.mxu0 0
        %511 = vmatpush1.bf16.msra.mxu0 %v363
        %512 = vmatprep.subr.bf16.mxu0 0
        %513 = vmatpush1.bf16.msra.mxu0 %v364
        %514 = vmatprep.subr.bf16.mxu0 0
        %515 = vmatpush1.bf16.msra.mxu0 %v365
        %516 = vmatprep.subr.bf16.mxu0 0
        %517 = vmatpush1.bf16.msra.mxu0 %v366
        %518 = vmatprep.subr.bf16.mxu0 0
        %519 = vmatpush1.bf16.msra.mxu0 %v367
        %520 = vmatprep.subr.bf16.mxu0 0
        %521 = vmatpush1.bf16.msra.mxu0 %v368
        %522 = vmatprep.subr.bf16.mxu0 0
        %523 = vmatpush1.bf16.msra.mxu0 %v369
        %524 = vmatprep.subr.bf16.mxu0 0
        %525 = vmatpush1.bf16.msra.mxu0 %v370
        %526 = vmatprep.subr.bf16.mxu0 0
        %527 = vmatpush1.bf16.msra.mxu0 %v371
        %528 = vmatprep.subr.bf16.mxu0 0
        %529 = vmatpush1.bf16.msra.mxu0 %v372
        %530 = vmatprep.subr.bf16.mxu0 0
        %531 = vmatpush1.bf16.msra.mxu0 %v373
        %532 = vmatprep.subr.bf16.mxu0 0
        %533 = vmatpush1.bf16.msra.mxu0 %v374
        %534 = vmatprep.subr.bf16.mxu0 0
        %535 = vmatpush1.bf16.msra.mxu0 %v375
        %536 = vmatprep.subr.bf16.mxu0 0
        %537 = vmatpush1.bf16.msra.mxu0 %v376
        %538 = vmatprep.mubr.bf16.mxu0 %v499
        %539 = vmatmul.mubr.bf16.gmra.mrb[0].mxu0 %v498
        %v540 = vpop.f32.mrb[0].mxu0
        %v541 = vadd.f32 0.0, %v540
        %v542 = vpop.f32.mrb[0].mxu0
        %v543 = vpop.f32.mrb[0].mxu0
        %v544 = vadd.f32 0.0, %v543
        %v545 = vpop.f32.mrb[0].mxu0
        %546 = vdwg.mxu0
        %547 = vmatprep.subr.bf16.mxu0 0
        %548 = vmatpush1.bf16.msra.mxu0 %v377
        %549 = vmatprep.subr.bf16.mxu0 0
        %550 = vmatpush1.bf16.msra.mxu0 %v378
        %551 = vmatprep.subr.bf16.mxu0 0
        %552 = vmatpush1.bf16.msra.mxu0 0
        %553 = vmatprep.subr.bf16.mxu0 0
        %554 = vmatpush1.bf16.msra.mxu0 0
        %555 = vmatprep.subr.bf16.mxu0 0
        %556 = vmatpush1.bf16.msra.mxu0 0
        %557 = vmatprep.subr.bf16.mxu0 0
        %558 = vmatpush1.bf16.msra.mxu0 0
        %559 = vmatprep.subr.bf16.mxu0 0
        %560 = vmatpush1.bf16.msra.mxu0 0
        %561 = vmatprep.subr.bf16.mxu0 0
        %562 = vmatpush1.bf16.msra.mxu0 0
        %563 = vmatprep.subr.bf16.mxu0 0
        %564 = vmatpush1.bf16.msra.mxu0 0
        %565 = vmatprep.subr.bf16.mxu0 0
        %566 = vmatpush1.bf16.msra.mxu0 0
        %567 = vmatprep.subr.bf16.mxu0 0
        %568 = vmatpush1.bf16.msra.mxu0 0
        %569 = vmatprep.subr.bf16.mxu0 0
        %570 = vmatpush1.bf16.msra.mxu0 0
        %571 = vmatprep.subr.bf16.mxu0 0
        %572 = vmatpush1.bf16.msra.mxu0 0
        %573 = vmatprep.subr.bf16.mxu0 0
        %574 = vmatpush1.bf16.msra.mxu0 0
        %575 = vmatprep.subr.bf16.mxu0 0
        %576 = vmatpush1.bf16.msra.mxu0 0
        %577 = vmatprep.subr.bf16.mxu0 0
        %578 = vmatpush1.bf16.msra.mxu0 0
        %579 = vmatprep.mubr.bf16.mxu0 0
        %580 = vmatmul.mubr.bf16.gmra.mrb[0].mxu0 %v504
        %v581 = vpop.f32.mrb[0].mxu0
        %v582 = vadd.f32 %v541, %v581
        %v583 = vpop.f32.mrb[0].mxu0
        %v584 = vpop.f32.mrb[0].mxu0
        %v585 = vadd.f32 %v544, %v584
        %v586 = vpop.f32.mrb[0].mxu0
        %587 = vdwg.mxu0
        %v588 = vmax.f32 %v477, %v582
        %v589 = vmax.f32 %v480, %v585
        %s590 = scalar_lea.vmem %s205, 48 [#allocation2]
        %v591 = vld [vmem:[%s590] sm:$0xff]
        %v592 = vld [vmem:[%s590 + $0x8] sm:$0xf]
        %v593 = vld [vmem:[%s590 + $0xc] sm:$0xff]
        %v594 = vld [vmem:[%s590 + $0x14] sm:$0xf]
        %v599 = vunpack.c.l.b16 %v591
        %v600 = vunpack.c.h.b16 %v591
        %v601 = vunpack.c.l.b16 %v592
        %v602 = vunpack.c.l.b16 %v593
        %v603 = vunpack.c.h.b16 %v593
        %v604 = vunpack.c.l.b16 %v594
        %v605 = vpack.c.b16 %v602, %v599
        %v606 = vpack.c.b16 %v603, %v600
        %v607 = vpack.c.b16 %v604, %v601
        %v611 = vsel %vm397, %v607, 0
        %613 = vmatprep.subr.bf16.mxu0 0
        %614 = vmatpush1.bf16.msra.mxu0 %v361
        %615 = vmatprep.subr.bf16.mxu0 0
        %616 = vmatpush1.bf16.msra.mxu0 %v362
        %617 = vmatprep.subr.bf16.mxu0 0
        %618 = vmatpush1.bf16.msra.mxu0 %v363
        %619 = vmatprep.subr.bf16.mxu0 0
        %620 = vmatpush1.bf16.msra.mxu0 %v364
        %621 = vmatprep.subr.bf16.mxu0 0
        %622 = vmatpush1.bf16.msra.mxu0 %v365
        %623 = vmatprep.subr.bf16.mxu0 0
        %624 = vmatpush1.bf16.msra.mxu0 %v366
        %625 = vmatprep.subr.bf16.mxu0 0
        %626 = vmatpush1.bf16.msra.mxu0 %v367
        %627 = vmatprep.subr.bf16.mxu0 0
        %628 = vmatpush1.bf16.msra.mxu0 %v368
        %629 = vmatprep.subr.bf16.mxu0 0
        %630 = vmatpush1.bf16.msra.mxu0 %v369
        %631 = vmatprep.subr.bf16.mxu0 0
        %632 = vmatpush1.bf16.msra.mxu0 %v370
        %633 = vmatprep.subr.bf16.mxu0 0
        %634 = vmatpush1.bf16.msra.mxu0 %v371
        %635 = vmatprep.subr.bf16.mxu0 0
        %636 = vmatpush1.bf16.msra.mxu0 %v372
        %637 = vmatprep.subr.bf16.mxu0 0
        %638 = vmatpush1.bf16.msra.mxu0 %v373
        %639 = vmatprep.subr.bf16.mxu0 0
        %640 = vmatpush1.bf16.msra.mxu0 %v374
        %641 = vmatprep.subr.bf16.mxu0 0
        %642 = vmatpush1.bf16.msra.mxu0 %v375
        %643 = vmatprep.subr.bf16.mxu0 0
        %644 = vmatpush1.bf16.msra.mxu0 %v376
        %645 = vmatprep.mubr.bf16.mxu0 %v606
        %646 = vmatmul.mubr.bf16.gmra.mrb[0].mxu0 %v605
        %v647 = vpop.f32.mrb[0].mxu0
        %v648 = vadd.f32 0.0, %v647
        %v649 = vpop.f32.mrb[0].mxu0
        %v650 = vpop.f32.mrb[0].mxu0
        %v651 = vadd.f32 0.0, %v650
        %v652 = vpop.f32.mrb[0].mxu0
        %653 = vdwg.mxu0
        %654 = vmatprep.subr.bf16.mxu0 0
        %655 = vmatpush1.bf16.msra.mxu0 %v377
        %656 = vmatprep.subr.bf16.mxu0 0
        %657 = vmatpush1.bf16.msra.mxu0 %v378
        %658 = vmatprep.subr.bf16.mxu0 0
        %659 = vmatpush1.bf16.msra.mxu0 0
        %660 = vmatprep.subr.bf16.mxu0 0
        %661 = vmatpush1.bf16.msra.mxu0 0
        %662 = vmatprep.subr.bf16.mxu0 0
        %663 = vmatpush1.bf16.msra.mxu0 0
        %664 = vmatprep.subr.bf16.mxu0 0
        %665 = vmatpush1.bf16.msra.mxu0 0
        %666 = vmatprep.subr.bf16.mxu0 0
        %667 = vmatpush1.bf16.msra.mxu0 0
        %668 = vmatprep.subr.bf16.mxu0 0
        %669 = vmatpush1.bf16.msra.mxu0 0
        %670 = vmatprep.subr.bf16.mxu0 0
        %671 = vmatpush1.bf16.msra.mxu0 0
        %672 = vmatprep.subr.bf16.mxu0 0
        %673 = vmatpush1.bf16.msra.mxu0 0
        %674 = vmatprep.subr.bf16.mxu0 0
        %675 = vmatpush1.bf16.msra.mxu0 0
        %676 = vmatprep.subr.bf16.mxu0 0
        %677 = vmatpush1.bf16.msra.mxu0 0
        %678 = vmatprep.subr.bf16.mxu0 0
        %679 = vmatpush1.bf16.msra.mxu0 0
        %680 = vmatprep.subr.bf16.mxu0 0
        %681 = vmatpush1.bf16.msra.mxu0 0
        %682 = vmatprep.subr.bf16.mxu0 0
        %683 = vmatpush1.bf16.msra.mxu0 0
        %684 = vmatprep.subr.bf16.mxu0 0
        %685 = vmatpush1.bf16.msra.mxu0 0
        %686 = vmatprep.mubr.bf16.mxu0 0
        %687 = vmatmul.mubr.bf16.gmra.mrb[0].mxu0 %v611
        %v688 = vpop.f32.mrb[0].mxu0
        %v689 = vadd.f32 %v648, %v688
        %v690 = vpop.f32.mrb[0].mxu0
        %v691 = vpop.f32.mrb[0].mxu0
        %v692 = vadd.f32 %v651, %v691
        %v693 = vpop.f32.mrb[0].mxu0
        %694 = vdwg.mxu0
        %v695 = vmax.f32 %v588, %v689
        %v696 = vmax.f32 %v589, %v692
        %s697 = scalar_lea.vmem %s205, 72 [#allocation2]
        %v698 = vld [vmem:[%s697] sm:$0xff]
        %v699 = vld [vmem:[%s697 + $0x8] sm:$0xf]
        %v700 = vld [vmem:[%s697 + $0xc] sm:$0xff]
        %v701 = vld [vmem:[%s697 + $0x14] sm:$0xf]
        %v706 = vunpack.c.l.b16 %v698
        %v707 = vunpack.c.h.b16 %v698
        %v708 = vunpack.c.l.b16 %v699
        %v709 = vunpack.c.l.b16 %v700
        %v710 = vunpack.c.h.b16 %v700
        %v711 = vunpack.c.l.b16 %v701
        %v712 = vpack.c.b16 %v709, %v706
        %v713 = vpack.c.b16 %v710, %v707
        %v714 = vpack.c.b16 %v711, %v708
        %v718 = vsel %vm397, %v714, 0
        %720 = vmatprep.subr.bf16.mxu0 0
        %721 = vmatpush1.bf16.msra.mxu0 %v361
        %722 = vmatprep.subr.bf16.mxu0 0
        %723 = vmatpush1.bf16.msra.mxu0 %v362
        %724 = vmatprep.subr.bf16.mxu0 0
        %725 = vmatpush1.bf16.msra.mxu0 %v363
        %726 = vmatprep.subr.bf16.mxu0 0
        %727 = vmatpush1.bf16.msra.mxu0 %v364
        %728 = vmatprep.subr.bf16.mxu0 0
        %729 = vmatpush1.bf16.msra.mxu0 %v365
        %730 = vmatprep.subr.bf16.mxu0 0
        %731 = vmatpush1.bf16.msra.mxu0 %v366
        %732 = vmatprep.subr.bf16.mxu0 0
        %733 = vmatpush1.bf16.msra.mxu0 %v367
        %734 = vmatprep.subr.bf16.mxu0 0
        %735 = vmatpush1.bf16.msra.mxu0 %v368
        %736 = vmatprep.subr.bf16.mxu0 0
        %737 = vmatpush1.bf16.msra.mxu0 %v369
        %738 = vmatprep.subr.bf16.mxu0 0
        %739 = vmatpush1.bf16.msra.mxu0 %v370
        %740 = vmatprep.subr.bf16.mxu0 0
        %741 = vmatpush1.bf16.msra.mxu0 %v371
        %742 = vmatprep.subr.bf16.mxu0 0
        %743 = vmatpush1.bf16.msra.mxu0 %v372
        %744 = vmatprep.subr.bf16.mxu0 0
        %745 = vmatpush1.bf16.msra.mxu0 %v373
        %746 = vmatprep.subr.bf16.mxu0 0
        %747 = vmatpush1.bf16.msra.mxu0 %v374
        %748 = vmatprep.subr.bf16.mxu0 0
        %749 = vmatpush1.bf16.msra.mxu0 %v375
        %750 = vmatprep.subr.bf16.mxu0 0
        %751 = vmatpush1.bf16.msra.mxu0 %v376
        %752 = vmatprep.mubr.bf16.mxu0 %v713
        %753 = vmatmul.mubr.bf16.gmra.mrb[0].mxu0 %v712
        %v754 = vpop.f32.mrb[0].mxu0
        %v755 = vadd.f32 0.0, %v754
        %v756 = vpop.f32.mrb[0].mxu0
        %v757 = vpop.f32.mrb[0].mxu0
        %v758 = vadd.f32 0.0, %v757
        %v759 = vpop.f32.mrb[0].mxu0
        %760 = vdwg.mxu0
        %761 = vmatprep.subr.bf16.mxu0 0
        %762 = vmatpush1.bf16.msra.mxu0 %v377
        %763 = vmatprep.subr.bf16.mxu0 0
        %764 = vmatpush1.bf16.msra.mxu0 %v378
        %765 = vmatprep.subr.bf16.mxu0 0
        %766 = vmatpush1.bf16.msra.mxu0 0
        %767 = vmatprep.subr.bf16.mxu0 0
        %768 = vmatpush1.bf16.msra.mxu0 0
        %769 = vmatprep.subr.bf16.mxu0 0
        %770 = vmatpush1.bf16.msra.mxu0 0
        %771 = vmatprep.subr.bf16.mxu0 0
        %772 = vmatpush1.bf16.msra.mxu0 0
        %773 = vmatprep.subr.bf16.mxu0 0
        %774 = vmatpush1.bf16.msra.mxu0 0
        %775 = vmatprep.subr.bf16.mxu0 0
        %776 = vmatpush1.bf16.msra.mxu0 0
        %777 = vmatprep.subr.bf16.mxu0 0
        %778 = vmatpush1.bf16.msra.mxu0 0
        %779 = vmatprep.subr.bf16.mxu0 0
        %780 = vmatpush1.bf16.msra.mxu0 0
        %781 = vmatprep.subr.bf16.mxu0 0
        %782 = vmatpush1.bf16.msra.mxu0 0
        %783 = vmatprep.subr.bf16.mxu0 0
        %784 = vmatpush1.bf16.msra.mxu0 0
        %785 = vmatprep.subr.bf16.mxu0 0
        %786 = vmatpush1.bf16.msra.mxu0 0
        %787 = vmatprep.subr.bf16.mxu0 0
        %788 = vmatpush1.bf16.msra.mxu0 0
        %789 = vmatprep.subr.bf16.mxu0 0
        %790 = vmatpush1.bf16.msra.mxu0 0
        %791 = vmatprep.subr.bf16.mxu0 0
        %792 = vmatpush1.bf16.msra.mxu0 0
        %793 = vmatprep.mubr.bf16.mxu0 0
        %794 = vmatmul.mubr.bf16.gmra.mrb[0].mxu0 %v718
        %v795 = vpop.f32.mrb[0].mxu0
        %v796 = vadd.f32 %v755, %v795
        %v797 = vpop.f32.mrb[0].mxu0
        %v798 = vpop.f32.mrb[0].mxu0
        %v799 = vadd.f32 %v758, %v798
        %v800 = vpop.f32.mrb[0].mxu0
        %801 = vdwg.mxu0
        %v802 = vmax.f32 %v695, %v796
        %v803 = vmax.f32 %v696, %v799
        %v804 = vld [vmem:[%s2] sm:$0x1]
        %v806 = vlaneseq
        %v807 = vshrl.u32 %v806, 7
        %v808 = vsub.s32 0, %v807
        %v809 = vrot.slane %v804, %v808
        %v811 = vadd.f32 %v802, %v809
        %v812 = vadd.f32 %v803, %v809
        %vm813 = vcmp.ge.f32.partialorder %v811, 0.0
        %vm814 = vcmp.ge.f32.partialorder %v812, 0.0
        %v815 = vmul.f32 %v811, 0.01
        %v816 = vmul.f32 %v812, 0.01
        %v817 = vsel %vm813, %v811, %v815
        %v818 = vsel %vm814, %v812, %v816
        %vm819 = vcmask 523264
        %820 = vst.msk [vmem:[%s231] sm:$0xff] %vm819, %v817
        %821 = vst.msk [vmem:[%s231 + $0x8] sm:$0xff] %vm819, %v818
        %s822 = smul.u32 2, %s14
        %p823 = scmp.lt.s32.totalorder %s822, 3
        %s824 = scalar_select %p823, %s822, 3
        %s825 = smul.addr %s824, 8
        %s826 = scalar_lea.vmem %s3, %s825
        // Predicated region
        $region59: #{_lambda_.7} parent=53 // pred_check
          %p827 = pneg %p100
        $region60: #{_lambda_.7} parent=53 // pred_check_branch
          %829 = sbr.rel (%p827) target = $region62
        $region61: #{_lambda_.7} parent=53 // pred_region
          %s830 = smul.u32 2, %s14
        $region62: #{_lambda_.7} parent=53 // pred_fallthru
          _
      $region54: #{_lambda_.7} parent=5 // pred_fallthru
        _
      %p831 = scmp.le.s32.totalorder 2, %s9
      // Predicated region
      $region63: #{_lambda_.7} parent=5 // pred_check
        %p832 = pneg %p831
      $region64: #{_lambda_.7} parent=5 // pred_check_branch
        %834 = sbr.rel (%p832) target = $region66
      $region65: #{_lambda_.7} parent=5 // pred_region
        %s835 = ssub.s32 %s9, 2
        // Predicated region
        $region67: #{_lambda_.7} parent=65 // pred_check
          %p836 = pneg %p106
        $region68: #{_lambda_.7} parent=65 // pred_check_branch
          %838 = sbr.rel (%p836) target = $region70
        $region69: #{_lambda_.7} parent=65 // pred_region
          %s839 = smul.u32 2, %s15
          %p840 = scmp.lt.s32.totalorder %s839, 3
          %s841 = scalar_select %p840, %s839, 3
          %s842 = smul.addr %s841, 8
          %s843 = scalar_lea.vmem %s3, %s842
        $region70: #{_lambda_.7} parent=65 // pred_fallthru
          _
      $region66: #{_lambda_.7} parent=5 // pred_fallthru
        _
    $region6: #{_lambda_.7} parent=1 // loop_footer
      %s13 = sadd.s32 1, %s9
    $region7: #{_lambda_.7} parent=1 // loop_footer_branch
      %8 = sbr.rel target = $region3
    $region8: #{_lambda_.7} parent=1 // loop_exit
      _

// kernel: _lambda_.8
$region0: #{_lambda_.8}
  #allocation0 [shape = 'u32[]', space=smem, size = 0x4, offset = 0x4, fixed_abs, tag = 'smem constant byte address 0x4 - core index']
  #allocation1 [shape = 'u32[144,128]{1,0:T(1,128)}', space=vmem, size = 0x12000, scoped, tag = 'internal scratch']
  %s0 = inlined_call_operand.vmem [shape: bf16[4,8,576], index: 0, kind: input, shape index: {}]
  %s1 = inlined_call_operand.vmem [shape: bf16[576,128], index: 1, kind: input, shape index: {}]
  %s2 = inlined_call_operand.vmem [shape: f32[1,128], index: 2, kind: input, shape index: {}]
  %s3 = inlined_call_operand.vmem [shape: f32[8,128], index: 3, kind: output, shape index: {}]
  %s4 = sld [smem:[#allocation0]]
  $region22: #{_lambda_.8} parent=0
    _
  %s6 = ssub.s32 1, %s4
  %s7 = scalar_select 0, %s6, %s4
  // Predicated region
  $region2: #{_lambda_.8} parent=0 // pred_check
    _
  $region3: #{_lambda_.8} parent=0 // pred_check_branch
    %9 = sbr.rel (0) target = $region5
  $region4: #{_lambda_.8} parent=0 // pred_region
    _
  $region5: #{_lambda_.8} parent=0 // pred_fallthru
    _
  // Predicated region
  $region6: #{_lambda_.8} parent=0 // pred_check
    _
  $region7: #{_lambda_.8} parent=0 // pred_check_branch
    %11 = sbr.rel (0) target = $region9
  $region8: #{_lambda_.8} parent=0 // pred_region
    _
  $region9: #{_lambda_.8} parent=0 // pred_fallthru
    _
  // Predicated region
  $region10: #{_lambda_.8} parent=0 // pred_check
    _
  $region11: #{_lambda_.8} parent=0 // pred_check_branch
    %13 = sbr.rel (0) target = $region13
  $region12: #{_lambda_.8} parent=0 // pred_region
    _
  $region13: #{_lambda_.8} parent=0 // pred_fallthru
    _
  %v15 = vld [vmem:[%s1] sm:$0xf]
  %v16 = vld [vmem:[%s1 + $0x4] sm:$0xf]
  %v17 = vld [vmem:[%s1 + $0x8] sm:$0xf]
  %v18 = vld [vmem:[%s1 + $0xc] sm:$0xf]
  %v19 = vld [vmem:[%s1 + $0x10] sm:$0xf]
  %v20 = vld [vmem:[%s1 + $0x14] sm:$0xf]
  %v21 = vld [vmem:[%s1 + $0x18] sm:$0xf]
  %v22 = vld [vmem:[%s1 + $0x1c] sm:$0xf]
  %v23 = vld [vmem:[%s1 + $0x20] sm:$0xf]
  %v24 = vld [vmem:[%s1 + $0x24] sm:$0xf]
  %v25 = vld [vmem:[%s1 + $0x28] sm:$0xf]
  %v26 = vld [vmem:[%s1 + $0x2c] sm:$0xf]
  %v27 = vld [vmem:[%s1 + $0x30] sm:$0xf]
  %v28 = vld [vmem:[%s1 + $0x34] sm:$0xf]
  %v29 = vld [vmem:[%s1 + $0x38] sm:$0xf]
  %v30 = vld [vmem:[%s1 + $0x3c] sm:$0xf]
  %v31 = vld [vmem:[%s1 + $0x40] sm:$0xf]
  %v32 = vld [vmem:[%s1 + $0x44] sm:$0xf]
  %v33 = vld [vmem:[%s1 + $0x48] sm:$0xf]
  %v34 = vld [vmem:[%s1 + $0x4c] sm:$0xf]
  %v35 = vld [vmem:[%s1 + $0x50] sm:$0xf]
  %v36 = vld [vmem:[%s1 + $0x54] sm:$0xf]
  %v37 = vld [vmem:[%s1 + $0x58] sm:$0xf]
  %v38 = vld [vmem:[%s1 + $0x5c] sm:$0xf]
  %v39 = vld [vmem:[%s1 + $0x60] sm:$0xf]
  %v40 = vld [vmem:[%s1 + $0x64] sm:$0xf]
  %v41 = vld [vmem:[%s1 + $0x68] sm:$0xf]
  %v42 = vld [vmem:[%s1 + $0x6c] sm:$0xf]
  %v43 = vld [vmem:[%s1 + $0x70] sm:$0xf]
  %v44 = vld [vmem:[%s1 + $0x74] sm:$0xf]
  %v45 = vld [vmem:[%s1 + $0x78] sm:$0xf]
  %v46 = vld [vmem:[%s1 + $0x7c] sm:$0xf]
  %v47 = vld [vmem:[%s1 + $0x80] sm:$0xf]
  %v48 = vld [vmem:[%s1 + $0x84] sm:$0xf]
  %v49 = vld [vmem:[%s1 + $0x88] sm:$0xf]
  %v50 = vld [vmem:[%s1 + $0x8c] sm:$0xf]
  %v51 = vld [vmem:[%s1 + $0x90] sm:$0xf]
  %v52 = vld [vmem:[%s1 + $0x94] sm:$0xf]
  %v53 = vld [vmem:[%s1 + $0x98] sm:$0xf]
  %v54 = vld [vmem:[%s1 + $0x9c] sm:$0xf]
  %v55 = vld [vmem:[%s1 + $0xa0] sm:$0xf]
  %v56 = vld [vmem:[%s1 + $0xa4] sm:$0xf]
  %v57 = vld [vmem:[%s1 + $0xa8] sm:$0xf]
  %v58 = vld [vmem:[%s1 + $0xac] sm:$0xf]
  %v59 = vld [vmem:[%s1 + $0xb0] sm:$0xf]
  %v60 = vld [vmem:[%s1 + $0xb4] sm:$0xf]
  %v61 = vld [vmem:[%s1 + $0xb8] sm:$0xf]
  %v62 = vld [vmem:[%s1 + $0xbc] sm:$0xf]
  %v63 = vld [vmem:[%s1 + $0xc0] sm:$0xf]
  %v64 = vld [vmem:[%s1 + $0xc4] sm:$0xf]
  %v65 = vld [vmem:[%s1 + $0xc8] sm:$0xf]
  %v66 = vld [vmem:[%s1 + $0xcc] sm:$0xf]
  %v67 = vld [vmem:[%s1 + $0xd0] sm:$0xf]
  %v68 = vld [vmem:[%s1 + $0xd4] sm:$0xf]
  %v69 = vld [vmem:[%s1 + $0xd8] sm:$0xf]
  %v70 = vld [vmem:[%s1 + $0xdc] sm:$0xf]
  %v71 = vld [vmem:[%s1 + $0xe0] sm:$0xf]
  %v72 = vld [vmem:[%s1 + $0xe4] sm:$0xf]
  %v73 = vld [vmem:[%s1 + $0xe8] sm:$0xf]
  %v74 = vld [vmem:[%s1 + $0xec] sm:$0xf]
  %v75 = vld [vmem:[%s1 + $0xf0] sm:$0xf]
  %v76 = vld [vmem:[%s1 + $0xf4] sm:$0xf]
  %v77 = vld [vmem:[%s1 + $0xf8] sm:$0xf]
  %v78 = vld [vmem:[%s1 + $0xfc] sm:$0xf]
  %v79 = vld [vmem:[%s1 + $0x100] sm:$0xf]
  %v80 = vld [vmem:[%s1 + $0x104] sm:$0xf]
  %v81 = vld [vmem:[%s1 + $0x108] sm:$0xf]
  %v82 = vld [vmem:[%s1 + $0x10c] sm:$0xf]
  %v83 = vld [vmem:[%s1 + $0x110] sm:$0xf]
  %v84 = vld [vmem:[%s1 + $0x114] sm:$0xf]
  %v85 = vld [vmem:[%s1 + $0x118] sm:$0xf]
  %v86 = vld [vmem:[%s1 + $0x11c] sm:$0xf]
  %v87 = vld [vmem:[%s0] sm:$0xff]
  %v88 = vld [vmem:[%s0 + $0x8] sm:$0xff]
  %v89 = vld [vmem:[%s0 + $0x10] sm:$0xf]
  %v93 = vunpack.c.l.b16 %v87
  %v94 = vunpack.c.h.b16 %v87
  %v95 = vunpack.c.l.b16 %v88
  %v96 = vunpack.c.h.b16 %v88
  %v97 = vunpack.c.l.b16 %v89
  %v98 = vpack.c.b16 %v93, %v93
  %v99 = vpack.c.b16 %v94, %v94
  %v100 = vpack.c.b16 %v95, %v95
  %v101 = vpack.c.b16 %v96, %v96
  %v102 = vpack.c.b16 %v97, %v97
  %v179 = vunpack.c.l.b16 %v15
  %v180 = vunpack.c.l.b16 %v16
  %v181 = vunpack.c.l.b16 %v17
  %v182 = vunpack.c.l.b16 %v18
  %v183 = vunpack.c.l.b16 %v19
  %v184 = vunpack.c.l.b16 %v20
  %v185 = vunpack.c.l.b16 %v21
  %v186 = vunpack.c.l.b16 %v22
  %v187 = vunpack.c.l.b16 %v23
  %v188 = vunpack.c.l.b16 %v24
  %v189 = vunpack.c.l.b16 %v25
  %v190 = vunpack.c.l.b16 %v26
  %v191 = vunpack.c.l.b16 %v27
  %v192 = vunpack.c.l.b16 %v28
  %v193 = vunpack.c.l.b16 %v29
  %v194 = vunpack.c.l.b16 %v30
  %v195 = vunpack.c.l.b16 %v31
  %v196 = vunpack.c.l.b16 %v32
  %v197 = vunpack.c.l.b16 %v33
  %v198 = vunpack.c.l.b16 %v34
  %v199 = vunpack.c.l.b16 %v35
  %v200 = vunpack.c.l.b16 %v36
  %v201 = vunpack.c.l.b16 %v37
  %v202 = vunpack.c.l.b16 %v38
  %v203 = vunpack.c.l.b16 %v39
  %v204 = vunpack.c.l.b16 %v40
  %v205 = vunpack.c.l.b16 %v41
  %v206 = vunpack.c.l.b16 %v42
  %v207 = vunpack.c.l.b16 %v43
  %v208 = vunpack.c.l.b16 %v44
  %v209 = vunpack.c.l.b16 %v45
  %v210 = vunpack.c.l.b16 %v46
  %v211 = vunpack.c.l.b16 %v47
  %v212 = vunpack.c.l.b16 %v48
  %v213 = vunpack.c.l.b16 %v49
  %v214 = vunpack.c.l.b16 %v50
  %v215 = vunpack.c.l.b16 %v51
  %v216 = vunpack.c.l.b16 %v52
  %v217 = vunpack.c.l.b16 %v53
  %v218 = vunpack.c.l.b16 %v54
  %v219 = vunpack.c.l.b16 %v55
  %v220 = vunpack.c.l.b16 %v56
  %v221 = vunpack.c.l.b16 %v57
  %v222 = vunpack.c.l.b16 %v58
  %v223 = vunpack.c.l.b16 %v59
  %v224 = vunpack.c.l.b16 %v60
  %v225 = vunpack.c.l.b16 %v61
  %v226 = vunpack.c.l.b16 %v62
  %v227 = vunpack.c.l.b16 %v63
  %v228 = vunpack.c.l.b16 %v64
  %v229 = vunpack.c.l.b16 %v65
  %v230 = vunpack.c.l.b16 %v66
  %v231 = vunpack.c.l.b16 %v67
  %v232 = vunpack.c.l.b16 %v68
  %v233 = vunpack.c.l.b16 %v69
  %v234 = vunpack.c.l.b16 %v70
  %v235 = vunpack.c.l.b16 %v71
  %v236 = vunpack.c.l.b16 %v72
  %v237 = vunpack.c.l.b16 %v73
  %v238 = vunpack.c.l.b16 %v74
  %v239 = vunpack.c.l.b16 %v75
  %v240 = vunpack.c.l.b16 %v76
  %v241 = vunpack.c.l.b16 %v77
  %v242 = vunpack.c.l.b16 %v78
  %v243 = vunpack.c.l.b16 %v79
  %v244 = vunpack.c.l.b16 %v80
  %v245 = vunpack.c.l.b16 %v81
  %v246 = vunpack.c.l.b16 %v82
  %v247 = vunpack.c.l.b16 %v83
  %v248 = vunpack.c.l.b16 %v84
  %v249 = vunpack.c.l.b16 %v85
  %v250 = vunpack.c.l.b16 %v86
  %v251 = vpack.c.b16 %v180, %v179
  %v252 = vpack.c.b16 %v182, %v181
  %v253 = vpack.c.b16 %v184, %v183
  %v254 = vpack.c.b16 %v186, %v185
  %v255 = vpack.c.b16 %v188, %v187
  %v256 = vpack.c.b16 %v190, %v189
  %v257 = vpack.c.b16 %v192, %v191
  %v258 = vpack.c.b16 %v194, %v193
  %v259 = vpack.c.b16 %v196, %v195
  %v260 = vpack.c.b16 %v198, %v197
  %v261 = vpack.c.b16 %v200, %v199
  %v262 = vpack.c.b16 %v202, %v201
  %v263 = vpack.c.b16 %v204, %v203
  %v264 = vpack.c.b16 %v206, %v205
  %v265 = vpack.c.b16 %v208, %v207
  %v266 = vpack.c.b16 %v210, %v209
  %v267 = vpack.c.b16 %v212, %v211
  %v268 = vpack.c.b16 %v214, %v213
  %v269 = vpack.c.b16 %v216, %v215
  %v270 = vpack.c.b16 %v218, %v217
  %v271 = vpack.c.b16 %v220, %v219
  %v272 = vpack.c.b16 %v222, %v221
  %v273 = vpack.c.b16 %v224, %v223
  %v274 = vpack.c.b16 %v226, %v225
  %v275 = vpack.c.b16 %v228, %v227
  %v276 = vpack.c.b16 %v230, %v229
  %v277 = vpack.c.b16 %v232, %v231
  %v278 = vpack.c.b16 %v234, %v233
  %v279 = vpack.c.b16 %v236, %v235
  %v280 = vpack.c.b16 %v238, %v237
  %v281 = vpack.c.b16 %v240, %v239
  %v282 = vpack.c.b16 %v242, %v241
  %v283 = vpack.c.b16 %v244, %v243
  %v284 = vpack.c.b16 %v246, %v245
  %v285 = vpack.c.b16 %v248, %v247
  %v286 = vpack.c.b16 %v250, %v249
  %vm323 = vcmask 523264
  %v325 = vsel %vm323, %v102, 0
  %327 = vmatprep.subr.bf16.mxu0 0
  %328 = vmatpush1.bf16.msra.mxu0 %v251
  %329 = vmatprep.subr.bf16.mxu0 0
  %330 = vmatpush1.bf16.msra.mxu0 %v252
  %331 = vmatprep.subr.bf16.mxu0 0
  %332 = vmatpush1.bf16.msra.mxu0 %v253
  %333 = vmatprep.subr.bf16.mxu0 0
  %334 = vmatpush1.bf16.msra.mxu0 %v254
  %335 = vmatprep.subr.bf16.mxu0 0
  %336 = vmatpush1.bf16.msra.mxu0 %v255
  %337 = vmatprep.subr.bf16.mxu0 0
  %338 = vmatpush1.bf16.msra.mxu0 %v256
  %339 = vmatprep.subr.bf16.mxu0 0
  %340 = vmatpush1.bf16.msra.mxu0 %v257
  %341 = vmatprep.subr.bf16.mxu0 0
  %342 = vmatpush1.bf16.msra.mxu0 %v258
  %343 = vmatprep.subr.bf16.mxu0 0
  %344 = vmatpush1.bf16.msra.mxu0 %v259
  %345 = vmatprep.subr.bf16.mxu0 0
  %346 = vmatpush1.bf16.msra.mxu0 %v260
  %347 = vmatprep.subr.bf16.mxu0 0
  %348 = vmatpush1.bf16.msra.mxu0 %v261
  %349 = vmatprep.subr.bf16.mxu0 0
  %350 = vmatpush1.bf16.msra.mxu0 %v262
  %351 = vmatprep.subr.bf16.mxu0 0
  %352 = vmatpush1.bf16.msra.mxu0 %v263
  %353 = vmatprep.subr.bf16.mxu0 0
  %354 = vmatpush1.bf16.msra.mxu0 %v264
  %355 = vmatprep.subr.bf16.mxu0 0
  %356 = vmatpush1.bf16.msra.mxu0 %v265
  %357 = vmatprep.subr.bf16.mxu0 0
  %358 = vmatpush1.bf16.msra.mxu0 %v266
  %359 = vmatprep.mubr.bf16.mxu0 %v99
  %360 = vmatmul.mubr.bf16.gmra.mrb[0].mxu0 %v98
  %v361 = vpop.f32.mrb[0].mxu0
  %v362 = vadd.f32 0.0, %v361
  %v363 = vpop.f32.mrb[0].mxu0
  %v364 = vpop.f32.mrb[0].mxu0
  %v365 = vpop.f32.mrb[0].mxu0
  %366 = vdwg.mxu0
  %367 = vmatprep.subr.bf16.mxu0 0
  %368 = vmatpush1.bf16.msra.mxu0 %v267
  %369 = vmatprep.subr.bf16.mxu0 0
  %370 = vmatpush1.bf16.msra.mxu0 %v268
  %371 = vmatprep.subr.bf16.mxu0 0
  %372 = vmatpush1.bf16.msra.mxu0 %v269
  %373 = vmatprep.subr.bf16.mxu0 0
  %374 = vmatpush1.bf16.msra.mxu0 %v270
  %375 = vmatprep.subr.bf16.mxu0 0
  %376 = vmatpush1.bf16.msra.mxu0 %v271
  %377 = vmatprep.subr.bf16.mxu0 0
  %378 = vmatpush1.bf16.msra.mxu0 %v272
  %379 = vmatprep.subr.bf16.mxu0 0
  %380 = vmatpush1.bf16.msra.mxu0 %v273
  %381 = vmatprep.subr.bf16.mxu0 0
  %382 = vmatpush1.bf16.msra.mxu0 %v274
  %383 = vmatprep.subr.bf16.mxu0 0
  %384 = vmatpush1.bf16.msra.mxu0 %v275
  %385 = vmatprep.subr.bf16.mxu0 0
  %386 = vmatpush1.bf16.msra.mxu0 %v276
  %387 = vmatprep.subr.bf16.mxu0 0
  %388 = vmatpush1.bf16.msra.mxu0 %v277
  %389 = vmatprep.subr.bf16.mxu0 0
  %390 = vmatpush1.bf16.msra.mxu0 %v278
  %391 = vmatprep.subr.bf16.mxu0 0
  %392 = vmatpush1.bf16.msra.mxu0 %v279
  %393 = vmatprep.subr.bf16.mxu0 0
  %394 = vmatpush1.bf16.msra.mxu0 %v280
  %395 = vmatprep.subr.bf16.mxu0 0
  %396 = vmatpush1.bf16.msra.mxu0 %v281
  %397 = vmatprep.subr.bf16.mxu0 0
  %398 = vmatpush1.bf16.msra.mxu0 %v282
  %399 = vmatprep.mubr.bf16.mxu0 %v101
  %400 = vmatmul.mubr.bf16.gmra.mrb[0].mxu0 %v100
  %v401 = vpop.f32.mrb[0].mxu0
  %v402 = vadd.f32 %v362, %v401
  %v403 = vpop.f32.mrb[0].mxu0
  %v404 = vpop.f32.mrb[0].mxu0
  %v405 = vpop.f32.mrb[0].mxu0
  %406 = vdwg.mxu0
  %407 = vmatprep.subr.bf16.mxu0 0
  %408 = vmatpush1.bf16.msra.mxu0 %v283
  %409 = vmatprep.subr.bf16.mxu0 0
  %410 = vmatpush1.bf16.msra.mxu0 %v284
  %411 = vmatprep.subr.bf16.mxu0 0
  %412 = vmatpush1.bf16.msra.mxu0 %v285
  %413 = vmatprep.subr.bf16.mxu0 0
  %414 = vmatpush1.bf16.msra.mxu0 %v286
  %415 = vmatprep.subr.bf16.mxu0 0
  %416 = vmatpush1.bf16.msra.mxu0 0
  %417 = vmatprep.subr.bf16.mxu0 0
  %418 = vmatpush1.bf16.msra.mxu0 0
  %419 = vmatprep.subr.bf16.mxu0 0
  %420 = vmatpush1.bf16.msra.mxu0 0
  %421 = vmatprep.subr.bf16.mxu0 0
  %422 = vmatpush1.bf16.msra.mxu0 0
  %423 = vmatprep.subr.bf16.mxu0 0
  %424 = vmatpush1.bf16.msra.mxu0 0
  %425 = vmatprep.subr.bf16.mxu0 0
  %426 = vmatpush1.bf16.msra.mxu0 0
  %427 = vmatprep.subr.bf16.mxu0 0
  %428 = vmatpush1.bf16.msra.mxu0 0
  %429 = vmatprep.subr.bf16.mxu0 0
  %430 = vmatpush1.bf16.msra.mxu0 0
  %431 = vmatprep.subr.bf16.mxu0 0
  %432 = vmatpush1.bf16.msra.mxu0 0
  %433 = vmatprep.subr.bf16.mxu0 0
  %434 = vmatpush1.bf16.msra.mxu0 0
  %435 = vmatprep.subr.bf16.mxu0 0
  %436 = vmatpush1.bf16.msra.mxu0 0
  %437 = vmatprep.subr.bf16.mxu0 0
  %438 = vmatpush1.bf16.msra.mxu0 0
  %439 = vmatprep.mubr.bf16.mxu0 0
  %440 = vmatmul.mubr.bf16.gmra.mrb[0].mxu0 %v325
  %v441 = vpop.f32.mrb[0].mxu0
  %v442 = vadd.f32 %v402, %v441
  %v443 = vpop.f32.mrb[0].mxu0
  %v444 = vpop.f32.mrb[0].mxu0
  %v445 = vpop.f32.mrb[0].mxu0
  %446 = vdwg.mxu0
  %s447 = scalar_lea.vmem %s0, 20
  %v448 = vld [vmem:[%s447] sm:$0xff]
  %v449 = vld [vmem:[%s447 + $0x8] sm:$0xff]
  %v450 = vld [vmem:[%s447 + $0x10] sm:$0xf]
  %v454 = vunpack.c.l.b16 %v448
  %v455 = vunpack.c.h.b16 %v448
  %v456 = vunpack.c.l.b16 %v449
  %v457 = vunpack.c.h.b16 %v449
  %v458 = vunpack.c.l.b16 %v450
  %v459 = vpack.c.b16 %v454, %v454
  %v460 = vpack.c.b16 %v455, %v455
  %v461 = vpack.c.b16 %v456, %v456
  %v462 = vpack.c.b16 %v457, %v457
  %v463 = vpack.c.b16 %v458, %v458
  %v469 = vsel %vm323, %v463, 0
  %471 = vmatprep.subr.bf16.mxu0 0
  %472 = vmatpush1.bf16.msra.mxu0 %v251
  %473 = vmatprep.subr.bf16.mxu0 0
  %474 = vmatpush1.bf16.msra.mxu0 %v252
  %475 = vmatprep.subr.bf16.mxu0 0
  %476 = vmatpush1.bf16.msra.mxu0 %v253
  %477 = vmatprep.subr.bf16.mxu0 0
  %478 = vmatpush1.bf16.msra.mxu0 %v254
  %479 = vmatprep.subr.bf16.mxu0 0
  %480 = vmatpush1.bf16.msra.mxu0 %v255
  %481 = vmatprep.subr.bf16.mxu0 0
  %482 = vmatpush1.bf16.msra.mxu0 %v256
  %483 = vmatprep.subr.bf16.mxu0 0
  %484 = vmatpush1.bf16.msra.mxu0 %v257
  %485 = vmatprep.subr.bf16.mxu0 0
  %486 = vmatpush1.bf16.msra.mxu0 %v258
  %487 = vmatprep.subr.bf16.mxu0 0
  %488 = vmatpush1.bf16.msra.mxu0 %v259
  %489 = vmatprep.subr.bf16.mxu0 0
  %490 = vmatpush1.bf16.msra.mxu0 %v260
  %491 = vmatprep.subr.bf16.mxu0 0
  %492 = vmatpush1.bf16.msra.mxu0 %v261
  %493 = vmatprep.subr.bf16.mxu0 0
  %494 = vmatpush1.bf16.msra.mxu0 %v262
  %495 = vmatprep.subr.bf16.mxu0 0
  %496 = vmatpush1.bf16.msra.mxu0 %v263
  %497 = vmatprep.subr.bf16.mxu0 0
  %498 = vmatpush1.bf16.msra.mxu0 %v264
  %499 = vmatprep.subr.bf16.mxu0 0
  %500 = vmatpush1.bf16.msra.mxu0 %v265
  %501 = vmatprep.subr.bf16.mxu0 0
  %502 = vmatpush1.bf16.msra.mxu0 %v266
  %503 = vmatprep.mubr.bf16.mxu0 %v460
  %504 = vmatmul.mubr.bf16.gmra.mrb[0].mxu0 %v459
  %v505 = vpop.f32.mrb[0].mxu0
  %v506 = vadd.f32 0.0, %v505
  %v507 = vpop.f32.mrb[0].mxu0
  %v508 = vpop.f32.mrb[0].mxu0
  %v509 = vpop.f32.mrb[0].mxu0
  %510 = vdwg.mxu0
  %511 = vmatprep.subr.bf16.mxu0 0
  %512 = vmatpush1.bf16.msra.mxu0 %v267
  %513 = vmatprep.subr.bf16.mxu0 0
  %514 = vmatpush1.bf16.msra.mxu0 %v268
  %515 = vmatprep.subr.bf16.mxu0 0
  %516 = vmatpush1.bf16.msra.mxu0 %v269
  %517 = vmatprep.subr.bf16.mxu0 0
  %518 = vmatpush1.bf16.msra.mxu0 %v270
  %519 = vmatprep.subr.bf16.mxu0 0
  %520 = vmatpush1.bf16.msra.mxu0 %v271
  %521 = vmatprep.subr.bf16.mxu0 0
  %522 = vmatpush1.bf16.msra.mxu0 %v272
  %523 = vmatprep.subr.bf16.mxu0 0
  %524 = vmatpush1.bf16.msra.mxu0 %v273
  %525 = vmatprep.subr.bf16.mxu0 0
  %526 = vmatpush1.bf16.msra.mxu0 %v274
  %527 = vmatprep.subr.bf16.mxu0 0
  %528 = vmatpush1.bf16.msra.mxu0 %v275
  %529 = vmatprep.subr.bf16.mxu0 0
  %530 = vmatpush1.bf16.msra.mxu0 %v276
  %531 = vmatprep.subr.bf16.mxu0 0
  %532 = vmatpush1.bf16.msra.mxu0 %v277
  %533 = vmatprep.subr.bf16.mxu0 0
  %534 = vmatpush1.bf16.msra.mxu0 %v278
  %535 = vmatprep.subr.bf16.mxu0 0
  %536 = vmatpush1.bf16.msra.mxu0 %v279
  %537 = vmatprep.subr.bf16.mxu0 0
  %538 = vmatpush1.bf16.msra.mxu0 %v280
  %539 = vmatprep.subr.bf16.mxu0 0
  %540 = vmatpush1.bf16.msra.mxu0 %v281
  %541 = vmatprep.subr.bf16.mxu0 0
  %542 = vmatpush1.bf16.msra.mxu0 %v282
  %543 = vmatprep.mubr.bf16.mxu0 %v462
  %544 = vmatmul.mubr.bf16.gmra.mrb[0].mxu0 %v461
  %v545 = vpop.f32.mrb[0].mxu0
  %v546 = vadd.f32 %v506, %v545
  %v547 = vpop.f32.mrb[0].mxu0
  %v548 = vpop.f32.mrb[0].mxu0
  %v549 = vpop.f32.mrb[0].mxu0
  %550 = vdwg.mxu0
  %551 = vmatprep.subr.bf16.mxu0 0
  %552 = vmatpush1.bf16.msra.mxu0 %v283
  %553 = vmatprep.subr.bf16.mxu0 0
  %554 = vmatpush1.bf16.msra.mxu0 %v284
  %555 = vmatprep.subr.bf16.mxu0 0
  %556 = vmatpush1.bf16.msra.mxu0 %v285
  %557 = vmatprep.subr.bf16.mxu0 0
  %558 = vmatpush1.bf16.msra.mxu0 %v286
  %559 = vmatprep.subr.bf16.mxu0 0
  %560 = vmatpush1.bf16.msra.mxu0 0
  %561 = vmatprep.subr.bf16.mxu0 0
  %562 = vmatpush1.bf16.msra.mxu0 0
  %563 = vmatprep.subr.bf16.mxu0 0
  %564 = vmatpush1.bf16.msra.mxu0 0
  %565 = vmatprep.subr.bf16.mxu0 0
  %566 = vmatpush1.bf16.msra.mxu0 0
  %567 = vmatprep.subr.bf16.mxu0 0
  %568 = vmatpush1.bf16.msra.mxu0 0
  %569 = vmatprep.subr.bf16.mxu0 0
  %570 = vmatpush1.bf16.msra.mxu0 0
  %571 = vmatprep.subr.bf16.mxu0 0
  %572 = vmatpush1.bf16.msra.mxu0 0
  %573 = vmatprep.subr.bf16.mxu0 0
  %574 = vmatpush1.bf16.msra.mxu0 0
  %575 = vmatprep.subr.bf16.mxu0 0
  %576 = vmatpush1.bf16.msra.mxu0 0
  %577 = vmatprep.subr.bf16.mxu0 0
  %578 = vmatpush1.bf16.msra.mxu0 0
  %579 = vmatprep.subr.bf16.mxu0 0
  %580 = vmatpush1.bf16.msra.mxu0 0
  %581 = vmatprep.subr.bf16.mxu0 0
  %582 = vmatpush1.bf16.msra.mxu0 0
  %583 = vmatprep.mubr.bf16.mxu0 0
  %584 = vmatmul.mubr.bf16.gmra.mrb[0].mxu0 %v469
  %v585 = vpop.f32.mrb[0].mxu0
  %v586 = vadd.f32 %v546, %v585
  %v587 = vpop.f32.mrb[0].mxu0
  %v588 = vpop.f32.mrb[0].mxu0
  %v589 = vpop.f32.mrb[0].mxu0
  %590 = vdwg.mxu0
  %v591 = vmax.f32 %v442, %v586
  %s592 = scalar_lea.vmem %s0, 40
  %v593 = vld [vmem:[%s592] sm:$0xff]
  %v594 = vld [vmem:[%s592 + $0x8] sm:$0xff]
  %v595 = vld [vmem:[%s592 + $0x10] sm:$0xf]
  %v599 = vunpack.c.l.b16 %v593
  %v600 = vunpack.c.h.b16 %v593
  %v601 = vunpack.c.l.b16 %v594
  %v602 = vunpack.c.h.b16 %v594
  %v603 = vunpack.c.l.b16 %v595
  %v604 = vpack.c.b16 %v599, %v599
  %v605 = vpack.c.b16 %v600, %v600
  %v606 = vpack.c.b16 %v601, %v601
  %v607 = vpack.c.b16 %v602, %v602
  %v608 = vpack.c.b16 %v603, %v603
  %v614 = vsel %vm323, %v608, 0
  %616 = vmatprep.subr.bf16.mxu0 0
  %617 = vmatpush1.bf16.msra.mxu0 %v251
  %618 = vmatprep.subr.bf16.mxu0 0
  %619 = vmatpush1.bf16.msra.mxu0 %v252
  %620 = vmatprep.subr.bf16.mxu0 0
  %621 = vmatpush1.bf16.msra.mxu0 %v253
  %622 = vmatprep.subr.bf16.mxu0 0
  %623 = vmatpush1.bf16.msra.mxu0 %v254
  %624 = vmatprep.subr.bf16.mxu0 0
  %625 = vmatpush1.bf16.msra.mxu0 %v255
  %626 = vmatprep.subr.bf16.mxu0 0
  %627 = vmatpush1.bf16.msra.mxu0 %v256
  %628 = vmatprep.subr.bf16.mxu0 0
  %629 = vmatpush1.bf16.msra.mxu0 %v257
  %630 = vmatprep.subr.bf16.mxu0 0
  %631 = vmatpush1.bf16.msra.mxu0 %v258
  %632 = vmatprep.subr.bf16.mxu0 0
  %633 = vmatpush1.bf16.msra.mxu0 %v259
  %634 = vmatprep.subr.bf16.mxu0 0
  %635 = vmatpush1.bf16.msra.mxu0 %v260
  %636 = vmatprep.subr.bf16.mxu0 0
  %637 = vmatpush1.bf16.msra.mxu0 %v261
  %638 = vmatprep.subr.bf16.mxu0 0
  %639 = vmatpush1.bf16.msra.mxu0 %v262
  %640 = vmatprep.subr.bf16.mxu0 0
  %641 = vmatpush1.bf16.msra.mxu0 %v263
  %642 = vmatprep.subr.bf16.mxu0 0
  %643 = vmatpush1.bf16.msra.mxu0 %v264
  %644 = vmatprep.subr.bf16.mxu0 0
  %645 = vmatpush1.bf16.msra.mxu0 %v265
  %646 = vmatprep.subr.bf16.mxu0 0
  %647 = vmatpush1.bf16.msra.mxu0 %v266
  %648 = vmatprep.mubr.bf16.mxu0 %v605
  %649 = vmatmul.mubr.bf16.gmra.mrb[0].mxu0 %v604
  %v650 = vpop.f32.mrb[0].mxu0
  %v651 = vadd.f32 0.0, %v650
  %v652 = vpop.f32.mrb[0].mxu0
  %v653 = vpop.f32.mrb[0].mxu0
  %v654 = vpop.f32.mrb[0].mxu0
  %655 = vdwg.mxu0
  %656 = vmatprep.subr.bf16.mxu0 0
  %657 = vmatpush1.bf16.msra.mxu0 %v267
  %658 = vmatprep.subr.bf16.mxu0 0
  %659 = vmatpush1.bf16.msra.mxu0 %v268
  %660 = vmatprep.subr.bf16.mxu0 0
  %661 = vmatpush1.bf16.msra.mxu0 %v269
  %662 = vmatprep.subr.bf16.mxu0 0
  %663 = vmatpush1.bf16.msra.mxu0 %v270
  %664 = vmatprep.subr.bf16.mxu0 0
  %665 = vmatpush1.bf16.msra.mxu0 %v271
  %666 = vmatprep.subr.bf16.mxu0 0
  %667 = vmatpush1.bf16.msra.mxu0 %v272
  %668 = vmatprep.subr.bf16.mxu0 0
  %669 = vmatpush1.bf16.msra.mxu0 %v273
  %670 = vmatprep.subr.bf16.mxu0 0
  %671 = vmatpush1.bf16.msra.mxu0 %v274
  %672 = vmatprep.subr.bf16.mxu0 0
  %673 = vmatpush1.bf16.msra.mxu0 %v275
  %674 = vmatprep.subr.bf16.mxu0 0
  %675 = vmatpush1.bf16.msra.mxu0 %v276
  %676 = vmatprep.subr.bf16.mxu0 0
  %677 = vmatpush1.bf16.msra.mxu0 %v277
  %678 = vmatprep.subr.bf16.mxu0 0
  %679 = vmatpush1.bf16.msra.mxu0 %v278
  %680 = vmatprep.subr.bf16.mxu0 0
  %681 = vmatpush1.bf16.msra.mxu0 %v279
  %682 = vmatprep.subr.bf16.mxu0 0
  %683 = vmatpush1.bf16.msra.mxu0 %v280
  %684 = vmatprep.subr.bf16.mxu0 0
  %685 = vmatpush1.bf16.msra.mxu0 %v281
  %686 = vmatprep.subr.bf16.mxu0 0
  %687 = vmatpush1.bf16.msra.mxu0 %v282
  %688 = vmatprep.mubr.bf16.mxu0 %v607
  %689 = vmatmul.mubr.bf16.gmra.mrb[0].mxu0 %v606
  %v690 = vpop.f32.mrb[0].mxu0
  %v691 = vadd.f32 %v651, %v690
  %v692 = vpop.f32.mrb[0].mxu0
  %v693 = vpop.f32.mrb[0].mxu0
  %v694 = vpop.f32.mrb[0].mxu0
  %695 = vdwg.mxu0
  %696 = vmatprep.subr.bf16.mxu0 0
  %697 = vmatpush1.bf16.msra.mxu0 %v283
  %698 = vmatprep.subr.bf16.mxu0 0
  %699 = vmatpush1.bf16.msra.mxu0 %v284
  %700 = vmatprep.subr.bf16.mxu0 0
  %701 = vmatpush1.bf16.msra.mxu0 %v285
  %702 = vmatprep.subr.bf16.mxu0 0
  %703 = vmatpush1.bf16.msra.mxu0 %v286
  %704 = vmatprep.subr.bf16.mxu0 0
  %705 = vmatpush1.bf16.msra.mxu0 0
  %706 = vmatprep.subr.bf16.mxu0 0
  %707 = vmatpush1.bf16.msra.mxu0 0
  %708 = vmatprep.subr.bf16.mxu0 0
  %709 = vmatpush1.bf16.msra.mxu0 0
  %710 = vmatprep.subr.bf16.mxu0 0
  %711 = vmatpush1.bf16.msra.mxu0 0
  %712 = vmatprep.subr.bf16.mxu0 0
  %713 = vmatpush1.bf16.msra.mxu0 0
  %714 = vmatprep.subr.bf16.mxu0 0
  %715 = vmatpush1.bf16.msra.mxu0 0
  %716 = vmatprep.subr.bf16.mxu0 0
  %717 = vmatpush1.bf16.msra.mxu0 0
  %718 = vmatprep.subr.bf16.mxu0 0
  %719 = vmatpush1.bf16.msra.mxu0 0
  %720 = vmatprep.subr.bf16.mxu0 0
  %721 = vmatpush1.bf16.msra.mxu0 0
  %722 = vmatprep.subr.bf16.mxu0 0
  %723 = vmatpush1.bf16.msra.mxu0 0
  %724 = vmatprep.subr.bf16.mxu0 0
  %725 = vmatpush1.bf16.msra.mxu0 0
  %726 = vmatprep.subr.bf16.mxu0 0
  %727 = vmatpush1.bf16.msra.mxu0 0
  %728 = vmatprep.mubr.bf16.mxu0 0
  %729 = vmatmul.mubr.bf16.gmra.mrb[0].mxu0 %v614
  %v730 = vpop.f32.mrb[0].mxu0
  %v731 = vadd.f32 %v691, %v730
  %v732 = vpop.f32.mrb[0].mxu0
  %v733 = vpop.f32.mrb[0].mxu0
  %v734 = vpop.f32.mrb[0].mxu0
  %735 = vdwg.mxu0
  %v736 = vmax.f32 %v591, %v731
  %s737 = scalar_lea.vmem %s0, 60
  %v738 = vld [vmem:[%s737] sm:$0xff]
  %v739 = vld [vmem:[%s737 + $0x8] sm:$0xff]
  %v740 = vld [vmem:[%s737 + $0x10] sm:$0xf]
  %v744 = vunpack.c.l.b16 %v738
  %v745 = vunpack.c.h.b16 %v738
  %v746 = vunpack.c.l.b16 %v739
  %v747 = vunpack.c.h.b16 %v739
  %v748 = vunpack.c.l.b16 %v740
  %v749 = vpack.c.b16 %v744, %v744
  %v750 = vpack.c.b16 %v745, %v745
  %v751 = vpack.c.b16 %v746, %v746
  %v752 = vpack.c.b16 %v747, %v747
  %v753 = vpack.c.b16 %v748, %v748
  %v759 = vsel %vm323, %v753, 0
  %761 = vmatprep.subr.bf16.mxu0 0
  %762 = vmatpush1.bf16.msra.mxu0 %v251
  %763 = vmatprep.subr.bf16.mxu0 0
  %764 = vmatpush1.bf16.msra.mxu0 %v252
  %765 = vmatprep.subr.bf16.mxu0 0
  %766 = vmatpush1.bf16.msra.mxu0 %v253
  %767 = vmatprep.subr.bf16.mxu0 0
  %768 = vmatpush1.bf16.msra.mxu0 %v254
  %769 = vmatprep.subr.bf16.mxu0 0
  %770 = vmatpush1.bf16.msra.mxu0 %v255
  %771 = vmatprep.subr.bf16.mxu0 0
  %772 = vmatpush1.bf16.msra.mxu0 %v256
  %773 = vmatprep.subr.bf16.mxu0 0
  %774 = vmatpush1.bf16.msra.mxu0 %v257
  %775 = vmatprep.subr.bf16.mxu0 0
  %776 = vmatpush1.bf16.msra.mxu0 %v258
  %777 = vmatprep.subr.bf16.mxu0 0
  %778 = vmatpush1.bf16.msra.mxu0 %v259
  %779 = vmatprep.subr.bf16.mxu0 0
  %780 = vmatpush1.bf16.msra.mxu0 %v260
  %781 = vmatprep.subr.bf16.mxu0 0
  %782 = vmatpush1.bf16.msra.mxu0 %v261
  %783 = vmatprep.subr.bf16.mxu0 0
  %784 = vmatpush1.bf16.msra.mxu0 %v262
  %785 = vmatprep.subr.bf16.mxu0 0
  %786 = vmatpush1.bf16.msra.mxu0 %v263
  %787 = vmatprep.subr.bf16.mxu0 0
  %788 = vmatpush1.bf16.msra.mxu0 %v264
  %789 = vmatprep.subr.bf16.mxu0 0
  %790 = vmatpush1.bf16.msra.mxu0 %v265
  %791 = vmatprep.subr.bf16.mxu0 0
  %792 = vmatpush1.bf16.msra.mxu0 %v266
  %793 = vmatprep.mubr.bf16.mxu0 %v750
  %794 = vmatmul.mubr.bf16.gmra.mrb[0].mxu0 %v749
  %v795 = vpop.f32.mrb[0].mxu0
  %v796 = vadd.f32 0.0, %v795
  %v797 = vpop.f32.mrb[0].mxu0
  %v798 = vpop.f32.mrb[0].mxu0
  %v799 = vpop.f32.mrb[0].mxu0
  %800 = vdwg.mxu0
  %801 = vmatprep.subr.bf16.mxu0 0
  %802 = vmatpush1.bf16.msra.mxu0 %v267
  %803 = vmatprep.subr.bf16.mxu0 0
  %804 = vmatpush1.bf16.msra.mxu0 %v268
  %805 = vmatprep.subr.bf16.mxu0 0
  %806 = vmatpush1.bf16.msra.mxu0 %v269
  %807 = vmatprep.subr.bf16.mxu0 0
  %808 = vmatpush1.bf16.msra.mxu0 %v270
  %809 = vmatprep.subr.bf16.mxu0 0
  %810 = vmatpush1.bf16.msra.mxu0 %v271
  %811 = vmatprep.subr.bf16.mxu0 0
  %812 = vmatpush1.bf16.msra.mxu0 %v272
  %813 = vmatprep.subr.bf16.mxu0 0
  %814 = vmatpush1.bf16.msra.mxu0 %v273
  %815 = vmatprep.subr.bf16.mxu0 0
  %816 = vmatpush1.bf16.msra.mxu0 %v274
  %817 = vmatprep.subr.bf16.mxu0 0
  %818 = vmatpush1.bf16.msra.mxu0 %v275
  %819 = vmatprep.subr.bf16.mxu0 0
  %820 = vmatpush1.bf16.msra.mxu0 %v276
  %821 = vmatprep.subr.bf16.mxu0 0
  %822 = vmatpush1.bf16.msra.mxu0 %v277
  %823 = vmatprep.subr.bf16.mxu0 0
  %824 = vmatpush1.bf16.msra.mxu0 %v278
  %825 = vmatprep.subr.bf16.mxu0 0
  %826 = vmatpush1.bf16.msra.mxu0 %v279
  %827 = vmatprep.subr.bf16.mxu0 0
  %828 = vmatpush1.bf16.msra.mxu0 %v280
  %829 = vmatprep.subr.bf16.mxu0 0
  %830 = vmatpush1.bf16.msra.mxu0 %v281
  %831 = vmatprep.subr.bf16.mxu0 0
  %832 = vmatpush1.bf16.msra.mxu0 %v282
  %833 = vmatprep.mubr.bf16.mxu0 %v752
  %834 = vmatmul.mubr.bf16.gmra.mrb[0].mxu0 %v751
  %v835 = vpop.f32.mrb[0].mxu0
  %v836 = vadd.f32 %v796, %v835
  %v837 = vpop.f32.mrb[0].mxu0
  %v838 = vpop.f32.mrb[0].mxu0
  %v839 = vpop.f32.mrb[0].mxu0
  %840 = vdwg.mxu0
  %841 = vmatprep.subr.bf16.mxu0 0
  %842 = vmatpush1.bf16.msra.mxu0 %v283
  %843 = vmatprep.subr.bf16.mxu0 0
  %844 = vmatpush1.bf16.msra.mxu0 %v284
  %845 = vmatprep.subr.bf16.mxu0 0
  %846 = vmatpush1.bf16.msra.mxu0 %v285
  %847 = vmatprep.subr.bf16.mxu0 0
  %848 = vmatpush1.bf16.msra.mxu0 %v286
  %849 = vmatprep.subr.bf16.mxu0 0
  %850 = vmatpush1.bf16.msra.mxu0 0
  %851 = vmatprep.subr.bf16.mxu0 0
  %852 = vmatpush1.bf16.msra.mxu0 0
  %853 = vmatprep.subr.bf16.mxu0 0
  %854 = vmatpush1.bf16.msra.mxu0 0
  %855 = vmatprep.subr.bf16.mxu0 0
  %856 = vmatpush1.bf16.msra.mxu0 0
  %857 = vmatprep.subr.bf16.mxu0 0
  %858 = vmatpush1.bf16.msra.mxu0 0
  %859 = vmatprep.subr.bf16.mxu0 0
  %860 = vmatpush1.bf16.msra.mxu0 0
  %861 = vmatprep.subr.bf16.mxu0 0
  %862 = vmatpush1.bf16.msra.mxu0 0
  %863 = vmatprep.subr.bf16.mxu0 0
  %864 = vmatpush1.bf16.msra.mxu0 0
  %865 = vmatprep.subr.bf16.mxu0 0
  %866 = vmatpush1.bf16.msra.mxu0 0
  %867 = vmatprep.subr.bf16.mxu0 0
  %868 = vmatpush1.bf16.msra.mxu0 0
  %869 = vmatprep.subr.bf16.mxu0 0
  %870 = vmatpush1.bf16.msra.mxu0 0
  %871 = vmatprep.subr.bf16.mxu0 0
  %872 = vmatpush1.bf16.msra.mxu0 0
  %873 = vmatprep.mubr.bf16.mxu0 0
  %874 = vmatmul.mubr.bf16.gmra.mrb[0].mxu0 %v759
  %v875 = vpop.f32.mrb[0].mxu0
  %v876 = vadd.f32 %v836, %v875
  %v877 = vpop.f32.mrb[0].mxu0
  %v878 = vpop.f32.mrb[0].mxu0
  %v879 = vpop.f32.mrb[0].mxu0
  %880 = vdwg.mxu0
  %v881 = vmax.f32 %v736, %v876
  %v882 = vld [vmem:[%s2] sm:$0x1]
  %v884 = vlaneseq
  %v885 = vshrl.u32 %v884, 7
  %v886 = vsub.s32 0, %v885
  %v887 = vrot.slane %v882, %v886
  %v889 = vadd.f32 %v881, %v887
  %vm890 = vcmp.ge.f32.partialorder %v889, 0.0
  %v891 = vmul.f32 %v889, 0.01
  %v892 = vsel %vm890, %v889, %v891
  %893 = vst [vmem:[%s3] sm:$0xff] %v892
  // Predicated region
  $region14: #{_lambda_.8} parent=0 // pred_check
    _
  $region15: #{_lambda_.8} parent=0 // pred_check_branch
    %895 = sbr.rel (0) target = $region17
  $region16: #{_lambda_.8} parent=0 // pred_region
    _
  $region17: #{_lambda_.8} parent=0 // pred_fallthru
    _
  // Predicated region
  $region18: #{_lambda_.8} parent=0 // pred_check
    _
  $region19: #{_lambda_.8} parent=0 // pred_check_branch
    %897 = sbr.rel (0) target = $region21
  $region20: #{_lambda_.8} parent=0 // pred_region
    _
  $region21: #{_lambda_.8} parent=0 // pred_fallthru
    _

// kernel: _lambda_.9
$region0: #{_lambda_.9}
  #allocation0 [shape = 'u32[]', space=smem, size = 0x4, offset = 0x4, fixed_abs, tag = 'smem constant byte address 0x4 - core index']
  #allocation1 [shape = 'u32[144,128]{1,0:T(1,128)}', space=vmem, size = 0x12000, scoped, tag = 'internal scratch']
  %s0 = inlined_call_operand.vmem [shape: bf16[8,1152], index: 0, kind: input, shape index: {}]
  %s1 = inlined_call_operand.vmem [shape: bf16[1152,256], index: 1, kind: input, shape index: {}]
  %s2 = inlined_call_operand.vmem [shape: f32[1,256], index: 2, kind: input, shape index: {}]
  %s3 = inlined_call_operand.vmem [shape: f32[256,3], index: 3, kind: input, shape index: {}]
  %s4 = inlined_call_operand.vmem [shape: f32[1,3], index: 4, kind: input, shape index: {}]
  %s5 = inlined_call_operand.hbm [shape: f32[2,3], index: 5, kind: output, shape index: {}]
  %s6 = sld [smem:[#allocation0]]
  $region30: #{_lambda_.9} parent=0
    _
  %s8 = ssub.s32 1, %s6
  %s9 = scalar_select 0, %s8, %s6
  $region1: #{_lambda_.9} parent=0
    #allocation2 [shape = 'u8[1024]{0}', space=vmem, size = 0x400, scoped, tag = 'output window, operand 0, single buffered']
    #allocation3 [shape = 's32[1]{0}', space=sflag, size = 0x4, scoped, tag = 'scoped memory for _lambda_.9']
    %10 = vsyncpa [#allocation3], 0
    // Predicated region
    $region2: #{_lambda_.9} parent=1 // pred_check
      _
    $region3: #{_lambda_.9} parent=1 // pred_check_branch
      %12 = sbr.rel (0) target = $region5
    $region4: #{_lambda_.9} parent=1 // pred_region
      _
    $region5: #{_lambda_.9} parent=1 // pred_fallthru
      _
    // Predicated region
    $region6: #{_lambda_.9} parent=1 // pred_check
      _
    $region7: #{_lambda_.9} parent=1 // pred_check_branch
      %14 = sbr.rel (0) target = $region9
    $region8: #{_lambda_.9} parent=1 // pred_region
      _
    $region9: #{_lambda_.9} parent=1 // pred_fallthru
      _
    // Predicated region
    $region10: #{_lambda_.9} parent=1 // pred_check
      _
    $region11: #{_lambda_.9} parent=1 // pred_check_branch
      %16 = sbr.rel (0) target = $region13
    $region12: #{_lambda_.9} parent=1 // pred_region
      _
    $region13: #{_lambda_.9} parent=1 // pred_fallthru
      _
    // Predicated region
    $region14: #{_lambda_.9} parent=1 // pred_check
      _
    $region15: #{_lambda_.9} parent=1 // pred_check_branch
      %18 = sbr.rel (0) target = $region17
    $region16: #{_lambda_.9} parent=1 // pred_region
      _
    $region17: #{_lambda_.9} parent=1 // pred_fallthru
      _
    // Predicated region
    $region18: #{_lambda_.9} parent=1 // pred_check
      _
    $region19: #{_lambda_.9} parent=1 // pred_check_branch
      %20 = sbr.rel (0) target = $region21
    $region20: #{_lambda_.9} parent=1 // pred_region
      _
    $region21: #{_lambda_.9} parent=1 // pred_fallthru
      _
    %v22 = vld [vmem:[%s0] sm:$0xff]
    %v23 = vld [vmem:[%s0 + $0x8] sm:$0xff]
    %v24 = vld [vmem:[%s0 + $0x10] sm:$0xff]
    %v25 = vld [vmem:[%s0 + $0x18] sm:$0xff]
    %v26 = vld [vmem:[%s0 + $0x20] sm:$0xf]
    %v27 = vld [vmem:[%s1] sm:$0xff]
    %v28 = vld [vmem:[%s1 + $0x8] sm:$0xff]
    %v29 = vld [vmem:[%s1 + $0x10] sm:$0xff]
    %v30 = vld [vmem:[%s1 + $0x18] sm:$0xff]
    %v31 = vld [vmem:[%s1 + $0x20] sm:$0xff]
    %v32 = vld [vmem:[%s1 + $0x28] sm:$0xff]
    %v33 = vld [vmem:[%s1 + $0x30] sm:$0xff]
    %v34 = vld [vmem:[%s1 + $0x38] sm:$0xff]
    %v35 = vld [vmem:[%s1 + $0x40] sm:$0xff]
    %v36 = vld [vmem:[%s1 + $0x48] sm:$0xff]
    %v37 = vld [vmem:[%s1 + $0x50] sm:$0xff]
    %v38 = vld [vmem:[%s1 + $0x58] sm:$0xff]
    %v39 = vld [vmem:[%s1 + $0x60] sm:$0xff]
    %v40 = vld [vmem:[%s1 + $0x68] sm:$0xff]
    %v41 = vld [vmem:[%s1 + $0x70] sm:$0xff]
    %v42 = vld [vmem:[%s1 + $0x78] sm:$0xff]
    %v43 = vld [vmem:[%s1 + $0x80] sm:$0xff]
    %v44 = vld [vmem:[%s1 + $0x88] sm:$0xff]
    %v45 = vld [vmem:[%s1 + $0x90] sm:$0xff]
    %v46 = vld [vmem:[%s1 + $0x98] sm:$0xff]
    %v47 = vld [vmem:[%s1 + $0xa0] sm:$0xff]
    %v48 = vld [vmem:[%s1 + $0xa8] sm:$0xff]
    %v49 = vld [vmem:[%s1 + $0xb0] sm:$0xff]
    %v50 = vld [vmem:[%s1 + $0xb8] sm:$0xff]
    %v51 = vld [vmem:[%s1 + $0xc0] sm:$0xff]
    %v52 = vld [vmem:[%s1 + $0xc8] sm:$0xff]
    %v53 = vld [vmem:[%s1 + $0xd0] sm:$0xff]
    %v54 = vld [vmem:[%s1 + $0xd8] sm:$0xff]
    %v55 = vld [vmem:[%s1 + $0xe0] sm:$0xff]
    %v56 = vld [vmem:[%s1 + $0xe8] sm:$0xff]
    %v57 = vld [vmem:[%s1 + $0xf0] sm:$0xff]
    %v58 = vld [vmem:[%s1 + $0xf8] sm:$0xff]
    %v59 = vld [vmem:[%s1 + $0x100] sm:$0xff]
    %v60 = vld [vmem:[%s1 + $0x108] sm:$0xff]
    %v61 = vld [vmem:[%s1 + $0x110] sm:$0xff]
    %v62 = vld [vmem:[%s1 + $0x118] sm:$0xff]
    %v63 = vld [vmem:[%s1 + $0x120] sm:$0xff]
    %v64 = vld [vmem:[%s1 + $0x128] sm:$0xff]
    %v65 = vld [vmem:[%s1 + $0x130] sm:$0xff]
    %v66 = vld [vmem:[%s1 + $0x138] sm:$0xff]
    %v67 = vld [vmem:[%s1 + $0x140] sm:$0xff]
    %v68 = vld [vmem:[%s1 + $0x148] sm:$0xff]
    %v69 = vld [vmem:[%s1 + $0x150] sm:$0xff]
    %v70 = vld [vmem:[%s1 + $0x158] sm:$0xff]
    %v71 = vld [vmem:[%s1 + $0x160] sm:$0xff]
    %v72 = vld [vmem:[%s1 + $0x168] sm:$0xff]
    %v73 = vld [vmem:[%s1 + $0x170] sm:$0xff]
    %v74 = vld [vmem:[%s1 + $0x178] sm:$0xff]
    %v75 = vld [vmem:[%s1 + $0x180] sm:$0xff]
    %v76 = vld [vmem:[%s1 + $0x188] sm:$0xff]
    %v77 = vld [vmem:[%s1 + $0x190] sm:$0xff]
    %v78 = vld [vmem:[%s1 + $0x198] sm:$0xff]
    %v79 = vld [vmem:[%s1 + $0x1a0] sm:$0xff]
    %v80 = vld [vmem:[%s1 + $0x1a8] sm:$0xff]
    %v81 = vld [vmem:[%s1 + $0x1b0] sm:$0xff]
    %v82 = vld [vmem:[%s1 + $0x1b8] sm:$0xff]
    %v83 = vld [vmem:[%s1 + $0x1c0] sm:$0xff]
    %v84 = vld [vmem:[%s1 + $0x1c8] sm:$0xff]
    %v85 = vld [vmem:[%s1 + $0x1d0] sm:$0xff]
    %v86 = vld [vmem:[%s1 + $0x1d8] sm:$0xff]
    %v87 = vld [vmem:[%s1 + $0x1e0] sm:$0xff]
    %v88 = vld [vmem:[%s1 + $0x1e8] sm:$0xff]
    %v89 = vld [vmem:[%s1 + $0x1f0] sm:$0xff]
    %v90 = vld [vmem:[%s1 + $0x1f8] sm:$0xff]
    %v91 = vld [vmem:[%s1 + $0x200] sm:$0xff]
    %v92 = vld [vmem:[%s1 + $0x208] sm:$0xff]
    %v93 = vld [vmem:[%s1 + $0x210] sm:$0xff]
    %v94 = vld [vmem:[%s1 + $0x218] sm:$0xff]
    %v95 = vld [vmem:[%s1 + $0x220] sm:$0xff]
    %v96 = vld [vmem:[%s1 + $0x228] sm:$0xff]
    %v97 = vld [vmem:[%s1 + $0x230] sm:$0xff]
    %v98 = vld [vmem:[%s1 + $0x238] sm:$0xff]
    %v99 = vld [vmem:[%s1 + $0x240] sm:$0xff]
    %v100 = vld [vmem:[%s1 + $0x248] sm:$0xff]
    %v101 = vld [vmem:[%s1 + $0x250] sm:$0xff]
    %v102 = vld [vmem:[%s1 + $0x258] sm:$0xff]
    %v103 = vld [vmem:[%s1 + $0x260] sm:$0xff]
    %v104 = vld [vmem:[%s1 + $0x268] sm:$0xff]
    %v105 = vld [vmem:[%s1 + $0x270] sm:$0xff]
    %v106 = vld [vmem:[%s1 + $0x278] sm:$0xff]
    %v107 = vld [vmem:[%s1 + $0x280] sm:$0xff]
    %v108 = vld [vmem:[%s1 + $0x288] sm:$0xff]
    %v109 = vld [vmem:[%s1 + $0x290] sm:$0xff]
    %v110 = vld [vmem:[%s1 + $0x298] sm:$0xff]
    %v111 = vld [vmem:[%s1 + $0x2a0] sm:$0xff]
    %v112 = vld [vmem:[%s1 + $0x2a8] sm:$0xff]
    %v113 = vld [vmem:[%s1 + $0x2b0] sm:$0xff]
    %v114 = vld [vmem:[%s1 + $0x2b8] sm:$0xff]
    %v115 = vld [vmem:[%s1 + $0x2c0] sm:$0xff]
    %v116 = vld [vmem:[%s1 + $0x2c8] sm:$0xff]
    %v117 = vld [vmem:[%s1 + $0x2d0] sm:$0xff]
    %v118 = vld [vmem:[%s1 + $0x2d8] sm:$0xff]
    %v119 = vld [vmem:[%s1 + $0x2e0] sm:$0xff]
    %v120 = vld [vmem:[%s1 + $0x2e8] sm:$0xff]
    %v121 = vld [vmem:[%s1 + $0x2f0] sm:$0xff]
    %v122 = vld [vmem:[%s1 + $0x2f8] sm:$0xff]
    %v123 = vld [vmem:[%s1 + $0x300] sm:$0xff]
    %v124 = vld [vmem:[%s1 + $0x308] sm:$0xff]
    %v125 = vld [vmem:[%s1 + $0x310] sm:$0xff]
    %v126 = vld [vmem:[%s1 + $0x318] sm:$0xff]
    %v127 = vld [vmem:[%s1 + $0x320] sm:$0xff]
    %v128 = vld [vmem:[%s1 + $0x328] sm:$0xff]
    %v129 = vld [vmem:[%s1 + $0x330] sm:$0xff]
    %v130 = vld [vmem:[%s1 + $0x338] sm:$0xff]
    %v131 = vld [vmem:[%s1 + $0x340] sm:$0xff]
    %v132 = vld [vmem:[%s1 + $0x348] sm:$0xff]
    %v133 = vld [vmem:[%s1 + $0x350] sm:$0xff]
    %v134 = vld [vmem:[%s1 + $0x358] sm:$0xff]
    %v135 = vld [vmem:[%s1 + $0x360] sm:$0xff]
    %v136 = vld [vmem:[%s1 + $0x368] sm:$0xff]
    %v137 = vld [vmem:[%s1 + $0x370] sm:$0xff]
    %v138 = vld [vmem:[%s1 + $0x378] sm:$0xff]
    %v139 = vld [vmem:[%s1 + $0x380] sm:$0xff]
    %v140 = vld [vmem:[%s1 + $0x388] sm:$0xff]
    %v141 = vld [vmem:[%s1 + $0x390] sm:$0xff]
    %v142 = vld [vmem:[%s1 + $0x398] sm:$0xff]
    %v143 = vld [vmem:[%s1 + $0x3a0] sm:$0xff]
    %v144 = vld [vmem:[%s1 + $0x3a8] sm:$0xff]
    %v145 = vld [vmem:[%s1 + $0x3b0] sm:$0xff]
    %v146 = vld [vmem:[%s1 + $0x3b8] sm:$0xff]
    %v147 = vld [vmem:[%s1 + $0x3c0] sm:$0xff]
    %v148 = vld [vmem:[%s1 + $0x3c8] sm:$0xff]
    %v149 = vld [vmem:[%s1 + $0x3d0] sm:$0xff]
    %v150 = vld [vmem:[%s1 + $0x3d8] sm:$0xff]
    %v151 = vld [vmem:[%s1 + $0x3e0] sm:$0xff]
    %v152 = vld [vmem:[%s1 + $0x3e8] sm:$0xff]
    %v153 = vld [vmem:[%s1 + $0x3f0] sm:$0xff]
    %v154 = vld [vmem:[%s1 + $0x3f8] sm:$0xff]
    %v155 = vld [vmem:[%s1 + $0x400] sm:$0xff]
    %v156 = vld [vmem:[%s1 + $0x408] sm:$0xff]
    %v157 = vld [vmem:[%s1 + $0x410] sm:$0xff]
    %v158 = vld [vmem:[%s1 + $0x418] sm:$0xff]
    %v159 = vld [vmem:[%s1 + $0x420] sm:$0xff]
    %v160 = vld [vmem:[%s1 + $0x428] sm:$0xff]
    %v161 = vld [vmem:[%s1 + $0x430] sm:$0xff]
    %v162 = vld [vmem:[%s1 + $0x438] sm:$0xff]
    %v163 = vld [vmem:[%s1 + $0x440] sm:$0xff]
    %v164 = vld [vmem:[%s1 + $0x448] sm:$0xff]
    %v165 = vld [vmem:[%s1 + $0x450] sm:$0xff]
    %v166 = vld [vmem:[%s1 + $0x458] sm:$0xff]
    %v167 = vld [vmem:[%s1 + $0x460] sm:$0xff]
    %v168 = vld [vmem:[%s1 + $0x468] sm:$0xff]
    %v169 = vld [vmem:[%s1 + $0x470] sm:$0xff]
    %v170 = vld [vmem:[%s1 + $0x478] sm:$0xff]
    %v171 = vld [vmem:[%s2] sm:$0x3]
    %v173 = vlaneseq
    %v174 = vshrl.u32 %v173, 7
    %v175 = vsub.s32 0, %v174
    %v176 = vrot.slane %v171, %v175
    %v177 = vlaneseq
    %v178 = vshrl.u32 %v177, 7
    %v179 = vsub.s32 1, %v178
    %v180 = vrot.slane %v171, %v179
    %v188 = vunpack.c.l.b16 %v22
    %v189 = vunpack.c.h.b16 %v22
    %v190 = vunpack.c.l.b16 %v23
    %v191 = vunpack.c.h.b16 %v23
    %v192 = vunpack.c.l.b16 %v24
    %v193 = vunpack.c.h.b16 %v24
    %v194 = vunpack.c.l.b16 %v25
    %v195 = vunpack.c.h.b16 %v25
    %v196 = vunpack.c.l.b16 %v26
    %v197 = vpack.c.b16 %v188, %v188
    %v198 = vpack.c.b16 %v189, %v189
    %v199 = vpack.c.b16 %v190, %v190
    %v200 = vpack.c.b16 %v191, %v191
    %v201 = vpack.c.b16 %v192, %v192
    %v202 = vpack.c.b16 %v193, %v193
    %v203 = vpack.c.b16 %v194, %v194
    %v204 = vpack.c.b16 %v195, %v195
    %v205 = vpack.c.b16 %v196, %v196
    %v359 = vunpack.c.l.b16 %v27
    %v360 = vunpack.c.h.b16 %v27
    %v361 = vunpack.c.l.b16 %v28
    %v362 = vunpack.c.h.b16 %v28
    %v363 = vunpack.c.l.b16 %v29
    %v364 = vunpack.c.h.b16 %v29
    %v365 = vunpack.c.l.b16 %v30
    %v366 = vunpack.c.h.b16 %v30
    %v367 = vunpack.c.l.b16 %v31
    %v368 = vunpack.c.h.b16 %v31
    %v369 = vunpack.c.l.b16 %v32
    %v370 = vunpack.c.h.b16 %v32
    %v371 = vunpack.c.l.b16 %v33
    %v372 = vunpack.c.h.b16 %v33
    %v373 = vunpack.c.l.b16 %v34
    %v374 = vunpack.c.h.b16 %v34
    %v375 = vunpack.c.l.b16 %v35
    %v376 = vunpack.c.h.b16 %v35
    %v377 = vunpack.c.l.b16 %v36
    %v378 = vunpack.c.h.b16 %v36
    %v379 = vunpack.c.l.b16 %v37
    %v380 = vunpack.c.h.b16 %v37
    %v381 = vunpack.c.l.b16 %v38
    %v382 = vunpack.c.h.b16 %v38
    %v383 = vunpack.c.l.b16 %v39
    %v384 = vunpack.c.h.b16 %v39
    %v385 = vunpack.c.l.b16 %v40
    %v386 = vunpack.c.h.b16 %v40
    %v387 = vunpack.c.l.b16 %v41
    %v388 = vunpack.c.h.b16 %v41
    %v389 = vunpack.c.l.b16 %v42
    %v390 = vunpack.c.h.b16 %v42
    %v391 = vunpack.c.l.b16 %v43
    %v392 = vunpack.c.h.b16 %v43
    %v393 = vunpack.c.l.b16 %v44
    %v394 = vunpack.c.h.b16 %v44
    %v395 = vunpack.c.l.b16 %v45
    %v396 = vunpack.c.h.b16 %v45
    %v397 = vunpack.c.l.b16 %v46
    %v398 = vunpack.c.h.b16 %v46
    %v399 = vunpack.c.l.b16 %v47
    %v400 = vunpack.c.h.b16 %v47
    %v401 = vunpack.c.l.b16 %v48
    %v402 = vunpack.c.h.b16 %v48
    %v403 = vunpack.c.l.b16 %v49
    %v404 = vunpack.c.h.b16 %v49
    %v405 = vunpack.c.l.b16 %v50
    %v406 = vunpack.c.h.b16 %v50
    %v407 = vunpack.c.l.b16 %v51
    %v408 = vunpack.c.h.b16 %v51
    %v409 = vunpack.c.l.b16 %v52
    %v410 = vunpack.c.h.b16 %v52
    %v411 = vunpack.c.l.b16 %v53
    %v412 = vunpack.c.h.b16 %v53
    %v413 = vunpack.c.l.b16 %v54
    %v414 = vunpack.c.h.b16 %v54
    %v415 = vunpack.c.l.b16 %v55
    %v416 = vunpack.c.h.b16 %v55
    %v417 = vunpack.c.l.b16 %v56
    %v418 = vunpack.c.h.b16 %v56
    %v419 = vunpack.c.l.b16 %v57
    %v420 = vunpack.c.h.b16 %v57
    %v421 = vunpack.c.l.b16 %v58
    %v422 = vunpack.c.h.b16 %v58
    %v423 = vunpack.c.l.b16 %v59
    %v424 = vunpack.c.h.b16 %v59
    %v425 = vunpack.c.l.b16 %v60
    %v426 = vunpack.c.h.b16 %v60
    %v427 = vunpack.c.l.b16 %v61
    %v428 = vunpack.c.h.b16 %v61
    %v429 = vunpack.c.l.b16 %v62
    %v430 = vunpack.c.h.b16 %v62
    %v431 = vunpack.c.l.b16 %v63
    %v432 = vunpack.c.h.b16 %v63
    %v433 = vunpack.c.l.b16 %v64
    %v434 = vunpack.c.h.b16 %v64
    %v435 = vunpack.c.l.b16 %v65
    %v436 = vunpack.c.h.b16 %v65
    %v437 = vunpack.c.l.b16 %v66
    %v438 = vunpack.c.h.b16 %v66
    %v439 = vunpack.c.l.b16 %v67
    %v440 = vunpack.c.h.b16 %v67
    %v441 = vunpack.c.l.b16 %v68
    %v442 = vunpack.c.h.b16 %v68
    %v443 = vunpack.c.l.b16 %v69
    %v444 = vunpack.c.h.b16 %v69
    %v445 = vunpack.c.l.b16 %v70
    %v446 = vunpack.c.h.b16 %v70
    %v447 = vunpack.c.l.b16 %v71
    %v448 = vunpack.c.h.b16 %v71
    %v449 = vunpack.c.l.b16 %v72
    %v450 = vunpack.c.h.b16 %v72
    %v451 = vunpack.c.l.b16 %v73
    %v452 = vunpack.c.h.b16 %v73
    %v453 = vunpack.c.l.b16 %v74
    %v454 = vunpack.c.h.b16 %v74
    %v455 = vunpack.c.l.b16 %v75
    %v456 = vunpack.c.h.b16 %v75
    %v457 = vunpack.c.l.b16 %v76
    %v458 = vunpack.c.h.b16 %v76
    %v459 = vunpack.c.l.b16 %v77
    %v460 = vunpack.c.h.b16 %v77
    %v461 = vunpack.c.l.b16 %v78
    %v462 = vunpack.c.h.b16 %v78
    %v463 = vunpack.c.l.b16 %v79
    %v464 = vunpack.c.h.b16 %v79
    %v465 = vunpack.c.l.b16 %v80
    %v466 = vunpack.c.h.b16 %v80
    %v467 = vunpack.c.l.b16 %v81
    %v468 = vunpack.c.h.b16 %v81
    %v469 = vunpack.c.l.b16 %v82
    %v470 = vunpack.c.h.b16 %v82
    %v471 = vunpack.c.l.b16 %v83
    %v472 = vunpack.c.h.b16 %v83
    %v473 = vunpack.c.l.b16 %v84
    %v474 = vunpack.c.h.b16 %v84
    %v475 = vunpack.c.l.b16 %v85
    %v476 = vunpack.c.h.b16 %v85
    %v477 = vunpack.c.l.b16 %v86
    %v478 = vunpack.c.h.b16 %v86
    %v479 = vunpack.c.l.b16 %v87
    %v480 = vunpack.c.h.b16 %v87
    %v481 = vunpack.c.l.b16 %v88
    %v482 = vunpack.c.h.b16 %v88
    %v483 = vunpack.c.l.b16 %v89
    %v484 = vunpack.c.h.b16 %v89
    %v485 = vunpack.c.l.b16 %v90
    %v486 = vunpack.c.h.b16 %v90
    %v487 = vunpack.c.l.b16 %v91
    %v488 = vunpack.c.h.b16 %v91
    %v489 = vunpack.c.l.b16 %v92
    %v490 = vunpack.c.h.b16 %v92
    %v491 = vunpack.c.l.b16 %v93
    %v492 = vunpack.c.h.b16 %v93
    %v493 = vunpack.c.l.b16 %v94
    %v494 = vunpack.c.h.b16 %v94
    %v495 = vunpack.c.l.b16 %v95
    %v496 = vunpack.c.h.b16 %v95
    %v497 = vunpack.c.l.b16 %v96
    %v498 = vunpack.c.h.b16 %v96
    %v499 = vunpack.c.l.b16 %v97
    %v500 = vunpack.c.h.b16 %v97
    %v501 = vunpack.c.l.b16 %v98
    %v502 = vunpack.c.h.b16 %v98
    %v503 = vunpack.c.l.b16 %v99
    %v504 = vunpack.c.h.b16 %v99
    %v505 = vunpack.c.l.b16 %v100
    %v506 = vunpack.c.h.b16 %v100
    %v507 = vunpack.c.l.b16 %v101
    %v508 = vunpack.c.h.b16 %v101
    %v509 = vunpack.c.l.b16 %v102
    %v510 = vunpack.c.h.b16 %v102
    %v511 = vunpack.c.l.b16 %v103
    %v512 = vunpack.c.h.b16 %v103
    %v513 = vunpack.c.l.b16 %v104
    %v514 = vunpack.c.h.b16 %v104
    %v515 = vunpack.c.l.b16 %v105
    %v516 = vunpack.c.h.b16 %v105
    %v517 = vunpack.c.l.b16 %v106
    %v518 = vunpack.c.h.b16 %v106
    %v519 = vunpack.c.l.b16 %v107
    %v520 = vunpack.c.h.b16 %v107
    %v521 = vunpack.c.l.b16 %v108
    %v522 = vunpack.c.h.b16 %v108
    %v523 = vunpack.c.l.b16 %v109
    %v524 = vunpack.c.h.b16 %v109
    %v525 = vunpack.c.l.b16 %v110
    %v526 = vunpack.c.h.b16 %v110
    %v527 = vunpack.c.l.b16 %v111
    %v528 = vunpack.c.h.b16 %v111
    %v529 = vunpack.c.l.b16 %v112
    %v530 = vunpack.c.h.b16 %v112
    %v531 = vunpack.c.l.b16 %v113
    %v532 = vunpack.c.h.b16 %v113
    %v533 = vunpack.c.l.b16 %v114
    %v534 = vunpack.c.h.b16 %v114
    %v535 = vunpack.c.l.b16 %v115
    %v536 = vunpack.c.h.b16 %v115
    %v537 = vunpack.c.l.b16 %v116
    %v538 = vunpack.c.h.b16 %v116
    %v539 = vunpack.c.l.b16 %v117
    %v540 = vunpack.c.h.b16 %v117
    %v541 = vunpack.c.l.b16 %v118
    %v542 = vunpack.c.h.b16 %v118
    %v543 = vunpack.c.l.b16 %v119
    %v544 = vunpack.c.h.b16 %v119
    %v545 = vunpack.c.l.b16 %v120
    %v546 = vunpack.c.h.b16 %v120
    %v547 = vunpack.c.l.b16 %v121
    %v548 = vunpack.c.h.b16 %v121
    %v549 = vunpack.c.l.b16 %v122
    %v550 = vunpack.c.h.b16 %v122
    %v551 = vunpack.c.l.b16 %v123
    %v552 = vunpack.c.h.b16 %v123
    %v553 = vunpack.c.l.b16 %v124
    %v554 = vunpack.c.h.b16 %v124
    %v555 = vunpack.c.l.b16 %v125
    %v556 = vunpack.c.h.b16 %v125
    %v557 = vunpack.c.l.b16 %v126
    %v558 = vunpack.c.h.b16 %v126
    %v559 = vunpack.c.l.b16 %v127
    %v560 = vunpack.c.h.b16 %v127
    %v561 = vunpack.c.l.b16 %v128
    %v562 = vunpack.c.h.b16 %v128
    %v563 = vunpack.c.l.b16 %v129
    %v564 = vunpack.c.h.b16 %v129
    %v565 = vunpack.c.l.b16 %v130
    %v566 = vunpack.c.h.b16 %v130
    %v567 = vunpack.c.l.b16 %v131
    %v568 = vunpack.c.h.b16 %v131
    %v569 = vunpack.c.l.b16 %v132
    %v570 = vunpack.c.h.b16 %v132
    %v571 = vunpack.c.l.b16 %v133
    %v572 = vunpack.c.h.b16 %v133
    %v573 = vunpack.c.l.b16 %v134
    %v574 = vunpack.c.h.b16 %v134
    %v575 = vunpack.c.l.b16 %v135
    %v576 = vunpack.c.h.b16 %v135
    %v577 = vunpack.c.l.b16 %v136
    %v578 = vunpack.c.h.b16 %v136
    %v579 = vunpack.c.l.b16 %v137
    %v580 = vunpack.c.h.b16 %v137
    %v581 = vunpack.c.l.b16 %v138
    %v582 = vunpack.c.h.b16 %v138
    %v583 = vunpack.c.l.b16 %v139
    %v584 = vunpack.c.h.b16 %v139
    %v585 = vunpack.c.l.b16 %v140
    %v586 = vunpack.c.h.b16 %v140
    %v587 = vunpack.c.l.b16 %v141
    %v588 = vunpack.c.h.b16 %v141
    %v589 = vunpack.c.l.b16 %v142
    %v590 = vunpack.c.h.b16 %v142
    %v591 = vunpack.c.l.b16 %v143
    %v592 = vunpack.c.h.b16 %v143
    %v593 = vunpack.c.l.b16 %v144
    %v594 = vunpack.c.h.b16 %v144
    %v595 = vunpack.c.l.b16 %v145
    %v596 = vunpack.c.h.b16 %v145
    %v597 = vunpack.c.l.b16 %v146
    %v598 = vunpack.c.h.b16 %v146
    %v599 = vunpack.c.l.b16 %v147
    %v600 = vunpack.c.h.b16 %v147
    %v601 = vunpack.c.l.b16 %v148
    %v602 = vunpack.c.h.b16 %v148
    %v603 = vunpack.c.l.b16 %v149
    %v604 = vunpack.c.h.b16 %v149
    %v605 = vunpack.c.l.b16 %v150
    %v606 = vunpack.c.h.b16 %v150
    %v607 = vunpack.c.l.b16 %v151
    %v608 = vunpack.c.h.b16 %v151
    %v609 = vunpack.c.l.b16 %v152
    %v610 = vunpack.c.h.b16 %v152
    %v611 = vunpack.c.l.b16 %v153
    %v612 = vunpack.c.h.b16 %v153
    %v613 = vunpack.c.l.b16 %v154
    %v614 = vunpack.c.h.b16 %v154
    %v615 = vunpack.c.l.b16 %v155
    %v616 = vunpack.c.h.b16 %v155
    %v617 = vunpack.c.l.b16 %v156
    %v618 = vunpack.c.h.b16 %v156
    %v619 = vunpack.c.l.b16 %v157
    %v620 = vunpack.c.h.b16 %v157
    %v621 = vunpack.c.l.b16 %v158
    %v622 = vunpack.c.h.b16 %v158
    %v623 = vunpack.c.l.b16 %v159
    %v624 = vunpack.c.h.b16 %v159
    %v625 = vunpack.c.l.b16 %v160
    %v626 = vunpack.c.h.b16 %v160
    %v627 = vunpack.c.l.b16 %v161
    %v628 = vunpack.c.h.b16 %v161
    %v629 = vunpack.c.l.b16 %v162
    %v630 = vunpack.c.h.b16 %v162
    %v631 = vunpack.c.l.b16 %v163
    %v632 = vunpack.c.h.b16 %v163
    %v633 = vunpack.c.l.b16 %v164
    %v634 = vunpack.c.h.b16 %v164
    %v635 = vunpack.c.l.b16 %v165
    %v636 = vunpack.c.h.b16 %v165
    %v637 = vunpack.c.l.b16 %v166
    %v638 = vunpack.c.h.b16 %v166
    %v639 = vunpack.c.l.b16 %v167
    %v640 = vunpack.c.h.b16 %v167
    %v641 = vunpack.c.l.b16 %v168
    %v642 = vunpack.c.h.b16 %v168
    %v643 = vunpack.c.l.b16 %v169
    %v644 = vunpack.c.h.b16 %v169
    %v645 = vunpack.c.l.b16 %v170
    %v646 = vunpack.c.h.b16 %v170
    %v647 = vpack.c.b16 %v361, %v359
    %v648 = vpack.c.b16 %v362, %v360
    %v649 = vpack.c.b16 %v365, %v363
    %v650 = vpack.c.b16 %v366, %v364
    %v651 = vpack.c.b16 %v369, %v367
    %v652 = vpack.c.b16 %v370, %v368
    %v653 = vpack.c.b16 %v373, %v371
    %v654 = vpack.c.b16 %v374, %v372
    %v655 = vpack.c.b16 %v377, %v375
    %v656 = vpack.c.b16 %v378, %v376
    %v657 = vpack.c.b16 %v381, %v379
    %v658 = vpack.c.b16 %v382, %v380
    %v659 = vpack.c.b16 %v385, %v383
    %v660 = vpack.c.b16 %v386, %v384
    %v661 = vpack.c.b16 %v389, %v387
    %v662 = vpack.c.b16 %v390, %v388
    %v663 = vpack.c.b16 %v393, %v391
    %v664 = vpack.c.b16 %v394, %v392
    %v665 = vpack.c.b16 %v397, %v395
    %v666 = vpack.c.b16 %v398, %v396
    %v667 = vpack.c.b16 %v401, %v399
    %v668 = vpack.c.b16 %v402, %v400
    %v669 = vpack.c.b16 %v405, %v403
    %v670 = vpack.c.b16 %v406, %v404
    %v671 = vpack.c.b16 %v409, %v407
    %v672 = vpack.c.b16 %v410, %v408
    %v673 = vpack.c.b16 %v413, %v411
    %v674 = vpack.c.b16 %v414, %v412
    %v675 = vpack.c.b16 %v417, %v415
    %v676 = vpack.c.b16 %v418, %v416
    %v677 = vpack.c.b16 %v421, %v419
    %v678 = vpack.c.b16 %v422, %v420
    %v679 = vpack.c.b16 %v425, %v423
    %v680 = vpack.c.b16 %v426, %v424
    %v681 = vpack.c.b16 %v429, %v427
    %v682 = vpack.c.b16 %v430, %v428
    %v683 = vpack.c.b16 %v433, %v431
    %v684 = vpack.c.b16 %v434, %v432
    %v685 = vpack.c.b16 %v437, %v435
    %v686 = vpack.c.b16 %v438, %v436
    %v687 = vpack.c.b16 %v441, %v439
    %v688 = vpack.c.b16 %v442, %v440
    %v689 = vpack.c.b16 %v445, %v443
    %v690 = vpack.c.b16 %v446, %v444
    %v691 = vpack.c.b16 %v449, %v447
    %v692 = vpack.c.b16 %v450, %v448
    %v693 = vpack.c.b16 %v453, %v451
    %v694 = vpack.c.b16 %v454, %v452
    %v695 = vpack.c.b16 %v457, %v455
    %v696 = vpack.c.b16 %v458, %v456
    %v697 = vpack.c.b16 %v461, %v459
    %v698 = vpack.c.b16 %v462, %v460
    %v699 = vpack.c.b16 %v465, %v463
    %v700 = vpack.c.b16 %v466, %v464
    %v701 = vpack.c.b16 %v469, %v467
    %v702 = vpack.c.b16 %v470, %v468
    %v703 = vpack.c.b16 %v473, %v471
    %v704 = vpack.c.b16 %v474, %v472
    %v705 = vpack.c.b16 %v477, %v475
    %v706 = vpack.c.b16 %v478, %v476
    %v707 = vpack.c.b16 %v481, %v479
    %v708 = vpack.c.b16 %v482, %v480
    %v709 = vpack.c.b16 %v485, %v483
    %v710 = vpack.c.b16 %v486, %v484
    %v711 = vpack.c.b16 %v489, %v487
    %v712 = vpack.c.b16 %v490, %v488
    %v713 = vpack.c.b16 %v493, %v491
    %v714 = vpack.c.b16 %v494, %v492
    %v715 = vpack.c.b16 %v497, %v495
    %v716 = vpack.c.b16 %v498, %v496
    %v717 = vpack.c.b16 %v501, %v499
    %v718 = vpack.c.b16 %v502, %v500
    %v719 = vpack.c.b16 %v505, %v503
    %v720 = vpack.c.b16 %v506, %v504
    %v721 = vpack.c.b16 %v509, %v507
    %v722 = vpack.c.b16 %v510, %v508
    %v723 = vpack.c.b16 %v513, %v511
    %v724 = vpack.c.b16 %v514, %v512
    %v725 = vpack.c.b16 %v517, %v515
    %v726 = vpack.c.b16 %v518, %v516
    %v727 = vpack.c.b16 %v521, %v519
    %v728 = vpack.c.b16 %v522, %v520
    %v729 = vpack.c.b16 %v525, %v523
    %v730 = vpack.c.b16 %v526, %v524
    %v731 = vpack.c.b16 %v529, %v527
    %v732 = vpack.c.b16 %v530, %v528
    %v733 = vpack.c.b16 %v533, %v531
    %v734 = vpack.c.b16 %v534, %v532
    %v735 = vpack.c.b16 %v537, %v535
    %v736 = vpack.c.b16 %v538, %v536
    %v737 = vpack.c.b16 %v541, %v539
    %v738 = vpack.c.b16 %v542, %v540
    %v739 = vpack.c.b16 %v545, %v543
    %v740 = vpack.c.b16 %v546, %v544
    %v741 = vpack.c.b16 %v549, %v547
    %v742 = vpack.c.b16 %v550, %v548
    %v743 = vpack.c.b16 %v553, %v551
    %v744 = vpack.c.b16 %v554, %v552
    %v745 = vpack.c.b16 %v557, %v555
    %v746 = vpack.c.b16 %v558, %v556
    %v747 = vpack.c.b16 %v561, %v559
    %v748 = vpack.c.b16 %v562, %v560
    %v749 = vpack.c.b16 %v565, %v563
    %v750 = vpack.c.b16 %v566, %v564
    %v751 = vpack.c.b16 %v569, %v567
    %v752 = vpack.c.b16 %v570, %v568
    %v753 = vpack.c.b16 %v573, %v571
    %v754 = vpack.c.b16 %v574, %v572
    %v755 = vpack.c.b16 %v577, %v575
    %v756 = vpack.c.b16 %v578, %v576
    %v757 = vpack.c.b16 %v581, %v579
    %v758 = vpack.c.b16 %v582, %v580
    %v759 = vpack.c.b16 %v585, %v583
    %v760 = vpack.c.b16 %v586, %v584
    %v761 = vpack.c.b16 %v589, %v587
    %v762 = vpack.c.b16 %v590, %v588
    %v763 = vpack.c.b16 %v593, %v591
    %v764 = vpack.c.b16 %v594, %v592
    %v765 = vpack.c.b16 %v597, %v595
    %v766 = vpack.c.b16 %v598, %v596
    %v767 = vpack.c.b16 %v601, %v599
    %v768 = vpack.c.b16 %v602, %v600
    %v769 = vpack.c.b16 %v605, %v603
    %v770 = vpack.c.b16 %v606, %v604
    %v771 = vpack.c.b16 %v609, %v607
    %v772 = vpack.c.b16 %v610, %v608
    %v773 = vpack.c.b16 %v613, %v611
    %v774 = vpack.c.b16 %v614, %v612
    %v775 = vpack.c.b16 %v617, %v615
    %v776 = vpack.c.b16 %v618, %v616
    %v777 = vpack.c.b16 %v621, %v619
    %v778 = vpack.c.b16 %v622, %v620
    %v779 = vpack.c.b16 %v625, %v623
    %v780 = vpack.c.b16 %v626, %v624
    %v781 = vpack.c.b16 %v629, %v627
    %v782 = vpack.c.b16 %v630, %v628
    %v783 = vpack.c.b16 %v633, %v631
    %v784 = vpack.c.b16 %v634, %v632
    %v785 = vpack.c.b16 %v637, %v635
    %v786 = vpack.c.b16 %v638, %v636
    %v787 = vpack.c.b16 %v641, %v639
    %v788 = vpack.c.b16 %v642, %v640
    %v789 = vpack.c.b16 %v645, %v643
    %v790 = vpack.c.b16 %v646, %v644
    %935 = vmatprep.subr.bf16.mxu0 %v648
    %936 = vmatpush1.bf16.msra.mxu0 %v647
    %937 = vmatprep.subr.bf16.mxu0 %v650
    %938 = vmatpush1.bf16.msra.mxu0 %v649
    %939 = vmatprep.subr.bf16.mxu0 %v652
    %940 = vmatpush1.bf16.msra.mxu0 %v651
    %941 = vmatprep.subr.bf16.mxu0 %v654
    %942 = vmatpush1.bf16.msra.mxu0 %v653
    %943 = vmatprep.subr.bf16.mxu0 %v656
    %944 = vmatpush1.bf16.msra.mxu0 %v655
    %945 = vmatprep.subr.bf16.mxu0 %v658
    %946 = vmatpush1.bf16.msra.mxu0 %v657
    %947 = vmatprep.subr.bf16.mxu0 %v660
    %948 = vmatpush1.bf16.msra.mxu0 %v659
    %949 = vmatprep.subr.bf16.mxu0 %v662
    %950 = vmatpush1.bf16.msra.mxu0 %v661
    %951 = vmatprep.subr.bf16.mxu0 %v664
    %952 = vmatpush1.bf16.msra.mxu0 %v663
    %953 = vmatprep.subr.bf16.mxu0 %v666
    %954 = vmatpush1.bf16.msra.mxu0 %v665
    %955 = vmatprep.subr.bf16.mxu0 %v668
    %956 = vmatpush1.bf16.msra.mxu0 %v667
    %957 = vmatprep.subr.bf16.mxu0 %v670
    %958 = vmatpush1.bf16.msra.mxu0 %v669
    %959 = vmatprep.subr.bf16.mxu0 %v672
    %960 = vmatpush1.bf16.msra.mxu0 %v671
    %961 = vmatprep.subr.bf16.mxu0 %v674
    %962 = vmatpush1.bf16.msra.mxu0 %v673
    %963 = vmatprep.subr.bf16.mxu0 %v676
    %964 = vmatpush1.bf16.msra.mxu0 %v675
    %965 = vmatprep.subr.bf16.mxu0 %v678
    %966 = vmatpush1.bf16.msra.mxu0 %v677
    %967 = vmatprep.mubr.bf16.mxu0 %v198
    %968 = vmatmul.mubr.bf16.gmra.mrb[0].mxu0 %v197
    %v969 = vpop.f32.mrb[0].mxu0
    %v970 = vadd.f32 %v176, %v969
    %v971 = vpop.f32.mrb[0].mxu0
    %v972 = vadd.f32 %v180, %v971
    %v973 = vpop.f32.mrb[0].mxu0
    %v974 = vpop.f32.mrb[0].mxu0
    %975 = vdwg.mxu0
    %976 = vmatprep.subr.bf16.mxu0 %v680
    %977 = vmatpush1.bf16.msra.mxu0 %v679
    %978 = vmatprep.subr.bf16.mxu0 %v682
    %979 = vmatpush1.bf16.msra.mxu0 %v681
    %980 = vmatprep.subr.bf16.mxu0 %v684
    %981 = vmatpush1.bf16.msra.mxu0 %v683
    %982 = vmatprep.subr.bf16.mxu0 %v686
    %983 = vmatpush1.bf16.msra.mxu0 %v685
    %984 = vmatprep.subr.bf16.mxu0 %v688
    %985 = vmatpush1.bf16.msra.mxu0 %v687
    %986 = vmatprep.subr.bf16.mxu0 %v690
    %987 = vmatpush1.bf16.msra.mxu0 %v689
    %988 = vmatprep.subr.bf16.mxu0 %v692
    %989 = vmatpush1.bf16.msra.mxu0 %v691
    %990 = vmatprep.subr.bf16.mxu0 %v694
    %991 = vmatpush1.bf16.msra.mxu0 %v693
    %992 = vmatprep.subr.bf16.mxu0 %v696
    %993 = vmatpush1.bf16.msra.mxu0 %v695
    %994 = vmatprep.subr.bf16.mxu0 %v698
    %995 = vmatpush1.bf16.msra.mxu0 %v697
    %996 = vmatprep.subr.bf16.mxu0 %v700
    %997 = vmatpush1.bf16.msra.mxu0 %v699
    %998 = vmatprep.subr.bf16.mxu0 %v702
    %999 = vmatpush1.bf16.msra.mxu0 %v701
    %1000 = vmatprep.subr.bf16.mxu0 %v704
    %1001 = vmatpush1.bf16.msra.mxu0 %v703
    %1002 = vmatprep.subr.bf16.mxu0 %v706
    %1003 = vmatpush1.bf16.msra.mxu0 %v705
    %1004 = vmatprep.subr.bf16.mxu0 %v708
    %1005 = vmatpush1.bf16.msra.mxu0 %v707
    %1006 = vmatprep.subr.bf16.mxu0 %v710
    %1007 = vmatpush1.bf16.msra.mxu0 %v709
    %1008 = vmatprep.mubr.bf16.mxu0 %v200
    %1009 = vmatmul.mubr.bf16.gmra.mrb[0].mxu0 %v199
    %v1010 = vpop.f32.mrb[0].mxu0
    %v1011 = vadd.f32 %v970, %v1010
    %v1012 = vpop.f32.mrb[0].mxu0
    %v1013 = vadd.f32 %v972, %v1012
    %v1014 = vpop.f32.mrb[0].mxu0
    %v1015 = vpop.f32.mrb[0].mxu0
    %1016 = vdwg.mxu0
    %1017 = vmatprep.subr.bf16.mxu0 %v712
    %1018 = vmatpush1.bf16.msra.mxu0 %v711
    %1019 = vmatprep.subr.bf16.mxu0 %v714
    %1020 = vmatpush1.bf16.msra.mxu0 %v713
    %1021 = vmatprep.subr.bf16.mxu0 %v716
    %1022 = vmatpush1.bf16.msra.mxu0 %v715
    %1023 = vmatprep.subr.bf16.mxu0 %v718
    %1024 = vmatpush1.bf16.msra.mxu0 %v717
    %1025 = vmatprep.subr.bf16.mxu0 %v720
    %1026 = vmatpush1.bf16.msra.mxu0 %v719
    %1027 = vmatprep.subr.bf16.mxu0 %v722
    %1028 = vmatpush1.bf16.msra.mxu0 %v721
    %1029 = vmatprep.subr.bf16.mxu0 %v724
    %1030 = vmatpush1.bf16.msra.mxu0 %v723
    %1031 = vmatprep.subr.bf16.mxu0 %v726
    %1032 = vmatpush1.bf16.msra.mxu0 %v725
    %1033 = vmatprep.subr.bf16.mxu0 %v728
    %1034 = vmatpush1.bf16.msra.mxu0 %v727
    %1035 = vmatprep.subr.bf16.mxu0 %v730
    %1036 = vmatpush1.bf16.msra.mxu0 %v729
    %1037 = vmatprep.subr.bf16.mxu0 %v732
    %1038 = vmatpush1.bf16.msra.mxu0 %v731
    %1039 = vmatprep.subr.bf16.mxu0 %v734
    %1040 = vmatpush1.bf16.msra.mxu0 %v733
    %1041 = vmatprep.subr.bf16.mxu0 %v736
    %1042 = vmatpush1.bf16.msra.mxu0 %v735
    %1043 = vmatprep.subr.bf16.mxu0 %v738
    %1044 = vmatpush1.bf16.msra.mxu0 %v737
    %1045 = vmatprep.subr.bf16.mxu0 %v740
    %1046 = vmatpush1.bf16.msra.mxu0 %v739
    %1047 = vmatprep.subr.bf16.mxu0 %v742
    %1048 = vmatpush1.bf16.msra.mxu0 %v741
    %1049 = vmatprep.mubr.bf16.mxu0 %v202
    %1050 = vmatmul.mubr.bf16.gmra.mrb[0].mxu0 %v201
    %v1051 = vpop.f32.mrb[0].mxu0
    %v1052 = vadd.f32 %v1011, %v1051
    %v1053 = vpop.f32.mrb[0].mxu0
    %v1054 = vadd.f32 %v1013, %v1053
    %v1055 = vpop.f32.mrb[0].mxu0
    %v1056 = vpop.f32.mrb[0].mxu0
    %1057 = vdwg.mxu0
    %1058 = vmatprep.subr.bf16.mxu0 %v744
    %1059 = vmatpush1.bf16.msra.mxu0 %v743
    %1060 = vmatprep.subr.bf16.mxu0 %v746
    %1061 = vmatpush1.bf16.msra.mxu0 %v745
    %1062 = vmatprep.subr.bf16.mxu0 %v748
    %1063 = vmatpush1.bf16.msra.mxu0 %v747
    %1064 = vmatprep.subr.bf16.mxu0 %v750
    %1065 = vmatpush1.bf16.msra.mxu0 %v749
    %1066 = vmatprep.subr.bf16.mxu0 %v752
    %1067 = vmatpush1.bf16.msra.mxu0 %v751
    %1068 = vmatprep.subr.bf16.mxu0 %v754
    %1069 = vmatpush1.bf16.msra.mxu0 %v753
    %1070 = vmatprep.subr.bf16.mxu0 %v756
    %1071 = vmatpush1.bf16.msra.mxu0 %v755
    %1072 = vmatprep.subr.bf16.mxu0 %v758
    %1073 = vmatpush1.bf16.msra.mxu0 %v757
    %1074 = vmatprep.subr.bf16.mxu0 %v760
    %1075 = vmatpush1.bf16.msra.mxu0 %v759
    %1076 = vmatprep.subr.bf16.mxu0 %v762
    %1077 = vmatpush1.bf16.msra.mxu0 %v761
    %1078 = vmatprep.subr.bf16.mxu0 %v764
    %1079 = vmatpush1.bf16.msra.mxu0 %v763
    %1080 = vmatprep.subr.bf16.mxu0 %v766
    %1081 = vmatpush1.bf16.msra.mxu0 %v765
    %1082 = vmatprep.subr.bf16.mxu0 %v768
    %1083 = vmatpush1.bf16.msra.mxu0 %v767
    %1084 = vmatprep.subr.bf16.mxu0 %v770
    %1085 = vmatpush1.bf16.msra.mxu0 %v769
    %1086 = vmatprep.subr.bf16.mxu0 %v772
    %1087 = vmatpush1.bf16.msra.mxu0 %v771
    %1088 = vmatprep.subr.bf16.mxu0 %v774
    %1089 = vmatpush1.bf16.msra.mxu0 %v773
    %1090 = vmatprep.mubr.bf16.mxu0 %v204
    %1091 = vmatmul.mubr.bf16.gmra.mrb[0].mxu0 %v203
    %v1092 = vpop.f32.mrb[0].mxu0
    %v1093 = vadd.f32 %v1052, %v1092
    %v1094 = vpop.f32.mrb[0].mxu0
    %v1095 = vadd.f32 %v1054, %v1094
    %v1096 = vpop.f32.mrb[0].mxu0
    %v1097 = vpop.f32.mrb[0].mxu0
    %1098 = vdwg.mxu0
    %1099 = vmatprep.subr.bf16.mxu0 %v776
    %1100 = vmatpush1.bf16.msra.mxu0 %v775
    %1101 = vmatprep.subr.bf16.mxu0 %v778
    %1102 = vmatpush1.bf16.msra.mxu0 %v777
    %1103 = vmatprep.subr.bf16.mxu0 %v780
    %1104 = vmatpush1.bf16.msra.mxu0 %v779
    %1105 = vmatprep.subr.bf16.mxu0 %v782
    %1106 = vmatpush1.bf16.msra.mxu0 %v781
    %1107 = vmatprep.subr.bf16.mxu0 %v784
    %1108 = vmatpush1.bf16.msra.mxu0 %v783
    %1109 = vmatprep.subr.bf16.mxu0 %v786
    %1110 = vmatpush1.bf16.msra.mxu0 %v785
    %1111 = vmatprep.subr.bf16.mxu0 %v788
    %1112 = vmatpush1.bf16.msra.mxu0 %v787
    %1113 = vmatprep.subr.bf16.mxu0 %v790
    %1114 = vmatpush1.bf16.msra.mxu0 %v789
    %1115 = vmatprep.subr.bf16.mxu0 0
    %1116 = vmatpush1.bf16.msra.mxu0 0
    %1117 = vmatprep.subr.bf16.mxu0 0
    %1118 = vmatpush1.bf16.msra.mxu0 0
    %1119 = vmatprep.subr.bf16.mxu0 0
    %1120 = vmatpush1.bf16.msra.mxu0 0
    %1121 = vmatprep.subr.bf16.mxu0 0
    %1122 = vmatpush1.bf16.msra.mxu0 0
    %1123 = vmatprep.subr.bf16.mxu0 0
    %1124 = vmatpush1.bf16.msra.mxu0 0
    %1125 = vmatprep.subr.bf16.mxu0 0
    %1126 = vmatpush1.bf16.msra.mxu0 0
    %1127 = vmatprep.subr.bf16.mxu0 0
    %1128 = vmatpush1.bf16.msra.mxu0 0
    %1129 = vmatprep.subr.bf16.mxu0 0
    %1130 = vmatpush1.bf16.msra.mxu0 0
    %1131 = vmatprep.mubr.bf16.mxu0 0
    %1132 = vmatmul.mubr.bf16.gmra.mrb[0].mxu0 %v205
    %v1133 = vpop.f32.mrb[0].mxu0
    %v1134 = vadd.f32 %v1093, %v1133
    %v1135 = vpop.f32.mrb[0].mxu0
    %v1136 = vadd.f32 %v1095, %v1135
    %v1137 = vpop.f32.mrb[0].mxu0
    %v1138 = vpop.f32.mrb[0].mxu0
    %1139 = vdwg.mxu0
    %vm1140 = vcmp.ge.f32.partialorder %v1134, 0.0
    %vm1141 = vcmp.ge.f32.partialorder %v1136, 0.0
    %v1142 = vmul.f32 %v1134, 0.01
    %v1143 = vmul.f32 %v1136, 0.01
    %v1144 = vsel %vm1140, %v1134, %v1142
    %v1145 = vsel %vm1141, %v1136, %v1143
    %v1148 = vcombine.low %v1144, %v1145
    %v1149 = vcombine.high %v1144, %v1145
    %v1152 = vcombine.high %v1148, %v1148
    %v1153 = vcombine.high %v1149, %v1149
    %vm1156 = vcmask 1043456
    %v1157 = vsel %vm1156, %v1148, 0.0
    %v1158 = vrot.slane %v1157, 4
    %v1159 = vadd.f32 %v1157, %v1158
    %v1160 = vrot.slane %v1159, 2
    %v1161 = vadd.f32 %v1159, %v1160
    %v1162 = vrot.slane %v1161, 1
    %v1163 = vadd.f32 %v1161, %v1162
    %v1164 = vsel %vm1156, %v1152, 0.0
    %v1165 = vrot.slane %v1164, 4
    %v1166 = vadd.f32 %v1164, %v1165
    %v1167 = vrot.slane %v1166, 2
    %v1168 = vadd.f32 %v1166, %v1167
    %v1169 = vrot.slane %v1168, 1
    %v1170 = vadd.f32 %v1168, %v1169
    %v1171 = vsel %vm1156, %v1149, 0.0
    %v1172 = vrot.slane %v1171, 4
    %v1173 = vadd.f32 %v1171, %v1172
    %v1174 = vrot.slane %v1173, 2
    %v1175 = vadd.f32 %v1173, %v1174
    %v1176 = vrot.slane %v1175, 1
    %v1177 = vadd.f32 %v1175, %v1176
    %v1178 = vsel %vm1156, %v1153, 0.0
    %v1179 = vrot.slane %v1178, 4
    %v1180 = vadd.f32 %v1178, %v1179
    %v1181 = vrot.slane %v1180, 2
    %v1182 = vadd.f32 %v1180, %v1181
    %v1183 = vrot.slane %v1182, 1
    %v1184 = vadd.f32 %v1182, %v1183
    %v1185 = vrcp.pop 4.0
    %v1186 = vmul.f32 %v1163, %v1185
    %v1187 = vmul.f32 %v1170, %v1185
    %v1188 = vmul.f32 %v1177, %v1185
    %v1189 = vmul.f32 %v1184, %v1185
    %v1190 = vld [vmem:[%s3] sm:$0xff]
    %v1191 = vld [vmem:[%s3 + $0x8] sm:$0xff]
    %v1192 = vld [vmem:[%s3 + $0x10] sm:$0xff]
    %v1193 = vld [vmem:[%s3 + $0x18] sm:$0xff]
    %v1194 = vld [vmem:[%s3 + $0x20] sm:$0xff]
    %v1195 = vld [vmem:[%s3 + $0x28] sm:$0xff]
    %v1196 = vld [vmem:[%s3 + $0x30] sm:$0xff]
    %v1197 = vld [vmem:[%s3 + $0x38] sm:$0xff]
    %v1198 = vld [vmem:[%s3 + $0x40] sm:$0xff]
    %v1199 = vld [vmem:[%s3 + $0x48] sm:$0xff]
    %v1200 = vld [vmem:[%s3 + $0x50] sm:$0xff]
    %v1201 = vld [vmem:[%s3 + $0x58] sm:$0xff]
    %v1202 = vld [vmem:[%s3 + $0x60] sm:$0xff]
    %v1203 = vld [vmem:[%s3 + $0x68] sm:$0xff]
    %v1204 = vld [vmem:[%s3 + $0x70] sm:$0xff]
    %v1205 = vld [vmem:[%s3 + $0x78] sm:$0xff]
    %v1206 = vld [vmem:[%s3 + $0x80] sm:$0xff]
    %v1207 = vld [vmem:[%s3 + $0x88] sm:$0xff]
    %v1208 = vld [vmem:[%s3 + $0x90] sm:$0xff]
    %v1209 = vld [vmem:[%s3 + $0x98] sm:$0xff]
    %v1210 = vld [vmem:[%s3 + $0xa0] sm:$0xff]
    %v1211 = vld [vmem:[%s3 + $0xa8] sm:$0xff]
    %v1212 = vld [vmem:[%s3 + $0xb0] sm:$0xff]
    %v1213 = vld [vmem:[%s3 + $0xb8] sm:$0xff]
    %v1214 = vld [vmem:[%s3 + $0xc0] sm:$0xff]
    %v1215 = vld [vmem:[%s3 + $0xc8] sm:$0xff]
    %v1216 = vld [vmem:[%s3 + $0xd0] sm:$0xff]
    %v1217 = vld [vmem:[%s3 + $0xd8] sm:$0xff]
    %v1218 = vld [vmem:[%s3 + $0xe0] sm:$0xff]
    %v1219 = vld [vmem:[%s3 + $0xe8] sm:$0xff]
    %v1220 = vld [vmem:[%s3 + $0xf0] sm:$0xff]
    %v1221 = vld [vmem:[%s3 + $0xf8] sm:$0xff]
    %v1222 = vld [vmem:[%s4] sm:$0x1]
    %v1224 = vlaneseq
    %v1225 = vshrl.u32 %v1224, 7
    %v1226 = vsub.s32 0, %v1225
    %v1227 = vrot.slane %v1222, %v1226
    %vm1233 = vcmask 1041409
    %v1234 = vsel %vm1233, %v1188, %v1186
    %v1235 = vsel %vm1233, %v1189, %v1187
    %1238 = vmatprep.subr.mxu0 0.0
    %1239 = vmatpush1.msra.mxu0 %v1190
    %1240 = vmatprep.subr.mxu0 0.0
    %1241 = vmatpush1.msra.mxu0 %v1191
    %1242 = vmatprep.subr.mxu0 0.0
    %1243 = vmatpush1.msra.mxu0 %v1192
    %1244 = vmatprep.subr.mxu0 0.0
    %1245 = vmatpush1.msra.mxu0 %v1193
    %1246 = vmatprep.subr.mxu0 0.0
    %1247 = vmatpush1.msra.mxu0 %v1194
    %1248 = vmatprep.subr.mxu0 0.0
    %1249 = vmatpush1.msra.mxu0 %v1195
    %1250 = vmatprep.subr.mxu0 0.0
    %1251 = vmatpush1.msra.mxu0 %v1196
    %1252 = vmatprep.subr.mxu0 0.0
    %1253 = vmatpush1.msra.mxu0 %v1197
    %1254 = vmatprep.subr.mxu0 0.0
    %1255 = vmatpush1.msra.mxu0 %v1198
    %1256 = vmatprep.subr.mxu0 0.0
    %1257 = vmatpush1.msra.mxu0 %v1199
    %1258 = vmatprep.subr.mxu0 0.0
    %1259 = vmatpush1.msra.mxu0 %v1200
    %1260 = vmatprep.subr.mxu0 0.0
    %1261 = vmatpush1.msra.mxu0 %v1201
    %1262 = vmatprep.subr.mxu0 0.0
    %1263 = vmatpush1.msra.mxu0 %v1202
    %1264 = vmatprep.subr.mxu0 0.0
    %1265 = vmatpush1.msra.mxu0 %v1203
    %1266 = vmatprep.subr.mxu0 0.0
    %1267 = vmatpush1.msra.mxu0 %v1204
    %1268 = vmatprep.subr.mxu0 0.0
    %1269 = vmatpush1.msra.mxu0 %v1205
    %1270 = vmatprep.subr.mxu0 0.0
    %1271 = vmatpush1.msra.mxu0 %v1206
    %1272 = vmatprep.subr.mxu0 0.0
    %1273 = vmatpush1.msra.mxu0 %v1207
    %1274 = vmatprep.subr.mxu0 0.0
    %1275 = vmatpush1.msra.mxu0 %v1208
    %1276 = vmatprep.subr.mxu0 0.0
    %1277 = vmatpush1.msra.mxu0 %v1209
    %1278 = vmatprep.subr.mxu0 0.0
    %1279 = vmatpush1.msra.mxu0 %v1210
    %1280 = vmatprep.subr.mxu0 0.0
    %1281 = vmatpush1.msra.mxu0 %v1211
    %1282 = vmatprep.subr.mxu0 0.0
    %1283 = vmatpush1.msra.mxu0 %v1212
    %1284 = vmatprep.subr.mxu0 0.0
    %1285 = vmatpush1.msra.mxu0 %v1213
    %1286 = vmatprep.subr.mxu0 0.0
    %1287 = vmatpush1.msra.mxu0 %v1214
    %1288 = vmatprep.subr.mxu0 0.0
    %1289 = vmatpush1.msra.mxu0 %v1215
    %1290 = vmatprep.subr.mxu0 0.0
    %1291 = vmatpush1.msra.mxu0 %v1216
    %1292 = vmatprep.subr.mxu0 0.0
    %1293 = vmatpush1.msra.mxu0 %v1217
    %1294 = vmatprep.subr.mxu0 0.0
    %1295 = vmatpush1.msra.mxu0 %v1218
    %1296 = vmatprep.subr.mxu0 0.0
    %1297 = vmatpush1.msra.mxu0 %v1219
    %1298 = vmatprep.subr.mxu0 0.0
    %1299 = vmatpush1.msra.mxu0 %v1220
    %1300 = vmatprep.subr.mxu0 0.0
    %1301 = vmatpush1.msra.mxu0 %v1221
    %1302 = vmatprep.mubr.f32.mxu0 %v1235
    %1303 = vmatmul.mubr.f32.gmra.mrb[0].mxu0 %v1234
    %v1304 = vpop.f32.mrb[0].mxu0
    %v1305 = vadd.f32 %v1227, %v1304
    %v1306 = vpop.f32.mrb[0].mxu0
    %1307 = vdwg.mxu0
    %vm1308 = vcmask 17408
    %1309 = vst.msk [vmem:[#allocation2] sm:$0x3] %vm1308, %v1305
    // Predicated region
    $region22: #{_lambda_.9} parent=1 // pred_check
      _
    $region23: #{_lambda_.9} parent=1 // pred_check_branch
      %1311 = sbr.rel (0) target = $region25
    $region24: #{_lambda_.9} parent=1 // pred_region
      %s1313 = ssub.s32 32, 32
      %1314 = vsyncadd [#allocation3], %s1313
      %s1316 = sshll.u32 [#allocation2], 4
      %s1317 = int_to_ptr.vmem [resolvable:$true] %s1316
      %1319 = dma.vmem_to_hbm [thread:$0]  %s1317, 32, %s5, [#allocation3]
    $region25: #{_lambda_.9} parent=1 // pred_fallthru
      _
    // Predicated region
    $region26: #{_lambda_.9} parent=1 // pred_check
      _
    $region27: #{_lambda_.9} parent=1 // pred_check_branch
      %1321 = sbr.rel (0) target = $region29
    $region28: #{_lambda_.9} parent=1 // pred_region
      %1322 = dma.done [#allocation3], 32
    $region29: #{_lambda_.9} parent=1 // pred_fallthru
      _
    %1323 = vsyncpa [#allocation3], 1

</llo_original>
